<compile_context>
chip_gen: v7x
topology: tpu7x:2x2x1
jax: 0.10.0
libtpu: 0.0.40
codegen_flags: <defaults>
</compile_context>

<pallas_src>
import jax
import jax.numpy as jnp
from jax.experimental import pallas as pl
from jax.experimental.pallas import tpu as pltpu


def _round_up(x, m):
    return (x + m - 1) // m * m


def predictive_keyboard_kernel(tok_ref, table_hbm, w_hh_ref, w_fc_ref, b_fc_ref,
                               out_ref, gates_scr, h_scr, c_scr, copy_sems):
    """Grid axis = V tiles.  Recurrence runs only on grid step 0; fc runs every step."""
    j = pl.program_id(0)
    TB = gates_scr.shape[0]
    B, H = h_scr.shape
    T = TB // B

    @pl.when(j == 0)
    def _recurrence():
        # ---- Stage 0: fire-and-forget DMA row gathers from the HBM fused table.
        # One semaphore per timestep; the B copies of step t all signal copy_sems[t], and we
        # wait on all B of them before reading any of that step's rows.
        copies = []
        for t in range(T):
            for b in range(B):
                row = t * B + b
                tok = tok_ref[row]                                   # scalar read from SMEM
                cp = pltpu.make_async_copy(
                    table_hbm.at[pl.ds(tok, 1), :],                  # (1, 4H) row in HBM
                    gates_scr.at[pl.ds(row, 1), :],                  # (1, 4H) slot in VMEM
                    copy_sems.at[t])
                cp.start()
                copies.append(cp)

        # Zero-init of the state overlaps with the in-flight DMAs.
        h_scr[...] = jnp.zeros_like(h_scr)
        c_scr[...] = jnp.zeros_like(c_scr)

        # ---- Stage 1: LSTM recurrence (zero initial state).  Biases are already fused into
        # the gathered rows, so only h @ W_hh + elementwise gates sit on the critical path.
        for t in range(T):
            for b in range(B):
                copies[t * B + b].wait()                             # only this step's rows
            g_in = gates_scr[pl.ds(t * B, B), :]                     # (B, 4H), static slice
            h = h_scr[...]
            c = c_scr[...]
            gates = g_in + jnp.dot(h, w_hh_ref[...],
                                   preferred_element_type=jnp.float32)
            i_g = jax.nn.sigmoid(gates[:, 0 * H:1 * H])
            f_g = jax.nn.sigmoid(gates[:, 1 * H:2 * H])
            g_g = jnp.tanh(gates[:, 2 * H:3 * H])
            o_g = jax.nn.sigmoid(gates[:, 3 * H:4 * H])
            c_new = f_g * c + i_g * g_g
            c_scr[...] = c_new
            h_scr[...] = o_g * jnp.tanh(c_new)

    # ---- Stage 2: fc on the last hidden state for this V tile (lane-dense store).
    out_ref[...] = (jnp.dot(h_scr[...], w_fc_ref[...],
                            preferred_element_type=jnp.float32)
                    + b_fc_ref[...])


def precompute_fused_table(emb, w_ih_t, b_ih, b_hh):
    """Done ONCE per model (inference): table[v] = emb[v] @ W_ih^T + (b_ih + b_hh)."""
    return (emb @ w_ih_t + (b_ih + b_hh)[None, :]).astype(jnp.float32)       # (V, 4H)


def predictive_keyboard_forward(tokens_bt, table, w_hh_t, w_fc_t, b_fc, *, tile_n=512):
    """tokens_bt: (B, T) int32 (batch-first, like the PyTorch module). Returns (B, V) logits."""
    B, T = tokens_bt.shape
    H = w_hh_t.shape[0]
    V = w_fc_t.shape[1]

    # NOTE: per review, at realistic batch sizes raise B_pad toward the MXU height
    # (128 on v5e, 256 on v6e/v7x) -- per-step cost is nearly flat until the LHS fills it.
    B_pad = _round_up(max(B, 8), 8)            # fill sublanes
    V_pad = _round_up(V, 128)                  # lane-dense output stores
    TILE_N = min(tile_n, V_pad)                # fc streaming tile (multiple of 128)
    V_pad = _round_up(V_pad, TILE_N)

    # Zero-pad fc weights/bias along the vocab axis (zeros -> sliced off below).
    w_fc_p = jnp.zeros((H, V_pad), jnp.float32).at[:, :V].set(w_fc_t)
    b_fc_p = jnp.zeros((1, V_pad), jnp.float32).at[:, :V].set(b_fc.reshape(1, V))

    # Flat time-major token buffer; padded batch slots gather table row 0 (harmless).
    tok_flat = (jnp.zeros((T, B_pad), jnp.int32)
                .at[:, :B].set(tokens_bt.T.astype(jnp.int32))
                .reshape(T * B_pad))

    grid = (V_pad // TILE_N,)

    cost = pl.CostEstimate(
        flops=2 * T * B_pad * H * 4 * H + 2 * B_pad * H * V_pad,
        transcendentals=T * B_pad * 5 * H,
        bytes_accessed=4 * (T * B_pad * 4 * H + H * 4 * H + H * V_pad
                            + V_pad + B_pad * V_pad) + 4 * T * B_pad,
    )

    out = pl.pallas_call(
        predictive_keyboard_kernel,
        out_shape=jax.ShapeDtypeStruct((B_pad, V_pad), jnp.float32),
        grid_spec=pltpu.PrefetchScalarGridSpec(
            num_scalar_prefetch=1,                       # tokens -> SMEM
            grid=grid,
            in_specs=[
                pl.BlockSpec(memory_space=pl.ANY),                         # table stays in HBM
                pl.BlockSpec((H, 4 * H), lambda j, tok: (0, 0)),           # W_hh resident
                pl.BlockSpec((H, TILE_N), lambda j, tok: (0, j)),          # W_fc streamed over V
                pl.BlockSpec((1, TILE_N), lambda j, tok: (0, j)),          # b_fc streamed over V
            ],
            out_specs=pl.BlockSpec((B_pad, TILE_N), lambda j, tok: (0, j)),
            scratch_shapes=[
                pltpu.VMEM((T * B_pad, 4 * H), jnp.float32),   # gathered fused input gates
                pltpu.VMEM((B_pad, H), jnp.float32),           # h (persists across grid steps)
                pltpu.VMEM((B_pad, H), jnp.float32),           # c
                pltpu.SemaphoreType.DMA((T,)),                 # one DMA sem per timestep
            ],
        ),
        compiler_params=pltpu.CompilerParams(
            dimension_semantics=("arbitrary",),          # recurrence on step 0 -> sequential
        ),
        cost_estimate=cost,
    )(tok_flat, table, w_hh_t.astype(jnp.float32), w_fc_p, b_fc_p)

    return out[:B, :V]


def reference_forward(tokens_bt, emb, w_ih_t, w_hh_t, b_ih, b_hh, w_fc_t, b_fc):
    """Pure-JAX reference mirroring torch.nn.LSTM(batch_first=True) + fc on last step."""
    B, T = tokens_bt.shape
    H = w_hh_t.shape[0]
    x = emb[tokens_bt]                                    # (B, T, E)
    h = jnp.zeros((B, H), jnp.float32)
    c = jnp.zeros((B, H), jnp.float32)
    for t in range(T):
        gates = x[:, t, :] @ w_ih_t + b_ih + h @ w_hh_t + b_hh
        i_g = jax.nn.sigmoid(gates[:, 0 * H:1 * H])
        f_g = jax.nn.sigmoid(gates[:, 1 * H:2 * H])
        g_g = jnp.tanh(gates[:, 2 * H:3 * H])
        o_g = jax.nn.sigmoid(gates[:, 3 * H:4 * H])
        c = f_g * c + i_g * g_g
        h = o_g * jnp.tanh(c)
    return h @ w_fc_t + b_fc


if __name__ == "__main__":
    # Small shapes consistent with the module (embed_dim=64, hidden_dim=128 defaults).
    # V=1000 exercises the V-tiled fc streaming (V_pad=1024, TILE_N=512, grid=(2,)).
    B, T = 2, 8
    V, E, H = 1000, 64, 128

    key = jax.random.PRNGKey(0)
    k_tok, k_emb, k_wih, k_whh, k_bih, k_bhh, k_wfc, k_bfc = jax.random.split(key, 8)

    s = 1.0 / jnp.sqrt(jnp.float32(H))
    emb    = jax.random.uniform(k_emb, (V, E), jnp.float32, -0.1, 0.1)
    w_ih_t = jax.random.uniform(k_wih, (E, 4 * H), jnp.float32, -s, s)   # weight_ih_l0.T
    w_hh_t = jax.random.uniform(k_whh, (H, 4 * H), jnp.float32, -s, s)   # weight_hh_l0.T
    b_ih   = jax.random.uniform(k_bih, (4 * H,), jnp.float32, -s, s)
    b_hh   = jax.random.uniform(k_bhh, (4 * H,), jnp.float32, -s, s)
    w_fc_t = jax.random.uniform(k_wfc, (H, V), jnp.float32, -s, s)       # fc.weight.T
    b_fc   = jax.random.uniform(k_bfc, (V,), jnp.float32, -s, s)

    # PyTorch forward takes (B, T) int token indices.
    tokens_bt = jax.random.randint(k_tok, (B, T), 0, V, dtype=jnp.int32)

    # Fused table precomputed once and reused across forward calls (inference-style).
    table = precompute_fused_table(emb, w_ih_t, b_ih, b_hh)

    out = predictive_keyboard_forward(tokens_bt, table, w_hh_t, w_fc_t, b_fc)
    out = jax.block_until_ready(out)

    ref = reference_forward(tokens_bt, emb, w_ih_t, w_hh_t, b_ih, b_hh, w_fc_t, b_fc)
    assert out.shape == (B, V)
    assert jnp.allclose(out, ref, atol=1e-4, rtol=1e-4), "mismatch vs reference"

    print("KERNEL_OK")
</pallas_src>

<mosaic_0001>
module attributes {stable_mosaic.version = 11 : i64} {
  func.func @predictive_keyboard_kernel(%arg0: i32, %arg1: memref<64xi32, #tpu.memory_space<smem>>, %arg2: memref<1000x512xf32, #tpu.memory_space<any>>, %arg3: memref<128x512xf32, #tpu.memory_space<vmem>>, %arg4: memref<128x512xf32, #tpu.memory_space<vmem>>, %arg5: memref<1x512xf32, #tpu.memory_space<vmem>>, %arg6: memref<8x512xf32, #tpu.memory_space<vmem>>, %arg7: memref<64x512xf32, #tpu.memory_space<vmem>>, %arg8: memref<8x128xf32, #tpu.memory_space<vmem>>, %arg9: memref<8x128xf32, #tpu.memory_space<vmem>>, %arg10: memref<8x!tpu.dma_semaphore, #tpu.memory_space<semaphore_mem>>) attributes {dimension_semantics = [#tpu.dimension_semantics<arbitrary>], iteration_bounds = array<i64: 2>, scalar_prefetch = 1 : i64, scratch_operands = 4 : i64, tpu.core_type = #tpu.core_type<tc>, window_params = [{}, {pipeline_mode = #tpu.pipeline_mode<synchronous>, transform_indices = @transform_1, window_bounds = array<i64: 128, 512>}, {transform_indices = @transform_2, window_bounds = array<i64: 128, 512>}, {transform_indices = @transform_3, window_bounds = array<i64: 1, 512>}, {transform_indices = @transform_4, window_bounds = array<i64: 8, 512>}]} {
    %c0_i32 = arith.constant 0 : i32
    %0 = arith.cmpi eq, %arg0, %c0_i32 : i32
    %1 = arith.extui %0 : i1 to i32
    %c0_i32_0 = arith.constant 0 : i32
    %2 = arith.cmpi ne, %1, %c0_i32_0 : i32
    scf.if %2 {
      %c0_8 = arith.constant 0 : index
      %10 = memref.load %arg1[%c0_8] : memref<64xi32, #tpu.memory_space<smem>>
      %c0_i32_9 = arith.constant 0 : i32
      %c0_i32_10 = arith.constant 0 : i32
      %11 = tpu.memref_slice %arg2[%10, %c0_i32_10] : memref<1000x512xf32, #tpu.memory_space<any>> -> memref<1x512xf32, #tpu.memory_space<any>>
      %c0_i32_11 = arith.constant 0 : i32
      %c0_i32_12 = arith.constant 0 : i32
      %12 = tpu.memref_slice %arg7[%c0_i32_11, %c0_i32_12] : memref<64x512xf32, #tpu.memory_space<vmem>> -> memref<1x512xf32, #tpu.memory_space<vmem>>
      %13 = tpu.memref_slice %arg10[%c0_i32_9] : memref<8x!tpu.dma_semaphore, #tpu.memory_space<semaphore_mem>> -> memref<1x!tpu.dma_semaphore, #tpu.memory_space<semaphore_mem>>
      %14 = tpu.memref_squeeze %13 : memref<1x!tpu.dma_semaphore, #tpu.memory_space<semaphore_mem>> -> memref<!tpu.dma_semaphore, #tpu.memory_space<semaphore_mem>>
      tpu.enqueue_dma source(%11 : memref<1x512xf32, #tpu.memory_space<any>>) target(%12 : memref<1x512xf32, #tpu.memory_space<vmem>>) target_semaphore(%14 : memref<!tpu.dma_semaphore, #tpu.memory_space<semaphore_mem>>)
      %c1 = arith.constant 1 : index
      %15 = memref.load %arg1[%c1] : memref<64xi32, #tpu.memory_space<smem>>
      %c0_i32_13 = arith.constant 0 : i32
      %c0_i32_14 = arith.constant 0 : i32
      %16 = tpu.memref_slice %arg2[%15, %c0_i32_14] : memref<1000x512xf32, #tpu.memory_space<any>> -> memref<1x512xf32, #tpu.memory_space<any>>
      %c1_i32 = arith.constant 1 : i32
      %c0_i32_15 = arith.constant 0 : i32
      %17 = tpu.memref_slice %arg7[%c1_i32, %c0_i32_15] : memref<64x512xf32, #tpu.memory_space<vmem>> -> memref<1x512xf32, #tpu.memory_space<vmem>>
      %18 = tpu.memref_slice %arg10[%c0_i32_13] : memref<8x!tpu.dma_semaphore, #tpu.memory_space<semaphore_mem>> -> memref<1x!tpu.dma_semaphore, #tpu.memory_space<semaphore_mem>>
      %19 = tpu.memref_squeeze %18 : memref<1x!tpu.dma_semaphore, #tpu.memory_space<semaphore_mem>> -> memref<!tpu.dma_semaphore, #tpu.memory_space<semaphore_mem>>
      tpu.enqueue_dma source(%16 : memref<1x512xf32, #tpu.memory_space<any>>) target(%17 : memref<1x512xf32, #tpu.memory_space<vmem>>) target_semaphore(%19 : memref<!tpu.dma_semaphore, #tpu.memory_space<semaphore_mem>>)
      %c2 = arith.constant 2 : index
      %20 = memref.load %arg1[%c2] : memref<64xi32, #tpu.memory_space<smem>>
      %c0_i32_16 = arith.constant 0 : i32
      %c0_i32_17 = arith.constant 0 : i32
      %21 = tpu.memref_slice %arg2[%20, %c0_i32_17] : memref<1000x512xf32, #tpu.memory_space<any>> -> memref<1x512xf32, #tpu.memory_space<any>>
      %c2_i32 = arith.constant 2 : i32
      %c0_i32_18 = arith.constant 0 : i32
      %22 = tpu.memref_slice %arg7[%c2_i32, %c0_i32_18] : memref<64x512xf32, #tpu.memory_space<vmem>> -> memref<1x512xf32, #tpu.memory_space<vmem>>
      %23 = tpu.memref_slice %arg10[%c0_i32_16] : memref<8x!tpu.dma_semaphore, #tpu.memory_space<semaphore_mem>> -> memref<1x!tpu.dma_semaphore, #tpu.memory_space<semaphore_mem>>
      %24 = tpu.memref_squeeze %23 : memref<1x!tpu.dma_semaphore, #tpu.memory_space<semaphore_mem>> -> memref<!tpu.dma_semaphore, #tpu.memory_space<semaphore_mem>>
      tpu.enqueue_dma source(%21 : memref<1x512xf32, #tpu.memory_space<any>>) target(%22 : memref<1x512xf32, #tpu.memory_space<vmem>>) target_semaphore(%24 : memref<!tpu.dma_semaphore, #tpu.memory_space<semaphore_mem>>)
      %c3 = arith.constant 3 : index
      %25 = memref.load %arg1[%c3] : memref<64xi32, #tpu.memory_space<smem>>
      %c0_i32_19 = arith.constant 0 : i32
      %c0_i32_20 = arith.constant 0 : i32
      %26 = tpu.memref_slice %arg2[%25, %c0_i32_20] : memref<1000x512xf32, #tpu.memory_space<any>> -> memref<1x512xf32, #tpu.memory_space<any>>
      %c3_i32 = arith.constant 3 : i32
      %c0_i32_21 = arith.constant 0 : i32
      %27 = tpu.memref_slice %arg7[%c3_i32, %c0_i32_21] : memref<64x512xf32, #tpu.memory_space<vmem>> -> memref<1x512xf32, #tpu.memory_space<vmem>>
      %28 = tpu.memref_slice %arg10[%c0_i32_19] : memref<8x!tpu.dma_semaphore, #tpu.memory_space<semaphore_mem>> -> memref<1x!tpu.dma_semaphore, #tpu.memory_space<semaphore_mem>>
      %29 = tpu.memref_squeeze %28 : memref<1x!tpu.dma_semaphore, #tpu.memory_space<semaphore_mem>> -> memref<!tpu.dma_semaphore, #tpu.memory_space<semaphore_mem>>
      tpu.enqueue_dma source(%26 : memref<1x512xf32, #tpu.memory_space<any>>) target(%27 : memref<1x512xf32, #tpu.memory_space<vmem>>) target_semaphore(%29 : memref<!tpu.dma_semaphore, #tpu.memory_space<semaphore_mem>>)
      %c4 = arith.constant 4 : index
      %30 = memref.load %arg1[%c4] : memref<64xi32, #tpu.memory_space<smem>>
      %c0_i32_22 = arith.constant 0 : i32
      %c0_i32_23 = arith.constant 0 : i32
      %31 = tpu.memref_slice %arg2[%30, %c0_i32_23] : memref<1000x512xf32, #tpu.memory_space<any>> -> memref<1x512xf32, #tpu.memory_space<any>>
      %c4_i32 = arith.constant 4 : i32
      %c0_i32_24 = arith.constant 0 : i32
      %32 = tpu.memref_slice %arg7[%c4_i32, %c0_i32_24] : memref<64x512xf32, #tpu.memory_space<vmem>> -> memref<1x512xf32, #tpu.memory_space<vmem>>
      %33 = tpu.memref_slice %arg10[%c0_i32_22] : memref<8x!tpu.dma_semaphore, #tpu.memory_space<semaphore_mem>> -> memref<1x!tpu.dma_semaphore, #tpu.memory_space<semaphore_mem>>
      %34 = tpu.memref_squeeze %33 : memref<1x!tpu.dma_semaphore, #tpu.memory_space<semaphore_mem>> -> memref<!tpu.dma_semaphore, #tpu.memory_space<semaphore_mem>>
      tpu.enqueue_dma source(%31 : memref<1x512xf32, #tpu.memory_space<any>>) target(%32 : memref<1x512xf32, #tpu.memory_space<vmem>>) target_semaphore(%34 : memref<!tpu.dma_semaphore, #tpu.memory_space<semaphore_mem>>)
      %c5 = arith.constant 5 : index
      %35 = memref.load %arg1[%c5] : memref<64xi32, #tpu.memory_space<smem>>
      %c0_i32_25 = arith.constant 0 : i32
      %c0_i32_26 = arith.constant 0 : i32
      %36 = tpu.memref_slice %arg2[%35, %c0_i32_26] : memref<1000x512xf32, #tpu.memory_space<any>> -> memref<1x512xf32, #tpu.memory_space<any>>
      %c5_i32 = arith.constant 5 : i32
      %c0_i32_27 = arith.constant 0 : i32
      %37 = tpu.memref_slice %arg7[%c5_i32, %c0_i32_27] : memref<64x512xf32, #tpu.memory_space<vmem>> -> memref<1x512xf32, #tpu.memory_space<vmem>>
      %38 = tpu.memref_slice %arg10[%c0_i32_25] : memref<8x!tpu.dma_semaphore, #tpu.memory_space<semaphore_mem>> -> memref<1x!tpu.dma_semaphore, #tpu.memory_space<semaphore_mem>>
      %39 = tpu.memref_squeeze %38 : memref<1x!tpu.dma_semaphore, #tpu.memory_space<semaphore_mem>> -> memref<!tpu.dma_semaphore, #tpu.memory_space<semaphore_mem>>
      tpu.enqueue_dma source(%36 : memref<1x512xf32, #tpu.memory_space<any>>) target(%37 : memref<1x512xf32, #tpu.memory_space<vmem>>) target_semaphore(%39 : memref<!tpu.dma_semaphore, #tpu.memory_space<semaphore_mem>>)
      %c6 = arith.constant 6 : index
      %40 = memref.load %arg1[%c6] : memref<64xi32, #tpu.memory_space<smem>>
      %c0_i32_28 = arith.constant 0 : i32
      %c0_i32_29 = arith.constant 0 : i32
      %41 = tpu.memref_slice %arg2[%40, %c0_i32_29] : memref<1000x512xf32, #tpu.memory_space<any>> -> memref<1x512xf32, #tpu.memory_space<any>>
      %c6_i32 = arith.constant 6 : i32
      %c0_i32_30 = arith.constant 0 : i32
      %42 = tpu.memref_slice %arg7[%c6_i32, %c0_i32_30] : memref<64x512xf32, #tpu.memory_space<vmem>> -> memref<1x512xf32, #tpu.memory_space<vmem>>
      %43 = tpu.memref_slice %arg10[%c0_i32_28] : memref<8x!tpu.dma_semaphore, #tpu.memory_space<semaphore_mem>> -> memref<1x!tpu.dma_semaphore, #tpu.memory_space<semaphore_mem>>
      %44 = tpu.memref_squeeze %43 : memref<1x!tpu.dma_semaphore, #tpu.memory_space<semaphore_mem>> -> memref<!tpu.dma_semaphore, #tpu.memory_space<semaphore_mem>>
      tpu.enqueue_dma source(%41 : memref<1x512xf32, #tpu.memory_space<any>>) target(%42 : memref<1x512xf32, #tpu.memory_space<vmem>>) target_semaphore(%44 : memref<!tpu.dma_semaphore, #tpu.memory_space<semaphore_mem>>)
      %c7 = arith.constant 7 : index
      %45 = memref.load %arg1[%c7] : memref<64xi32, #tpu.memory_space<smem>>
      %c0_i32_31 = arith.constant 0 : i32
      %c0_i32_32 = arith.constant 0 : i32
      %46 = tpu.memref_slice %arg2[%45, %c0_i32_32] : memref<1000x512xf32, #tpu.memory_space<any>> -> memref<1x512xf32, #tpu.memory_space<any>>
      %c7_i32 = arith.constant 7 : i32
      %c0_i32_33 = arith.constant 0 : i32
      %47 = tpu.memref_slice %arg7[%c7_i32, %c0_i32_33] : memref<64x512xf32, #tpu.memory_space<vmem>> -> memref<1x512xf32, #tpu.memory_space<vmem>>
      %48 = tpu.memref_slice %arg10[%c0_i32_31] : memref<8x!tpu.dma_semaphore, #tpu.memory_space<semaphore_mem>> -> memref<1x!tpu.dma_semaphore, #tpu.memory_space<semaphore_mem>>
      %49 = tpu.memref_squeeze %48 : memref<1x!tpu.dma_semaphore, #tpu.memory_space<semaphore_mem>> -> memref<!tpu.dma_semaphore, #tpu.memory_space<semaphore_mem>>
      tpu.enqueue_dma source(%46 : memref<1x512xf32, #tpu.memory_space<any>>) target(%47 : memref<1x512xf32, #tpu.memory_space<vmem>>) target_semaphore(%49 : memref<!tpu.dma_semaphore, #tpu.memory_space<semaphore_mem>>)
      %c8 = arith.constant 8 : index
      %50 = memref.load %arg1[%c8] : memref<64xi32, #tpu.memory_space<smem>>
      %c1_i32_34 = arith.constant 1 : i32
      %c0_i32_35 = arith.constant 0 : i32
      %51 = tpu.memref_slice %arg2[%50, %c0_i32_35] : memref<1000x512xf32, #tpu.memory_space<any>> -> memref<1x512xf32, #tpu.memory_space<any>>
      %c8_i32 = arith.constant 8 : i32
      %c0_i32_36 = arith.constant 0 : i32
      %52 = tpu.memref_slice %arg7[%c8_i32, %c0_i32_36] : memref<64x512xf32, #tpu.memory_space<vmem>> -> memref<1x512xf32, #tpu.memory_space<vmem>>
      %53 = tpu.memref_slice %arg10[%c1_i32_34] : memref<8x!tpu.dma_semaphore, #tpu.memory_space<semaphore_mem>> -> memref<1x!tpu.dma_semaphore, #tpu.memory_space<semaphore_mem>>
      %54 = tpu.memref_squeeze %53 : memref<1x!tpu.dma_semaphore, #tpu.memory_space<semaphore_mem>> -> memref<!tpu.dma_semaphore, #tpu.memory_space<semaphore_mem>>
      tpu.enqueue_dma source(%51 : memref<1x512xf32, #tpu.memory_space<any>>) target(%52 : memref<1x512xf32, #tpu.memory_space<vmem>>) target_semaphore(%54 : memref<!tpu.dma_semaphore, #tpu.memory_space<semaphore_mem>>)
      %c9 = arith.constant 9 : index
      %55 = memref.load %arg1[%c9] : memref<64xi32, #tpu.memory_space<smem>>
      %c1_i32_37 = arith.constant 1 : i32
      %c0_i32_38 = arith.constant 0 : i32
      %56 = tpu.memref_slice %arg2[%55, %c0_i32_38] : memref<1000x512xf32, #tpu.memory_space<any>> -> memref<1x512xf32, #tpu.memory_space<any>>
      %c9_i32 = arith.constant 9 : i32
      %c0_i32_39 = arith.constant 0 : i32
      %57 = tpu.memref_slice %arg7[%c9_i32, %c0_i32_39] : memref<64x512xf32, #tpu.memory_space<vmem>> -> memref<1x512xf32, #tpu.memory_space<vmem>>
      %58 = tpu.memref_slice %arg10[%c1_i32_37] : memref<8x!tpu.dma_semaphore, #tpu.memory_space<semaphore_mem>> -> memref<1x!tpu.dma_semaphore, #tpu.memory_space<semaphore_mem>>
      %59 = tpu.memref_squeeze %58 : memref<1x!tpu.dma_semaphore, #tpu.memory_space<semaphore_mem>> -> memref<!tpu.dma_semaphore, #tpu.memory_space<semaphore_mem>>
      tpu.enqueue_dma source(%56 : memref<1x512xf32, #tpu.memory_space<any>>) target(%57 : memref<1x512xf32, #tpu.memory_space<vmem>>) target_semaphore(%59 : memref<!tpu.dma_semaphore, #tpu.memory_space<semaphore_mem>>)
      %c10 = arith.constant 10 : index
      %60 = memref.load %arg1[%c10] : memref<64xi32, #tpu.memory_space<smem>>
      %c1_i32_40 = arith.constant 1 : i32
      %c0_i32_41 = arith.constant 0 : i32
      %61 = tpu.memref_slice %arg2[%60, %c0_i32_41] : memref<1000x512xf32, #tpu.memory_space<any>> -> memref<1x512xf32, #tpu.memory_space<any>>
      %c10_i32 = arith.constant 10 : i32
      %c0_i32_42 = arith.constant 0 : i32
      %62 = tpu.memref_slice %arg7[%c10_i32, %c0_i32_42] : memref<64x512xf32, #tpu.memory_space<vmem>> -> memref<1x512xf32, #tpu.memory_space<vmem>>
      %63 = tpu.memref_slice %arg10[%c1_i32_40] : memref<8x!tpu.dma_semaphore, #tpu.memory_space<semaphore_mem>> -> memref<1x!tpu.dma_semaphore, #tpu.memory_space<semaphore_mem>>
      %64 = tpu.memref_squeeze %63 : memref<1x!tpu.dma_semaphore, #tpu.memory_space<semaphore_mem>> -> memref<!tpu.dma_semaphore, #tpu.memory_space<semaphore_mem>>
      tpu.enqueue_dma source(%61 : memref<1x512xf32, #tpu.memory_space<any>>) target(%62 : memref<1x512xf32, #tpu.memory_space<vmem>>) target_semaphore(%64 : memref<!tpu.dma_semaphore, #tpu.memory_space<semaphore_mem>>)
      %c11 = arith.constant 11 : index
      %65 = memref.load %arg1[%c11] : memref<64xi32, #tpu.memory_space<smem>>
      %c1_i32_43 = arith.constant 1 : i32
      %c0_i32_44 = arith.constant 0 : i32
      %66 = tpu.memref_slice %arg2[%65, %c0_i32_44] : memref<1000x512xf32, #tpu.memory_space<any>> -> memref<1x512xf32, #tpu.memory_space<any>>
      %c11_i32 = arith.constant 11 : i32
      %c0_i32_45 = arith.constant 0 : i32
      %67 = tpu.memref_slice %arg7[%c11_i32, %c0_i32_45] : memref<64x512xf32, #tpu.memory_space<vmem>> -> memref<1x512xf32, #tpu.memory_space<vmem>>
      %68 = tpu.memref_slice %arg10[%c1_i32_43] : memref<8x!tpu.dma_semaphore, #tpu.memory_space<semaphore_mem>> -> memref<1x!tpu.dma_semaphore, #tpu.memory_space<semaphore_mem>>
      %69 = tpu.memref_squeeze %68 : memref<1x!tpu.dma_semaphore, #tpu.memory_space<semaphore_mem>> -> memref<!tpu.dma_semaphore, #tpu.memory_space<semaphore_mem>>
      tpu.enqueue_dma source(%66 : memref<1x512xf32, #tpu.memory_space<any>>) target(%67 : memref<1x512xf32, #tpu.memory_space<vmem>>) target_semaphore(%69 : memref<!tpu.dma_semaphore, #tpu.memory_space<semaphore_mem>>)
      %c12 = arith.constant 12 : index
      %70 = memref.load %arg1[%c12] : memref<64xi32, #tpu.memory_space<smem>>
      %c1_i32_46 = arith.constant 1 : i32
      %c0_i32_47 = arith.constant 0 : i32
      %71 = tpu.memref_slice %arg2[%70, %c0_i32_47] : memref<1000x512xf32, #tpu.memory_space<any>> -> memref<1x512xf32, #tpu.memory_space<any>>
      %c12_i32 = arith.constant 12 : i32
      %c0_i32_48 = arith.constant 0 : i32
      %72 = tpu.memref_slice %arg7[%c12_i32, %c0_i32_48] : memref<64x512xf32, #tpu.memory_space<vmem>> -> memref<1x512xf32, #tpu.memory_space<vmem>>
      %73 = tpu.memref_slice %arg10[%c1_i32_46] : memref<8x!tpu.dma_semaphore, #tpu.memory_space<semaphore_mem>> -> memref<1x!tpu.dma_semaphore, #tpu.memory_space<semaphore_mem>>
      %74 = tpu.memref_squeeze %73 : memref<1x!tpu.dma_semaphore, #tpu.memory_space<semaphore_mem>> -> memref<!tpu.dma_semaphore, #tpu.memory_space<semaphore_mem>>
      tpu.enqueue_dma source(%71 : memref<1x512xf32, #tpu.memory_space<any>>) target(%72 : memref<1x512xf32, #tpu.memory_space<vmem>>) target_semaphore(%74 : memref<!tpu.dma_semaphore, #tpu.memory_space<semaphore_mem>>)
      %c13 = arith.constant 13 : index
      %75 = memref.load %arg1[%c13] : memref<64xi32, #tpu.memory_space<smem>>
      %c1_i32_49 = arith.constant 1 : i32
      %c0_i32_50 = arith.constant 0 : i32
      %76 = tpu.memref_slice %arg2[%75, %c0_i32_50] : memref<1000x512xf32, #tpu.memory_space<any>> -> memref<1x512xf32, #tpu.memory_space<any>>
      %c13_i32 = arith.constant 13 : i32
      %c0_i32_51 = arith.constant 0 : i32
      %77 = tpu.memref_slice %arg7[%c13_i32, %c0_i32_51] : memref<64x512xf32, #tpu.memory_space<vmem>> -> memref<1x512xf32, #tpu.memory_space<vmem>>
      %78 = tpu.memref_slice %arg10[%c1_i32_49] : memref<8x!tpu.dma_semaphore, #tpu.memory_space<semaphore_mem>> -> memref<1x!tpu.dma_semaphore, #tpu.memory_space<semaphore_mem>>
      %79 = tpu.memref_squeeze %78 : memref<1x!tpu.dma_semaphore, #tpu.memory_space<semaphore_mem>> -> memref<!tpu.dma_semaphore, #tpu.memory_space<semaphore_mem>>
      tpu.enqueue_dma source(%76 : memref<1x512xf32, #tpu.memory_space<any>>) target(%77 : memref<1x512xf32, #tpu.memory_space<vmem>>) target_semaphore(%79 : memref<!tpu.dma_semaphore, #tpu.memory_space<semaphore_mem>>)
      %c14 = arith.constant 14 : index
      %80 = memref.load %arg1[%c14] : memref<64xi32, #tpu.memory_space<smem>>
      %c1_i32_52 = arith.constant 1 : i32
      %c0_i32_53 = arith.constant 0 : i32
      %81 = tpu.memref_slice %arg2[%80, %c0_i32_53] : memref<1000x512xf32, #tpu.memory_space<any>> -> memref<1x512xf32, #tpu.memory_space<any>>
      %c14_i32 = arith.constant 14 : i32
      %c0_i32_54 = arith.constant 0 : i32
      %82 = tpu.memref_slice %arg7[%c14_i32, %c0_i32_54] : memref<64x512xf32, #tpu.memory_space<vmem>> -> memref<1x512xf32, #tpu.memory_space<vmem>>
      %83 = tpu.memref_slice %arg10[%c1_i32_52] : memref<8x!tpu.dma_semaphore, #tpu.memory_space<semaphore_mem>> -> memref<1x!tpu.dma_semaphore, #tpu.memory_space<semaphore_mem>>
      %84 = tpu.memref_squeeze %83 : memref<1x!tpu.dma_semaphore, #tpu.memory_space<semaphore_mem>> -> memref<!tpu.dma_semaphore, #tpu.memory_space<semaphore_mem>>
      tpu.enqueue_dma source(%81 : memref<1x512xf32, #tpu.memory_space<any>>) target(%82 : memref<1x512xf32, #tpu.memory_space<vmem>>) target_semaphore(%84 : memref<!tpu.dma_semaphore, #tpu.memory_space<semaphore_mem>>)
      %c15 = arith.constant 15 : index
      %85 = memref.load %arg1[%c15] : memref<64xi32, #tpu.memory_space<smem>>
      %c1_i32_55 = arith.constant 1 : i32
      %c0_i32_56 = arith.constant 0 : i32
      %86 = tpu.memref_slice %arg2[%85, %c0_i32_56] : memref<1000x512xf32, #tpu.memory_space<any>> -> memref<1x512xf32, #tpu.memory_space<any>>
      %c15_i32 = arith.constant 15 : i32
      %c0_i32_57 = arith.constant 0 : i32
      %87 = tpu.memref_slice %arg7[%c15_i32, %c0_i32_57] : memref<64x512xf32, #tpu.memory_space<vmem>> -> memref<1x512xf32, #tpu.memory_space<vmem>>
      %88 = tpu.memref_slice %arg10[%c1_i32_55] : memref<8x!tpu.dma_semaphore, #tpu.memory_space<semaphore_mem>> -> memref<1x!tpu.dma_semaphore, #tpu.memory_space<semaphore_mem>>
      %89 = tpu.memref_squeeze %88 : memref<1x!tpu.dma_semaphore, #tpu.memory_space<semaphore_mem>> -> memref<!tpu.dma_semaphore, #tpu.memory_space<semaphore_mem>>
      tpu.enqueue_dma source(%86 : memref<1x512xf32, #tpu.memory_space<any>>) target(%87 : memref<1x512xf32, #tpu.memory_space<vmem>>) target_semaphore(%89 : memref<!tpu.dma_semaphore, #tpu.memory_space<semaphore_mem>>)
      %c16 = arith.constant 16 : index
      %90 = memref.load %arg1[%c16] : memref<64xi32, #tpu.memory_space<smem>>
      %c2_i32_58 = arith.constant 2 : i32
      %c0_i32_59 = arith.constant 0 : i32
      %91 = tpu.memref_slice %arg2[%90, %c0_i32_59] : memref<1000x512xf32, #tpu.memory_space<any>> -> memref<1x512xf32, #tpu.memory_space<any>>
      %c16_i32 = arith.constant 16 : i32
      %c0_i32_60 = arith.constant 0 : i32
      %92 = tpu.memref_slice %arg7[%c16_i32, %c0_i32_60] : memref<64x512xf32, #tpu.memory_space<vmem>> -> memref<1x512xf32, #tpu.memory_space<vmem>>
      %93 = tpu.memref_slice %arg10[%c2_i32_58] : memref<8x!tpu.dma_semaphore, #tpu.memory_space<semaphore_mem>> -> memref<1x!tpu.dma_semaphore, #tpu.memory_space<semaphore_mem>>
      %94 = tpu.memref_squeeze %93 : memref<1x!tpu.dma_semaphore, #tpu.memory_space<semaphore_mem>> -> memref<!tpu.dma_semaphore, #tpu.memory_space<semaphore_mem>>
      tpu.enqueue_dma source(%91 : memref<1x512xf32, #tpu.memory_space<any>>) target(%92 : memref<1x512xf32, #tpu.memory_space<vmem>>) target_semaphore(%94 : memref<!tpu.dma_semaphore, #tpu.memory_space<semaphore_mem>>)
      %c17 = arith.constant 17 : index
      %95 = memref.load %arg1[%c17] : memref<64xi32, #tpu.memory_space<smem>>
      %c2_i32_61 = arith.constant 2 : i32
      %c0_i32_62 = arith.constant 0 : i32
      %96 = tpu.memref_slice %arg2[%95, %c0_i32_62] : memref<1000x512xf32, #tpu.memory_space<any>> -> memref<1x512xf32, #tpu.memory_space<any>>
      %c17_i32 = arith.constant 17 : i32
      %c0_i32_63 = arith.constant 0 : i32
      %97 = tpu.memref_slice %arg7[%c17_i32, %c0_i32_63] : memref<64x512xf32, #tpu.memory_space<vmem>> -> memref<1x512xf32, #tpu.memory_space<vmem>>
      %98 = tpu.memref_slice %arg10[%c2_i32_61] : memref<8x!tpu.dma_semaphore, #tpu.memory_space<semaphore_mem>> -> memref<1x!tpu.dma_semaphore, #tpu.memory_space<semaphore_mem>>
      %99 = tpu.memref_squeeze %98 : memref<1x!tpu.dma_semaphore, #tpu.memory_space<semaphore_mem>> -> memref<!tpu.dma_semaphore, #tpu.memory_space<semaphore_mem>>
      tpu.enqueue_dma source(%96 : memref<1x512xf32, #tpu.memory_space<any>>) target(%97 : memref<1x512xf32, #tpu.memory_space<vmem>>) target_semaphore(%99 : memref<!tpu.dma_semaphore, #tpu.memory_space<semaphore_mem>>)
      %c18 = arith.constant 18 : index
      %100 = memref.load %arg1[%c18] : memref<64xi32, #tpu.memory_space<smem>>
      %c2_i32_64 = arith.constant 2 : i32
      %c0_i32_65 = arith.constant 0 : i32
      %101 = tpu.memref_slice %arg2[%100, %c0_i32_65] : memref<1000x512xf32, #tpu.memory_space<any>> -> memref<1x512xf32, #tpu.memory_space<any>>
      %c18_i32 = arith.constant 18 : i32
      %c0_i32_66 = arith.constant 0 : i32
      %102 = tpu.memref_slice %arg7[%c18_i32, %c0_i32_66] : memref<64x512xf32, #tpu.memory_space<vmem>> -> memref<1x512xf32, #tpu.memory_space<vmem>>
      %103 = tpu.memref_slice %arg10[%c2_i32_64] : memref<8x!tpu.dma_semaphore, #tpu.memory_space<semaphore_mem>> -> memref<1x!tpu.dma_semaphore, #tpu.memory_space<semaphore_mem>>
      %104 = tpu.memref_squeeze %103 : memref<1x!tpu.dma_semaphore, #tpu.memory_space<semaphore_mem>> -> memref<!tpu.dma_semaphore, #tpu.memory_space<semaphore_mem>>
      tpu.enqueue_dma source(%101 : memref<1x512xf32, #tpu.memory_space<any>>) target(%102 : memref<1x512xf32, #tpu.memory_space<vmem>>) target_semaphore(%104 : memref<!tpu.dma_semaphore, #tpu.memory_space<semaphore_mem>>)
      %c19 = arith.constant 19 : index
      %105 = memref.load %arg1[%c19] : memref<64xi32, #tpu.memory_space<smem>>
      %c2_i32_67 = arith.constant 2 : i32
      %c0_i32_68 = arith.constant 0 : i32
      %106 = tpu.memref_slice %arg2[%105, %c0_i32_68] : memref<1000x512xf32, #tpu.memory_space<any>> -> memref<1x512xf32, #tpu.memory_space<any>>
      %c19_i32 = arith.constant 19 : i32
      %c0_i32_69 = arith.constant 0 : i32
      %107 = tpu.memref_slice %arg7[%c19_i32, %c0_i32_69] : memref<64x512xf32, #tpu.memory_space<vmem>> -> memref<1x512xf32, #tpu.memory_space<vmem>>
      %108 = tpu.memref_slice %arg10[%c2_i32_67] : memref<8x!tpu.dma_semaphore, #tpu.memory_space<semaphore_mem>> -> memref<1x!tpu.dma_semaphore, #tpu.memory_space<semaphore_mem>>
      %109 = tpu.memref_squeeze %108 : memref<1x!tpu.dma_semaphore, #tpu.memory_space<semaphore_mem>> -> memref<!tpu.dma_semaphore, #tpu.memory_space<semaphore_mem>>
      tpu.enqueue_dma source(%106 : memref<1x512xf32, #tpu.memory_space<any>>) target(%107 : memref<1x512xf32, #tpu.memory_space<vmem>>) target_semaphore(%109 : memref<!tpu.dma_semaphore, #tpu.memory_space<semaphore_mem>>)
      %c20 = arith.constant 20 : index
      %110 = memref.load %arg1[%c20] : memref<64xi32, #tpu.memory_space<smem>>
      %c2_i32_70 = arith.constant 2 : i32
      %c0_i32_71 = arith.constant 0 : i32
      %111 = tpu.memref_slice %arg2[%110, %c0_i32_71] : memref<1000x512xf32, #tpu.memory_space<any>> -> memref<1x512xf32, #tpu.memory_space<any>>
      %c20_i32 = arith.constant 20 : i32
      %c0_i32_72 = arith.constant 0 : i32
      %112 = tpu.memref_slice %arg7[%c20_i32, %c0_i32_72] : memref<64x512xf32, #tpu.memory_space<vmem>> -> memref<1x512xf32, #tpu.memory_space<vmem>>
      %113 = tpu.memref_slice %arg10[%c2_i32_70] : memref<8x!tpu.dma_semaphore, #tpu.memory_space<semaphore_mem>> -> memref<1x!tpu.dma_semaphore, #tpu.memory_space<semaphore_mem>>
      %114 = tpu.memref_squeeze %113 : memref<1x!tpu.dma_semaphore, #tpu.memory_space<semaphore_mem>> -> memref<!tpu.dma_semaphore, #tpu.memory_space<semaphore_mem>>
      tpu.enqueue_dma source(%111 : memref<1x512xf32, #tpu.memory_space<any>>) target(%112 : memref<1x512xf32, #tpu.memory_space<vmem>>) target_semaphore(%114 : memref<!tpu.dma_semaphore, #tpu.memory_space<semaphore_mem>>)
      %c21 = arith.constant 21 : index
      %115 = memref.load %arg1[%c21] : memref<64xi32, #tpu.memory_space<smem>>
      %c2_i32_73 = arith.constant 2 : i32
      %c0_i32_74 = arith.constant 0 : i32
      %116 = tpu.memref_slice %arg2[%115, %c0_i32_74] : memref<1000x512xf32, #tpu.memory_space<any>> -> memref<1x512xf32, #tpu.memory_space<any>>
      %c21_i32 = arith.constant 21 : i32
      %c0_i32_75 = arith.constant 0 : i32
      %117 = tpu.memref_slice %arg7[%c21_i32, %c0_i32_75] : memref<64x512xf32, #tpu.memory_space<vmem>> -> memref<1x512xf32, #tpu.memory_space<vmem>>
      %118 = tpu.memref_slice %arg10[%c2_i32_73] : memref<8x!tpu.dma_semaphore, #tpu.memory_space<semaphore_mem>> -> memref<1x!tpu.dma_semaphore, #tpu.memory_space<semaphore_mem>>
      %119 = tpu.memref_squeeze %118 : memref<1x!tpu.dma_semaphore, #tpu.memory_space<semaphore_mem>> -> memref<!tpu.dma_semaphore, #tpu.memory_space<semaphore_mem>>
      tpu.enqueue_dma source(%116 : memref<1x512xf32, #tpu.memory_space<any>>) target(%117 : memref<1x512xf32, #tpu.memory_space<vmem>>) target_semaphore(%119 : memref<!tpu.dma_semaphore, #tpu.memory_space<semaphore_mem>>)
      %c22 = arith.constant 22 : index
      %120 = memref.load %arg1[%c22] : memref<64xi32, #tpu.memory_space<smem>>
      %c2_i32_76 = arith.constant 2 : i32
      %c0_i32_77 = arith.constant 0 : i32
      %121 = tpu.memref_slice %arg2[%120, %c0_i32_77] : memref<1000x512xf32, #tpu.memory_space<any>> -> memref<1x512xf32, #tpu.memory_space<any>>
      %c22_i32 = arith.constant 22 : i32
      %c0_i32_78 = arith.constant 0 : i32
      %122 = tpu.memref_slice %arg7[%c22_i32, %c0_i32_78] : memref<64x512xf32, #tpu.memory_space<vmem>> -> memref<1x512xf32, #tpu.memory_space<vmem>>
      %123 = tpu.memref_slice %arg10[%c2_i32_76] : memref<8x!tpu.dma_semaphore, #tpu.memory_space<semaphore_mem>> -> memref<1x!tpu.dma_semaphore, #tpu.memory_space<semaphore_mem>>
      %124 = tpu.memref_squeeze %123 : memref<1x!tpu.dma_semaphore, #tpu.memory_space<semaphore_mem>> -> memref<!tpu.dma_semaphore, #tpu.memory_space<semaphore_mem>>
      tpu.enqueue_dma source(%121 : memref<1x512xf32, #tpu.memory_space<any>>) target(%122 : memref<1x512xf32, #tpu.memory_space<vmem>>) target_semaphore(%124 : memref<!tpu.dma_semaphore, #tpu.memory_space<semaphore_mem>>)
      %c23 = arith.constant 23 : index
      %125 = memref.load %arg1[%c23] : memref<64xi32, #tpu.memory_space<smem>>
      %c2_i32_79 = arith.constant 2 : i32
      %c0_i32_80 = arith.constant 0 : i32
      %126 = tpu.memref_slice %arg2[%125, %c0_i32_80] : memref<1000x512xf32, #tpu.memory_space<any>> -> memref<1x512xf32, #tpu.memory_space<any>>
      %c23_i32 = arith.constant 23 : i32
      %c0_i32_81 = arith.constant 0 : i32
      %127 = tpu.memref_slice %arg7[%c23_i32, %c0_i32_81] : memref<64x512xf32, #tpu.memory_space<vmem>> -> memref<1x512xf32, #tpu.memory_space<vmem>>
      %128 = tpu.memref_slice %arg10[%c2_i32_79] : memref<8x!tpu.dma_semaphore, #tpu.memory_space<semaphore_mem>> -> memref<1x!tpu.dma_semaphore, #tpu.memory_space<semaphore_mem>>
      %129 = tpu.memref_squeeze %128 : memref<1x!tpu.dma_semaphore, #tpu.memory_space<semaphore_mem>> -> memref<!tpu.dma_semaphore, #tpu.memory_space<semaphore_mem>>
      tpu.enqueue_dma source(%126 : memref<1x512xf32, #tpu.memory_space<any>>) target(%127 : memref<1x512xf32, #tpu.memory_space<vmem>>) target_semaphore(%129 : memref<!tpu.dma_semaphore, #tpu.memory_space<semaphore_mem>>)
      %c24 = arith.constant 24 : index
      %130 = memref.load %arg1[%c24] : memref<64xi32, #tpu.memory_space<smem>>
      %c3_i32_82 = arith.constant 3 : i32
      %c0_i32_83 = arith.constant 0 : i32
      %131 = tpu.memref_slice %arg2[%130, %c0_i32_83] : memref<1000x512xf32, #tpu.memory_space<any>> -> memref<1x512xf32, #tpu.memory_space<any>>
      %c24_i32 = arith.constant 24 : i32
      %c0_i32_84 = arith.constant 0 : i32
      %132 = tpu.memref_slice %arg7[%c24_i32, %c0_i32_84] : memref<64x512xf32, #tpu.memory_space<vmem>> -> memref<1x512xf32, #tpu.memory_space<vmem>>
      %133 = tpu.memref_slice %arg10[%c3_i32_82] : memref<8x!tpu.dma_semaphore, #tpu.memory_space<semaphore_mem>> -> memref<1x!tpu.dma_semaphore, #tpu.memory_space<semaphore_mem>>
      %134 = tpu.memref_squeeze %133 : memref<1x!tpu.dma_semaphore, #tpu.memory_space<semaphore_mem>> -> memref<!tpu.dma_semaphore, #tpu.memory_space<semaphore_mem>>
      tpu.enqueue_dma source(%131 : memref<1x512xf32, #tpu.memory_space<any>>) target(%132 : memref<1x512xf32, #tpu.memory_space<vmem>>) target_semaphore(%134 : memref<!tpu.dma_semaphore, #tpu.memory_space<semaphore_mem>>)
      %c25 = arith.constant 25 : index
      %135 = memref.load %arg1[%c25] : memref<64xi32, #tpu.memory_space<smem>>
      %c3_i32_85 = arith.constant 3 : i32
      %c0_i32_86 = arith.constant 0 : i32
      %136 = tpu.memref_slice %arg2[%135, %c0_i32_86] : memref<1000x512xf32, #tpu.memory_space<any>> -> memref<1x512xf32, #tpu.memory_space<any>>
      %c25_i32 = arith.constant 25 : i32
      %c0_i32_87 = arith.constant 0 : i32
      %137 = tpu.memref_slice %arg7[%c25_i32, %c0_i32_87] : memref<64x512xf32, #tpu.memory_space<vmem>> -> memref<1x512xf32, #tpu.memory_space<vmem>>
      %138 = tpu.memref_slice %arg10[%c3_i32_85] : memref<8x!tpu.dma_semaphore, #tpu.memory_space<semaphore_mem>> -> memref<1x!tpu.dma_semaphore, #tpu.memory_space<semaphore_mem>>
      %139 = tpu.memref_squeeze %138 : memref<1x!tpu.dma_semaphore, #tpu.memory_space<semaphore_mem>> -> memref<!tpu.dma_semaphore, #tpu.memory_space<semaphore_mem>>
      tpu.enqueue_dma source(%136 : memref<1x512xf32, #tpu.memory_space<any>>) target(%137 : memref<1x512xf32, #tpu.memory_space<vmem>>) target_semaphore(%139 : memref<!tpu.dma_semaphore, #tpu.memory_space<semaphore_mem>>)
      %c26 = arith.constant 26 : index
      %140 = memref.load %arg1[%c26] : memref<64xi32, #tpu.memory_space<smem>>
      %c3_i32_88 = arith.constant 3 : i32
      %c0_i32_89 = arith.constant 0 : i32
      %141 = tpu.memref_slice %arg2[%140, %c0_i32_89] : memref<1000x512xf32, #tpu.memory_space<any>> -> memref<1x512xf32, #tpu.memory_space<any>>
      %c26_i32 = arith.constant 26 : i32
      %c0_i32_90 = arith.constant 0 : i32
      %142 = tpu.memref_slice %arg7[%c26_i32, %c0_i32_90] : memref<64x512xf32, #tpu.memory_space<vmem>> -> memref<1x512xf32, #tpu.memory_space<vmem>>
      %143 = tpu.memref_slice %arg10[%c3_i32_88] : memref<8x!tpu.dma_semaphore, #tpu.memory_space<semaphore_mem>> -> memref<1x!tpu.dma_semaphore, #tpu.memory_space<semaphore_mem>>
      %144 = tpu.memref_squeeze %143 : memref<1x!tpu.dma_semaphore, #tpu.memory_space<semaphore_mem>> -> memref<!tpu.dma_semaphore, #tpu.memory_space<semaphore_mem>>
      tpu.enqueue_dma source(%141 : memref<1x512xf32, #tpu.memory_space<any>>) target(%142 : memref<1x512xf32, #tpu.memory_space<vmem>>) target_semaphore(%144 : memref<!tpu.dma_semaphore, #tpu.memory_space<semaphore_mem>>)
      %c27 = arith.constant 27 : index
      %145 = memref.load %arg1[%c27] : memref<64xi32, #tpu.memory_space<smem>>
      %c3_i32_91 = arith.constant 3 : i32
      %c0_i32_92 = arith.constant 0 : i32
      %146 = tpu.memref_slice %arg2[%145, %c0_i32_92] : memref<1000x512xf32, #tpu.memory_space<any>> -> memref<1x512xf32, #tpu.memory_space<any>>
      %c27_i32 = arith.constant 27 : i32
      %c0_i32_93 = arith.constant 0 : i32
      %147 = tpu.memref_slice %arg7[%c27_i32, %c0_i32_93] : memref<64x512xf32, #tpu.memory_space<vmem>> -> memref<1x512xf32, #tpu.memory_space<vmem>>
      %148 = tpu.memref_slice %arg10[%c3_i32_91] : memref<8x!tpu.dma_semaphore, #tpu.memory_space<semaphore_mem>> -> memref<1x!tpu.dma_semaphore, #tpu.memory_space<semaphore_mem>>
      %149 = tpu.memref_squeeze %148 : memref<1x!tpu.dma_semaphore, #tpu.memory_space<semaphore_mem>> -> memref<!tpu.dma_semaphore, #tpu.memory_space<semaphore_mem>>
      tpu.enqueue_dma source(%146 : memref<1x512xf32, #tpu.memory_space<any>>) target(%147 : memref<1x512xf32, #tpu.memory_space<vmem>>) target_semaphore(%149 : memref<!tpu.dma_semaphore, #tpu.memory_space<semaphore_mem>>)
      %c28 = arith.constant 28 : index
      %150 = memref.load %arg1[%c28] : memref<64xi32, #tpu.memory_space<smem>>
      %c3_i32_94 = arith.constant 3 : i32
      %c0_i32_95 = arith.constant 0 : i32
      %151 = tpu.memref_slice %arg2[%150, %c0_i32_95] : memref<1000x512xf32, #tpu.memory_space<any>> -> memref<1x512xf32, #tpu.memory_space<any>>
      %c28_i32 = arith.constant 28 : i32
      %c0_i32_96 = arith.constant 0 : i32
      %152 = tpu.memref_slice %arg7[%c28_i32, %c0_i32_96] : memref<64x512xf32, #tpu.memory_space<vmem>> -> memref<1x512xf32, #tpu.memory_space<vmem>>
      %153 = tpu.memref_slice %arg10[%c3_i32_94] : memref<8x!tpu.dma_semaphore, #tpu.memory_space<semaphore_mem>> -> memref<1x!tpu.dma_semaphore, #tpu.memory_space<semaphore_mem>>
      %154 = tpu.memref_squeeze %153 : memref<1x!tpu.dma_semaphore, #tpu.memory_space<semaphore_mem>> -> memref<!tpu.dma_semaphore, #tpu.memory_space<semaphore_mem>>
      tpu.enqueue_dma source(%151 : memref<1x512xf32, #tpu.memory_space<any>>) target(%152 : memref<1x512xf32, #tpu.memory_space<vmem>>) target_semaphore(%154 : memref<!tpu.dma_semaphore, #tpu.memory_space<semaphore_mem>>)
      %c29 = arith.constant 29 : index
      %155 = memref.load %arg1[%c29] : memref<64xi32, #tpu.memory_space<smem>>
      %c3_i32_97 = arith.constant 3 : i32
      %c0_i32_98 = arith.constant 0 : i32
      %156 = tpu.memref_slice %arg2[%155, %c0_i32_98] : memref<1000x512xf32, #tpu.memory_space<any>> -> memref<1x512xf32, #tpu.memory_space<any>>
      %c29_i32 = arith.constant 29 : i32
      %c0_i32_99 = arith.constant 0 : i32
      %157 = tpu.memref_slice %arg7[%c29_i32, %c0_i32_99] : memref<64x512xf32, #tpu.memory_space<vmem>> -> memref<1x512xf32, #tpu.memory_space<vmem>>
      %158 = tpu.memref_slice %arg10[%c3_i32_97] : memref<8x!tpu.dma_semaphore, #tpu.memory_space<semaphore_mem>> -> memref<1x!tpu.dma_semaphore, #tpu.memory_space<semaphore_mem>>
      %159 = tpu.memref_squeeze %158 : memref<1x!tpu.dma_semaphore, #tpu.memory_space<semaphore_mem>> -> memref<!tpu.dma_semaphore, #tpu.memory_space<semaphore_mem>>
      tpu.enqueue_dma source(%156 : memref<1x512xf32, #tpu.memory_space<any>>) target(%157 : memref<1x512xf32, #tpu.memory_space<vmem>>) target_semaphore(%159 : memref<!tpu.dma_semaphore, #tpu.memory_space<semaphore_mem>>)
      %c30 = arith.constant 30 : index
      %160 = memref.load %arg1[%c30] : memref<64xi32, #tpu.memory_space<smem>>
      %c3_i32_100 = arith.constant 3 : i32
      %c0_i32_101 = arith.constant 0 : i32
      %161 = tpu.memref_slice %arg2[%160, %c0_i32_101] : memref<1000x512xf32, #tpu.memory_space<any>> -> memref<1x512xf32, #tpu.memory_space<any>>
      %c30_i32 = arith.constant 30 : i32
      %c0_i32_102 = arith.constant 0 : i32
      %162 = tpu.memref_slice %arg7[%c30_i32, %c0_i32_102] : memref<64x512xf32, #tpu.memory_space<vmem>> -> memref<1x512xf32, #tpu.memory_space<vmem>>
      %163 = tpu.memref_slice %arg10[%c3_i32_100] : memref<8x!tpu.dma_semaphore, #tpu.memory_space<semaphore_mem>> -> memref<1x!tpu.dma_semaphore, #tpu.memory_space<semaphore_mem>>
      %164 = tpu.memref_squeeze %163 : memref<1x!tpu.dma_semaphore, #tpu.memory_space<semaphore_mem>> -> memref<!tpu.dma_semaphore, #tpu.memory_space<semaphore_mem>>
      tpu.enqueue_dma source(%161 : memref<1x512xf32, #tpu.memory_space<any>>) target(%162 : memref<1x512xf32, #tpu.memory_space<vmem>>) target_semaphore(%164 : memref<!tpu.dma_semaphore, #tpu.memory_space<semaphore_mem>>)
      %c31 = arith.constant 31 : index
      %165 = memref.load %arg1[%c31] : memref<64xi32, #tpu.memory_space<smem>>
      %c3_i32_103 = arith.constant 3 : i32
      %c0_i32_104 = arith.constant 0 : i32
      %166 = tpu.memref_slice %arg2[%165, %c0_i32_104] : memref<1000x512xf32, #tpu.memory_space<any>> -> memref<1x512xf32, #tpu.memory_space<any>>
      %c31_i32 = arith.constant 31 : i32
      %c0_i32_105 = arith.constant 0 : i32
      %167 = tpu.memref_slice %arg7[%c31_i32, %c0_i32_105] : memref<64x512xf32, #tpu.memory_space<vmem>> -> memref<1x512xf32, #tpu.memory_space<vmem>>
      %168 = tpu.memref_slice %arg10[%c3_i32_103] : memref<8x!tpu.dma_semaphore, #tpu.memory_space<semaphore_mem>> -> memref<1x!tpu.dma_semaphore, #tpu.memory_space<semaphore_mem>>
      %169 = tpu.memref_squeeze %168 : memref<1x!tpu.dma_semaphore, #tpu.memory_space<semaphore_mem>> -> memref<!tpu.dma_semaphore, #tpu.memory_space<semaphore_mem>>
      tpu.enqueue_dma source(%166 : memref<1x512xf32, #tpu.memory_space<any>>) target(%167 : memref<1x512xf32, #tpu.memory_space<vmem>>) target_semaphore(%169 : memref<!tpu.dma_semaphore, #tpu.memory_space<semaphore_mem>>)
      %c32 = arith.constant 32 : index
      %170 = memref.load %arg1[%c32] : memref<64xi32, #tpu.memory_space<smem>>
      %c4_i32_106 = arith.constant 4 : i32
      %c0_i32_107 = arith.constant 0 : i32
      %171 = tpu.memref_slice %arg2[%170, %c0_i32_107] : memref<1000x512xf32, #tpu.memory_space<any>> -> memref<1x512xf32, #tpu.memory_space<any>>
      %c32_i32 = arith.constant 32 : i32
      %c0_i32_108 = arith.constant 0 : i32
      %172 = tpu.memref_slice %arg7[%c32_i32, %c0_i32_108] : memref<64x512xf32, #tpu.memory_space<vmem>> -> memref<1x512xf32, #tpu.memory_space<vmem>>
      %173 = tpu.memref_slice %arg10[%c4_i32_106] : memref<8x!tpu.dma_semaphore, #tpu.memory_space<semaphore_mem>> -> memref<1x!tpu.dma_semaphore, #tpu.memory_space<semaphore_mem>>
      %174 = tpu.memref_squeeze %173 : memref<1x!tpu.dma_semaphore, #tpu.memory_space<semaphore_mem>> -> memref<!tpu.dma_semaphore, #tpu.memory_space<semaphore_mem>>
      tpu.enqueue_dma source(%171 : memref<1x512xf32, #tpu.memory_space<any>>) target(%172 : memref<1x512xf32, #tpu.memory_space<vmem>>) target_semaphore(%174 : memref<!tpu.dma_semaphore, #tpu.memory_space<semaphore_mem>>)
      %c33 = arith.constant 33 : index
      %175 = memref.load %arg1[%c33] : memref<64xi32, #tpu.memory_space<smem>>
      %c4_i32_109 = arith.constant 4 : i32
      %c0_i32_110 = arith.constant 0 : i32
      %176 = tpu.memref_slice %arg2[%175, %c0_i32_110] : memref<1000x512xf32, #tpu.memory_space<any>> -> memref<1x512xf32, #tpu.memory_space<any>>
      %c33_i32 = arith.constant 33 : i32
      %c0_i32_111 = arith.constant 0 : i32
      %177 = tpu.memref_slice %arg7[%c33_i32, %c0_i32_111] : memref<64x512xf32, #tpu.memory_space<vmem>> -> memref<1x512xf32, #tpu.memory_space<vmem>>
      %178 = tpu.memref_slice %arg10[%c4_i32_109] : memref<8x!tpu.dma_semaphore, #tpu.memory_space<semaphore_mem>> -> memref<1x!tpu.dma_semaphore, #tpu.memory_space<semaphore_mem>>
      %179 = tpu.memref_squeeze %178 : memref<1x!tpu.dma_semaphore, #tpu.memory_space<semaphore_mem>> -> memref<!tpu.dma_semaphore, #tpu.memory_space<semaphore_mem>>
      tpu.enqueue_dma source(%176 : memref<1x512xf32, #tpu.memory_space<any>>) target(%177 : memref<1x512xf32, #tpu.memory_space<vmem>>) target_semaphore(%179 : memref<!tpu.dma_semaphore, #tpu.memory_space<semaphore_mem>>)
      %c34 = arith.constant 34 : index
      %180 = memref.load %arg1[%c34] : memref<64xi32, #tpu.memory_space<smem>>
      %c4_i32_112 = arith.constant 4 : i32
      %c0_i32_113 = arith.constant 0 : i32
      %181 = tpu.memref_slice %arg2[%180, %c0_i32_113] : memref<1000x512xf32, #tpu.memory_space<any>> -> memref<1x512xf32, #tpu.memory_space<any>>
      %c34_i32 = arith.constant 34 : i32
      %c0_i32_114 = arith.constant 0 : i32
      %182 = tpu.memref_slice %arg7[%c34_i32, %c0_i32_114] : memref<64x512xf32, #tpu.memory_space<vmem>> -> memref<1x512xf32, #tpu.memory_space<vmem>>
      %183 = tpu.memref_slice %arg10[%c4_i32_112] : memref<8x!tpu.dma_semaphore, #tpu.memory_space<semaphore_mem>> -> memref<1x!tpu.dma_semaphore, #tpu.memory_space<semaphore_mem>>
      %184 = tpu.memref_squeeze %183 : memref<1x!tpu.dma_semaphore, #tpu.memory_space<semaphore_mem>> -> memref<!tpu.dma_semaphore, #tpu.memory_space<semaphore_mem>>
      tpu.enqueue_dma source(%181 : memref<1x512xf32, #tpu.memory_space<any>>) target(%182 : memref<1x512xf32, #tpu.memory_space<vmem>>) target_semaphore(%184 : memref<!tpu.dma_semaphore, #tpu.memory_space<semaphore_mem>>)
      %c35 = arith.constant 35 : index
      %185 = memref.load %arg1[%c35] : memref<64xi32, #tpu.memory_space<smem>>
      %c4_i32_115 = arith.constant 4 : i32
      %c0_i32_116 = arith.constant 0 : i32
      %186 = tpu.memref_slice %arg2[%185, %c0_i32_116] : memref<1000x512xf32, #tpu.memory_space<any>> -> memref<1x512xf32, #tpu.memory_space<any>>
      %c35_i32 = arith.constant 35 : i32
      %c0_i32_117 = arith.constant 0 : i32
      %187 = tpu.memref_slice %arg7[%c35_i32, %c0_i32_117] : memref<64x512xf32, #tpu.memory_space<vmem>> -> memref<1x512xf32, #tpu.memory_space<vmem>>
      %188 = tpu.memref_slice %arg10[%c4_i32_115] : memref<8x!tpu.dma_semaphore, #tpu.memory_space<semaphore_mem>> -> memref<1x!tpu.dma_semaphore, #tpu.memory_space<semaphore_mem>>
      %189 = tpu.memref_squeeze %188 : memref<1x!tpu.dma_semaphore, #tpu.memory_space<semaphore_mem>> -> memref<!tpu.dma_semaphore, #tpu.memory_space<semaphore_mem>>
      tpu.enqueue_dma source(%186 : memref<1x512xf32, #tpu.memory_space<any>>) target(%187 : memref<1x512xf32, #tpu.memory_space<vmem>>) target_semaphore(%189 : memref<!tpu.dma_semaphore, #tpu.memory_space<semaphore_mem>>)
      %c36 = arith.constant 36 : index
      %190 = memref.load %arg1[%c36] : memref<64xi32, #tpu.memory_space<smem>>
      %c4_i32_118 = arith.constant 4 : i32
      %c0_i32_119 = arith.constant 0 : i32
      %191 = tpu.memref_slice %arg2[%190, %c0_i32_119] : memref<1000x512xf32, #tpu.memory_space<any>> -> memref<1x512xf32, #tpu.memory_space<any>>
      %c36_i32 = arith.constant 36 : i32
      %c0_i32_120 = arith.constant 0 : i32
      %192 = tpu.memref_slice %arg7[%c36_i32, %c0_i32_120] : memref<64x512xf32, #tpu.memory_space<vmem>> -> memref<1x512xf32, #tpu.memory_space<vmem>>
      %193 = tpu.memref_slice %arg10[%c4_i32_118] : memref<8x!tpu.dma_semaphore, #tpu.memory_space<semaphore_mem>> -> memref<1x!tpu.dma_semaphore, #tpu.memory_space<semaphore_mem>>
      %194 = tpu.memref_squeeze %193 : memref<1x!tpu.dma_semaphore, #tpu.memory_space<semaphore_mem>> -> memref<!tpu.dma_semaphore, #tpu.memory_space<semaphore_mem>>
      tpu.enqueue_dma source(%191 : memref<1x512xf32, #tpu.memory_space<any>>) target(%192 : memref<1x512xf32, #tpu.memory_space<vmem>>) target_semaphore(%194 : memref<!tpu.dma_semaphore, #tpu.memory_space<semaphore_mem>>)
      %c37 = arith.constant 37 : index
      %195 = memref.load %arg1[%c37] : memref<64xi32, #tpu.memory_space<smem>>
      %c4_i32_121 = arith.constant 4 : i32
      %c0_i32_122 = arith.constant 0 : i32
      %196 = tpu.memref_slice %arg2[%195, %c0_i32_122] : memref<1000x512xf32, #tpu.memory_space<any>> -> memref<1x512xf32, #tpu.memory_space<any>>
      %c37_i32 = arith.constant 37 : i32
      %c0_i32_123 = arith.constant 0 : i32
      %197 = tpu.memref_slice %arg7[%c37_i32, %c0_i32_123] : memref<64x512xf32, #tpu.memory_space<vmem>> -> memref<1x512xf32, #tpu.memory_space<vmem>>
      %198 = tpu.memref_slice %arg10[%c4_i32_121] : memref<8x!tpu.dma_semaphore, #tpu.memory_space<semaphore_mem>> -> memref<1x!tpu.dma_semaphore, #tpu.memory_space<semaphore_mem>>
      %199 = tpu.memref_squeeze %198 : memref<1x!tpu.dma_semaphore, #tpu.memory_space<semaphore_mem>> -> memref<!tpu.dma_semaphore, #tpu.memory_space<semaphore_mem>>
      tpu.enqueue_dma source(%196 : memref<1x512xf32, #tpu.memory_space<any>>) target(%197 : memref<1x512xf32, #tpu.memory_space<vmem>>) target_semaphore(%199 : memref<!tpu.dma_semaphore, #tpu.memory_space<semaphore_mem>>)
      %c38 = arith.constant 38 : index
      %200 = memref.load %arg1[%c38] : memref<64xi32, #tpu.memory_space<smem>>
      %c4_i32_124 = arith.constant 4 : i32
      %c0_i32_125 = arith.constant 0 : i32
      %201 = tpu.memref_slice %arg2[%200, %c0_i32_125] : memref<1000x512xf32, #tpu.memory_space<any>> -> memref<1x512xf32, #tpu.memory_space<any>>
      %c38_i32 = arith.constant 38 : i32
      %c0_i32_126 = arith.constant 0 : i32
      %202 = tpu.memref_slice %arg7[%c38_i32, %c0_i32_126] : memref<64x512xf32, #tpu.memory_space<vmem>> -> memref<1x512xf32, #tpu.memory_space<vmem>>
      %203 = tpu.memref_slice %arg10[%c4_i32_124] : memref<8x!tpu.dma_semaphore, #tpu.memory_space<semaphore_mem>> -> memref<1x!tpu.dma_semaphore, #tpu.memory_space<semaphore_mem>>
      %204 = tpu.memref_squeeze %203 : memref<1x!tpu.dma_semaphore, #tpu.memory_space<semaphore_mem>> -> memref<!tpu.dma_semaphore, #tpu.memory_space<semaphore_mem>>
      tpu.enqueue_dma source(%201 : memref<1x512xf32, #tpu.memory_space<any>>) target(%202 : memref<1x512xf32, #tpu.memory_space<vmem>>) target_semaphore(%204 : memref<!tpu.dma_semaphore, #tpu.memory_space<semaphore_mem>>)
      %c39 = arith.constant 39 : index
      %205 = memref.load %arg1[%c39] : memref<64xi32, #tpu.memory_space<smem>>
      %c4_i32_127 = arith.constant 4 : i32
      %c0_i32_128 = arith.constant 0 : i32
      %206 = tpu.memref_slice %arg2[%205, %c0_i32_128] : memref<1000x512xf32, #tpu.memory_space<any>> -> memref<1x512xf32, #tpu.memory_space<any>>
      %c39_i32 = arith.constant 39 : i32
      %c0_i32_129 = arith.constant 0 : i32
      %207 = tpu.memref_slice %arg7[%c39_i32, %c0_i32_129] : memref<64x512xf32, #tpu.memory_space<vmem>> -> memref<1x512xf32, #tpu.memory_space<vmem>>
      %208 = tpu.memref_slice %arg10[%c4_i32_127] : memref<8x!tpu.dma_semaphore, #tpu.memory_space<semaphore_mem>> -> memref<1x!tpu.dma_semaphore, #tpu.memory_space<semaphore_mem>>
      %209 = tpu.memref_squeeze %208 : memref<1x!tpu.dma_semaphore, #tpu.memory_space<semaphore_mem>> -> memref<!tpu.dma_semaphore, #tpu.memory_space<semaphore_mem>>
      tpu.enqueue_dma source(%206 : memref<1x512xf32, #tpu.memory_space<any>>) target(%207 : memref<1x512xf32, #tpu.memory_space<vmem>>) target_semaphore(%209 : memref<!tpu.dma_semaphore, #tpu.memory_space<semaphore_mem>>)
      %c40 = arith.constant 40 : index
      %210 = memref.load %arg1[%c40] : memref<64xi32, #tpu.memory_space<smem>>
      %c5_i32_130 = arith.constant 5 : i32
      %c0_i32_131 = arith.constant 0 : i32
      %211 = tpu.memref_slice %arg2[%210, %c0_i32_131] : memref<1000x512xf32, #tpu.memory_space<any>> -> memref<1x512xf32, #tpu.memory_space<any>>
      %c40_i32 = arith.constant 40 : i32
      %c0_i32_132 = arith.constant 0 : i32
      %212 = tpu.memref_slice %arg7[%c40_i32, %c0_i32_132] : memref<64x512xf32, #tpu.memory_space<vmem>> -> memref<1x512xf32, #tpu.memory_space<vmem>>
      %213 = tpu.memref_slice %arg10[%c5_i32_130] : memref<8x!tpu.dma_semaphore, #tpu.memory_space<semaphore_mem>> -> memref<1x!tpu.dma_semaphore, #tpu.memory_space<semaphore_mem>>
      %214 = tpu.memref_squeeze %213 : memref<1x!tpu.dma_semaphore, #tpu.memory_space<semaphore_mem>> -> memref<!tpu.dma_semaphore, #tpu.memory_space<semaphore_mem>>
      tpu.enqueue_dma source(%211 : memref<1x512xf32, #tpu.memory_space<any>>) target(%212 : memref<1x512xf32, #tpu.memory_space<vmem>>) target_semaphore(%214 : memref<!tpu.dma_semaphore, #tpu.memory_space<semaphore_mem>>)
      %c41 = arith.constant 41 : index
      %215 = memref.load %arg1[%c41] : memref<64xi32, #tpu.memory_space<smem>>
      %c5_i32_133 = arith.constant 5 : i32
      %c0_i32_134 = arith.constant 0 : i32
      %216 = tpu.memref_slice %arg2[%215, %c0_i32_134] : memref<1000x512xf32, #tpu.memory_space<any>> -> memref<1x512xf32, #tpu.memory_space<any>>
      %c41_i32 = arith.constant 41 : i32
      %c0_i32_135 = arith.constant 0 : i32
      %217 = tpu.memref_slice %arg7[%c41_i32, %c0_i32_135] : memref<64x512xf32, #tpu.memory_space<vmem>> -> memref<1x512xf32, #tpu.memory_space<vmem>>
      %218 = tpu.memref_slice %arg10[%c5_i32_133] : memref<8x!tpu.dma_semaphore, #tpu.memory_space<semaphore_mem>> -> memref<1x!tpu.dma_semaphore, #tpu.memory_space<semaphore_mem>>
      %219 = tpu.memref_squeeze %218 : memref<1x!tpu.dma_semaphore, #tpu.memory_space<semaphore_mem>> -> memref<!tpu.dma_semaphore, #tpu.memory_space<semaphore_mem>>
      tpu.enqueue_dma source(%216 : memref<1x512xf32, #tpu.memory_space<any>>) target(%217 : memref<1x512xf32, #tpu.memory_space<vmem>>) target_semaphore(%219 : memref<!tpu.dma_semaphore, #tpu.memory_space<semaphore_mem>>)
      %c42 = arith.constant 42 : index
      %220 = memref.load %arg1[%c42] : memref<64xi32, #tpu.memory_space<smem>>
      %c5_i32_136 = arith.constant 5 : i32
      %c0_i32_137 = arith.constant 0 : i32
      %221 = tpu.memref_slice %arg2[%220, %c0_i32_137] : memref<1000x512xf32, #tpu.memory_space<any>> -> memref<1x512xf32, #tpu.memory_space<any>>
      %c42_i32 = arith.constant 42 : i32
      %c0_i32_138 = arith.constant 0 : i32
      %222 = tpu.memref_slice %arg7[%c42_i32, %c0_i32_138] : memref<64x512xf32, #tpu.memory_space<vmem>> -> memref<1x512xf32, #tpu.memory_space<vmem>>
      %223 = tpu.memref_slice %arg10[%c5_i32_136] : memref<8x!tpu.dma_semaphore, #tpu.memory_space<semaphore_mem>> -> memref<1x!tpu.dma_semaphore, #tpu.memory_space<semaphore_mem>>
      %224 = tpu.memref_squeeze %223 : memref<1x!tpu.dma_semaphore, #tpu.memory_space<semaphore_mem>> -> memref<!tpu.dma_semaphore, #tpu.memory_space<semaphore_mem>>
      tpu.enqueue_dma source(%221 : memref<1x512xf32, #tpu.memory_space<any>>) target(%222 : memref<1x512xf32, #tpu.memory_space<vmem>>) target_semaphore(%224 : memref<!tpu.dma_semaphore, #tpu.memory_space<semaphore_mem>>)
      %c43 = arith.constant 43 : index
      %225 = memref.load %arg1[%c43] : memref<64xi32, #tpu.memory_space<smem>>
      %c5_i32_139 = arith.constant 5 : i32
      %c0_i32_140 = arith.constant 0 : i32
      %226 = tpu.memref_slice %arg2[%225, %c0_i32_140] : memref<1000x512xf32, #tpu.memory_space<any>> -> memref<1x512xf32, #tpu.memory_space<any>>
      %c43_i32 = arith.constant 43 : i32
      %c0_i32_141 = arith.constant 0 : i32
      %227 = tpu.memref_slice %arg7[%c43_i32, %c0_i32_141] : memref<64x512xf32, #tpu.memory_space<vmem>> -> memref<1x512xf32, #tpu.memory_space<vmem>>
      %228 = tpu.memref_slice %arg10[%c5_i32_139] : memref<8x!tpu.dma_semaphore, #tpu.memory_space<semaphore_mem>> -> memref<1x!tpu.dma_semaphore, #tpu.memory_space<semaphore_mem>>
      %229 = tpu.memref_squeeze %228 : memref<1x!tpu.dma_semaphore, #tpu.memory_space<semaphore_mem>> -> memref<!tpu.dma_semaphore, #tpu.memory_space<semaphore_mem>>
      tpu.enqueue_dma source(%226 : memref<1x512xf32, #tpu.memory_space<any>>) target(%227 : memref<1x512xf32, #tpu.memory_space<vmem>>) target_semaphore(%229 : memref<!tpu.dma_semaphore, #tpu.memory_space<semaphore_mem>>)
      %c44 = arith.constant 44 : index
      %230 = memref.load %arg1[%c44] : memref<64xi32, #tpu.memory_space<smem>>
      %c5_i32_142 = arith.constant 5 : i32
      %c0_i32_143 = arith.constant 0 : i32
      %231 = tpu.memref_slice %arg2[%230, %c0_i32_143] : memref<1000x512xf32, #tpu.memory_space<any>> -> memref<1x512xf32, #tpu.memory_space<any>>
      %c44_i32 = arith.constant 44 : i32
      %c0_i32_144 = arith.constant 0 : i32
      %232 = tpu.memref_slice %arg7[%c44_i32, %c0_i32_144] : memref<64x512xf32, #tpu.memory_space<vmem>> -> memref<1x512xf32, #tpu.memory_space<vmem>>
      %233 = tpu.memref_slice %arg10[%c5_i32_142] : memref<8x!tpu.dma_semaphore, #tpu.memory_space<semaphore_mem>> -> memref<1x!tpu.dma_semaphore, #tpu.memory_space<semaphore_mem>>
      %234 = tpu.memref_squeeze %233 : memref<1x!tpu.dma_semaphore, #tpu.memory_space<semaphore_mem>> -> memref<!tpu.dma_semaphore, #tpu.memory_space<semaphore_mem>>
      tpu.enqueue_dma source(%231 : memref<1x512xf32, #tpu.memory_space<any>>) target(%232 : memref<1x512xf32, #tpu.memory_space<vmem>>) target_semaphore(%234 : memref<!tpu.dma_semaphore, #tpu.memory_space<semaphore_mem>>)
      %c45 = arith.constant 45 : index
      %235 = memref.load %arg1[%c45] : memref<64xi32, #tpu.memory_space<smem>>
      %c5_i32_145 = arith.constant 5 : i32
      %c0_i32_146 = arith.constant 0 : i32
      %236 = tpu.memref_slice %arg2[%235, %c0_i32_146] : memref<1000x512xf32, #tpu.memory_space<any>> -> memref<1x512xf32, #tpu.memory_space<any>>
      %c45_i32 = arith.constant 45 : i32
      %c0_i32_147 = arith.constant 0 : i32
      %237 = tpu.memref_slice %arg7[%c45_i32, %c0_i32_147] : memref<64x512xf32, #tpu.memory_space<vmem>> -> memref<1x512xf32, #tpu.memory_space<vmem>>
      %238 = tpu.memref_slice %arg10[%c5_i32_145] : memref<8x!tpu.dma_semaphore, #tpu.memory_space<semaphore_mem>> -> memref<1x!tpu.dma_semaphore, #tpu.memory_space<semaphore_mem>>
      %239 = tpu.memref_squeeze %238 : memref<1x!tpu.dma_semaphore, #tpu.memory_space<semaphore_mem>> -> memref<!tpu.dma_semaphore, #tpu.memory_space<semaphore_mem>>
      tpu.enqueue_dma source(%236 : memref<1x512xf32, #tpu.memory_space<any>>) target(%237 : memref<1x512xf32, #tpu.memory_space<vmem>>) target_semaphore(%239 : memref<!tpu.dma_semaphore, #tpu.memory_space<semaphore_mem>>)
      %c46 = arith.constant 46 : index
      %240 = memref.load %arg1[%c46] : memref<64xi32, #tpu.memory_space<smem>>
      %c5_i32_148 = arith.constant 5 : i32
      %c0_i32_149 = arith.constant 0 : i32
      %241 = tpu.memref_slice %arg2[%240, %c0_i32_149] : memref<1000x512xf32, #tpu.memory_space<any>> -> memref<1x512xf32, #tpu.memory_space<any>>
      %c46_i32 = arith.constant 46 : i32
      %c0_i32_150 = arith.constant 0 : i32
      %242 = tpu.memref_slice %arg7[%c46_i32, %c0_i32_150] : memref<64x512xf32, #tpu.memory_space<vmem>> -> memref<1x512xf32, #tpu.memory_space<vmem>>
      %243 = tpu.memref_slice %arg10[%c5_i32_148] : memref<8x!tpu.dma_semaphore, #tpu.memory_space<semaphore_mem>> -> memref<1x!tpu.dma_semaphore, #tpu.memory_space<semaphore_mem>>
      %244 = tpu.memref_squeeze %243 : memref<1x!tpu.dma_semaphore, #tpu.memory_space<semaphore_mem>> -> memref<!tpu.dma_semaphore, #tpu.memory_space<semaphore_mem>>
      tpu.enqueue_dma source(%241 : memref<1x512xf32, #tpu.memory_space<any>>) target(%242 : memref<1x512xf32, #tpu.memory_space<vmem>>) target_semaphore(%244 : memref<!tpu.dma_semaphore, #tpu.memory_space<semaphore_mem>>)
      %c47 = arith.constant 47 : index
      %245 = memref.load %arg1[%c47] : memref<64xi32, #tpu.memory_space<smem>>
      %c5_i32_151 = arith.constant 5 : i32
      %c0_i32_152 = arith.constant 0 : i32
      %246 = tpu.memref_slice %arg2[%245, %c0_i32_152] : memref<1000x512xf32, #tpu.memory_space<any>> -> memref<1x512xf32, #tpu.memory_space<any>>
      %c47_i32 = arith.constant 47 : i32
      %c0_i32_153 = arith.constant 0 : i32
      %247 = tpu.memref_slice %arg7[%c47_i32, %c0_i32_153] : memref<64x512xf32, #tpu.memory_space<vmem>> -> memref<1x512xf32, #tpu.memory_space<vmem>>
      %248 = tpu.memref_slice %arg10[%c5_i32_151] : memref<8x!tpu.dma_semaphore, #tpu.memory_space<semaphore_mem>> -> memref<1x!tpu.dma_semaphore, #tpu.memory_space<semaphore_mem>>
      %249 = tpu.memref_squeeze %248 : memref<1x!tpu.dma_semaphore, #tpu.memory_space<semaphore_mem>> -> memref<!tpu.dma_semaphore, #tpu.memory_space<semaphore_mem>>
      tpu.enqueue_dma source(%246 : memref<1x512xf32, #tpu.memory_space<any>>) target(%247 : memref<1x512xf32, #tpu.memory_space<vmem>>) target_semaphore(%249 : memref<!tpu.dma_semaphore, #tpu.memory_space<semaphore_mem>>)
      %c48 = arith.constant 48 : index
      %250 = memref.load %arg1[%c48] : memref<64xi32, #tpu.memory_space<smem>>
      %c6_i32_154 = arith.constant 6 : i32
      %c0_i32_155 = arith.constant 0 : i32
      %251 = tpu.memref_slice %arg2[%250, %c0_i32_155] : memref<1000x512xf32, #tpu.memory_space<any>> -> memref<1x512xf32, #tpu.memory_space<any>>
      %c48_i32 = arith.constant 48 : i32
      %c0_i32_156 = arith.constant 0 : i32
      %252 = tpu.memref_slice %arg7[%c48_i32, %c0_i32_156] : memref<64x512xf32, #tpu.memory_space<vmem>> -> memref<1x512xf32, #tpu.memory_space<vmem>>
      %253 = tpu.memref_slice %arg10[%c6_i32_154] : memref<8x!tpu.dma_semaphore, #tpu.memory_space<semaphore_mem>> -> memref<1x!tpu.dma_semaphore, #tpu.memory_space<semaphore_mem>>
      %254 = tpu.memref_squeeze %253 : memref<1x!tpu.dma_semaphore, #tpu.memory_space<semaphore_mem>> -> memref<!tpu.dma_semaphore, #tpu.memory_space<semaphore_mem>>
      tpu.enqueue_dma source(%251 : memref<1x512xf32, #tpu.memory_space<any>>) target(%252 : memref<1x512xf32, #tpu.memory_space<vmem>>) target_semaphore(%254 : memref<!tpu.dma_semaphore, #tpu.memory_space<semaphore_mem>>)
      %c49 = arith.constant 49 : index
      %255 = memref.load %arg1[%c49] : memref<64xi32, #tpu.memory_space<smem>>
      %c6_i32_157 = arith.constant 6 : i32
      %c0_i32_158 = arith.constant 0 : i32
      %256 = tpu.memref_slice %arg2[%255, %c0_i32_158] : memref<1000x512xf32, #tpu.memory_space<any>> -> memref<1x512xf32, #tpu.memory_space<any>>
      %c49_i32 = arith.constant 49 : i32
      %c0_i32_159 = arith.constant 0 : i32
      %257 = tpu.memref_slice %arg7[%c49_i32, %c0_i32_159] : memref<64x512xf32, #tpu.memory_space<vmem>> -> memref<1x512xf32, #tpu.memory_space<vmem>>
      %258 = tpu.memref_slice %arg10[%c6_i32_157] : memref<8x!tpu.dma_semaphore, #tpu.memory_space<semaphore_mem>> -> memref<1x!tpu.dma_semaphore, #tpu.memory_space<semaphore_mem>>
      %259 = tpu.memref_squeeze %258 : memref<1x!tpu.dma_semaphore, #tpu.memory_space<semaphore_mem>> -> memref<!tpu.dma_semaphore, #tpu.memory_space<semaphore_mem>>
      tpu.enqueue_dma source(%256 : memref<1x512xf32, #tpu.memory_space<any>>) target(%257 : memref<1x512xf32, #tpu.memory_space<vmem>>) target_semaphore(%259 : memref<!tpu.dma_semaphore, #tpu.memory_space<semaphore_mem>>)
      %c50 = arith.constant 50 : index
      %260 = memref.load %arg1[%c50] : memref<64xi32, #tpu.memory_space<smem>>
      %c6_i32_160 = arith.constant 6 : i32
      %c0_i32_161 = arith.constant 0 : i32
      %261 = tpu.memref_slice %arg2[%260, %c0_i32_161] : memref<1000x512xf32, #tpu.memory_space<any>> -> memref<1x512xf32, #tpu.memory_space<any>>
      %c50_i32 = arith.constant 50 : i32
      %c0_i32_162 = arith.constant 0 : i32
      %262 = tpu.memref_slice %arg7[%c50_i32, %c0_i32_162] : memref<64x512xf32, #tpu.memory_space<vmem>> -> memref<1x512xf32, #tpu.memory_space<vmem>>
      %263 = tpu.memref_slice %arg10[%c6_i32_160] : memref<8x!tpu.dma_semaphore, #tpu.memory_space<semaphore_mem>> -> memref<1x!tpu.dma_semaphore, #tpu.memory_space<semaphore_mem>>
      %264 = tpu.memref_squeeze %263 : memref<1x!tpu.dma_semaphore, #tpu.memory_space<semaphore_mem>> -> memref<!tpu.dma_semaphore, #tpu.memory_space<semaphore_mem>>
      tpu.enqueue_dma source(%261 : memref<1x512xf32, #tpu.memory_space<any>>) target(%262 : memref<1x512xf32, #tpu.memory_space<vmem>>) target_semaphore(%264 : memref<!tpu.dma_semaphore, #tpu.memory_space<semaphore_mem>>)
      %c51 = arith.constant 51 : index
      %265 = memref.load %arg1[%c51] : memref<64xi32, #tpu.memory_space<smem>>
      %c6_i32_163 = arith.constant 6 : i32
      %c0_i32_164 = arith.constant 0 : i32
      %266 = tpu.memref_slice %arg2[%265, %c0_i32_164] : memref<1000x512xf32, #tpu.memory_space<any>> -> memref<1x512xf32, #tpu.memory_space<any>>
      %c51_i32 = arith.constant 51 : i32
      %c0_i32_165 = arith.constant 0 : i32
      %267 = tpu.memref_slice %arg7[%c51_i32, %c0_i32_165] : memref<64x512xf32, #tpu.memory_space<vmem>> -> memref<1x512xf32, #tpu.memory_space<vmem>>
      %268 = tpu.memref_slice %arg10[%c6_i32_163] : memref<8x!tpu.dma_semaphore, #tpu.memory_space<semaphore_mem>> -> memref<1x!tpu.dma_semaphore, #tpu.memory_space<semaphore_mem>>
      %269 = tpu.memref_squeeze %268 : memref<1x!tpu.dma_semaphore, #tpu.memory_space<semaphore_mem>> -> memref<!tpu.dma_semaphore, #tpu.memory_space<semaphore_mem>>
      tpu.enqueue_dma source(%266 : memref<1x512xf32, #tpu.memory_space<any>>) target(%267 : memref<1x512xf32, #tpu.memory_space<vmem>>) target_semaphore(%269 : memref<!tpu.dma_semaphore, #tpu.memory_space<semaphore_mem>>)
      %c52 = arith.constant 52 : index
      %270 = memref.load %arg1[%c52] : memref<64xi32, #tpu.memory_space<smem>>
      %c6_i32_166 = arith.constant 6 : i32
      %c0_i32_167 = arith.constant 0 : i32
      %271 = tpu.memref_slice %arg2[%270, %c0_i32_167] : memref<1000x512xf32, #tpu.memory_space<any>> -> memref<1x512xf32, #tpu.memory_space<any>>
      %c52_i32 = arith.constant 52 : i32
      %c0_i32_168 = arith.constant 0 : i32
      %272 = tpu.memref_slice %arg7[%c52_i32, %c0_i32_168] : memref<64x512xf32, #tpu.memory_space<vmem>> -> memref<1x512xf32, #tpu.memory_space<vmem>>
      %273 = tpu.memref_slice %arg10[%c6_i32_166] : memref<8x!tpu.dma_semaphore, #tpu.memory_space<semaphore_mem>> -> memref<1x!tpu.dma_semaphore, #tpu.memory_space<semaphore_mem>>
      %274 = tpu.memref_squeeze %273 : memref<1x!tpu.dma_semaphore, #tpu.memory_space<semaphore_mem>> -> memref<!tpu.dma_semaphore, #tpu.memory_space<semaphore_mem>>
      tpu.enqueue_dma source(%271 : memref<1x512xf32, #tpu.memory_space<any>>) target(%272 : memref<1x512xf32, #tpu.memory_space<vmem>>) target_semaphore(%274 : memref<!tpu.dma_semaphore, #tpu.memory_space<semaphore_mem>>)
      %c53 = arith.constant 53 : index
      %275 = memref.load %arg1[%c53] : memref<64xi32, #tpu.memory_space<smem>>
      %c6_i32_169 = arith.constant 6 : i32
      %c0_i32_170 = arith.constant 0 : i32
      %276 = tpu.memref_slice %arg2[%275, %c0_i32_170] : memref<1000x512xf32, #tpu.memory_space<any>> -> memref<1x512xf32, #tpu.memory_space<any>>
      %c53_i32 = arith.constant 53 : i32
      %c0_i32_171 = arith.constant 0 : i32
      %277 = tpu.memref_slice %arg7[%c53_i32, %c0_i32_171] : memref<64x512xf32, #tpu.memory_space<vmem>> -> memref<1x512xf32, #tpu.memory_space<vmem>>
      %278 = tpu.memref_slice %arg10[%c6_i32_169] : memref<8x!tpu.dma_semaphore, #tpu.memory_space<semaphore_mem>> -> memref<1x!tpu.dma_semaphore, #tpu.memory_space<semaphore_mem>>
      %279 = tpu.memref_squeeze %278 : memref<1x!tpu.dma_semaphore, #tpu.memory_space<semaphore_mem>> -> memref<!tpu.dma_semaphore, #tpu.memory_space<semaphore_mem>>
      tpu.enqueue_dma source(%276 : memref<1x512xf32, #tpu.memory_space<any>>) target(%277 : memref<1x512xf32, #tpu.memory_space<vmem>>) target_semaphore(%279 : memref<!tpu.dma_semaphore, #tpu.memory_space<semaphore_mem>>)
      %c54 = arith.constant 54 : index
      %280 = memref.load %arg1[%c54] : memref<64xi32, #tpu.memory_space<smem>>
      %c6_i32_172 = arith.constant 6 : i32
      %c0_i32_173 = arith.constant 0 : i32
      %281 = tpu.memref_slice %arg2[%280, %c0_i32_173] : memref<1000x512xf32, #tpu.memory_space<any>> -> memref<1x512xf32, #tpu.memory_space<any>>
      %c54_i32 = arith.constant 54 : i32
      %c0_i32_174 = arith.constant 0 : i32
      %282 = tpu.memref_slice %arg7[%c54_i32, %c0_i32_174] : memref<64x512xf32, #tpu.memory_space<vmem>> -> memref<1x512xf32, #tpu.memory_space<vmem>>
      %283 = tpu.memref_slice %arg10[%c6_i32_172] : memref<8x!tpu.dma_semaphore, #tpu.memory_space<semaphore_mem>> -> memref<1x!tpu.dma_semaphore, #tpu.memory_space<semaphore_mem>>
      %284 = tpu.memref_squeeze %283 : memref<1x!tpu.dma_semaphore, #tpu.memory_space<semaphore_mem>> -> memref<!tpu.dma_semaphore, #tpu.memory_space<semaphore_mem>>
      tpu.enqueue_dma source(%281 : memref<1x512xf32, #tpu.memory_space<any>>) target(%282 : memref<1x512xf32, #tpu.memory_space<vmem>>) target_semaphore(%284 : memref<!tpu.dma_semaphore, #tpu.memory_space<semaphore_mem>>)
      %c55 = arith.constant 55 : index
      %285 = memref.load %arg1[%c55] : memref<64xi32, #tpu.memory_space<smem>>
      %c6_i32_175 = arith.constant 6 : i32
      %c0_i32_176 = arith.constant 0 : i32
      %286 = tpu.memref_slice %arg2[%285, %c0_i32_176] : memref<1000x512xf32, #tpu.memory_space<any>> -> memref<1x512xf32, #tpu.memory_space<any>>
      %c55_i32 = arith.constant 55 : i32
      %c0_i32_177 = arith.constant 0 : i32
      %287 = tpu.memref_slice %arg7[%c55_i32, %c0_i32_177] : memref<64x512xf32, #tpu.memory_space<vmem>> -> memref<1x512xf32, #tpu.memory_space<vmem>>
      %288 = tpu.memref_slice %arg10[%c6_i32_175] : memref<8x!tpu.dma_semaphore, #tpu.memory_space<semaphore_mem>> -> memref<1x!tpu.dma_semaphore, #tpu.memory_space<semaphore_mem>>
      %289 = tpu.memref_squeeze %288 : memref<1x!tpu.dma_semaphore, #tpu.memory_space<semaphore_mem>> -> memref<!tpu.dma_semaphore, #tpu.memory_space<semaphore_mem>>
      tpu.enqueue_dma source(%286 : memref<1x512xf32, #tpu.memory_space<any>>) target(%287 : memref<1x512xf32, #tpu.memory_space<vmem>>) target_semaphore(%289 : memref<!tpu.dma_semaphore, #tpu.memory_space<semaphore_mem>>)
      %c56 = arith.constant 56 : index
      %290 = memref.load %arg1[%c56] : memref<64xi32, #tpu.memory_space<smem>>
      %c7_i32_178 = arith.constant 7 : i32
      %c0_i32_179 = arith.constant 0 : i32
      %291 = tpu.memref_slice %arg2[%290, %c0_i32_179] : memref<1000x512xf32, #tpu.memory_space<any>> -> memref<1x512xf32, #tpu.memory_space<any>>
      %c56_i32 = arith.constant 56 : i32
      %c0_i32_180 = arith.constant 0 : i32
      %292 = tpu.memref_slice %arg7[%c56_i32, %c0_i32_180] : memref<64x512xf32, #tpu.memory_space<vmem>> -> memref<1x512xf32, #tpu.memory_space<vmem>>
      %293 = tpu.memref_slice %arg10[%c7_i32_178] : memref<8x!tpu.dma_semaphore, #tpu.memory_space<semaphore_mem>> -> memref<1x!tpu.dma_semaphore, #tpu.memory_space<semaphore_mem>>
      %294 = tpu.memref_squeeze %293 : memref<1x!tpu.dma_semaphore, #tpu.memory_space<semaphore_mem>> -> memref<!tpu.dma_semaphore, #tpu.memory_space<semaphore_mem>>
      tpu.enqueue_dma source(%291 : memref<1x512xf32, #tpu.memory_space<any>>) target(%292 : memref<1x512xf32, #tpu.memory_space<vmem>>) target_semaphore(%294 : memref<!tpu.dma_semaphore, #tpu.memory_space<semaphore_mem>>)
      %c57 = arith.constant 57 : index
      %295 = memref.load %arg1[%c57] : memref<64xi32, #tpu.memory_space<smem>>
      %c7_i32_181 = arith.constant 7 : i32
      %c0_i32_182 = arith.constant 0 : i32
      %296 = tpu.memref_slice %arg2[%295, %c0_i32_182] : memref<1000x512xf32, #tpu.memory_space<any>> -> memref<1x512xf32, #tpu.memory_space<any>>
      %c57_i32 = arith.constant 57 : i32
      %c0_i32_183 = arith.constant 0 : i32
      %297 = tpu.memref_slice %arg7[%c57_i32, %c0_i32_183] : memref<64x512xf32, #tpu.memory_space<vmem>> -> memref<1x512xf32, #tpu.memory_space<vmem>>
      %298 = tpu.memref_slice %arg10[%c7_i32_181] : memref<8x!tpu.dma_semaphore, #tpu.memory_space<semaphore_mem>> -> memref<1x!tpu.dma_semaphore, #tpu.memory_space<semaphore_mem>>
      %299 = tpu.memref_squeeze %298 : memref<1x!tpu.dma_semaphore, #tpu.memory_space<semaphore_mem>> -> memref<!tpu.dma_semaphore, #tpu.memory_space<semaphore_mem>>
      tpu.enqueue_dma source(%296 : memref<1x512xf32, #tpu.memory_space<any>>) target(%297 : memref<1x512xf32, #tpu.memory_space<vmem>>) target_semaphore(%299 : memref<!tpu.dma_semaphore, #tpu.memory_space<semaphore_mem>>)
      %c58 = arith.constant 58 : index
      %300 = memref.load %arg1[%c58] : memref<64xi32, #tpu.memory_space<smem>>
      %c7_i32_184 = arith.constant 7 : i32
      %c0_i32_185 = arith.constant 0 : i32
      %301 = tpu.memref_slice %arg2[%300, %c0_i32_185] : memref<1000x512xf32, #tpu.memory_space<any>> -> memref<1x512xf32, #tpu.memory_space<any>>
      %c58_i32 = arith.constant 58 : i32
      %c0_i32_186 = arith.constant 0 : i32
      %302 = tpu.memref_slice %arg7[%c58_i32, %c0_i32_186] : memref<64x512xf32, #tpu.memory_space<vmem>> -> memref<1x512xf32, #tpu.memory_space<vmem>>
      %303 = tpu.memref_slice %arg10[%c7_i32_184] : memref<8x!tpu.dma_semaphore, #tpu.memory_space<semaphore_mem>> -> memref<1x!tpu.dma_semaphore, #tpu.memory_space<semaphore_mem>>
      %304 = tpu.memref_squeeze %303 : memref<1x!tpu.dma_semaphore, #tpu.memory_space<semaphore_mem>> -> memref<!tpu.dma_semaphore, #tpu.memory_space<semaphore_mem>>
      tpu.enqueue_dma source(%301 : memref<1x512xf32, #tpu.memory_space<any>>) target(%302 : memref<1x512xf32, #tpu.memory_space<vmem>>) target_semaphore(%304 : memref<!tpu.dma_semaphore, #tpu.memory_space<semaphore_mem>>)
      %c59 = arith.constant 59 : index
      %305 = memref.load %arg1[%c59] : memref<64xi32, #tpu.memory_space<smem>>
      %c7_i32_187 = arith.constant 7 : i32
      %c0_i32_188 = arith.constant 0 : i32
      %306 = tpu.memref_slice %arg2[%305, %c0_i32_188] : memref<1000x512xf32, #tpu.memory_space<any>> -> memref<1x512xf32, #tpu.memory_space<any>>
      %c59_i32 = arith.constant 59 : i32
      %c0_i32_189 = arith.constant 0 : i32
      %307 = tpu.memref_slice %arg7[%c59_i32, %c0_i32_189] : memref<64x512xf32, #tpu.memory_space<vmem>> -> memref<1x512xf32, #tpu.memory_space<vmem>>
      %308 = tpu.memref_slice %arg10[%c7_i32_187] : memref<8x!tpu.dma_semaphore, #tpu.memory_space<semaphore_mem>> -> memref<1x!tpu.dma_semaphore, #tpu.memory_space<semaphore_mem>>
      %309 = tpu.memref_squeeze %308 : memref<1x!tpu.dma_semaphore, #tpu.memory_space<semaphore_mem>> -> memref<!tpu.dma_semaphore, #tpu.memory_space<semaphore_mem>>
      tpu.enqueue_dma source(%306 : memref<1x512xf32, #tpu.memory_space<any>>) target(%307 : memref<1x512xf32, #tpu.memory_space<vmem>>) target_semaphore(%309 : memref<!tpu.dma_semaphore, #tpu.memory_space<semaphore_mem>>)
      %c60 = arith.constant 60 : index
      %310 = memref.load %arg1[%c60] : memref<64xi32, #tpu.memory_space<smem>>
      %c7_i32_190 = arith.constant 7 : i32
      %c0_i32_191 = arith.constant 0 : i32
      %311 = tpu.memref_slice %arg2[%310, %c0_i32_191] : memref<1000x512xf32, #tpu.memory_space<any>> -> memref<1x512xf32, #tpu.memory_space<any>>
      %c60_i32 = arith.constant 60 : i32
      %c0_i32_192 = arith.constant 0 : i32
      %312 = tpu.memref_slice %arg7[%c60_i32, %c0_i32_192] : memref<64x512xf32, #tpu.memory_space<vmem>> -> memref<1x512xf32, #tpu.memory_space<vmem>>
      %313 = tpu.memref_slice %arg10[%c7_i32_190] : memref<8x!tpu.dma_semaphore, #tpu.memory_space<semaphore_mem>> -> memref<1x!tpu.dma_semaphore, #tpu.memory_space<semaphore_mem>>
      %314 = tpu.memref_squeeze %313 : memref<1x!tpu.dma_semaphore, #tpu.memory_space<semaphore_mem>> -> memref<!tpu.dma_semaphore, #tpu.memory_space<semaphore_mem>>
      tpu.enqueue_dma source(%311 : memref<1x512xf32, #tpu.memory_space<any>>) target(%312 : memref<1x512xf32, #tpu.memory_space<vmem>>) target_semaphore(%314 : memref<!tpu.dma_semaphore, #tpu.memory_space<semaphore_mem>>)
      %c61 = arith.constant 61 : index
      %315 = memref.load %arg1[%c61] : memref<64xi32, #tpu.memory_space<smem>>
      %c7_i32_193 = arith.constant 7 : i32
      %c0_i32_194 = arith.constant 0 : i32
      %316 = tpu.memref_slice %arg2[%315, %c0_i32_194] : memref<1000x512xf32, #tpu.memory_space<any>> -> memref<1x512xf32, #tpu.memory_space<any>>
      %c61_i32 = arith.constant 61 : i32
      %c0_i32_195 = arith.constant 0 : i32
      %317 = tpu.memref_slice %arg7[%c61_i32, %c0_i32_195] : memref<64x512xf32, #tpu.memory_space<vmem>> -> memref<1x512xf32, #tpu.memory_space<vmem>>
      %318 = tpu.memref_slice %arg10[%c7_i32_193] : memref<8x!tpu.dma_semaphore, #tpu.memory_space<semaphore_mem>> -> memref<1x!tpu.dma_semaphore, #tpu.memory_space<semaphore_mem>>
      %319 = tpu.memref_squeeze %318 : memref<1x!tpu.dma_semaphore, #tpu.memory_space<semaphore_mem>> -> memref<!tpu.dma_semaphore, #tpu.memory_space<semaphore_mem>>
      tpu.enqueue_dma source(%316 : memref<1x512xf32, #tpu.memory_space<any>>) target(%317 : memref<1x512xf32, #tpu.memory_space<vmem>>) target_semaphore(%319 : memref<!tpu.dma_semaphore, #tpu.memory_space<semaphore_mem>>)
      %c62 = arith.constant 62 : index
      %320 = memref.load %arg1[%c62] : memref<64xi32, #tpu.memory_space<smem>>
      %c7_i32_196 = arith.constant 7 : i32
      %c0_i32_197 = arith.constant 0 : i32
      %321 = tpu.memref_slice %arg2[%320, %c0_i32_197] : memref<1000x512xf32, #tpu.memory_space<any>> -> memref<1x512xf32, #tpu.memory_space<any>>
      %c62_i32 = arith.constant 62 : i32
      %c0_i32_198 = arith.constant 0 : i32
      %322 = tpu.memref_slice %arg7[%c62_i32, %c0_i32_198] : memref<64x512xf32, #tpu.memory_space<vmem>> -> memref<1x512xf32, #tpu.memory_space<vmem>>
      %323 = tpu.memref_slice %arg10[%c7_i32_196] : memref<8x!tpu.dma_semaphore, #tpu.memory_space<semaphore_mem>> -> memref<1x!tpu.dma_semaphore, #tpu.memory_space<semaphore_mem>>
      %324 = tpu.memref_squeeze %323 : memref<1x!tpu.dma_semaphore, #tpu.memory_space<semaphore_mem>> -> memref<!tpu.dma_semaphore, #tpu.memory_space<semaphore_mem>>
      tpu.enqueue_dma source(%321 : memref<1x512xf32, #tpu.memory_space<any>>) target(%322 : memref<1x512xf32, #tpu.memory_space<vmem>>) target_semaphore(%324 : memref<!tpu.dma_semaphore, #tpu.memory_space<semaphore_mem>>)
      %c63 = arith.constant 63 : index
      %325 = memref.load %arg1[%c63] : memref<64xi32, #tpu.memory_space<smem>>
      %c7_i32_199 = arith.constant 7 : i32
      %c0_i32_200 = arith.constant 0 : i32
      %326 = tpu.memref_slice %arg2[%325, %c0_i32_200] : memref<1000x512xf32, #tpu.memory_space<any>> -> memref<1x512xf32, #tpu.memory_space<any>>
      %c63_i32 = arith.constant 63 : i32
      %c0_i32_201 = arith.constant 0 : i32
      %327 = tpu.memref_slice %arg7[%c63_i32, %c0_i32_201] : memref<64x512xf32, #tpu.memory_space<vmem>> -> memref<1x512xf32, #tpu.memory_space<vmem>>
      %328 = tpu.memref_slice %arg10[%c7_i32_199] : memref<8x!tpu.dma_semaphore, #tpu.memory_space<semaphore_mem>> -> memref<1x!tpu.dma_semaphore, #tpu.memory_space<semaphore_mem>>
      %329 = tpu.memref_squeeze %328 : memref<1x!tpu.dma_semaphore, #tpu.memory_space<semaphore_mem>> -> memref<!tpu.dma_semaphore, #tpu.memory_space<semaphore_mem>>
      tpu.enqueue_dma source(%326 : memref<1x512xf32, #tpu.memory_space<any>>) target(%327 : memref<1x512xf32, #tpu.memory_space<vmem>>) target_semaphore(%329 : memref<!tpu.dma_semaphore, #tpu.memory_space<semaphore_mem>>)
      %cst_202 = arith.constant 0.000000e+00 : f32
      %330 = vector.broadcast %cst_202 : f32 to vector<8x128xf32>
      %c0_203 = arith.constant 0 : index
      %c0_204 = arith.constant 0 : index
      %331 = vector.load %arg8[%c0_203, %c0_204] : memref<8x128xf32, #tpu.memory_space<vmem>>, vector<8x128xf32>
      tpu.vector_store %arg8[%c0_203, %c0_204], %330 {strides = array<i32>} : memref<8x128xf32, #tpu.memory_space<vmem>>, vector<8x128xf32>,
      %cst_205 = arith.constant 0.000000e+00 : f32
      %332 = vector.broadcast %cst_205 : f32 to vector<8x128xf32>
      %c0_206 = arith.constant 0 : index
      %c0_207 = arith.constant 0 : index
      %333 = vector.load %arg9[%c0_206, %c0_207] : memref<8x128xf32, #tpu.memory_space<vmem>>, vector<8x128xf32>
      tpu.vector_store %arg9[%c0_206, %c0_207], %332 {strides = array<i32>} : memref<8x128xf32, #tpu.memory_space<vmem>>, vector<8x128xf32>,
      %c0_i32_208 = arith.constant 0 : i32
      %c0_i32_209 = arith.constant 0 : i32
      %334 = tpu.memref_slice %arg2[%10, %c0_i32_209] : memref<1000x512xf32, #tpu.memory_space<any>> -> memref<1x512xf32, #tpu.memory_space<any>>
      %c0_i32_210 = arith.constant 0 : i32
      %c0_i32_211 = arith.constant 0 : i32
      %335 = tpu.memref_slice %arg7[%c0_i32_210, %c0_i32_211] : memref<64x512xf32, #tpu.memory_space<vmem>> -> memref<1x512xf32, #tpu.memory_space<vmem>>
      %336 = tpu.memref_slice %arg10[%c0_i32_208] : memref<8x!tpu.dma_semaphore, #tpu.memory_space<semaphore_mem>> -> memref<1x!tpu.dma_semaphore, #tpu.memory_space<semaphore_mem>>
      %337 = tpu.memref_squeeze %336 : memref<1x!tpu.dma_semaphore, #tpu.memory_space<semaphore_mem>> -> memref<!tpu.dma_semaphore, #tpu.memory_space<semaphore_mem>>
      tpu.wait_dma2 semaphore(%337 : memref<!tpu.dma_semaphore, #tpu.memory_space<semaphore_mem>>) src(%334 : memref<1x512xf32, #tpu.memory_space<any>>) dst(%335 : memref<1x512xf32, #tpu.memory_space<vmem>>)
      %c0_i32_212 = arith.constant 0 : i32
      %c0_i32_213 = arith.constant 0 : i32
      %338 = tpu.memref_slice %arg2[%15, %c0_i32_213] : memref<1000x512xf32, #tpu.memory_space<any>> -> memref<1x512xf32, #tpu.memory_space<any>>
      %c1_i32_214 = arith.constant 1 : i32
      %c0_i32_215 = arith.constant 0 : i32
      %339 = tpu.memref_slice %arg7[%c1_i32_214, %c0_i32_215] : memref<64x512xf32, #tpu.memory_space<vmem>> -> memref<1x512xf32, #tpu.memory_space<vmem>>
      %340 = tpu.memref_slice %arg10[%c0_i32_212] : memref<8x!tpu.dma_semaphore, #tpu.memory_space<semaphore_mem>> -> memref<1x!tpu.dma_semaphore, #tpu.memory_space<semaphore_mem>>
      %341 = tpu.memref_squeeze %340 : memref<1x!tpu.dma_semaphore, #tpu.memory_space<semaphore_mem>> -> memref<!tpu.dma_semaphore, #tpu.memory_space<semaphore_mem>>
      tpu.wait_dma2 semaphore(%341 : memref<!tpu.dma_semaphore, #tpu.memory_space<semaphore_mem>>) src(%338 : memref<1x512xf32, #tpu.memory_space<any>>) dst(%339 : memref<1x512xf32, #tpu.memory_space<vmem>>)
      %c0_i32_216 = arith.constant 0 : i32
      %c0_i32_217 = arith.constant 0 : i32
      %342 = tpu.memref_slice %arg2[%20, %c0_i32_217] : memref<1000x512xf32, #tpu.memory_space<any>> -> memref<1x512xf32, #tpu.memory_space<any>>
      %c2_i32_218 = arith.constant 2 : i32
      %c0_i32_219 = arith.constant 0 : i32
      %343 = tpu.memref_slice %arg7[%c2_i32_218, %c0_i32_219] : memref<64x512xf32, #tpu.memory_space<vmem>> -> memref<1x512xf32, #tpu.memory_space<vmem>>
      %344 = tpu.memref_slice %arg10[%c0_i32_216] : memref<8x!tpu.dma_semaphore, #tpu.memory_space<semaphore_mem>> -> memref<1x!tpu.dma_semaphore, #tpu.memory_space<semaphore_mem>>
      %345 = tpu.memref_squeeze %344 : memref<1x!tpu.dma_semaphore, #tpu.memory_space<semaphore_mem>> -> memref<!tpu.dma_semaphore, #tpu.memory_space<semaphore_mem>>
      tpu.wait_dma2 semaphore(%345 : memref<!tpu.dma_semaphore, #tpu.memory_space<semaphore_mem>>) src(%342 : memref<1x512xf32, #tpu.memory_space<any>>) dst(%343 : memref<1x512xf32, #tpu.memory_space<vmem>>)
      %c0_i32_220 = arith.constant 0 : i32
      %c0_i32_221 = arith.constant 0 : i32
      %346 = tpu.memref_slice %arg2[%25, %c0_i32_221] : memref<1000x512xf32, #tpu.memory_space<any>> -> memref<1x512xf32, #tpu.memory_space<any>>
      %c3_i32_222 = arith.constant 3 : i32
      %c0_i32_223 = arith.constant 0 : i32
      %347 = tpu.memref_slice %arg7[%c3_i32_222, %c0_i32_223] : memref<64x512xf32, #tpu.memory_space<vmem>> -> memref<1x512xf32, #tpu.memory_space<vmem>>
      %348 = tpu.memref_slice %arg10[%c0_i32_220] : memref<8x!tpu.dma_semaphore, #tpu.memory_space<semaphore_mem>> -> memref<1x!tpu.dma_semaphore, #tpu.memory_space<semaphore_mem>>
      %349 = tpu.memref_squeeze %348 : memref<1x!tpu.dma_semaphore, #tpu.memory_space<semaphore_mem>> -> memref<!tpu.dma_semaphore, #tpu.memory_space<semaphore_mem>>
      tpu.wait_dma2 semaphore(%349 : memref<!tpu.dma_semaphore, #tpu.memory_space<semaphore_mem>>) src(%346 : memref<1x512xf32, #tpu.memory_space<any>>) dst(%347 : memref<1x512xf32, #tpu.memory_space<vmem>>)
      %c0_i32_224 = arith.constant 0 : i32
      %c0_i32_225 = arith.constant 0 : i32
      %350 = tpu.memref_slice %arg2[%30, %c0_i32_225] : memref<1000x512xf32, #tpu.memory_space<any>> -> memref<1x512xf32, #tpu.memory_space<any>>
      %c4_i32_226 = arith.constant 4 : i32
      %c0_i32_227 = arith.constant 0 : i32
      %351 = tpu.memref_slice %arg7[%c4_i32_226, %c0_i32_227] : memref<64x512xf32, #tpu.memory_space<vmem>> -> memref<1x512xf32, #tpu.memory_space<vmem>>
      %352 = tpu.memref_slice %arg10[%c0_i32_224] : memref<8x!tpu.dma_semaphore, #tpu.memory_space<semaphore_mem>> -> memref<1x!tpu.dma_semaphore, #tpu.memory_space<semaphore_mem>>
      %353 = tpu.memref_squeeze %352 : memref<1x!tpu.dma_semaphore, #tpu.memory_space<semaphore_mem>> -> memref<!tpu.dma_semaphore, #tpu.memory_space<semaphore_mem>>
      tpu.wait_dma2 semaphore(%353 : memref<!tpu.dma_semaphore, #tpu.memory_space<semaphore_mem>>) src(%350 : memref<1x512xf32, #tpu.memory_space<any>>) dst(%351 : memref<1x512xf32, #tpu.memory_space<vmem>>)
      %c0_i32_228 = arith.constant 0 : i32
      %c0_i32_229 = arith.constant 0 : i32
      %354 = tpu.memref_slice %arg2[%35, %c0_i32_229] : memref<1000x512xf32, #tpu.memory_space<any>> -> memref<1x512xf32, #tpu.memory_space<any>>
      %c5_i32_230 = arith.constant 5 : i32
      %c0_i32_231 = arith.constant 0 : i32
      %355 = tpu.memref_slice %arg7[%c5_i32_230, %c0_i32_231] : memref<64x512xf32, #tpu.memory_space<vmem>> -> memref<1x512xf32, #tpu.memory_space<vmem>>
      %356 = tpu.memref_slice %arg10[%c0_i32_228] : memref<8x!tpu.dma_semaphore, #tpu.memory_space<semaphore_mem>> -> memref<1x!tpu.dma_semaphore, #tpu.memory_space<semaphore_mem>>
      %357 = tpu.memref_squeeze %356 : memref<1x!tpu.dma_semaphore, #tpu.memory_space<semaphore_mem>> -> memref<!tpu.dma_semaphore, #tpu.memory_space<semaphore_mem>>
      tpu.wait_dma2 semaphore(%357 : memref<!tpu.dma_semaphore, #tpu.memory_space<semaphore_mem>>) src(%354 : memref<1x512xf32, #tpu.memory_space<any>>) dst(%355 : memref<1x512xf32, #tpu.memory_space<vmem>>)
      %c0_i32_232 = arith.constant 0 : i32
      %c0_i32_233 = arith.constant 0 : i32
      %358 = tpu.memref_slice %arg2[%40, %c0_i32_233] : memref<1000x512xf32, #tpu.memory_space<any>> -> memref<1x512xf32, #tpu.memory_space<any>>
      %c6_i32_234 = arith.constant 6 : i32
      %c0_i32_235 = arith.constant 0 : i32
      %359 = tpu.memref_slice %arg7[%c6_i32_234, %c0_i32_235] : memref<64x512xf32, #tpu.memory_space<vmem>> -> memref<1x512xf32, #tpu.memory_space<vmem>>
      %360 = tpu.memref_slice %arg10[%c0_i32_232] : memref<8x!tpu.dma_semaphore, #tpu.memory_space<semaphore_mem>> -> memref<1x!tpu.dma_semaphore, #tpu.memory_space<semaphore_mem>>
      %361 = tpu.memref_squeeze %360 : memref<1x!tpu.dma_semaphore, #tpu.memory_space<semaphore_mem>> -> memref<!tpu.dma_semaphore, #tpu.memory_space<semaphore_mem>>
      tpu.wait_dma2 semaphore(%361 : memref<!tpu.dma_semaphore, #tpu.memory_space<semaphore_mem>>) src(%358 : memref<1x512xf32, #tpu.memory_space<any>>) dst(%359 : memref<1x512xf32, #tpu.memory_space<vmem>>)
      %c0_i32_236 = arith.constant 0 : i32
      %c0_i32_237 = arith.constant 0 : i32
      %362 = tpu.memref_slice %arg2[%45, %c0_i32_237] : memref<1000x512xf32, #tpu.memory_space<any>> -> memref<1x512xf32, #tpu.memory_space<any>>
      %c7_i32_238 = arith.constant 7 : i32
      %c0_i32_239 = arith.constant 0 : i32
      %363 = tpu.memref_slice %arg7[%c7_i32_238, %c0_i32_239] : memref<64x512xf32, #tpu.memory_space<vmem>> -> memref<1x512xf32, #tpu.memory_space<vmem>>
      %364 = tpu.memref_slice %arg10[%c0_i32_236] : memref<8x!tpu.dma_semaphore, #tpu.memory_space<semaphore_mem>> -> memref<1x!tpu.dma_semaphore, #tpu.memory_space<semaphore_mem>>
      %365 = tpu.memref_squeeze %364 : memref<1x!tpu.dma_semaphore, #tpu.memory_space<semaphore_mem>> -> memref<!tpu.dma_semaphore, #tpu.memory_space<semaphore_mem>>
      tpu.wait_dma2 semaphore(%365 : memref<!tpu.dma_semaphore, #tpu.memory_space<semaphore_mem>>) src(%362 : memref<1x512xf32, #tpu.memory_space<any>>) dst(%363 : memref<1x512xf32, #tpu.memory_space<vmem>>)
      %c0_240 = arith.constant 0 : index
      %c0_241 = arith.constant 0 : index
      %366 = vector.load %arg7[%c0_240, %c0_241] : memref<64x512xf32, #tpu.memory_space<vmem>>, vector<8x512xf32>
      %c0_242 = arith.constant 0 : index
      %c0_243 = arith.constant 0 : index
      %367 = vector.load %arg8[%c0_242, %c0_243] : memref<8x128xf32, #tpu.memory_space<vmem>>, vector<8x128xf32>
      %c0_244 = arith.constant 0 : index
      %c0_245 = arith.constant 0 : index
      %368 = vector.load %arg9[%c0_244, %c0_245] : memref<8x128xf32, #tpu.memory_space<vmem>>, vector<8x128xf32>
      %c0_246 = arith.constant 0 : index
      %c0_247 = arith.constant 0 : index
      %369 = vector.load %arg3[%c0_246, %c0_247] : memref<128x512xf32, #tpu.memory_space<vmem>>, vector<128x512xf32>
      %cst_248 = arith.constant dense<0.000000e+00> : vector<8x512xf32>
      %370 = tpu.matmul %367, %369, %cst_248 {dimension_numbers = #tpu.dot_dimension_numbers<[1], [0], [0], [1], [0, 0, 1, 1], [], []>} : vector<8x128xf32>, vector<128x512xf32>, vector<8x512xf32> -> vector<8x512xf32>
      %371 = arith.addf %366, %370 : vector<8x512xf32>
      %372 = vector.extract_strided_slice %371 {offsets = [0, 0], sizes = [8, 128], strides = [1, 1]} : vector<8x512xf32> to vector<8x128xf32>
      %373 = arith.negf %372 : vector<8x128xf32>
      %374 = math.exp %373 : vector<8x128xf32>
      %cst_249 = arith.constant 1.000000e+00 : f32
      %375 = vector.broadcast %cst_249 : f32 to vector<8x128xf32>
      %376 = arith.addf %375, %374 : vector<8x128xf32>
      %377 = arith.divf %375, %376 : vector<8x128xf32>
      %378 = vector.extract_strided_slice %371 {offsets = [0, 128], sizes = [8, 128], strides = [1, 1]} : vector<8x512xf32> to vector<8x128xf32>
      %379 = arith.negf %378 : vector<8x128xf32>
      %380 = math.exp %379 : vector<8x128xf32>
      %cst_250 = arith.constant 1.000000e+00 : f32
      %381 = vector.broadcast %cst_250 : f32 to vector<8x128xf32>
      %382 = arith.addf %381, %380 : vector<8x128xf32>
      %383 = arith.divf %381, %382 : vector<8x128xf32>
      %384 = vector.extract_strided_slice %371 {offsets = [0, 256], sizes = [8, 128], strides = [1, 1]} : vector<8x512xf32> to vector<8x128xf32>
      %385 = math.tanh %384 : vector<8x128xf32>
      %386 = vector.extract_strided_slice %371 {offsets = [0, 384], sizes = [8, 128], strides = [1, 1]} : vector<8x512xf32> to vector<8x128xf32>
      %387 = arith.negf %386 : vector<8x128xf32>
      %388 = math.exp %387 : vector<8x128xf32>
      %cst_251 = arith.constant 1.000000e+00 : f32
      %389 = vector.broadcast %cst_251 : f32 to vector<8x128xf32>
      %390 = arith.addf %389, %388 : vector<8x128xf32>
      %391 = arith.divf %389, %390 : vector<8x128xf32>
      %392 = arith.mulf %383, %368 : vector<8x128xf32>
      %393 = arith.mulf %377, %385 : vector<8x128xf32>
      %394 = arith.addf %392, %393 : vector<8x128xf32>
      %c0_252 = arith.constant 0 : index
      %c0_253 = arith.constant 0 : index
      %395 = vector.load %arg9[%c0_252, %c0_253] : memref<8x128xf32, #tpu.memory_space<vmem>>, vector<8x128xf32>
      tpu.vector_store %arg9[%c0_252, %c0_253], %394 {strides = array<i32>} : memref<8x128xf32, #tpu.memory_space<vmem>>, vector<8x128xf32>,
      %396 = math.tanh %394 : vector<8x128xf32>
      %397 = arith.mulf %391, %396 : vector<8x128xf32>
      %c0_254 = arith.constant 0 : index
      %c0_255 = arith.constant 0 : index
      %398 = vector.load %arg8[%c0_254, %c0_255] : memref<8x128xf32, #tpu.memory_space<vmem>>, vector<8x128xf32>
      tpu.vector_store %arg8[%c0_254, %c0_255], %397 {strides = array<i32>} : memref<8x128xf32, #tpu.memory_space<vmem>>, vector<8x128xf32>,
      %c1_i32_256 = arith.constant 1 : i32
      %c0_i32_257 = arith.constant 0 : i32
      %399 = tpu.memref_slice %arg2[%50, %c0_i32_257] : memref<1000x512xf32, #tpu.memory_space<any>> -> memref<1x512xf32, #tpu.memory_space<any>>
      %c8_i32_258 = arith.constant 8 : i32
      %c0_i32_259 = arith.constant 0 : i32
      %400 = tpu.memref_slice %arg7[%c8_i32_258, %c0_i32_259] : memref<64x512xf32, #tpu.memory_space<vmem>> -> memref<1x512xf32, #tpu.memory_space<vmem>>
      %401 = tpu.memref_slice %arg10[%c1_i32_256] : memref<8x!tpu.dma_semaphore, #tpu.memory_space<semaphore_mem>> -> memref<1x!tpu.dma_semaphore, #tpu.memory_space<semaphore_mem>>
      %402 = tpu.memref_squeeze %401 : memref<1x!tpu.dma_semaphore, #tpu.memory_space<semaphore_mem>> -> memref<!tpu.dma_semaphore, #tpu.memory_space<semaphore_mem>>
      tpu.wait_dma2 semaphore(%402 : memref<!tpu.dma_semaphore, #tpu.memory_space<semaphore_mem>>) src(%399 : memref<1x512xf32, #tpu.memory_space<any>>) dst(%400 : memref<1x512xf32, #tpu.memory_space<vmem>>)
      %c1_i32_260 = arith.constant 1 : i32
      %c0_i32_261 = arith.constant 0 : i32
      %403 = tpu.memref_slice %arg2[%55, %c0_i32_261] : memref<1000x512xf32, #tpu.memory_space<any>> -> memref<1x512xf32, #tpu.memory_space<any>>
      %c9_i32_262 = arith.constant 9 : i32
      %c0_i32_263 = arith.constant 0 : i32
      %404 = tpu.memref_slice %arg7[%c9_i32_262, %c0_i32_263] : memref<64x512xf32, #tpu.memory_space<vmem>> -> memref<1x512xf32, #tpu.memory_space<vmem>>
      %405 = tpu.memref_slice %arg10[%c1_i32_260] : memref<8x!tpu.dma_semaphore, #tpu.memory_space<semaphore_mem>> -> memref<1x!tpu.dma_semaphore, #tpu.memory_space<semaphore_mem>>
      %406 = tpu.memref_squeeze %405 : memref<1x!tpu.dma_semaphore, #tpu.memory_space<semaphore_mem>> -> memref<!tpu.dma_semaphore, #tpu.memory_space<semaphore_mem>>
      tpu.wait_dma2 semaphore(%406 : memref<!tpu.dma_semaphore, #tpu.memory_space<semaphore_mem>>) src(%403 : memref<1x512xf32, #tpu.memory_space<any>>) dst(%404 : memref<1x512xf32, #tpu.memory_space<vmem>>)
      %c1_i32_264 = arith.constant 1 : i32
      %c0_i32_265 = arith.constant 0 : i32
      %407 = tpu.memref_slice %arg2[%60, %c0_i32_265] : memref<1000x512xf32, #tpu.memory_space<any>> -> memref<1x512xf32, #tpu.memory_space<any>>
      %c10_i32_266 = arith.constant 10 : i32
      %c0_i32_267 = arith.constant 0 : i32
      %408 = tpu.memref_slice %arg7[%c10_i32_266, %c0_i32_267] : memref<64x512xf32, #tpu.memory_space<vmem>> -> memref<1x512xf32, #tpu.memory_space<vmem>>
      %409 = tpu.memref_slice %arg10[%c1_i32_264] : memref<8x!tpu.dma_semaphore, #tpu.memory_space<semaphore_mem>> -> memref<1x!tpu.dma_semaphore, #tpu.memory_space<semaphore_mem>>
      %410 = tpu.memref_squeeze %409 : memref<1x!tpu.dma_semaphore, #tpu.memory_space<semaphore_mem>> -> memref<!tpu.dma_semaphore, #tpu.memory_space<semaphore_mem>>
      tpu.wait_dma2 semaphore(%410 : memref<!tpu.dma_semaphore, #tpu.memory_space<semaphore_mem>>) src(%407 : memref<1x512xf32, #tpu.memory_space<any>>) dst(%408 : memref<1x512xf32, #tpu.memory_space<vmem>>)
      %c1_i32_268 = arith.constant 1 : i32
      %c0_i32_269 = arith.constant 0 : i32
      %411 = tpu.memref_slice %arg2[%65, %c0_i32_269] : memref<1000x512xf32, #tpu.memory_space<any>> -> memref<1x512xf32, #tpu.memory_space<any>>
      %c11_i32_270 = arith.constant 11 : i32
      %c0_i32_271 = arith.constant 0 : i32
      %412 = tpu.memref_slice %arg7[%c11_i32_270, %c0_i32_271] : memref<64x512xf32, #tpu.memory_space<vmem>> -> memref<1x512xf32, #tpu.memory_space<vmem>>
      %413 = tpu.memref_slice %arg10[%c1_i32_268] : memref<8x!tpu.dma_semaphore, #tpu.memory_space<semaphore_mem>> -> memref<1x!tpu.dma_semaphore, #tpu.memory_space<semaphore_mem>>
      %414 = tpu.memref_squeeze %413 : memref<1x!tpu.dma_semaphore, #tpu.memory_space<semaphore_mem>> -> memref<!tpu.dma_semaphore, #tpu.memory_space<semaphore_mem>>
      tpu.wait_dma2 semaphore(%414 : memref<!tpu.dma_semaphore, #tpu.memory_space<semaphore_mem>>) src(%411 : memref<1x512xf32, #tpu.memory_space<any>>) dst(%412 : memref<1x512xf32, #tpu.memory_space<vmem>>)
      %c1_i32_272 = arith.constant 1 : i32
      %c0_i32_273 = arith.constant 0 : i32
      %415 = tpu.memref_slice %arg2[%70, %c0_i32_273] : memref<1000x512xf32, #tpu.memory_space<any>> -> memref<1x512xf32, #tpu.memory_space<any>>
      %c12_i32_274 = arith.constant 12 : i32
      %c0_i32_275 = arith.constant 0 : i32
      %416 = tpu.memref_slice %arg7[%c12_i32_274, %c0_i32_275] : memref<64x512xf32, #tpu.memory_space<vmem>> -> memref<1x512xf32, #tpu.memory_space<vmem>>
      %417 = tpu.memref_slice %arg10[%c1_i32_272] : memref<8x!tpu.dma_semaphore, #tpu.memory_space<semaphore_mem>> -> memref<1x!tpu.dma_semaphore, #tpu.memory_space<semaphore_mem>>
      %418 = tpu.memref_squeeze %417 : memref<1x!tpu.dma_semaphore, #tpu.memory_space<semaphore_mem>> -> memref<!tpu.dma_semaphore, #tpu.memory_space<semaphore_mem>>
      tpu.wait_dma2 semaphore(%418 : memref<!tpu.dma_semaphore, #tpu.memory_space<semaphore_mem>>) src(%415 : memref<1x512xf32, #tpu.memory_space<any>>) dst(%416 : memref<1x512xf32, #tpu.memory_space<vmem>>)
      %c1_i32_276 = arith.constant 1 : i32
      %c0_i32_277 = arith.constant 0 : i32
      %419 = tpu.memref_slice %arg2[%75, %c0_i32_277] : memref<1000x512xf32, #tpu.memory_space<any>> -> memref<1x512xf32, #tpu.memory_space<any>>
      %c13_i32_278 = arith.constant 13 : i32
      %c0_i32_279 = arith.constant 0 : i32
      %420 = tpu.memref_slice %arg7[%c13_i32_278, %c0_i32_279] : memref<64x512xf32, #tpu.memory_space<vmem>> -> memref<1x512xf32, #tpu.memory_space<vmem>>
      %421 = tpu.memref_slice %arg10[%c1_i32_276] : memref<8x!tpu.dma_semaphore, #tpu.memory_space<semaphore_mem>> -> memref<1x!tpu.dma_semaphore, #tpu.memory_space<semaphore_mem>>
      %422 = tpu.memref_squeeze %421 : memref<1x!tpu.dma_semaphore, #tpu.memory_space<semaphore_mem>> -> memref<!tpu.dma_semaphore, #tpu.memory_space<semaphore_mem>>
      tpu.wait_dma2 semaphore(%422 : memref<!tpu.dma_semaphore, #tpu.memory_space<semaphore_mem>>) src(%419 : memref<1x512xf32, #tpu.memory_space<any>>) dst(%420 : memref<1x512xf32, #tpu.memory_space<vmem>>)
      %c1_i32_280 = arith.constant 1 : i32
      %c0_i32_281 = arith.constant 0 : i32
      %423 = tpu.memref_slice %arg2[%80, %c0_i32_281] : memref<1000x512xf32, #tpu.memory_space<any>> -> memref<1x512xf32, #tpu.memory_space<any>>
      %c14_i32_282 = arith.constant 14 : i32
      %c0_i32_283 = arith.constant 0 : i32
      %424 = tpu.memref_slice %arg7[%c14_i32_282, %c0_i32_283] : memref<64x512xf32, #tpu.memory_space<vmem>> -> memref<1x512xf32, #tpu.memory_space<vmem>>
      %425 = tpu.memref_slice %arg10[%c1_i32_280] : memref<8x!tpu.dma_semaphore, #tpu.memory_space<semaphore_mem>> -> memref<1x!tpu.dma_semaphore, #tpu.memory_space<semaphore_mem>>
      %426 = tpu.memref_squeeze %425 : memref<1x!tpu.dma_semaphore, #tpu.memory_space<semaphore_mem>> -> memref<!tpu.dma_semaphore, #tpu.memory_space<semaphore_mem>>
      tpu.wait_dma2 semaphore(%426 : memref<!tpu.dma_semaphore, #tpu.memory_space<semaphore_mem>>) src(%423 : memref<1x512xf32, #tpu.memory_space<any>>) dst(%424 : memref<1x512xf32, #tpu.memory_space<vmem>>)
      %c1_i32_284 = arith.constant 1 : i32
      %c0_i32_285 = arith.constant 0 : i32
      %427 = tpu.memref_slice %arg2[%85, %c0_i32_285] : memref<1000x512xf32, #tpu.memory_space<any>> -> memref<1x512xf32, #tpu.memory_space<any>>
      %c15_i32_286 = arith.constant 15 : i32
      %c0_i32_287 = arith.constant 0 : i32
      %428 = tpu.memref_slice %arg7[%c15_i32_286, %c0_i32_287] : memref<64x512xf32, #tpu.memory_space<vmem>> -> memref<1x512xf32, #tpu.memory_space<vmem>>
      %429 = tpu.memref_slice %arg10[%c1_i32_284] : memref<8x!tpu.dma_semaphore, #tpu.memory_space<semaphore_mem>> -> memref<1x!tpu.dma_semaphore, #tpu.memory_space<semaphore_mem>>
      %430 = tpu.memref_squeeze %429 : memref<1x!tpu.dma_semaphore, #tpu.memory_space<semaphore_mem>> -> memref<!tpu.dma_semaphore, #tpu.memory_space<semaphore_mem>>
      tpu.wait_dma2 semaphore(%430 : memref<!tpu.dma_semaphore, #tpu.memory_space<semaphore_mem>>) src(%427 : memref<1x512xf32, #tpu.memory_space<any>>) dst(%428 : memref<1x512xf32, #tpu.memory_space<vmem>>)
      %c8_288 = arith.constant 8 : index
      %c0_289 = arith.constant 0 : index
      %431 = vector.load %arg7[%c8_288, %c0_289] : memref<64x512xf32, #tpu.memory_space<vmem>>, vector<8x512xf32>
      %c0_290 = arith.constant 0 : index
      %c0_291 = arith.constant 0 : index
      %432 = vector.load %arg8[%c0_290, %c0_291] : memref<8x128xf32, #tpu.memory_space<vmem>>, vector<8x128xf32>
      %c0_292 = arith.constant 0 : index
      %c0_293 = arith.constant 0 : index
      %433 = vector.load %arg9[%c0_292, %c0_293] : memref<8x128xf32, #tpu.memory_space<vmem>>, vector<8x128xf32>
      %c0_294 = arith.constant 0 : index
      %c0_295 = arith.constant 0 : index
      %434 = vector.load %arg3[%c0_294, %c0_295] : memref<128x512xf32, #tpu.memory_space<vmem>>, vector<128x512xf32>
      %cst_296 = arith.constant dense<0.000000e+00> : vector<8x512xf32>
      %435 = tpu.matmul %432, %434, %cst_296 {dimension_numbers = #tpu.dot_dimension_numbers<[1], [0], [0], [1], [0, 0, 1, 1], [], []>} : vector<8x128xf32>, vector<128x512xf32>, vector<8x512xf32> -> vector<8x512xf32>
      %436 = arith.addf %431, %435 : vector<8x512xf32>
      %437 = vector.extract_strided_slice %436 {offsets = [0, 0], sizes = [8, 128], strides = [1, 1]} : vector<8x512xf32> to vector<8x128xf32>
      %438 = arith.negf %437 : vector<8x128xf32>
      %439 = math.exp %438 : vector<8x128xf32>
      %cst_297 = arith.constant 1.000000e+00 : f32
      %440 = vector.broadcast %cst_297 : f32 to vector<8x128xf32>
      %441 = arith.addf %440, %439 : vector<8x128xf32>
      %442 = arith.divf %440, %441 : vector<8x128xf32>
      %443 = vector.extract_strided_slice %436 {offsets = [0, 128], sizes = [8, 128], strides = [1, 1]} : vector<8x512xf32> to vector<8x128xf32>
      %444 = arith.negf %443 : vector<8x128xf32>
      %445 = math.exp %444 : vector<8x128xf32>
      %cst_298 = arith.constant 1.000000e+00 : f32
      %446 = vector.broadcast %cst_298 : f32 to vector<8x128xf32>
      %447 = arith.addf %446, %445 : vector<8x128xf32>
      %448 = arith.divf %446, %447 : vector<8x128xf32>
      %449 = vector.extract_strided_slice %436 {offsets = [0, 256], sizes = [8, 128], strides = [1, 1]} : vector<8x512xf32> to vector<8x128xf32>
      %450 = math.tanh %449 : vector<8x128xf32>
      %451 = vector.extract_strided_slice %436 {offsets = [0, 384], sizes = [8, 128], strides = [1, 1]} : vector<8x512xf32> to vector<8x128xf32>
      %452 = arith.negf %451 : vector<8x128xf32>
      %453 = math.exp %452 : vector<8x128xf32>
      %cst_299 = arith.constant 1.000000e+00 : f32
      %454 = vector.broadcast %cst_299 : f32 to vector<8x128xf32>
      %455 = arith.addf %454, %453 : vector<8x128xf32>
      %456 = arith.divf %454, %455 : vector<8x128xf32>
      %457 = arith.mulf %448, %433 : vector<8x128xf32>
      %458 = arith.mulf %442, %450 : vector<8x128xf32>
      %459 = arith.addf %457, %458 : vector<8x128xf32>
      %c0_300 = arith.constant 0 : index
      %c0_301 = arith.constant 0 : index
      %460 = vector.load %arg9[%c0_300, %c0_301] : memref<8x128xf32, #tpu.memory_space<vmem>>, vector<8x128xf32>
      tpu.vector_store %arg9[%c0_300, %c0_301], %459 {strides = array<i32>} : memref<8x128xf32, #tpu.memory_space<vmem>>, vector<8x128xf32>,
      %461 = math.tanh %459 : vector<8x128xf32>
      %462 = arith.mulf %456, %461 : vector<8x128xf32>
      %c0_302 = arith.constant 0 : index
      %c0_303 = arith.constant 0 : index
      %463 = vector.load %arg8[%c0_302, %c0_303] : memref<8x128xf32, #tpu.memory_space<vmem>>, vector<8x128xf32>
      tpu.vector_store %arg8[%c0_302, %c0_303], %462 {strides = array<i32>} : memref<8x128xf32, #tpu.memory_space<vmem>>, vector<8x128xf32>,
      %c2_i32_304 = arith.constant 2 : i32
      %c0_i32_305 = arith.constant 0 : i32
      %464 = tpu.memref_slice %arg2[%90, %c0_i32_305] : memref<1000x512xf32, #tpu.memory_space<any>> -> memref<1x512xf32, #tpu.memory_space<any>>
      %c16_i32_306 = arith.constant 16 : i32
      %c0_i32_307 = arith.constant 0 : i32
      %465 = tpu.memref_slice %arg7[%c16_i32_306, %c0_i32_307] : memref<64x512xf32, #tpu.memory_space<vmem>> -> memref<1x512xf32, #tpu.memory_space<vmem>>
      %466 = tpu.memref_slice %arg10[%c2_i32_304] : memref<8x!tpu.dma_semaphore, #tpu.memory_space<semaphore_mem>> -> memref<1x!tpu.dma_semaphore, #tpu.memory_space<semaphore_mem>>
      %467 = tpu.memref_squeeze %466 : memref<1x!tpu.dma_semaphore, #tpu.memory_space<semaphore_mem>> -> memref<!tpu.dma_semaphore, #tpu.memory_space<semaphore_mem>>
      tpu.wait_dma2 semaphore(%467 : memref<!tpu.dma_semaphore, #tpu.memory_space<semaphore_mem>>) src(%464 : memref<1x512xf32, #tpu.memory_space<any>>) dst(%465 : memref<1x512xf32, #tpu.memory_space<vmem>>)
      %c2_i32_308 = arith.constant 2 : i32
      %c0_i32_309 = arith.constant 0 : i32
      %468 = tpu.memref_slice %arg2[%95, %c0_i32_309] : memref<1000x512xf32, #tpu.memory_space<any>> -> memref<1x512xf32, #tpu.memory_space<any>>
      %c17_i32_310 = arith.constant 17 : i32
      %c0_i32_311 = arith.constant 0 : i32
      %469 = tpu.memref_slice %arg7[%c17_i32_310, %c0_i32_311] : memref<64x512xf32, #tpu.memory_space<vmem>> -> memref<1x512xf32, #tpu.memory_space<vmem>>
      %470 = tpu.memref_slice %arg10[%c2_i32_308] : memref<8x!tpu.dma_semaphore, #tpu.memory_space<semaphore_mem>> -> memref<1x!tpu.dma_semaphore, #tpu.memory_space<semaphore_mem>>
      %471 = tpu.memref_squeeze %470 : memref<1x!tpu.dma_semaphore, #tpu.memory_space<semaphore_mem>> -> memref<!tpu.dma_semaphore, #tpu.memory_space<semaphore_mem>>
      tpu.wait_dma2 semaphore(%471 : memref<!tpu.dma_semaphore, #tpu.memory_space<semaphore_mem>>) src(%468 : memref<1x512xf32, #tpu.memory_space<any>>) dst(%469 : memref<1x512xf32, #tpu.memory_space<vmem>>)
      %c2_i32_312 = arith.constant 2 : i32
      %c0_i32_313 = arith.constant 0 : i32
      %472 = tpu.memref_slice %arg2[%100, %c0_i32_313] : memref<1000x512xf32, #tpu.memory_space<any>> -> memref<1x512xf32, #tpu.memory_space<any>>
      %c18_i32_314 = arith.constant 18 : i32
      %c0_i32_315 = arith.constant 0 : i32
      %473 = tpu.memref_slice %arg7[%c18_i32_314, %c0_i32_315] : memref<64x512xf32, #tpu.memory_space<vmem>> -> memref<1x512xf32, #tpu.memory_space<vmem>>
      %474 = tpu.memref_slice %arg10[%c2_i32_312] : memref<8x!tpu.dma_semaphore, #tpu.memory_space<semaphore_mem>> -> memref<1x!tpu.dma_semaphore, #tpu.memory_space<semaphore_mem>>
      %475 = tpu.memref_squeeze %474 : memref<1x!tpu.dma_semaphore, #tpu.memory_space<semaphore_mem>> -> memref<!tpu.dma_semaphore, #tpu.memory_space<semaphore_mem>>
      tpu.wait_dma2 semaphore(%475 : memref<!tpu.dma_semaphore, #tpu.memory_space<semaphore_mem>>) src(%472 : memref<1x512xf32, #tpu.memory_space<any>>) dst(%473 : memref<1x512xf32, #tpu.memory_space<vmem>>)
      %c2_i32_316 = arith.constant 2 : i32
      %c0_i32_317 = arith.constant 0 : i32
      %476 = tpu.memref_slice %arg2[%105, %c0_i32_317] : memref<1000x512xf32, #tpu.memory_space<any>> -> memref<1x512xf32, #tpu.memory_space<any>>
      %c19_i32_318 = arith.constant 19 : i32
      %c0_i32_319 = arith.constant 0 : i32
      %477 = tpu.memref_slice %arg7[%c19_i32_318, %c0_i32_319] : memref<64x512xf32, #tpu.memory_space<vmem>> -> memref<1x512xf32, #tpu.memory_space<vmem>>
      %478 = tpu.memref_slice %arg10[%c2_i32_316] : memref<8x!tpu.dma_semaphore, #tpu.memory_space<semaphore_mem>> -> memref<1x!tpu.dma_semaphore, #tpu.memory_space<semaphore_mem>>
      %479 = tpu.memref_squeeze %478 : memref<1x!tpu.dma_semaphore, #tpu.memory_space<semaphore_mem>> -> memref<!tpu.dma_semaphore, #tpu.memory_space<semaphore_mem>>
      tpu.wait_dma2 semaphore(%479 : memref<!tpu.dma_semaphore, #tpu.memory_space<semaphore_mem>>) src(%476 : memref<1x512xf32, #tpu.memory_space<any>>) dst(%477 : memref<1x512xf32, #tpu.memory_space<vmem>>)
      %c2_i32_320 = arith.constant 2 : i32
      %c0_i32_321 = arith.constant 0 : i32
      %480 = tpu.memref_slice %arg2[%110, %c0_i32_321] : memref<1000x512xf32, #tpu.memory_space<any>> -> memref<1x512xf32, #tpu.memory_space<any>>
      %c20_i32_322 = arith.constant 20 : i32
      %c0_i32_323 = arith.constant 0 : i32
      %481 = tpu.memref_slice %arg7[%c20_i32_322, %c0_i32_323] : memref<64x512xf32, #tpu.memory_space<vmem>> -> memref<1x512xf32, #tpu.memory_space<vmem>>
      %482 = tpu.memref_slice %arg10[%c2_i32_320] : memref<8x!tpu.dma_semaphore, #tpu.memory_space<semaphore_mem>> -> memref<1x!tpu.dma_semaphore, #tpu.memory_space<semaphore_mem>>
      %483 = tpu.memref_squeeze %482 : memref<1x!tpu.dma_semaphore, #tpu.memory_space<semaphore_mem>> -> memref<!tpu.dma_semaphore, #tpu.memory_space<semaphore_mem>>
      tpu.wait_dma2 semaphore(%483 : memref<!tpu.dma_semaphore, #tpu.memory_space<semaphore_mem>>) src(%480 : memref<1x512xf32, #tpu.memory_space<any>>) dst(%481 : memref<1x512xf32, #tpu.memory_space<vmem>>)
      %c2_i32_324 = arith.constant 2 : i32
      %c0_i32_325 = arith.constant 0 : i32
      %484 = tpu.memref_slice %arg2[%115, %c0_i32_325] : memref<1000x512xf32, #tpu.memory_space<any>> -> memref<1x512xf32, #tpu.memory_space<any>>
      %c21_i32_326 = arith.constant 21 : i32
      %c0_i32_327 = arith.constant 0 : i32
      %485 = tpu.memref_slice %arg7[%c21_i32_326, %c0_i32_327] : memref<64x512xf32, #tpu.memory_space<vmem>> -> memref<1x512xf32, #tpu.memory_space<vmem>>
      %486 = tpu.memref_slice %arg10[%c2_i32_324] : memref<8x!tpu.dma_semaphore, #tpu.memory_space<semaphore_mem>> -> memref<1x!tpu.dma_semaphore, #tpu.memory_space<semaphore_mem>>
      %487 = tpu.memref_squeeze %486 : memref<1x!tpu.dma_semaphore, #tpu.memory_space<semaphore_mem>> -> memref<!tpu.dma_semaphore, #tpu.memory_space<semaphore_mem>>
      tpu.wait_dma2 semaphore(%487 : memref<!tpu.dma_semaphore, #tpu.memory_space<semaphore_mem>>) src(%484 : memref<1x512xf32, #tpu.memory_space<any>>) dst(%485 : memref<1x512xf32, #tpu.memory_space<vmem>>)
      %c2_i32_328 = arith.constant 2 : i32
      %c0_i32_329 = arith.constant 0 : i32
      %488 = tpu.memref_slice %arg2[%120, %c0_i32_329] : memref<1000x512xf32, #tpu.memory_space<any>> -> memref<1x512xf32, #tpu.memory_space<any>>
      %c22_i32_330 = arith.constant 22 : i32
      %c0_i32_331 = arith.constant 0 : i32
      %489 = tpu.memref_slice %arg7[%c22_i32_330, %c0_i32_331] : memref<64x512xf32, #tpu.memory_space<vmem>> -> memref<1x512xf32, #tpu.memory_space<vmem>>
      %490 = tpu.memref_slice %arg10[%c2_i32_328] : memref<8x!tpu.dma_semaphore, #tpu.memory_space<semaphore_mem>> -> memref<1x!tpu.dma_semaphore, #tpu.memory_space<semaphore_mem>>
      %491 = tpu.memref_squeeze %490 : memref<1x!tpu.dma_semaphore, #tpu.memory_space<semaphore_mem>> -> memref<!tpu.dma_semaphore, #tpu.memory_space<semaphore_mem>>
      tpu.wait_dma2 semaphore(%491 : memref<!tpu.dma_semaphore, #tpu.memory_space<semaphore_mem>>) src(%488 : memref<1x512xf32, #tpu.memory_space<any>>) dst(%489 : memref<1x512xf32, #tpu.memory_space<vmem>>)
      %c2_i32_332 = arith.constant 2 : i32
      %c0_i32_333 = arith.constant 0 : i32
      %492 = tpu.memref_slice %arg2[%125, %c0_i32_333] : memref<1000x512xf32, #tpu.memory_space<any>> -> memref<1x512xf32, #tpu.memory_space<any>>
      %c23_i32_334 = arith.constant 23 : i32
      %c0_i32_335 = arith.constant 0 : i32
      %493 = tpu.memref_slice %arg7[%c23_i32_334, %c0_i32_335] : memref<64x512xf32, #tpu.memory_space<vmem>> -> memref<1x512xf32, #tpu.memory_space<vmem>>
      %494 = tpu.memref_slice %arg10[%c2_i32_332] : memref<8x!tpu.dma_semaphore, #tpu.memory_space<semaphore_mem>> -> memref<1x!tpu.dma_semaphore, #tpu.memory_space<semaphore_mem>>
      %495 = tpu.memref_squeeze %494 : memref<1x!tpu.dma_semaphore, #tpu.memory_space<semaphore_mem>> -> memref<!tpu.dma_semaphore, #tpu.memory_space<semaphore_mem>>
      tpu.wait_dma2 semaphore(%495 : memref<!tpu.dma_semaphore, #tpu.memory_space<semaphore_mem>>) src(%492 : memref<1x512xf32, #tpu.memory_space<any>>) dst(%493 : memref<1x512xf32, #tpu.memory_space<vmem>>)
      %c16_336 = arith.constant 16 : index
      %c0_337 = arith.constant 0 : index
      %496 = vector.load %arg7[%c16_336, %c0_337] : memref<64x512xf32, #tpu.memory_space<vmem>>, vector<8x512xf32>
      %c0_338 = arith.constant 0 : index
      %c0_339 = arith.constant 0 : index
      %497 = vector.load %arg8[%c0_338, %c0_339] : memref<8x128xf32, #tpu.memory_space<vmem>>, vector<8x128xf32>
      %c0_340 = arith.constant 0 : index
      %c0_341 = arith.constant 0 : index
      %498 = vector.load %arg9[%c0_340, %c0_341] : memref<8x128xf32, #tpu.memory_space<vmem>>, vector<8x128xf32>
      %c0_342 = arith.constant 0 : index
      %c0_343 = arith.constant 0 : index
      %499 = vector.load %arg3[%c0_342, %c0_343] : memref<128x512xf32, #tpu.memory_space<vmem>>, vector<128x512xf32>
      %cst_344 = arith.constant dense<0.000000e+00> : vector<8x512xf32>
      %500 = tpu.matmul %497, %499, %cst_344 {dimension_numbers = #tpu.dot_dimension_numbers<[1], [0], [0], [1], [0, 0, 1, 1], [], []>} : vector<8x128xf32>, vector<128x512xf32>, vector<8x512xf32> -> vector<8x512xf32>
      %501 = arith.addf %496, %500 : vector<8x512xf32>
      %502 = vector.extract_strided_slice %501 {offsets = [0, 0], sizes = [8, 128], strides = [1, 1]} : vector<8x512xf32> to vector<8x128xf32>
      %503 = arith.negf %502 : vector<8x128xf32>
      %504 = math.exp %503 : vector<8x128xf32>
      %cst_345 = arith.constant 1.000000e+00 : f32
      %505 = vector.broadcast %cst_345 : f32 to vector<8x128xf32>
      %506 = arith.addf %505, %504 : vector<8x128xf32>
      %507 = arith.divf %505, %506 : vector<8x128xf32>
      %508 = vector.extract_strided_slice %501 {offsets = [0, 128], sizes = [8, 128], strides = [1, 1]} : vector<8x512xf32> to vector<8x128xf32>
      %509 = arith.negf %508 : vector<8x128xf32>
      %510 = math.exp %509 : vector<8x128xf32>
      %cst_346 = arith.constant 1.000000e+00 : f32
      %511 = vector.broadcast %cst_346 : f32 to vector<8x128xf32>
      %512 = arith.addf %511, %510 : vector<8x128xf32>
      %513 = arith.divf %511, %512 : vector<8x128xf32>
      %514 = vector.extract_strided_slice %501 {offsets = [0, 256], sizes = [8, 128], strides = [1, 1]} : vector<8x512xf32> to vector<8x128xf32>
      %515 = math.tanh %514 : vector<8x128xf32>
      %516 = vector.extract_strided_slice %501 {offsets = [0, 384], sizes = [8, 128], strides = [1, 1]} : vector<8x512xf32> to vector<8x128xf32>
      %517 = arith.negf %516 : vector<8x128xf32>
      %518 = math.exp %517 : vector<8x128xf32>
      %cst_347 = arith.constant 1.000000e+00 : f32
      %519 = vector.broadcast %cst_347 : f32 to vector<8x128xf32>
      %520 = arith.addf %519, %518 : vector<8x128xf32>
      %521 = arith.divf %519, %520 : vector<8x128xf32>
      %522 = arith.mulf %513, %498 : vector<8x128xf32>
      %523 = arith.mulf %507, %515 : vector<8x128xf32>
      %524 = arith.addf %522, %523 : vector<8x128xf32>
      %c0_348 = arith.constant 0 : index
      %c0_349 = arith.constant 0 : index
      %525 = vector.load %arg9[%c0_348, %c0_349] : memref<8x128xf32, #tpu.memory_space<vmem>>, vector<8x128xf32>
      tpu.vector_store %arg9[%c0_348, %c0_349], %524 {strides = array<i32>} : memref<8x128xf32, #tpu.memory_space<vmem>>, vector<8x128xf32>,
      %526 = math.tanh %524 : vector<8x128xf32>
      %527 = arith.mulf %521, %526 : vector<8x128xf32>
      %c0_350 = arith.constant 0 : index
      %c0_351 = arith.constant 0 : index
      %528 = vector.load %arg8[%c0_350, %c0_351] : memref<8x128xf32, #tpu.memory_space<vmem>>, vector<8x128xf32>
      tpu.vector_store %arg8[%c0_350, %c0_351], %527 {strides = array<i32>} : memref<8x128xf32, #tpu.memory_space<vmem>>, vector<8x128xf32>,
      %c3_i32_352 = arith.constant 3 : i32
      %c0_i32_353 = arith.constant 0 : i32
      %529 = tpu.memref_slice %arg2[%130, %c0_i32_353] : memref<1000x512xf32, #tpu.memory_space<any>> -> memref<1x512xf32, #tpu.memory_space<any>>
      %c24_i32_354 = arith.constant 24 : i32
      %c0_i32_355 = arith.constant 0 : i32
      %530 = tpu.memref_slice %arg7[%c24_i32_354, %c0_i32_355] : memref<64x512xf32, #tpu.memory_space<vmem>> -> memref<1x512xf32, #tpu.memory_space<vmem>>
      %531 = tpu.memref_slice %arg10[%c3_i32_352] : memref<8x!tpu.dma_semaphore, #tpu.memory_space<semaphore_mem>> -> memref<1x!tpu.dma_semaphore, #tpu.memory_space<semaphore_mem>>
      %532 = tpu.memref_squeeze %531 : memref<1x!tpu.dma_semaphore, #tpu.memory_space<semaphore_mem>> -> memref<!tpu.dma_semaphore, #tpu.memory_space<semaphore_mem>>
      tpu.wait_dma2 semaphore(%532 : memref<!tpu.dma_semaphore, #tpu.memory_space<semaphore_mem>>) src(%529 : memref<1x512xf32, #tpu.memory_space<any>>) dst(%530 : memref<1x512xf32, #tpu.memory_space<vmem>>)
      %c3_i32_356 = arith.constant 3 : i32
      %c0_i32_357 = arith.constant 0 : i32
      %533 = tpu.memref_slice %arg2[%135, %c0_i32_357] : memref<1000x512xf32, #tpu.memory_space<any>> -> memref<1x512xf32, #tpu.memory_space<any>>
      %c25_i32_358 = arith.constant 25 : i32
      %c0_i32_359 = arith.constant 0 : i32
      %534 = tpu.memref_slice %arg7[%c25_i32_358, %c0_i32_359] : memref<64x512xf32, #tpu.memory_space<vmem>> -> memref<1x512xf32, #tpu.memory_space<vmem>>
      %535 = tpu.memref_slice %arg10[%c3_i32_356] : memref<8x!tpu.dma_semaphore, #tpu.memory_space<semaphore_mem>> -> memref<1x!tpu.dma_semaphore, #tpu.memory_space<semaphore_mem>>
      %536 = tpu.memref_squeeze %535 : memref<1x!tpu.dma_semaphore, #tpu.memory_space<semaphore_mem>> -> memref<!tpu.dma_semaphore, #tpu.memory_space<semaphore_mem>>
      tpu.wait_dma2 semaphore(%536 : memref<!tpu.dma_semaphore, #tpu.memory_space<semaphore_mem>>) src(%533 : memref<1x512xf32, #tpu.memory_space<any>>) dst(%534 : memref<1x512xf32, #tpu.memory_space<vmem>>)
      %c3_i32_360 = arith.constant 3 : i32
      %c0_i32_361 = arith.constant 0 : i32
      %537 = tpu.memref_slice %arg2[%140, %c0_i32_361] : memref<1000x512xf32, #tpu.memory_space<any>> -> memref<1x512xf32, #tpu.memory_space<any>>
      %c26_i32_362 = arith.constant 26 : i32
      %c0_i32_363 = arith.constant 0 : i32
      %538 = tpu.memref_slice %arg7[%c26_i32_362, %c0_i32_363] : memref<64x512xf32, #tpu.memory_space<vmem>> -> memref<1x512xf32, #tpu.memory_space<vmem>>
      %539 = tpu.memref_slice %arg10[%c3_i32_360] : memref<8x!tpu.dma_semaphore, #tpu.memory_space<semaphore_mem>> -> memref<1x!tpu.dma_semaphore, #tpu.memory_space<semaphore_mem>>
      %540 = tpu.memref_squeeze %539 : memref<1x!tpu.dma_semaphore, #tpu.memory_space<semaphore_mem>> -> memref<!tpu.dma_semaphore, #tpu.memory_space<semaphore_mem>>
      tpu.wait_dma2 semaphore(%540 : memref<!tpu.dma_semaphore, #tpu.memory_space<semaphore_mem>>) src(%537 : memref<1x512xf32, #tpu.memory_space<any>>) dst(%538 : memref<1x512xf32, #tpu.memory_space<vmem>>)
      %c3_i32_364 = arith.constant 3 : i32
      %c0_i32_365 = arith.constant 0 : i32
      %541 = tpu.memref_slice %arg2[%145, %c0_i32_365] : memref<1000x512xf32, #tpu.memory_space<any>> -> memref<1x512xf32, #tpu.memory_space<any>>
      %c27_i32_366 = arith.constant 27 : i32
      %c0_i32_367 = arith.constant 0 : i32
      %542 = tpu.memref_slice %arg7[%c27_i32_366, %c0_i32_367] : memref<64x512xf32, #tpu.memory_space<vmem>> -> memref<1x512xf32, #tpu.memory_space<vmem>>
      %543 = tpu.memref_slice %arg10[%c3_i32_364] : memref<8x!tpu.dma_semaphore, #tpu.memory_space<semaphore_mem>> -> memref<1x!tpu.dma_semaphore, #tpu.memory_space<semaphore_mem>>
      %544 = tpu.memref_squeeze %543 : memref<1x!tpu.dma_semaphore, #tpu.memory_space<semaphore_mem>> -> memref<!tpu.dma_semaphore, #tpu.memory_space<semaphore_mem>>
      tpu.wait_dma2 semaphore(%544 : memref<!tpu.dma_semaphore, #tpu.memory_space<semaphore_mem>>) src(%541 : memref<1x512xf32, #tpu.memory_space<any>>) dst(%542 : memref<1x512xf32, #tpu.memory_space<vmem>>)
      %c3_i32_368 = arith.constant 3 : i32
      %c0_i32_369 = arith.constant 0 : i32
      %545 = tpu.memref_slice %arg2[%150, %c0_i32_369] : memref<1000x512xf32, #tpu.memory_space<any>> -> memref<1x512xf32, #tpu.memory_space<any>>
      %c28_i32_370 = arith.constant 28 : i32
      %c0_i32_371 = arith.constant 0 : i32
      %546 = tpu.memref_slice %arg7[%c28_i32_370, %c0_i32_371] : memref<64x512xf32, #tpu.memory_space<vmem>> -> memref<1x512xf32, #tpu.memory_space<vmem>>
      %547 = tpu.memref_slice %arg10[%c3_i32_368] : memref<8x!tpu.dma_semaphore, #tpu.memory_space<semaphore_mem>> -> memref<1x!tpu.dma_semaphore, #tpu.memory_space<semaphore_mem>>
      %548 = tpu.memref_squeeze %547 : memref<1x!tpu.dma_semaphore, #tpu.memory_space<semaphore_mem>> -> memref<!tpu.dma_semaphore, #tpu.memory_space<semaphore_mem>>
      tpu.wait_dma2 semaphore(%548 : memref<!tpu.dma_semaphore, #tpu.memory_space<semaphore_mem>>) src(%545 : memref<1x512xf32, #tpu.memory_space<any>>) dst(%546 : memref<1x512xf32, #tpu.memory_space<vmem>>)
      %c3_i32_372 = arith.constant 3 : i32
      %c0_i32_373 = arith.constant 0 : i32
      %549 = tpu.memref_slice %arg2[%155, %c0_i32_373] : memref<1000x512xf32, #tpu.memory_space<any>> -> memref<1x512xf32, #tpu.memory_space<any>>
      %c29_i32_374 = arith.constant 29 : i32
      %c0_i32_375 = arith.constant 0 : i32
      %550 = tpu.memref_slice %arg7[%c29_i32_374, %c0_i32_375] : memref<64x512xf32, #tpu.memory_space<vmem>> -> memref<1x512xf32, #tpu.memory_space<vmem>>
      %551 = tpu.memref_slice %arg10[%c3_i32_372] : memref<8x!tpu.dma_semaphore, #tpu.memory_space<semaphore_mem>> -> memref<1x!tpu.dma_semaphore, #tpu.memory_space<semaphore_mem>>
      %552 = tpu.memref_squeeze %551 : memref<1x!tpu.dma_semaphore, #tpu.memory_space<semaphore_mem>> -> memref<!tpu.dma_semaphore, #tpu.memory_space<semaphore_mem>>
      tpu.wait_dma2 semaphore(%552 : memref<!tpu.dma_semaphore, #tpu.memory_space<semaphore_mem>>) src(%549 : memref<1x512xf32, #tpu.memory_space<any>>) dst(%550 : memref<1x512xf32, #tpu.memory_space<vmem>>)
      %c3_i32_376 = arith.constant 3 : i32
      %c0_i32_377 = arith.constant 0 : i32
      %553 = tpu.memref_slice %arg2[%160, %c0_i32_377] : memref<1000x512xf32, #tpu.memory_space<any>> -> memref<1x512xf32, #tpu.memory_space<any>>
      %c30_i32_378 = arith.constant 30 : i32
      %c0_i32_379 = arith.constant 0 : i32
      %554 = tpu.memref_slice %arg7[%c30_i32_378, %c0_i32_379] : memref<64x512xf32, #tpu.memory_space<vmem>> -> memref<1x512xf32, #tpu.memory_space<vmem>>
      %555 = tpu.memref_slice %arg10[%c3_i32_376] : memref<8x!tpu.dma_semaphore, #tpu.memory_space<semaphore_mem>> -> memref<1x!tpu.dma_semaphore, #tpu.memory_space<semaphore_mem>>
      %556 = tpu.memref_squeeze %555 : memref<1x!tpu.dma_semaphore, #tpu.memory_space<semaphore_mem>> -> memref<!tpu.dma_semaphore, #tpu.memory_space<semaphore_mem>>
      tpu.wait_dma2 semaphore(%556 : memref<!tpu.dma_semaphore, #tpu.memory_space<semaphore_mem>>) src(%553 : memref<1x512xf32, #tpu.memory_space<any>>) dst(%554 : memref<1x512xf32, #tpu.memory_space<vmem>>)
      %c3_i32_380 = arith.constant 3 : i32
      %c0_i32_381 = arith.constant 0 : i32
      %557 = tpu.memref_slice %arg2[%165, %c0_i32_381] : memref<1000x512xf32, #tpu.memory_space<any>> -> memref<1x512xf32, #tpu.memory_space<any>>
      %c31_i32_382 = arith.constant 31 : i32
      %c0_i32_383 = arith.constant 0 : i32
      %558 = tpu.memref_slice %arg7[%c31_i32_382, %c0_i32_383] : memref<64x512xf32, #tpu.memory_space<vmem>> -> memref<1x512xf32, #tpu.memory_space<vmem>>
      %559 = tpu.memref_slice %arg10[%c3_i32_380] : memref<8x!tpu.dma_semaphore, #tpu.memory_space<semaphore_mem>> -> memref<1x!tpu.dma_semaphore, #tpu.memory_space<semaphore_mem>>
      %560 = tpu.memref_squeeze %559 : memref<1x!tpu.dma_semaphore, #tpu.memory_space<semaphore_mem>> -> memref<!tpu.dma_semaphore, #tpu.memory_space<semaphore_mem>>
      tpu.wait_dma2 semaphore(%560 : memref<!tpu.dma_semaphore, #tpu.memory_space<semaphore_mem>>) src(%557 : memref<1x512xf32, #tpu.memory_space<any>>) dst(%558 : memref<1x512xf32, #tpu.memory_space<vmem>>)
      %c24_384 = arith.constant 24 : index
      %c0_385 = arith.constant 0 : index
      %561 = vector.load %arg7[%c24_384, %c0_385] : memref<64x512xf32, #tpu.memory_space<vmem>>, vector<8x512xf32>
      %c0_386 = arith.constant 0 : index
      %c0_387 = arith.constant 0 : index
      %562 = vector.load %arg8[%c0_386, %c0_387] : memref<8x128xf32, #tpu.memory_space<vmem>>, vector<8x128xf32>
      %c0_388 = arith.constant 0 : index
      %c0_389 = arith.constant 0 : index
      %563 = vector.load %arg9[%c0_388, %c0_389] : memref<8x128xf32, #tpu.memory_space<vmem>>, vector<8x128xf32>
      %c0_390 = arith.constant 0 : index
      %c0_391 = arith.constant 0 : index
      %564 = vector.load %arg3[%c0_390, %c0_391] : memref<128x512xf32, #tpu.memory_space<vmem>>, vector<128x512xf32>
      %cst_392 = arith.constant dense<0.000000e+00> : vector<8x512xf32>
      %565 = tpu.matmul %562, %564, %cst_392 {dimension_numbers = #tpu.dot_dimension_numbers<[1], [0], [0], [1], [0, 0, 1, 1], [], []>} : vector<8x128xf32>, vector<128x512xf32>, vector<8x512xf32> -> vector<8x512xf32>
      %566 = arith.addf %561, %565 : vector<8x512xf32>
      %567 = vector.extract_strided_slice %566 {offsets = [0, 0], sizes = [8, 128], strides = [1, 1]} : vector<8x512xf32> to vector<8x128xf32>
      %568 = arith.negf %567 : vector<8x128xf32>
      %569 = math.exp %568 : vector<8x128xf32>
      %cst_393 = arith.constant 1.000000e+00 : f32
      %570 = vector.broadcast %cst_393 : f32 to vector<8x128xf32>
      %571 = arith.addf %570, %569 : vector<8x128xf32>
      %572 = arith.divf %570, %571 : vector<8x128xf32>
      %573 = vector.extract_strided_slice %566 {offsets = [0, 128], sizes = [8, 128], strides = [1, 1]} : vector<8x512xf32> to vector<8x128xf32>
      %574 = arith.negf %573 : vector<8x128xf32>
      %575 = math.exp %574 : vector<8x128xf32>
      %cst_394 = arith.constant 1.000000e+00 : f32
      %576 = vector.broadcast %cst_394 : f32 to vector<8x128xf32>
      %577 = arith.addf %576, %575 : vector<8x128xf32>
      %578 = arith.divf %576, %577 : vector<8x128xf32>
      %579 = vector.extract_strided_slice %566 {offsets = [0, 256], sizes = [8, 128], strides = [1, 1]} : vector<8x512xf32> to vector<8x128xf32>
      %580 = math.tanh %579 : vector<8x128xf32>
      %581 = vector.extract_strided_slice %566 {offsets = [0, 384], sizes = [8, 128], strides = [1, 1]} : vector<8x512xf32> to vector<8x128xf32>
      %582 = arith.negf %581 : vector<8x128xf32>
      %583 = math.exp %582 : vector<8x128xf32>
      %cst_395 = arith.constant 1.000000e+00 : f32
      %584 = vector.broadcast %cst_395 : f32 to vector<8x128xf32>
      %585 = arith.addf %584, %583 : vector<8x128xf32>
      %586 = arith.divf %584, %585 : vector<8x128xf32>
      %587 = arith.mulf %578, %563 : vector<8x128xf32>
      %588 = arith.mulf %572, %580 : vector<8x128xf32>
      %589 = arith.addf %587, %588 : vector<8x128xf32>
      %c0_396 = arith.constant 0 : index
      %c0_397 = arith.constant 0 : index
      %590 = vector.load %arg9[%c0_396, %c0_397] : memref<8x128xf32, #tpu.memory_space<vmem>>, vector<8x128xf32>
      tpu.vector_store %arg9[%c0_396, %c0_397], %589 {strides = array<i32>} : memref<8x128xf32, #tpu.memory_space<vmem>>, vector<8x128xf32>,
      %591 = math.tanh %589 : vector<8x128xf32>
      %592 = arith.mulf %586, %591 : vector<8x128xf32>
      %c0_398 = arith.constant 0 : index
      %c0_399 = arith.constant 0 : index
      %593 = vector.load %arg8[%c0_398, %c0_399] : memref<8x128xf32, #tpu.memory_space<vmem>>, vector<8x128xf32>
      tpu.vector_store %arg8[%c0_398, %c0_399], %592 {strides = array<i32>} : memref<8x128xf32, #tpu.memory_space<vmem>>, vector<8x128xf32>,
      %c4_i32_400 = arith.constant 4 : i32
      %c0_i32_401 = arith.constant 0 : i32
      %594 = tpu.memref_slice %arg2[%170, %c0_i32_401] : memref<1000x512xf32, #tpu.memory_space<any>> -> memref<1x512xf32, #tpu.memory_space<any>>
      %c32_i32_402 = arith.constant 32 : i32
      %c0_i32_403 = arith.constant 0 : i32
      %595 = tpu.memref_slice %arg7[%c32_i32_402, %c0_i32_403] : memref<64x512xf32, #tpu.memory_space<vmem>> -> memref<1x512xf32, #tpu.memory_space<vmem>>
      %596 = tpu.memref_slice %arg10[%c4_i32_400] : memref<8x!tpu.dma_semaphore, #tpu.memory_space<semaphore_mem>> -> memref<1x!tpu.dma_semaphore, #tpu.memory_space<semaphore_mem>>
      %597 = tpu.memref_squeeze %596 : memref<1x!tpu.dma_semaphore, #tpu.memory_space<semaphore_mem>> -> memref<!tpu.dma_semaphore, #tpu.memory_space<semaphore_mem>>
      tpu.wait_dma2 semaphore(%597 : memref<!tpu.dma_semaphore, #tpu.memory_space<semaphore_mem>>) src(%594 : memref<1x512xf32, #tpu.memory_space<any>>) dst(%595 : memref<1x512xf32, #tpu.memory_space<vmem>>)
      %c4_i32_404 = arith.constant 4 : i32
      %c0_i32_405 = arith.constant 0 : i32
      %598 = tpu.memref_slice %arg2[%175, %c0_i32_405] : memref<1000x512xf32, #tpu.memory_space<any>> -> memref<1x512xf32, #tpu.memory_space<any>>
      %c33_i32_406 = arith.constant 33 : i32
      %c0_i32_407 = arith.constant 0 : i32
      %599 = tpu.memref_slice %arg7[%c33_i32_406, %c0_i32_407] : memref<64x512xf32, #tpu.memory_space<vmem>> -> memref<1x512xf32, #tpu.memory_space<vmem>>
      %600 = tpu.memref_slice %arg10[%c4_i32_404] : memref<8x!tpu.dma_semaphore, #tpu.memory_space<semaphore_mem>> -> memref<1x!tpu.dma_semaphore, #tpu.memory_space<semaphore_mem>>
      %601 = tpu.memref_squeeze %600 : memref<1x!tpu.dma_semaphore, #tpu.memory_space<semaphore_mem>> -> memref<!tpu.dma_semaphore, #tpu.memory_space<semaphore_mem>>
      tpu.wait_dma2 semaphore(%601 : memref<!tpu.dma_semaphore, #tpu.memory_space<semaphore_mem>>) src(%598 : memref<1x512xf32, #tpu.memory_space<any>>) dst(%599 : memref<1x512xf32, #tpu.memory_space<vmem>>)
      %c4_i32_408 = arith.constant 4 : i32
      %c0_i32_409 = arith.constant 0 : i32
      %602 = tpu.memref_slice %arg2[%180, %c0_i32_409] : memref<1000x512xf32, #tpu.memory_space<any>> -> memref<1x512xf32, #tpu.memory_space<any>>
      %c34_i32_410 = arith.constant 34 : i32
      %c0_i32_411 = arith.constant 0 : i32
      %603 = tpu.memref_slice %arg7[%c34_i32_410, %c0_i32_411] : memref<64x512xf32, #tpu.memory_space<vmem>> -> memref<1x512xf32, #tpu.memory_space<vmem>>
      %604 = tpu.memref_slice %arg10[%c4_i32_408] : memref<8x!tpu.dma_semaphore, #tpu.memory_space<semaphore_mem>> -> memref<1x!tpu.dma_semaphore, #tpu.memory_space<semaphore_mem>>
      %605 = tpu.memref_squeeze %604 : memref<1x!tpu.dma_semaphore, #tpu.memory_space<semaphore_mem>> -> memref<!tpu.dma_semaphore, #tpu.memory_space<semaphore_mem>>
      tpu.wait_dma2 semaphore(%605 : memref<!tpu.dma_semaphore, #tpu.memory_space<semaphore_mem>>) src(%602 : memref<1x512xf32, #tpu.memory_space<any>>) dst(%603 : memref<1x512xf32, #tpu.memory_space<vmem>>)
      %c4_i32_412 = arith.constant 4 : i32
      %c0_i32_413 = arith.constant 0 : i32
      %606 = tpu.memref_slice %arg2[%185, %c0_i32_413] : memref<1000x512xf32, #tpu.memory_space<any>> -> memref<1x512xf32, #tpu.memory_space<any>>
      %c35_i32_414 = arith.constant 35 : i32
      %c0_i32_415 = arith.constant 0 : i32
      %607 = tpu.memref_slice %arg7[%c35_i32_414, %c0_i32_415] : memref<64x512xf32, #tpu.memory_space<vmem>> -> memref<1x512xf32, #tpu.memory_space<vmem>>
      %608 = tpu.memref_slice %arg10[%c4_i32_412] : memref<8x!tpu.dma_semaphore, #tpu.memory_space<semaphore_mem>> -> memref<1x!tpu.dma_semaphore, #tpu.memory_space<semaphore_mem>>
      %609 = tpu.memref_squeeze %608 : memref<1x!tpu.dma_semaphore, #tpu.memory_space<semaphore_mem>> -> memref<!tpu.dma_semaphore, #tpu.memory_space<semaphore_mem>>
      tpu.wait_dma2 semaphore(%609 : memref<!tpu.dma_semaphore, #tpu.memory_space<semaphore_mem>>) src(%606 : memref<1x512xf32, #tpu.memory_space<any>>) dst(%607 : memref<1x512xf32, #tpu.memory_space<vmem>>)
      %c4_i32_416 = arith.constant 4 : i32
      %c0_i32_417 = arith.constant 0 : i32
      %610 = tpu.memref_slice %arg2[%190, %c0_i32_417] : memref<1000x512xf32, #tpu.memory_space<any>> -> memref<1x512xf32, #tpu.memory_space<any>>
      %c36_i32_418 = arith.constant 36 : i32
      %c0_i32_419 = arith.constant 0 : i32
      %611 = tpu.memref_slice %arg7[%c36_i32_418, %c0_i32_419] : memref<64x512xf32, #tpu.memory_space<vmem>> -> memref<1x512xf32, #tpu.memory_space<vmem>>
      %612 = tpu.memref_slice %arg10[%c4_i32_416] : memref<8x!tpu.dma_semaphore, #tpu.memory_space<semaphore_mem>> -> memref<1x!tpu.dma_semaphore, #tpu.memory_space<semaphore_mem>>
      %613 = tpu.memref_squeeze %612 : memref<1x!tpu.dma_semaphore, #tpu.memory_space<semaphore_mem>> -> memref<!tpu.dma_semaphore, #tpu.memory_space<semaphore_mem>>
      tpu.wait_dma2 semaphore(%613 : memref<!tpu.dma_semaphore, #tpu.memory_space<semaphore_mem>>) src(%610 : memref<1x512xf32, #tpu.memory_space<any>>) dst(%611 : memref<1x512xf32, #tpu.memory_space<vmem>>)
      %c4_i32_420 = arith.constant 4 : i32
      %c0_i32_421 = arith.constant 0 : i32
      %614 = tpu.memref_slice %arg2[%195, %c0_i32_421] : memref<1000x512xf32, #tpu.memory_space<any>> -> memref<1x512xf32, #tpu.memory_space<any>>
      %c37_i32_422 = arith.constant 37 : i32
      %c0_i32_423 = arith.constant 0 : i32
      %615 = tpu.memref_slice %arg7[%c37_i32_422, %c0_i32_423] : memref<64x512xf32, #tpu.memory_space<vmem>> -> memref<1x512xf32, #tpu.memory_space<vmem>>
      %616 = tpu.memref_slice %arg10[%c4_i32_420] : memref<8x!tpu.dma_semaphore, #tpu.memory_space<semaphore_mem>> -> memref<1x!tpu.dma_semaphore, #tpu.memory_space<semaphore_mem>>
      %617 = tpu.memref_squeeze %616 : memref<1x!tpu.dma_semaphore, #tpu.memory_space<semaphore_mem>> -> memref<!tpu.dma_semaphore, #tpu.memory_space<semaphore_mem>>
      tpu.wait_dma2 semaphore(%617 : memref<!tpu.dma_semaphore, #tpu.memory_space<semaphore_mem>>) src(%614 : memref<1x512xf32, #tpu.memory_space<any>>) dst(%615 : memref<1x512xf32, #tpu.memory_space<vmem>>)
      %c4_i32_424 = arith.constant 4 : i32
      %c0_i32_425 = arith.constant 0 : i32
      %618 = tpu.memref_slice %arg2[%200, %c0_i32_425] : memref<1000x512xf32, #tpu.memory_space<any>> -> memref<1x512xf32, #tpu.memory_space<any>>
      %c38_i32_426 = arith.constant 38 : i32
      %c0_i32_427 = arith.constant 0 : i32
      %619 = tpu.memref_slice %arg7[%c38_i32_426, %c0_i32_427] : memref<64x512xf32, #tpu.memory_space<vmem>> -> memref<1x512xf32, #tpu.memory_space<vmem>>
      %620 = tpu.memref_slice %arg10[%c4_i32_424] : memref<8x!tpu.dma_semaphore, #tpu.memory_space<semaphore_mem>> -> memref<1x!tpu.dma_semaphore, #tpu.memory_space<semaphore_mem>>
      %621 = tpu.memref_squeeze %620 : memref<1x!tpu.dma_semaphore, #tpu.memory_space<semaphore_mem>> -> memref<!tpu.dma_semaphore, #tpu.memory_space<semaphore_mem>>
      tpu.wait_dma2 semaphore(%621 : memref<!tpu.dma_semaphore, #tpu.memory_space<semaphore_mem>>) src(%618 : memref<1x512xf32, #tpu.memory_space<any>>) dst(%619 : memref<1x512xf32, #tpu.memory_space<vmem>>)
      %c4_i32_428 = arith.constant 4 : i32
      %c0_i32_429 = arith.constant 0 : i32
      %622 = tpu.memref_slice %arg2[%205, %c0_i32_429] : memref<1000x512xf32, #tpu.memory_space<any>> -> memref<1x512xf32, #tpu.memory_space<any>>
      %c39_i32_430 = arith.constant 39 : i32
      %c0_i32_431 = arith.constant 0 : i32
      %623 = tpu.memref_slice %arg7[%c39_i32_430, %c0_i32_431] : memref<64x512xf32, #tpu.memory_space<vmem>> -> memref<1x512xf32, #tpu.memory_space<vmem>>
      %624 = tpu.memref_slice %arg10[%c4_i32_428] : memref<8x!tpu.dma_semaphore, #tpu.memory_space<semaphore_mem>> -> memref<1x!tpu.dma_semaphore, #tpu.memory_space<semaphore_mem>>
      %625 = tpu.memref_squeeze %624 : memref<1x!tpu.dma_semaphore, #tpu.memory_space<semaphore_mem>> -> memref<!tpu.dma_semaphore, #tpu.memory_space<semaphore_mem>>
      tpu.wait_dma2 semaphore(%625 : memref<!tpu.dma_semaphore, #tpu.memory_space<semaphore_mem>>) src(%622 : memref<1x512xf32, #tpu.memory_space<any>>) dst(%623 : memref<1x512xf32, #tpu.memory_space<vmem>>)
      %c32_432 = arith.constant 32 : index
      %c0_433 = arith.constant 0 : index
      %626 = vector.load %arg7[%c32_432, %c0_433] : memref<64x512xf32, #tpu.memory_space<vmem>>, vector<8x512xf32>
      %c0_434 = arith.constant 0 : index
      %c0_435 = arith.constant 0 : index
      %627 = vector.load %arg8[%c0_434, %c0_435] : memref<8x128xf32, #tpu.memory_space<vmem>>, vector<8x128xf32>
      %c0_436 = arith.constant 0 : index
      %c0_437 = arith.constant 0 : index
      %628 = vector.load %arg9[%c0_436, %c0_437] : memref<8x128xf32, #tpu.memory_space<vmem>>, vector<8x128xf32>
      %c0_438 = arith.constant 0 : index
      %c0_439 = arith.constant 0 : index
      %629 = vector.load %arg3[%c0_438, %c0_439] : memref<128x512xf32, #tpu.memory_space<vmem>>, vector<128x512xf32>
      %cst_440 = arith.constant dense<0.000000e+00> : vector<8x512xf32>
      %630 = tpu.matmul %627, %629, %cst_440 {dimension_numbers = #tpu.dot_dimension_numbers<[1], [0], [0], [1], [0, 0, 1, 1], [], []>} : vector<8x128xf32>, vector<128x512xf32>, vector<8x512xf32> -> vector<8x512xf32>
      %631 = arith.addf %626, %630 : vector<8x512xf32>
      %632 = vector.extract_strided_slice %631 {offsets = [0, 0], sizes = [8, 128], strides = [1, 1]} : vector<8x512xf32> to vector<8x128xf32>
      %633 = arith.negf %632 : vector<8x128xf32>
      %634 = math.exp %633 : vector<8x128xf32>
      %cst_441 = arith.constant 1.000000e+00 : f32
      %635 = vector.broadcast %cst_441 : f32 to vector<8x128xf32>
      %636 = arith.addf %635, %634 : vector<8x128xf32>
      %637 = arith.divf %635, %636 : vector<8x128xf32>
      %638 = vector.extract_strided_slice %631 {offsets = [0, 128], sizes = [8, 128], strides = [1, 1]} : vector<8x512xf32> to vector<8x128xf32>
      %639 = arith.negf %638 : vector<8x128xf32>
      %640 = math.exp %639 : vector<8x128xf32>
      %cst_442 = arith.constant 1.000000e+00 : f32
      %641 = vector.broadcast %cst_442 : f32 to vector<8x128xf32>
      %642 = arith.addf %641, %640 : vector<8x128xf32>
      %643 = arith.divf %641, %642 : vector<8x128xf32>
      %644 = vector.extract_strided_slice %631 {offsets = [0, 256], sizes = [8, 128], strides = [1, 1]} : vector<8x512xf32> to vector<8x128xf32>
      %645 = math.tanh %644 : vector<8x128xf32>
      %646 = vector.extract_strided_slice %631 {offsets = [0, 384], sizes = [8, 128], strides = [1, 1]} : vector<8x512xf32> to vector<8x128xf32>
      %647 = arith.negf %646 : vector<8x128xf32>
      %648 = math.exp %647 : vector<8x128xf32>
      %cst_443 = arith.constant 1.000000e+00 : f32
      %649 = vector.broadcast %cst_443 : f32 to vector<8x128xf32>
      %650 = arith.addf %649, %648 : vector<8x128xf32>
      %651 = arith.divf %649, %650 : vector<8x128xf32>
      %652 = arith.mulf %643, %628 : vector<8x128xf32>
      %653 = arith.mulf %637, %645 : vector<8x128xf32>
      %654 = arith.addf %652, %653 : vector<8x128xf32>
      %c0_444 = arith.constant 0 : index
      %c0_445 = arith.constant 0 : index
      %655 = vector.load %arg9[%c0_444, %c0_445] : memref<8x128xf32, #tpu.memory_space<vmem>>, vector<8x128xf32>
      tpu.vector_store %arg9[%c0_444, %c0_445], %654 {strides = array<i32>} : memref<8x128xf32, #tpu.memory_space<vmem>>, vector<8x128xf32>,
      %656 = math.tanh %654 : vector<8x128xf32>
      %657 = arith.mulf %651, %656 : vector<8x128xf32>
      %c0_446 = arith.constant 0 : index
      %c0_447 = arith.constant 0 : index
      %658 = vector.load %arg8[%c0_446, %c0_447] : memref<8x128xf32, #tpu.memory_space<vmem>>, vector<8x128xf32>
      tpu.vector_store %arg8[%c0_446, %c0_447], %657 {strides = array<i32>} : memref<8x128xf32, #tpu.memory_space<vmem>>, vector<8x128xf32>,
      %c5_i32_448 = arith.constant 5 : i32
      %c0_i32_449 = arith.constant 0 : i32
      %659 = tpu.memref_slice %arg2[%210, %c0_i32_449] : memref<1000x512xf32, #tpu.memory_space<any>> -> memref<1x512xf32, #tpu.memory_space<any>>
      %c40_i32_450 = arith.constant 40 : i32
      %c0_i32_451 = arith.constant 0 : i32
      %660 = tpu.memref_slice %arg7[%c40_i32_450, %c0_i32_451] : memref<64x512xf32, #tpu.memory_space<vmem>> -> memref<1x512xf32, #tpu.memory_space<vmem>>
      %661 = tpu.memref_slice %arg10[%c5_i32_448] : memref<8x!tpu.dma_semaphore, #tpu.memory_space<semaphore_mem>> -> memref<1x!tpu.dma_semaphore, #tpu.memory_space<semaphore_mem>>
      %662 = tpu.memref_squeeze %661 : memref<1x!tpu.dma_semaphore, #tpu.memory_space<semaphore_mem>> -> memref<!tpu.dma_semaphore, #tpu.memory_space<semaphore_mem>>
      tpu.wait_dma2 semaphore(%662 : memref<!tpu.dma_semaphore, #tpu.memory_space<semaphore_mem>>) src(%659 : memref<1x512xf32, #tpu.memory_space<any>>) dst(%660 : memref<1x512xf32, #tpu.memory_space<vmem>>)
      %c5_i32_452 = arith.constant 5 : i32
      %c0_i32_453 = arith.constant 0 : i32
      %663 = tpu.memref_slice %arg2[%215, %c0_i32_453] : memref<1000x512xf32, #tpu.memory_space<any>> -> memref<1x512xf32, #tpu.memory_space<any>>
      %c41_i32_454 = arith.constant 41 : i32
      %c0_i32_455 = arith.constant 0 : i32
      %664 = tpu.memref_slice %arg7[%c41_i32_454, %c0_i32_455] : memref<64x512xf32, #tpu.memory_space<vmem>> -> memref<1x512xf32, #tpu.memory_space<vmem>>
      %665 = tpu.memref_slice %arg10[%c5_i32_452] : memref<8x!tpu.dma_semaphore, #tpu.memory_space<semaphore_mem>> -> memref<1x!tpu.dma_semaphore, #tpu.memory_space<semaphore_mem>>
      %666 = tpu.memref_squeeze %665 : memref<1x!tpu.dma_semaphore, #tpu.memory_space<semaphore_mem>> -> memref<!tpu.dma_semaphore, #tpu.memory_space<semaphore_mem>>
      tpu.wait_dma2 semaphore(%666 : memref<!tpu.dma_semaphore, #tpu.memory_space<semaphore_mem>>) src(%663 : memref<1x512xf32, #tpu.memory_space<any>>) dst(%664 : memref<1x512xf32, #tpu.memory_space<vmem>>)
      %c5_i32_456 = arith.constant 5 : i32
      %c0_i32_457 = arith.constant 0 : i32
      %667 = tpu.memref_slice %arg2[%220, %c0_i32_457] : memref<1000x512xf32, #tpu.memory_space<any>> -> memref<1x512xf32, #tpu.memory_space<any>>
      %c42_i32_458 = arith.constant 42 : i32
      %c0_i32_459 = arith.constant 0 : i32
      %668 = tpu.memref_slice %arg7[%c42_i32_458, %c0_i32_459] : memref<64x512xf32, #tpu.memory_space<vmem>> -> memref<1x512xf32, #tpu.memory_space<vmem>>
      %669 = tpu.memref_slice %arg10[%c5_i32_456] : memref<8x!tpu.dma_semaphore, #tpu.memory_space<semaphore_mem>> -> memref<1x!tpu.dma_semaphore, #tpu.memory_space<semaphore_mem>>
      %670 = tpu.memref_squeeze %669 : memref<1x!tpu.dma_semaphore, #tpu.memory_space<semaphore_mem>> -> memref<!tpu.dma_semaphore, #tpu.memory_space<semaphore_mem>>
      tpu.wait_dma2 semaphore(%670 : memref<!tpu.dma_semaphore, #tpu.memory_space<semaphore_mem>>) src(%667 : memref<1x512xf32, #tpu.memory_space<any>>) dst(%668 : memref<1x512xf32, #tpu.memory_space<vmem>>)
      %c5_i32_460 = arith.constant 5 : i32
      %c0_i32_461 = arith.constant 0 : i32
      %671 = tpu.memref_slice %arg2[%225, %c0_i32_461] : memref<1000x512xf32, #tpu.memory_space<any>> -> memref<1x512xf32, #tpu.memory_space<any>>
      %c43_i32_462 = arith.constant 43 : i32
      %c0_i32_463 = arith.constant 0 : i32
      %672 = tpu.memref_slice %arg7[%c43_i32_462, %c0_i32_463] : memref<64x512xf32, #tpu.memory_space<vmem>> -> memref<1x512xf32, #tpu.memory_space<vmem>>
      %673 = tpu.memref_slice %arg10[%c5_i32_460] : memref<8x!tpu.dma_semaphore, #tpu.memory_space<semaphore_mem>> -> memref<1x!tpu.dma_semaphore, #tpu.memory_space<semaphore_mem>>
      %674 = tpu.memref_squeeze %673 : memref<1x!tpu.dma_semaphore, #tpu.memory_space<semaphore_mem>> -> memref<!tpu.dma_semaphore, #tpu.memory_space<semaphore_mem>>
      tpu.wait_dma2 semaphore(%674 : memref<!tpu.dma_semaphore, #tpu.memory_space<semaphore_mem>>) src(%671 : memref<1x512xf32, #tpu.memory_space<any>>) dst(%672 : memref<1x512xf32, #tpu.memory_space<vmem>>)
      %c5_i32_464 = arith.constant 5 : i32
      %c0_i32_465 = arith.constant 0 : i32
      %675 = tpu.memref_slice %arg2[%230, %c0_i32_465] : memref<1000x512xf32, #tpu.memory_space<any>> -> memref<1x512xf32, #tpu.memory_space<any>>
      %c44_i32_466 = arith.constant 44 : i32
      %c0_i32_467 = arith.constant 0 : i32
      %676 = tpu.memref_slice %arg7[%c44_i32_466, %c0_i32_467] : memref<64x512xf32, #tpu.memory_space<vmem>> -> memref<1x512xf32, #tpu.memory_space<vmem>>
      %677 = tpu.memref_slice %arg10[%c5_i32_464] : memref<8x!tpu.dma_semaphore, #tpu.memory_space<semaphore_mem>> -> memref<1x!tpu.dma_semaphore, #tpu.memory_space<semaphore_mem>>
      %678 = tpu.memref_squeeze %677 : memref<1x!tpu.dma_semaphore, #tpu.memory_space<semaphore_mem>> -> memref<!tpu.dma_semaphore, #tpu.memory_space<semaphore_mem>>
      tpu.wait_dma2 semaphore(%678 : memref<!tpu.dma_semaphore, #tpu.memory_space<semaphore_mem>>) src(%675 : memref<1x512xf32, #tpu.memory_space<any>>) dst(%676 : memref<1x512xf32, #tpu.memory_space<vmem>>)
      %c5_i32_468 = arith.constant 5 : i32
      %c0_i32_469 = arith.constant 0 : i32
      %679 = tpu.memref_slice %arg2[%235, %c0_i32_469] : memref<1000x512xf32, #tpu.memory_space<any>> -> memref<1x512xf32, #tpu.memory_space<any>>
      %c45_i32_470 = arith.constant 45 : i32
      %c0_i32_471 = arith.constant 0 : i32
      %680 = tpu.memref_slice %arg7[%c45_i32_470, %c0_i32_471] : memref<64x512xf32, #tpu.memory_space<vmem>> -> memref<1x512xf32, #tpu.memory_space<vmem>>
      %681 = tpu.memref_slice %arg10[%c5_i32_468] : memref<8x!tpu.dma_semaphore, #tpu.memory_space<semaphore_mem>> -> memref<1x!tpu.dma_semaphore, #tpu.memory_space<semaphore_mem>>
      %682 = tpu.memref_squeeze %681 : memref<1x!tpu.dma_semaphore, #tpu.memory_space<semaphore_mem>> -> memref<!tpu.dma_semaphore, #tpu.memory_space<semaphore_mem>>
      tpu.wait_dma2 semaphore(%682 : memref<!tpu.dma_semaphore, #tpu.memory_space<semaphore_mem>>) src(%679 : memref<1x512xf32, #tpu.memory_space<any>>) dst(%680 : memref<1x512xf32, #tpu.memory_space<vmem>>)
      %c5_i32_472 = arith.constant 5 : i32
      %c0_i32_473 = arith.constant 0 : i32
      %683 = tpu.memref_slice %arg2[%240, %c0_i32_473] : memref<1000x512xf32, #tpu.memory_space<any>> -> memref<1x512xf32, #tpu.memory_space<any>>
      %c46_i32_474 = arith.constant 46 : i32
      %c0_i32_475 = arith.constant 0 : i32
      %684 = tpu.memref_slice %arg7[%c46_i32_474, %c0_i32_475] : memref<64x512xf32, #tpu.memory_space<vmem>> -> memref<1x512xf32, #tpu.memory_space<vmem>>
      %685 = tpu.memref_slice %arg10[%c5_i32_472] : memref<8x!tpu.dma_semaphore, #tpu.memory_space<semaphore_mem>> -> memref<1x!tpu.dma_semaphore, #tpu.memory_space<semaphore_mem>>
      %686 = tpu.memref_squeeze %685 : memref<1x!tpu.dma_semaphore, #tpu.memory_space<semaphore_mem>> -> memref<!tpu.dma_semaphore, #tpu.memory_space<semaphore_mem>>
      tpu.wait_dma2 semaphore(%686 : memref<!tpu.dma_semaphore, #tpu.memory_space<semaphore_mem>>) src(%683 : memref<1x512xf32, #tpu.memory_space<any>>) dst(%684 : memref<1x512xf32, #tpu.memory_space<vmem>>)
      %c5_i32_476 = arith.constant 5 : i32
      %c0_i32_477 = arith.constant 0 : i32
      %687 = tpu.memref_slice %arg2[%245, %c0_i32_477] : memref<1000x512xf32, #tpu.memory_space<any>> -> memref<1x512xf32, #tpu.memory_space<any>>
      %c47_i32_478 = arith.constant 47 : i32
      %c0_i32_479 = arith.constant 0 : i32
      %688 = tpu.memref_slice %arg7[%c47_i32_478, %c0_i32_479] : memref<64x512xf32, #tpu.memory_space<vmem>> -> memref<1x512xf32, #tpu.memory_space<vmem>>
      %689 = tpu.memref_slice %arg10[%c5_i32_476] : memref<8x!tpu.dma_semaphore, #tpu.memory_space<semaphore_mem>> -> memref<1x!tpu.dma_semaphore, #tpu.memory_space<semaphore_mem>>
      %690 = tpu.memref_squeeze %689 : memref<1x!tpu.dma_semaphore, #tpu.memory_space<semaphore_mem>> -> memref<!tpu.dma_semaphore, #tpu.memory_space<semaphore_mem>>
      tpu.wait_dma2 semaphore(%690 : memref<!tpu.dma_semaphore, #tpu.memory_space<semaphore_mem>>) src(%687 : memref<1x512xf32, #tpu.memory_space<any>>) dst(%688 : memref<1x512xf32, #tpu.memory_space<vmem>>)
      %c40_480 = arith.constant 40 : index
      %c0_481 = arith.constant 0 : index
      %691 = vector.load %arg7[%c40_480, %c0_481] : memref<64x512xf32, #tpu.memory_space<vmem>>, vector<8x512xf32>
      %c0_482 = arith.constant 0 : index
      %c0_483 = arith.constant 0 : index
      %692 = vector.load %arg8[%c0_482, %c0_483] : memref<8x128xf32, #tpu.memory_space<vmem>>, vector<8x128xf32>
      %c0_484 = arith.constant 0 : index
      %c0_485 = arith.constant 0 : index
      %693 = vector.load %arg9[%c0_484, %c0_485] : memref<8x128xf32, #tpu.memory_space<vmem>>, vector<8x128xf32>
      %c0_486 = arith.constant 0 : index
      %c0_487 = arith.constant 0 : index
      %694 = vector.load %arg3[%c0_486, %c0_487] : memref<128x512xf32, #tpu.memory_space<vmem>>, vector<128x512xf32>
      %cst_488 = arith.constant dense<0.000000e+00> : vector<8x512xf32>
      %695 = tpu.matmul %692, %694, %cst_488 {dimension_numbers = #tpu.dot_dimension_numbers<[1], [0], [0], [1], [0, 0, 1, 1], [], []>} : vector<8x128xf32>, vector<128x512xf32>, vector<8x512xf32> -> vector<8x512xf32>
      %696 = arith.addf %691, %695 : vector<8x512xf32>
      %697 = vector.extract_strided_slice %696 {offsets = [0, 0], sizes = [8, 128], strides = [1, 1]} : vector<8x512xf32> to vector<8x128xf32>
      %698 = arith.negf %697 : vector<8x128xf32>
      %699 = math.exp %698 : vector<8x128xf32>
      %cst_489 = arith.constant 1.000000e+00 : f32
      %700 = vector.broadcast %cst_489 : f32 to vector<8x128xf32>
      %701 = arith.addf %700, %699 : vector<8x128xf32>
      %702 = arith.divf %700, %701 : vector<8x128xf32>
      %703 = vector.extract_strided_slice %696 {offsets = [0, 128], sizes = [8, 128], strides = [1, 1]} : vector<8x512xf32> to vector<8x128xf32>
      %704 = arith.negf %703 : vector<8x128xf32>
      %705 = math.exp %704 : vector<8x128xf32>
      %cst_490 = arith.constant 1.000000e+00 : f32
      %706 = vector.broadcast %cst_490 : f32 to vector<8x128xf32>
      %707 = arith.addf %706, %705 : vector<8x128xf32>
      %708 = arith.divf %706, %707 : vector<8x128xf32>
      %709 = vector.extract_strided_slice %696 {offsets = [0, 256], sizes = [8, 128], strides = [1, 1]} : vector<8x512xf32> to vector<8x128xf32>
      %710 = math.tanh %709 : vector<8x128xf32>
      %711 = vector.extract_strided_slice %696 {offsets = [0, 384], sizes = [8, 128], strides = [1, 1]} : vector<8x512xf32> to vector<8x128xf32>
      %712 = arith.negf %711 : vector<8x128xf32>
      %713 = math.exp %712 : vector<8x128xf32>
      %cst_491 = arith.constant 1.000000e+00 : f32
      %714 = vector.broadcast %cst_491 : f32 to vector<8x128xf32>
      %715 = arith.addf %714, %713 : vector<8x128xf32>
      %716 = arith.divf %714, %715 : vector<8x128xf32>
      %717 = arith.mulf %708, %693 : vector<8x128xf32>
      %718 = arith.mulf %702, %710 : vector<8x128xf32>
      %719 = arith.addf %717, %718 : vector<8x128xf32>
      %c0_492 = arith.constant 0 : index
      %c0_493 = arith.constant 0 : index
      %720 = vector.load %arg9[%c0_492, %c0_493] : memref<8x128xf32, #tpu.memory_space<vmem>>, vector<8x128xf32>
      tpu.vector_store %arg9[%c0_492, %c0_493], %719 {strides = array<i32>} : memref<8x128xf32, #tpu.memory_space<vmem>>, vector<8x128xf32>,
      %721 = math.tanh %719 : vector<8x128xf32>
      %722 = arith.mulf %716, %721 : vector<8x128xf32>
      %c0_494 = arith.constant 0 : index
      %c0_495 = arith.constant 0 : index
      %723 = vector.load %arg8[%c0_494, %c0_495] : memref<8x128xf32, #tpu.memory_space<vmem>>, vector<8x128xf32>
      tpu.vector_store %arg8[%c0_494, %c0_495], %722 {strides = array<i32>} : memref<8x128xf32, #tpu.memory_space<vmem>>, vector<8x128xf32>,
      %c6_i32_496 = arith.constant 6 : i32
      %c0_i32_497 = arith.constant 0 : i32
      %724 = tpu.memref_slice %arg2[%250, %c0_i32_497] : memref<1000x512xf32, #tpu.memory_space<any>> -> memref<1x512xf32, #tpu.memory_space<any>>
      %c48_i32_498 = arith.constant 48 : i32
      %c0_i32_499 = arith.constant 0 : i32
      %725 = tpu.memref_slice %arg7[%c48_i32_498, %c0_i32_499] : memref<64x512xf32, #tpu.memory_space<vmem>> -> memref<1x512xf32, #tpu.memory_space<vmem>>
      %726 = tpu.memref_slice %arg10[%c6_i32_496] : memref<8x!tpu.dma_semaphore, #tpu.memory_space<semaphore_mem>> -> memref<1x!tpu.dma_semaphore, #tpu.memory_space<semaphore_mem>>
      %727 = tpu.memref_squeeze %726 : memref<1x!tpu.dma_semaphore, #tpu.memory_space<semaphore_mem>> -> memref<!tpu.dma_semaphore, #tpu.memory_space<semaphore_mem>>
      tpu.wait_dma2 semaphore(%727 : memref<!tpu.dma_semaphore, #tpu.memory_space<semaphore_mem>>) src(%724 : memref<1x512xf32, #tpu.memory_space<any>>) dst(%725 : memref<1x512xf32, #tpu.memory_space<vmem>>)
      %c6_i32_500 = arith.constant 6 : i32
      %c0_i32_501 = arith.constant 0 : i32
      %728 = tpu.memref_slice %arg2[%255, %c0_i32_501] : memref<1000x512xf32, #tpu.memory_space<any>> -> memref<1x512xf32, #tpu.memory_space<any>>
      %c49_i32_502 = arith.constant 49 : i32
      %c0_i32_503 = arith.constant 0 : i32
      %729 = tpu.memref_slice %arg7[%c49_i32_502, %c0_i32_503] : memref<64x512xf32, #tpu.memory_space<vmem>> -> memref<1x512xf32, #tpu.memory_space<vmem>>
      %730 = tpu.memref_slice %arg10[%c6_i32_500] : memref<8x!tpu.dma_semaphore, #tpu.memory_space<semaphore_mem>> -> memref<1x!tpu.dma_semaphore, #tpu.memory_space<semaphore_mem>>
      %731 = tpu.memref_squeeze %730 : memref<1x!tpu.dma_semaphore, #tpu.memory_space<semaphore_mem>> -> memref<!tpu.dma_semaphore, #tpu.memory_space<semaphore_mem>>
      tpu.wait_dma2 semaphore(%731 : memref<!tpu.dma_semaphore, #tpu.memory_space<semaphore_mem>>) src(%728 : memref<1x512xf32, #tpu.memory_space<any>>) dst(%729 : memref<1x512xf32, #tpu.memory_space<vmem>>)
      %c6_i32_504 = arith.constant 6 : i32
      %c0_i32_505 = arith.constant 0 : i32
      %732 = tpu.memref_slice %arg2[%260, %c0_i32_505] : memref<1000x512xf32, #tpu.memory_space<any>> -> memref<1x512xf32, #tpu.memory_space<any>>
      %c50_i32_506 = arith.constant 50 : i32
      %c0_i32_507 = arith.constant 0 : i32
      %733 = tpu.memref_slice %arg7[%c50_i32_506, %c0_i32_507] : memref<64x512xf32, #tpu.memory_space<vmem>> -> memref<1x512xf32, #tpu.memory_space<vmem>>
      %734 = tpu.memref_slice %arg10[%c6_i32_504] : memref<8x!tpu.dma_semaphore, #tpu.memory_space<semaphore_mem>> -> memref<1x!tpu.dma_semaphore, #tpu.memory_space<semaphore_mem>>
      %735 = tpu.memref_squeeze %734 : memref<1x!tpu.dma_semaphore, #tpu.memory_space<semaphore_mem>> -> memref<!tpu.dma_semaphore, #tpu.memory_space<semaphore_mem>>
      tpu.wait_dma2 semaphore(%735 : memref<!tpu.dma_semaphore, #tpu.memory_space<semaphore_mem>>) src(%732 : memref<1x512xf32, #tpu.memory_space<any>>) dst(%733 : memref<1x512xf32, #tpu.memory_space<vmem>>)
      %c6_i32_508 = arith.constant 6 : i32
      %c0_i32_509 = arith.constant 0 : i32
      %736 = tpu.memref_slice %arg2[%265, %c0_i32_509] : memref<1000x512xf32, #tpu.memory_space<any>> -> memref<1x512xf32, #tpu.memory_space<any>>
      %c51_i32_510 = arith.constant 51 : i32
      %c0_i32_511 = arith.constant 0 : i32
      %737 = tpu.memref_slice %arg7[%c51_i32_510, %c0_i32_511] : memref<64x512xf32, #tpu.memory_space<vmem>> -> memref<1x512xf32, #tpu.memory_space<vmem>>
      %738 = tpu.memref_slice %arg10[%c6_i32_508] : memref<8x!tpu.dma_semaphore, #tpu.memory_space<semaphore_mem>> -> memref<1x!tpu.dma_semaphore, #tpu.memory_space<semaphore_mem>>
      %739 = tpu.memref_squeeze %738 : memref<1x!tpu.dma_semaphore, #tpu.memory_space<semaphore_mem>> -> memref<!tpu.dma_semaphore, #tpu.memory_space<semaphore_mem>>
      tpu.wait_dma2 semaphore(%739 : memref<!tpu.dma_semaphore, #tpu.memory_space<semaphore_mem>>) src(%736 : memref<1x512xf32, #tpu.memory_space<any>>) dst(%737 : memref<1x512xf32, #tpu.memory_space<vmem>>)
      %c6_i32_512 = arith.constant 6 : i32
      %c0_i32_513 = arith.constant 0 : i32
      %740 = tpu.memref_slice %arg2[%270, %c0_i32_513] : memref<1000x512xf32, #tpu.memory_space<any>> -> memref<1x512xf32, #tpu.memory_space<any>>
      %c52_i32_514 = arith.constant 52 : i32
      %c0_i32_515 = arith.constant 0 : i32
      %741 = tpu.memref_slice %arg7[%c52_i32_514, %c0_i32_515] : memref<64x512xf32, #tpu.memory_space<vmem>> -> memref<1x512xf32, #tpu.memory_space<vmem>>
      %742 = tpu.memref_slice %arg10[%c6_i32_512] : memref<8x!tpu.dma_semaphore, #tpu.memory_space<semaphore_mem>> -> memref<1x!tpu.dma_semaphore, #tpu.memory_space<semaphore_mem>>
      %743 = tpu.memref_squeeze %742 : memref<1x!tpu.dma_semaphore, #tpu.memory_space<semaphore_mem>> -> memref<!tpu.dma_semaphore, #tpu.memory_space<semaphore_mem>>
      tpu.wait_dma2 semaphore(%743 : memref<!tpu.dma_semaphore, #tpu.memory_space<semaphore_mem>>) src(%740 : memref<1x512xf32, #tpu.memory_space<any>>) dst(%741 : memref<1x512xf32, #tpu.memory_space<vmem>>)
      %c6_i32_516 = arith.constant 6 : i32
      %c0_i32_517 = arith.constant 0 : i32
      %744 = tpu.memref_slice %arg2[%275, %c0_i32_517] : memref<1000x512xf32, #tpu.memory_space<any>> -> memref<1x512xf32, #tpu.memory_space<any>>
      %c53_i32_518 = arith.constant 53 : i32
      %c0_i32_519 = arith.constant 0 : i32
      %745 = tpu.memref_slice %arg7[%c53_i32_518, %c0_i32_519] : memref<64x512xf32, #tpu.memory_space<vmem>> -> memref<1x512xf32, #tpu.memory_space<vmem>>
      %746 = tpu.memref_slice %arg10[%c6_i32_516] : memref<8x!tpu.dma_semaphore, #tpu.memory_space<semaphore_mem>> -> memref<1x!tpu.dma_semaphore, #tpu.memory_space<semaphore_mem>>
      %747 = tpu.memref_squeeze %746 : memref<1x!tpu.dma_semaphore, #tpu.memory_space<semaphore_mem>> -> memref<!tpu.dma_semaphore, #tpu.memory_space<semaphore_mem>>
      tpu.wait_dma2 semaphore(%747 : memref<!tpu.dma_semaphore, #tpu.memory_space<semaphore_mem>>) src(%744 : memref<1x512xf32, #tpu.memory_space<any>>) dst(%745 : memref<1x512xf32, #tpu.memory_space<vmem>>)
      %c6_i32_520 = arith.constant 6 : i32
      %c0_i32_521 = arith.constant 0 : i32
      %748 = tpu.memref_slice %arg2[%280, %c0_i32_521] : memref<1000x512xf32, #tpu.memory_space<any>> -> memref<1x512xf32, #tpu.memory_space<any>>
      %c54_i32_522 = arith.constant 54 : i32
      %c0_i32_523 = arith.constant 0 : i32
      %749 = tpu.memref_slice %arg7[%c54_i32_522, %c0_i32_523] : memref<64x512xf32, #tpu.memory_space<vmem>> -> memref<1x512xf32, #tpu.memory_space<vmem>>
      %750 = tpu.memref_slice %arg10[%c6_i32_520] : memref<8x!tpu.dma_semaphore, #tpu.memory_space<semaphore_mem>> -> memref<1x!tpu.dma_semaphore, #tpu.memory_space<semaphore_mem>>
      %751 = tpu.memref_squeeze %750 : memref<1x!tpu.dma_semaphore, #tpu.memory_space<semaphore_mem>> -> memref<!tpu.dma_semaphore, #tpu.memory_space<semaphore_mem>>
      tpu.wait_dma2 semaphore(%751 : memref<!tpu.dma_semaphore, #tpu.memory_space<semaphore_mem>>) src(%748 : memref<1x512xf32, #tpu.memory_space<any>>) dst(%749 : memref<1x512xf32, #tpu.memory_space<vmem>>)
      %c6_i32_524 = arith.constant 6 : i32
      %c0_i32_525 = arith.constant 0 : i32
      %752 = tpu.memref_slice %arg2[%285, %c0_i32_525] : memref<1000x512xf32, #tpu.memory_space<any>> -> memref<1x512xf32, #tpu.memory_space<any>>
      %c55_i32_526 = arith.constant 55 : i32
      %c0_i32_527 = arith.constant 0 : i32
      %753 = tpu.memref_slice %arg7[%c55_i32_526, %c0_i32_527] : memref<64x512xf32, #tpu.memory_space<vmem>> -> memref<1x512xf32, #tpu.memory_space<vmem>>
      %754 = tpu.memref_slice %arg10[%c6_i32_524] : memref<8x!tpu.dma_semaphore, #tpu.memory_space<semaphore_mem>> -> memref<1x!tpu.dma_semaphore, #tpu.memory_space<semaphore_mem>>
      %755 = tpu.memref_squeeze %754 : memref<1x!tpu.dma_semaphore, #tpu.memory_space<semaphore_mem>> -> memref<!tpu.dma_semaphore, #tpu.memory_space<semaphore_mem>>
      tpu.wait_dma2 semaphore(%755 : memref<!tpu.dma_semaphore, #tpu.memory_space<semaphore_mem>>) src(%752 : memref<1x512xf32, #tpu.memory_space<any>>) dst(%753 : memref<1x512xf32, #tpu.memory_space<vmem>>)
      %c48_528 = arith.constant 48 : index
      %c0_529 = arith.constant 0 : index
      %756 = vector.load %arg7[%c48_528, %c0_529] : memref<64x512xf32, #tpu.memory_space<vmem>>, vector<8x512xf32>
      %c0_530 = arith.constant 0 : index
      %c0_531 = arith.constant 0 : index
      %757 = vector.load %arg8[%c0_530, %c0_531] : memref<8x128xf32, #tpu.memory_space<vmem>>, vector<8x128xf32>
      %c0_532 = arith.constant 0 : index
      %c0_533 = arith.constant 0 : index
      %758 = vector.load %arg9[%c0_532, %c0_533] : memref<8x128xf32, #tpu.memory_space<vmem>>, vector<8x128xf32>
      %c0_534 = arith.constant 0 : index
      %c0_535 = arith.constant 0 : index
      %759 = vector.load %arg3[%c0_534, %c0_535] : memref<128x512xf32, #tpu.memory_space<vmem>>, vector<128x512xf32>
      %cst_536 = arith.constant dense<0.000000e+00> : vector<8x512xf32>
      %760 = tpu.matmul %757, %759, %cst_536 {dimension_numbers = #tpu.dot_dimension_numbers<[1], [0], [0], [1], [0, 0, 1, 1], [], []>} : vector<8x128xf32>, vector<128x512xf32>, vector<8x512xf32> -> vector<8x512xf32>
      %761 = arith.addf %756, %760 : vector<8x512xf32>
      %762 = vector.extract_strided_slice %761 {offsets = [0, 0], sizes = [8, 128], strides = [1, 1]} : vector<8x512xf32> to vector<8x128xf32>
      %763 = arith.negf %762 : vector<8x128xf32>
      %764 = math.exp %763 : vector<8x128xf32>
      %cst_537 = arith.constant 1.000000e+00 : f32
      %765 = vector.broadcast %cst_537 : f32 to vector<8x128xf32>
      %766 = arith.addf %765, %764 : vector<8x128xf32>
      %767 = arith.divf %765, %766 : vector<8x128xf32>
      %768 = vector.extract_strided_slice %761 {offsets = [0, 128], sizes = [8, 128], strides = [1, 1]} : vector<8x512xf32> to vector<8x128xf32>
      %769 = arith.negf %768 : vector<8x128xf32>
      %770 = math.exp %769 : vector<8x128xf32>
      %cst_538 = arith.constant 1.000000e+00 : f32
      %771 = vector.broadcast %cst_538 : f32 to vector<8x128xf32>
      %772 = arith.addf %771, %770 : vector<8x128xf32>
      %773 = arith.divf %771, %772 : vector<8x128xf32>
      %774 = vector.extract_strided_slice %761 {offsets = [0, 256], sizes = [8, 128], strides = [1, 1]} : vector<8x512xf32> to vector<8x128xf32>
      %775 = math.tanh %774 : vector<8x128xf32>
      %776 = vector.extract_strided_slice %761 {offsets = [0, 384], sizes = [8, 128], strides = [1, 1]} : vector<8x512xf32> to vector<8x128xf32>
      %777 = arith.negf %776 : vector<8x128xf32>
      %778 = math.exp %777 : vector<8x128xf32>
      %cst_539 = arith.constant 1.000000e+00 : f32
      %779 = vector.broadcast %cst_539 : f32 to vector<8x128xf32>
      %780 = arith.addf %779, %778 : vector<8x128xf32>
      %781 = arith.divf %779, %780 : vector<8x128xf32>
      %782 = arith.mulf %773, %758 : vector<8x128xf32>
      %783 = arith.mulf %767, %775 : vector<8x128xf32>
      %784 = arith.addf %782, %783 : vector<8x128xf32>
      %c0_540 = arith.constant 0 : index
      %c0_541 = arith.constant 0 : index
      %785 = vector.load %arg9[%c0_540, %c0_541] : memref<8x128xf32, #tpu.memory_space<vmem>>, vector<8x128xf32>
      tpu.vector_store %arg9[%c0_540, %c0_541], %784 {strides = array<i32>} : memref<8x128xf32, #tpu.memory_space<vmem>>, vector<8x128xf32>,
      %786 = math.tanh %784 : vector<8x128xf32>
      %787 = arith.mulf %781, %786 : vector<8x128xf32>
      %c0_542 = arith.constant 0 : index
      %c0_543 = arith.constant 0 : index
      %788 = vector.load %arg8[%c0_542, %c0_543] : memref<8x128xf32, #tpu.memory_space<vmem>>, vector<8x128xf32>
      tpu.vector_store %arg8[%c0_542, %c0_543], %787 {strides = array<i32>} : memref<8x128xf32, #tpu.memory_space<vmem>>, vector<8x128xf32>,
      %c7_i32_544 = arith.constant 7 : i32
      %c0_i32_545 = arith.constant 0 : i32
      %789 = tpu.memref_slice %arg2[%290, %c0_i32_545] : memref<1000x512xf32, #tpu.memory_space<any>> -> memref<1x512xf32, #tpu.memory_space<any>>
      %c56_i32_546 = arith.constant 56 : i32
      %c0_i32_547 = arith.constant 0 : i32
      %790 = tpu.memref_slice %arg7[%c56_i32_546, %c0_i32_547] : memref<64x512xf32, #tpu.memory_space<vmem>> -> memref<1x512xf32, #tpu.memory_space<vmem>>
      %791 = tpu.memref_slice %arg10[%c7_i32_544] : memref<8x!tpu.dma_semaphore, #tpu.memory_space<semaphore_mem>> -> memref<1x!tpu.dma_semaphore, #tpu.memory_space<semaphore_mem>>
      %792 = tpu.memref_squeeze %791 : memref<1x!tpu.dma_semaphore, #tpu.memory_space<semaphore_mem>> -> memref<!tpu.dma_semaphore, #tpu.memory_space<semaphore_mem>>
      tpu.wait_dma2 semaphore(%792 : memref<!tpu.dma_semaphore, #tpu.memory_space<semaphore_mem>>) src(%789 : memref<1x512xf32, #tpu.memory_space<any>>) dst(%790 : memref<1x512xf32, #tpu.memory_space<vmem>>)
      %c7_i32_548 = arith.constant 7 : i32
      %c0_i32_549 = arith.constant 0 : i32
      %793 = tpu.memref_slice %arg2[%295, %c0_i32_549] : memref<1000x512xf32, #tpu.memory_space<any>> -> memref<1x512xf32, #tpu.memory_space<any>>
      %c57_i32_550 = arith.constant 57 : i32
      %c0_i32_551 = arith.constant 0 : i32
      %794 = tpu.memref_slice %arg7[%c57_i32_550, %c0_i32_551] : memref<64x512xf32, #tpu.memory_space<vmem>> -> memref<1x512xf32, #tpu.memory_space<vmem>>
      %795 = tpu.memref_slice %arg10[%c7_i32_548] : memref<8x!tpu.dma_semaphore, #tpu.memory_space<semaphore_mem>> -> memref<1x!tpu.dma_semaphore, #tpu.memory_space<semaphore_mem>>
      %796 = tpu.memref_squeeze %795 : memref<1x!tpu.dma_semaphore, #tpu.memory_space<semaphore_mem>> -> memref<!tpu.dma_semaphore, #tpu.memory_space<semaphore_mem>>
      tpu.wait_dma2 semaphore(%796 : memref<!tpu.dma_semaphore, #tpu.memory_space<semaphore_mem>>) src(%793 : memref<1x512xf32, #tpu.memory_space<any>>) dst(%794 : memref<1x512xf32, #tpu.memory_space<vmem>>)
      %c7_i32_552 = arith.constant 7 : i32
      %c0_i32_553 = arith.constant 0 : i32
      %797 = tpu.memref_slice %arg2[%300, %c0_i32_553] : memref<1000x512xf32, #tpu.memory_space<any>> -> memref<1x512xf32, #tpu.memory_space<any>>
      %c58_i32_554 = arith.constant 58 : i32
      %c0_i32_555 = arith.constant 0 : i32
      %798 = tpu.memref_slice %arg7[%c58_i32_554, %c0_i32_555] : memref<64x512xf32, #tpu.memory_space<vmem>> -> memref<1x512xf32, #tpu.memory_space<vmem>>
      %799 = tpu.memref_slice %arg10[%c7_i32_552] : memref<8x!tpu.dma_semaphore, #tpu.memory_space<semaphore_mem>> -> memref<1x!tpu.dma_semaphore, #tpu.memory_space<semaphore_mem>>
      %800 = tpu.memref_squeeze %799 : memref<1x!tpu.dma_semaphore, #tpu.memory_space<semaphore_mem>> -> memref<!tpu.dma_semaphore, #tpu.memory_space<semaphore_mem>>
      tpu.wait_dma2 semaphore(%800 : memref<!tpu.dma_semaphore, #tpu.memory_space<semaphore_mem>>) src(%797 : memref<1x512xf32, #tpu.memory_space<any>>) dst(%798 : memref<1x512xf32, #tpu.memory_space<vmem>>)
      %c7_i32_556 = arith.constant 7 : i32
      %c0_i32_557 = arith.constant 0 : i32
      %801 = tpu.memref_slice %arg2[%305, %c0_i32_557] : memref<1000x512xf32, #tpu.memory_space<any>> -> memref<1x512xf32, #tpu.memory_space<any>>
      %c59_i32_558 = arith.constant 59 : i32
      %c0_i32_559 = arith.constant 0 : i32
      %802 = tpu.memref_slice %arg7[%c59_i32_558, %c0_i32_559] : memref<64x512xf32, #tpu.memory_space<vmem>> -> memref<1x512xf32, #tpu.memory_space<vmem>>
      %803 = tpu.memref_slice %arg10[%c7_i32_556] : memref<8x!tpu.dma_semaphore, #tpu.memory_space<semaphore_mem>> -> memref<1x!tpu.dma_semaphore, #tpu.memory_space<semaphore_mem>>
      %804 = tpu.memref_squeeze %803 : memref<1x!tpu.dma_semaphore, #tpu.memory_space<semaphore_mem>> -> memref<!tpu.dma_semaphore, #tpu.memory_space<semaphore_mem>>
      tpu.wait_dma2 semaphore(%804 : memref<!tpu.dma_semaphore, #tpu.memory_space<semaphore_mem>>) src(%801 : memref<1x512xf32, #tpu.memory_space<any>>) dst(%802 : memref<1x512xf32, #tpu.memory_space<vmem>>)
      %c7_i32_560 = arith.constant 7 : i32
      %c0_i32_561 = arith.constant 0 : i32
      %805 = tpu.memref_slice %arg2[%310, %c0_i32_561] : memref<1000x512xf32, #tpu.memory_space<any>> -> memref<1x512xf32, #tpu.memory_space<any>>
      %c60_i32_562 = arith.constant 60 : i32
      %c0_i32_563 = arith.constant 0 : i32
      %806 = tpu.memref_slice %arg7[%c60_i32_562, %c0_i32_563] : memref<64x512xf32, #tpu.memory_space<vmem>> -> memref<1x512xf32, #tpu.memory_space<vmem>>
      %807 = tpu.memref_slice %arg10[%c7_i32_560] : memref<8x!tpu.dma_semaphore, #tpu.memory_space<semaphore_mem>> -> memref<1x!tpu.dma_semaphore, #tpu.memory_space<semaphore_mem>>
      %808 = tpu.memref_squeeze %807 : memref<1x!tpu.dma_semaphore, #tpu.memory_space<semaphore_mem>> -> memref<!tpu.dma_semaphore, #tpu.memory_space<semaphore_mem>>
      tpu.wait_dma2 semaphore(%808 : memref<!tpu.dma_semaphore, #tpu.memory_space<semaphore_mem>>) src(%805 : memref<1x512xf32, #tpu.memory_space<any>>) dst(%806 : memref<1x512xf32, #tpu.memory_space<vmem>>)
      %c7_i32_564 = arith.constant 7 : i32
      %c0_i32_565 = arith.constant 0 : i32
      %809 = tpu.memref_slice %arg2[%315, %c0_i32_565] : memref<1000x512xf32, #tpu.memory_space<any>> -> memref<1x512xf32, #tpu.memory_space<any>>
      %c61_i32_566 = arith.constant 61 : i32
      %c0_i32_567 = arith.constant 0 : i32
      %810 = tpu.memref_slice %arg7[%c61_i32_566, %c0_i32_567] : memref<64x512xf32, #tpu.memory_space<vmem>> -> memref<1x512xf32, #tpu.memory_space<vmem>>
      %811 = tpu.memref_slice %arg10[%c7_i32_564] : memref<8x!tpu.dma_semaphore, #tpu.memory_space<semaphore_mem>> -> memref<1x!tpu.dma_semaphore, #tpu.memory_space<semaphore_mem>>
      %812 = tpu.memref_squeeze %811 : memref<1x!tpu.dma_semaphore, #tpu.memory_space<semaphore_mem>> -> memref<!tpu.dma_semaphore, #tpu.memory_space<semaphore_mem>>
      tpu.wait_dma2 semaphore(%812 : memref<!tpu.dma_semaphore, #tpu.memory_space<semaphore_mem>>) src(%809 : memref<1x512xf32, #tpu.memory_space<any>>) dst(%810 : memref<1x512xf32, #tpu.memory_space<vmem>>)
      %c7_i32_568 = arith.constant 7 : i32
      %c0_i32_569 = arith.constant 0 : i32
      %813 = tpu.memref_slice %arg2[%320, %c0_i32_569] : memref<1000x512xf32, #tpu.memory_space<any>> -> memref<1x512xf32, #tpu.memory_space<any>>
      %c62_i32_570 = arith.constant 62 : i32
      %c0_i32_571 = arith.constant 0 : i32
      %814 = tpu.memref_slice %arg7[%c62_i32_570, %c0_i32_571] : memref<64x512xf32, #tpu.memory_space<vmem>> -> memref<1x512xf32, #tpu.memory_space<vmem>>
      %815 = tpu.memref_slice %arg10[%c7_i32_568] : memref<8x!tpu.dma_semaphore, #tpu.memory_space<semaphore_mem>> -> memref<1x!tpu.dma_semaphore, #tpu.memory_space<semaphore_mem>>
      %816 = tpu.memref_squeeze %815 : memref<1x!tpu.dma_semaphore, #tpu.memory_space<semaphore_mem>> -> memref<!tpu.dma_semaphore, #tpu.memory_space<semaphore_mem>>
      tpu.wait_dma2 semaphore(%816 : memref<!tpu.dma_semaphore, #tpu.memory_space<semaphore_mem>>) src(%813 : memref<1x512xf32, #tpu.memory_space<any>>) dst(%814 : memref<1x512xf32, #tpu.memory_space<vmem>>)
      %c7_i32_572 = arith.constant 7 : i32
      %c0_i32_573 = arith.constant 0 : i32
      %817 = tpu.memref_slice %arg2[%325, %c0_i32_573] : memref<1000x512xf32, #tpu.memory_space<any>> -> memref<1x512xf32, #tpu.memory_space<any>>
      %c63_i32_574 = arith.constant 63 : i32
      %c0_i32_575 = arith.constant 0 : i32
      %818 = tpu.memref_slice %arg7[%c63_i32_574, %c0_i32_575] : memref<64x512xf32, #tpu.memory_space<vmem>> -> memref<1x512xf32, #tpu.memory_space<vmem>>
      %819 = tpu.memref_slice %arg10[%c7_i32_572] : memref<8x!tpu.dma_semaphore, #tpu.memory_space<semaphore_mem>> -> memref<1x!tpu.dma_semaphore, #tpu.memory_space<semaphore_mem>>
      %820 = tpu.memref_squeeze %819 : memref<1x!tpu.dma_semaphore, #tpu.memory_space<semaphore_mem>> -> memref<!tpu.dma_semaphore, #tpu.memory_space<semaphore_mem>>
      tpu.wait_dma2 semaphore(%820 : memref<!tpu.dma_semaphore, #tpu.memory_space<semaphore_mem>>) src(%817 : memref<1x512xf32, #tpu.memory_space<any>>) dst(%818 : memref<1x512xf32, #tpu.memory_space<vmem>>)
      %c56_576 = arith.constant 56 : index
      %c0_577 = arith.constant 0 : index
      %821 = vector.load %arg7[%c56_576, %c0_577] : memref<64x512xf32, #tpu.memory_space<vmem>>, vector<8x512xf32>
      %c0_578 = arith.constant 0 : index
      %c0_579 = arith.constant 0 : index
      %822 = vector.load %arg8[%c0_578, %c0_579] : memref<8x128xf32, #tpu.memory_space<vmem>>, vector<8x128xf32>
      %c0_580 = arith.constant 0 : index
      %c0_581 = arith.constant 0 : index
      %823 = vector.load %arg9[%c0_580, %c0_581] : memref<8x128xf32, #tpu.memory_space<vmem>>, vector<8x128xf32>
      %c0_582 = arith.constant 0 : index
      %c0_583 = arith.constant 0 : index
      %824 = vector.load %arg3[%c0_582, %c0_583] : memref<128x512xf32, #tpu.memory_space<vmem>>, vector<128x512xf32>
      %cst_584 = arith.constant dense<0.000000e+00> : vector<8x512xf32>
      %825 = tpu.matmul %822, %824, %cst_584 {dimension_numbers = #tpu.dot_dimension_numbers<[1], [0], [0], [1], [0, 0, 1, 1], [], []>} : vector<8x128xf32>, vector<128x512xf32>, vector<8x512xf32> -> vector<8x512xf32>
      %826 = arith.addf %821, %825 : vector<8x512xf32>
      %827 = vector.extract_strided_slice %826 {offsets = [0, 0], sizes = [8, 128], strides = [1, 1]} : vector<8x512xf32> to vector<8x128xf32>
      %828 = arith.negf %827 : vector<8x128xf32>
      %829 = math.exp %828 : vector<8x128xf32>
      %cst_585 = arith.constant 1.000000e+00 : f32
      %830 = vector.broadcast %cst_585 : f32 to vector<8x128xf32>
      %831 = arith.addf %830, %829 : vector<8x128xf32>
      %832 = arith.divf %830, %831 : vector<8x128xf32>
      %833 = vector.extract_strided_slice %826 {offsets = [0, 128], sizes = [8, 128], strides = [1, 1]} : vector<8x512xf32> to vector<8x128xf32>
      %834 = arith.negf %833 : vector<8x128xf32>
      %835 = math.exp %834 : vector<8x128xf32>
      %cst_586 = arith.constant 1.000000e+00 : f32
      %836 = vector.broadcast %cst_586 : f32 to vector<8x128xf32>
      %837 = arith.addf %836, %835 : vector<8x128xf32>
      %838 = arith.divf %836, %837 : vector<8x128xf32>
      %839 = vector.extract_strided_slice %826 {offsets = [0, 256], sizes = [8, 128], strides = [1, 1]} : vector<8x512xf32> to vector<8x128xf32>
      %840 = math.tanh %839 : vector<8x128xf32>
      %841 = vector.extract_strided_slice %826 {offsets = [0, 384], sizes = [8, 128], strides = [1, 1]} : vector<8x512xf32> to vector<8x128xf32>
      %842 = arith.negf %841 : vector<8x128xf32>
      %843 = math.exp %842 : vector<8x128xf32>
      %cst_587 = arith.constant 1.000000e+00 : f32
      %844 = vector.broadcast %cst_587 : f32 to vector<8x128xf32>
      %845 = arith.addf %844, %843 : vector<8x128xf32>
      %846 = arith.divf %844, %845 : vector<8x128xf32>
      %847 = arith.mulf %838, %823 : vector<8x128xf32>
      %848 = arith.mulf %832, %840 : vector<8x128xf32>
      %849 = arith.addf %847, %848 : vector<8x128xf32>
      %c0_588 = arith.constant 0 : index
      %c0_589 = arith.constant 0 : index
      %850 = vector.load %arg9[%c0_588, %c0_589] : memref<8x128xf32, #tpu.memory_space<vmem>>, vector<8x128xf32>
      tpu.vector_store %arg9[%c0_588, %c0_589], %849 {strides = array<i32>} : memref<8x128xf32, #tpu.memory_space<vmem>>, vector<8x128xf32>,
      %851 = math.tanh %849 : vector<8x128xf32>
      %852 = arith.mulf %846, %851 : vector<8x128xf32>
      %c0_590 = arith.constant 0 : index
      %c0_591 = arith.constant 0 : index
      %853 = vector.load %arg8[%c0_590, %c0_591] : memref<8x128xf32, #tpu.memory_space<vmem>>, vector<8x128xf32>
      tpu.vector_store %arg8[%c0_590, %c0_591], %852 {strides = array<i32>} : memref<8x128xf32, #tpu.memory_space<vmem>>, vector<8x128xf32>,
    } else {
    }
    %c0 = arith.constant 0 : index
    %c0_1 = arith.constant 0 : index
    %3 = vector.load %arg8[%c0, %c0_1] : memref<8x128xf32, #tpu.memory_space<vmem>>, vector<8x128xf32>
    %c0_2 = arith.constant 0 : index
    %c0_3 = arith.constant 0 : index
    %4 = vector.load %arg4[%c0_2, %c0_3] : memref<128x512xf32, #tpu.memory_space<vmem>>, vector<128x512xf32>
    %cst = arith.constant dense<0.000000e+00> : vector<8x512xf32>
    %5 = tpu.matmul %3, %4, %cst {dimension_numbers = #tpu.dot_dimension_numbers<[1], [0], [0], [1], [0, 0, 1, 1], [], []>} : vector<8x128xf32>, vector<128x512xf32>, vector<8x512xf32> -> vector<8x512xf32>
    %c0_4 = arith.constant 0 : index
    %c0_5 = arith.constant 0 : index
    %6 = vector.load %arg5[%c0_4, %c0_5] : memref<1x512xf32, #tpu.memory_space<vmem>>, vector<1x512xf32>
    %7 = vector.broadcast %6 : vector<1x512xf32> to vector<8x512xf32>
    %8 = arith.addf %5, %7 : vector<8x512xf32>
    %c0_6 = arith.constant 0 : index
    %c0_7 = arith.constant 0 : index
    %9 = vector.load %arg6[%c0_6, %c0_7] : memref<8x512xf32, #tpu.memory_space<vmem>>, vector<8x512xf32>
    tpu.vector_store %arg6[%c0_6, %c0_7], %8 {strides = array<i32>} : memref<8x512xf32, #tpu.memory_space<vmem>>, vector<8x512xf32>,
    return
  }
  func.func @transform_1(%arg0: i32, %arg1: memref<64xi32, #tpu.memory_space<smem>>) -> (i32, i32) {
    %c0_i32 = arith.constant 0 : i32
    %c0_i32_0 = arith.constant 0 : i32
    %c0_i32_1 = arith.constant 0 : i32
    return %c0_i32, %c0_i32_0 : i32, i32
  }
  func.func @transform_2(%arg0: i32, %arg1: memref<64xi32, #tpu.memory_space<smem>>) -> (i32, i32) {
    %c0_i32 = arith.constant 0 : i32
    %c0_i32_0 = arith.constant 0 : i32
    return %c0_i32, %arg0 : i32, i32
  }
  func.func @transform_3(%arg0: i32, %arg1: memref<64xi32, #tpu.memory_space<smem>>) -> (i32, i32) {
    %c0_i32 = arith.constant 0 : i32
    %c0_i32_0 = arith.constant 0 : i32
    return %c0_i32, %arg0 : i32, i32
  }
  func.func @transform_4(%arg0: i32, %arg1: memref<64xi32, #tpu.memory_space<smem>>) -> (i32, i32) {
    %c0_i32 = arith.constant 0 : i32
    %c0_i32_0 = arith.constant 0 : i32
    return %c0_i32, %arg0 : i32, i32
  }
}

</mosaic_0001>

<llo_original>
// kernel: tpu_custom_call.1
$region0: #{tpu_custom_call.1}
  #allocation0 [shape = 'u32[]', space=smem, size = 0x4, offset = 0x4, fixed_abs, tag = 'smem constant byte address 0x4 - core index']
  #allocation1 [shape = 'u32[144,128]{1,0:T(1,128)}', space=vmem, size = 0x12000, scoped, tag = 'internal scratch']
  #allocation2 [shape = 'f32[64,512]{1,0:T(8,128)}', space=vmem, size = 0x20000, scoped, tag = 'scratch operand']
  #allocation3 [shape = 'f32[8,128]{1,0:T(8,128)}', space=vmem, size = 0x1000, scoped, tag = 'scratch operand']
  #allocation4 [shape = 'f32[8,128]{1,0:T(8,128)}', space=vmem, size = 0x1000, scoped, tag = 'scratch operand']
  #allocation5 [shape = 's32[8]{0}', space=sflag, size = 0x20, scoped, tag = 'scratch operand']
  #allocation6 [shape = 's32[1]{0}', space=sflag, size = 0x4, scoped, tag = 'scoped memory for tpu_custom_call.1']
  #allocation7 [shape = 'u8[512]{0}', space=smem, size = 0x200, scoped, tag = 'prefetched SMEM operand 0']
  #allocation15 [shape = 's32[]', space=sflag, size = 0x4, offset = 0, fixed_abs, tag = 'sflag constant byte address 0x0 - dummy sync flag']
  #allocation16 [shape = 's32[]', space=sflag, size = 0x4, offset = 0, fixed_abs, tag = 'sflag constant byte address 0x0 - dummy sync flag']
  #allocation17 [shape = 's32[]', space=sflag, size = 0x4, offset = 0, fixed_abs, tag = 'sflag constant byte address 0x0 - dummy sync flag']
  #allocation18 [shape = 's32[]', space=sflag, size = 0x4, offset = 0, fixed_abs, tag = 'sflag constant byte address 0x0 - dummy sync flag']
  #allocation19 [shape = 's32[]', space=sflag, size = 0x4, offset = 0, fixed_abs, tag = 'sflag constant byte address 0x0 - dummy sync flag']
  #allocation20 [shape = 's32[]', space=sflag, size = 0x4, offset = 0, fixed_abs, tag = 'sflag constant byte address 0x0 - dummy sync flag']
  #allocation21 [shape = 's32[]', space=sflag, size = 0x4, offset = 0, fixed_abs, tag = 'sflag constant byte address 0x0 - dummy sync flag']
  #allocation22 [shape = 's32[]', space=sflag, size = 0x4, offset = 0, fixed_abs, tag = 'sflag constant byte address 0x0 - dummy sync flag']
  #allocation23 [shape = 's32[]', space=sflag, size = 0x4, offset = 0, fixed_abs, tag = 'sflag constant byte address 0x0 - dummy sync flag']
  #allocation24 [shape = 's32[]', space=sflag, size = 0x4, offset = 0, fixed_abs, tag = 'sflag constant byte address 0x0 - dummy sync flag']
  #allocation25 [shape = 's32[]', space=sflag, size = 0x4, offset = 0, fixed_abs, tag = 'sflag constant byte address 0x0 - dummy sync flag']
  #allocation26 [shape = 's32[]', space=sflag, size = 0x4, offset = 0, fixed_abs, tag = 'sflag constant byte address 0x0 - dummy sync flag']
  #allocation27 [shape = 's32[]', space=sflag, size = 0x4, offset = 0, fixed_abs, tag = 'sflag constant byte address 0x0 - dummy sync flag']
  #allocation28 [shape = 's32[]', space=sflag, size = 0x4, offset = 0, fixed_abs, tag = 'sflag constant byte address 0x0 - dummy sync flag']
  #allocation29 [shape = 's32[]', space=sflag, size = 0x4, offset = 0, fixed_abs, tag = 'sflag constant byte address 0x0 - dummy sync flag']
  #allocation30 [shape = 's32[]', space=sflag, size = 0x4, offset = 0, fixed_abs, tag = 'sflag constant byte address 0x0 - dummy sync flag']
  #allocation31 [shape = 's32[]', space=sflag, size = 0x4, offset = 0, fixed_abs, tag = 'sflag constant byte address 0x0 - dummy sync flag']
  #allocation32 [shape = 's32[]', space=sflag, size = 0x4, offset = 0, fixed_abs, tag = 'sflag constant byte address 0x0 - dummy sync flag']
  #allocation33 [shape = 's32[]', space=sflag, size = 0x4, offset = 0, fixed_abs, tag = 'sflag constant byte address 0x0 - dummy sync flag']
  #allocation34 [shape = 's32[]', space=sflag, size = 0x4, offset = 0, fixed_abs, tag = 'sflag constant byte address 0x0 - dummy sync flag']
  #allocation35 [shape = 's32[]', space=sflag, size = 0x4, offset = 0, fixed_abs, tag = 'sflag constant byte address 0x0 - dummy sync flag']
  #allocation36 [shape = 's32[]', space=sflag, size = 0x4, offset = 0, fixed_abs, tag = 'sflag constant byte address 0x0 - dummy sync flag']
  #allocation37 [shape = 's32[]', space=sflag, size = 0x4, offset = 0, fixed_abs, tag = 'sflag constant byte address 0x0 - dummy sync flag']
  #allocation38 [shape = 's32[]', space=sflag, size = 0x4, offset = 0, fixed_abs, tag = 'sflag constant byte address 0x0 - dummy sync flag']
  #allocation39 [shape = 's32[]', space=sflag, size = 0x4, offset = 0, fixed_abs, tag = 'sflag constant byte address 0x0 - dummy sync flag']
  #allocation40 [shape = 's32[]', space=sflag, size = 0x4, offset = 0, fixed_abs, tag = 'sflag constant byte address 0x0 - dummy sync flag']
  #allocation41 [shape = 's32[]', space=sflag, size = 0x4, offset = 0, fixed_abs, tag = 'sflag constant byte address 0x0 - dummy sync flag']
  #allocation42 [shape = 's32[]', space=sflag, size = 0x4, offset = 0, fixed_abs, tag = 'sflag constant byte address 0x0 - dummy sync flag']
  #allocation43 [shape = 's32[]', space=sflag, size = 0x4, offset = 0, fixed_abs, tag = 'sflag constant byte address 0x0 - dummy sync flag']
  #allocation44 [shape = 's32[]', space=sflag, size = 0x4, offset = 0, fixed_abs, tag = 'sflag constant byte address 0x0 - dummy sync flag']
  #allocation45 [shape = 's32[]', space=sflag, size = 0x4, offset = 0, fixed_abs, tag = 'sflag constant byte address 0x0 - dummy sync flag']
  #allocation46 [shape = 's32[]', space=sflag, size = 0x4, offset = 0, fixed_abs, tag = 'sflag constant byte address 0x0 - dummy sync flag']
  #allocation47 [shape = 's32[]', space=sflag, size = 0x4, offset = 0, fixed_abs, tag = 'sflag constant byte address 0x0 - dummy sync flag']
  #allocation48 [shape = 's32[]', space=sflag, size = 0x4, offset = 0, fixed_abs, tag = 'sflag constant byte address 0x0 - dummy sync flag']
  #allocation49 [shape = 's32[]', space=sflag, size = 0x4, offset = 0, fixed_abs, tag = 'sflag constant byte address 0x0 - dummy sync flag']
  #allocation50 [shape = 's32[]', space=sflag, size = 0x4, offset = 0, fixed_abs, tag = 'sflag constant byte address 0x0 - dummy sync flag']
  #allocation51 [shape = 's32[]', space=sflag, size = 0x4, offset = 0, fixed_abs, tag = 'sflag constant byte address 0x0 - dummy sync flag']
  #allocation52 [shape = 's32[]', space=sflag, size = 0x4, offset = 0, fixed_abs, tag = 'sflag constant byte address 0x0 - dummy sync flag']
  #allocation53 [shape = 's32[]', space=sflag, size = 0x4, offset = 0, fixed_abs, tag = 'sflag constant byte address 0x0 - dummy sync flag']
  #allocation54 [shape = 's32[]', space=sflag, size = 0x4, offset = 0, fixed_abs, tag = 'sflag constant byte address 0x0 - dummy sync flag']
  #allocation55 [shape = 's32[]', space=sflag, size = 0x4, offset = 0, fixed_abs, tag = 'sflag constant byte address 0x0 - dummy sync flag']
  #allocation56 [shape = 's32[]', space=sflag, size = 0x4, offset = 0, fixed_abs, tag = 'sflag constant byte address 0x0 - dummy sync flag']
  #allocation57 [shape = 's32[]', space=sflag, size = 0x4, offset = 0, fixed_abs, tag = 'sflag constant byte address 0x0 - dummy sync flag']
  #allocation58 [shape = 's32[]', space=sflag, size = 0x4, offset = 0, fixed_abs, tag = 'sflag constant byte address 0x0 - dummy sync flag']
  #allocation59 [shape = 's32[]', space=sflag, size = 0x4, offset = 0, fixed_abs, tag = 'sflag constant byte address 0x0 - dummy sync flag']
  #allocation60 [shape = 's32[]', space=sflag, size = 0x4, offset = 0, fixed_abs, tag = 'sflag constant byte address 0x0 - dummy sync flag']
  #allocation61 [shape = 's32[]', space=sflag, size = 0x4, offset = 0, fixed_abs, tag = 'sflag constant byte address 0x0 - dummy sync flag']
  #allocation62 [shape = 's32[]', space=sflag, size = 0x4, offset = 0, fixed_abs, tag = 'sflag constant byte address 0x0 - dummy sync flag']
  #allocation63 [shape = 's32[]', space=sflag, size = 0x4, offset = 0, fixed_abs, tag = 'sflag constant byte address 0x0 - dummy sync flag']
  #allocation64 [shape = 's32[]', space=sflag, size = 0x4, offset = 0, fixed_abs, tag = 'sflag constant byte address 0x0 - dummy sync flag']
  #allocation65 [shape = 's32[]', space=sflag, size = 0x4, offset = 0, fixed_abs, tag = 'sflag constant byte address 0x0 - dummy sync flag']
  #allocation66 [shape = 's32[]', space=sflag, size = 0x4, offset = 0, fixed_abs, tag = 'sflag constant byte address 0x0 - dummy sync flag']
  #allocation67 [shape = 's32[]', space=sflag, size = 0x4, offset = 0, fixed_abs, tag = 'sflag constant byte address 0x0 - dummy sync flag']
  #allocation68 [shape = 's32[]', space=sflag, size = 0x4, offset = 0, fixed_abs, tag = 'sflag constant byte address 0x0 - dummy sync flag']
  #allocation69 [shape = 's32[]', space=sflag, size = 0x4, offset = 0, fixed_abs, tag = 'sflag constant byte address 0x0 - dummy sync flag']
  #allocation70 [shape = 's32[]', space=sflag, size = 0x4, offset = 0, fixed_abs, tag = 'sflag constant byte address 0x0 - dummy sync flag']
  #allocation71 [shape = 's32[]', space=sflag, size = 0x4, offset = 0, fixed_abs, tag = 'sflag constant byte address 0x0 - dummy sync flag']
  #allocation72 [shape = 's32[]', space=sflag, size = 0x4, offset = 0, fixed_abs, tag = 'sflag constant byte address 0x0 - dummy sync flag']
  #allocation73 [shape = 's32[]', space=sflag, size = 0x4, offset = 0, fixed_abs, tag = 'sflag constant byte address 0x0 - dummy sync flag']
  #allocation74 [shape = 's32[]', space=sflag, size = 0x4, offset = 0, fixed_abs, tag = 'sflag constant byte address 0x0 - dummy sync flag']
  #allocation75 [shape = 's32[]', space=sflag, size = 0x4, offset = 0, fixed_abs, tag = 'sflag constant byte address 0x0 - dummy sync flag']
  #allocation76 [shape = 's32[]', space=sflag, size = 0x4, offset = 0, fixed_abs, tag = 'sflag constant byte address 0x0 - dummy sync flag']
  #allocation77 [shape = 's32[]', space=sflag, size = 0x4, offset = 0, fixed_abs, tag = 'sflag constant byte address 0x0 - dummy sync flag']
  #allocation78 [shape = 's32[]', space=sflag, size = 0x4, offset = 0, fixed_abs, tag = 'sflag constant byte address 0x0 - dummy sync flag']
  %s0 = inlined_call_operand.hbm [shape: s32[64], index: 0, kind: input, shape index: {}]
  %s1 = inlined_call_operand.hbm [shape: f32[1000,512], index: 1, kind: input, shape index: {}]
  %s2 = inlined_call_operand.hbm [shape: f32[128,512], index: 2, kind: input, shape index: {}]
  %s3 = inlined_call_operand.hbm [shape: f32[128,1024], index: 3, kind: input, shape index: {}]
  %s4 = inlined_call_operand.hbm [shape: f32[1,1024], index: 4, kind: input, shape index: {}]
  %s5 = inlined_call_operand.hbm [shape: f32[8,1024], index: 5, kind: output, shape index: {}]
  %s6 = sld [smem:[#allocation0]]
  $region61: #{tpu_custom_call.1} parent=0
    _
  %s8 = ssub.s32 1, %s6
  %s9 = scalar_select 0, %s8, %s6
  %11 = dma.hbm_to_smem %s0, 16, [#allocation7], [#allocation6]
  %12 = dma.done [#allocation6], 16
  %13 = sfence
  $region1: #{tpu_custom_call.1} parent=0
    #allocation8 [shape = 'u8[262144]{0}', space=vmem, size = 0x40000, scoped, tag = 'input window, operand 2, single buffered']
    #allocation9 [shape = 's32[2]{0}', space=sflag, size = 0x8, scoped, tag = 'scoped memory for tpu_custom_call.1']
    #allocation10 [shape = 's32[2]{0}', space=sflag, size = 0x8, scoped, tag = 'scoped memory for tpu_custom_call.1']
    #allocation11 [shape = 'u8[524288]{0}', space=vmem, size = 0x80000, scoped, tag = 'input window, operand 3']
    #allocation12 [shape = 's32[2]{0}', space=sflag, size = 0x8, scoped, tag = 'scoped memory for tpu_custom_call.1']
    #allocation13 [shape = 'u8[4096]{0}', space=vmem, size = 0x1000, scoped, tag = 'input window, operand 4']
    #allocation14 [shape = 'u8[32768]{0}', space=vmem, size = 0x8000, scoped, tag = 'output window, operand 0']
    %14 = vsyncpa [#allocation9], 0
    %15 = vsyncpa [#allocation12], 0
    %s16 = scalar_lea.sflag [#allocation12], 1
    %17 = vsyncpa %s16, 0
    %18 = vsyncpa [#allocation10], 0
    %s19 = scalar_lea.sflag [#allocation10], 1
    %20 = vsyncpa %s19, 0
    loop: start=0, step=1, limit=4
    $region2: #{tpu_custom_call.1} parent=1 // loop_pre_header
      _
    $region3: #{tpu_custom_call.1} parent=1 // loop_header
      %s22 = sphi 0, %s26
      %p23 = scmp.ge.s32.totalorder %s22, 4
      %s30 = sphi 0, %s30
      %s32 = sphi 0, %s30
      %s33 = sphi 0, %s32
      %s47 = sphi 0, %s33
      %s53 = sphi 0, %s55
      %s56 = sphi 0, %s53
      %s57 = sphi 0, %s56
      %s73 = sphi 0, %s57
      %s79 = sphi 0, %s81
      %s82 = sphi 0, %s79
      %s83 = sphi 0, %s82
      %s99 = sphi 0, %s83
      %s105 = sphi 0, %s107
      %s108 = sphi 0, %s105
      %s109 = sphi 0, %s108
      %s125 = sphi 0, %s109
    $region4: #{tpu_custom_call.1} parent=1 // loop_header_branch
      %25 = sbr.rel (%p23) target = $region8
    $region5: #{tpu_custom_call.1} parent=1 // loop_body
      %s27 = ssub.s32 %s22, 1
      %s28 = ssub.s32 %s22, 2
      %s29 = sadd.s32 %s22, 1
      %s31 = sadd.s32 %s30, 1
      %p34 = scmp.eq.s32.totalorder %s22, 1
      %p35 = scmp.ne.s32.totalorder %s30, %s32
      %p36 = scmp.eq.s32.totalorder %s22, 0
      %p37 = por %p35, %p36
      %p38 = scmp.ne.s32.totalorder %s30, %s32
      %p39 = scmp.eq.s32.totalorder %s27, 1
      %p40 = por %p38, %p39
      %p41 = scmp.ne.s32.totalorder %s32, %s33
      %p42 = scmp.eq.s32.totalorder %s27, 0
      %p43 = por %p41, %p42
      %p44 = scmp.ne.s32.totalorder %s32, %s33
      %p45 = scmp.eq.s32.totalorder %s28, 1
      %p46 = por %p44, %p45
      %p48 = scmp.ne.s32.totalorder %s33, %s47
      %p49 = scmp.eq.s32.totalorder %s28, 0
      %p50 = por %p48, %p49
      %s51 = ssub.s32 %s22, %s29
      %p52 = scmp.eq.s32.totalorder %s51, 0
      %s54 = sadd.s32 %s53, 1
      %s55 = scalar_select %p52, %s53, %s54
      %p58 = pneg %p52
      %p59 = scmp.eq.s32.totalorder %s22, 1
      %p60 = por %p58, %p59
      %p61 = scmp.ne.s32.totalorder %s53, %s56
      %p62 = scmp.eq.s32.totalorder %s22, 0
      %p63 = por %p61, %p62
      %p64 = scmp.ne.s32.totalorder %s53, %s56
      %p65 = scmp.eq.s32.totalorder %s27, 1
      %p66 = por %p64, %p65
      %p67 = scmp.ne.s32.totalorder %s56, %s57
      %p68 = scmp.eq.s32.totalorder %s27, 0
      %p69 = por %p67, %p68
      %p70 = scmp.ne.s32.totalorder %s56, %s57
      %p71 = scmp.eq.s32.totalorder %s28, 1
      %p72 = por %p70, %p71
      %p74 = scmp.ne.s32.totalorder %s57, %s73
      %p75 = scmp.eq.s32.totalorder %s28, 0
      %p76 = por %p74, %p75
      %s77 = ssub.s32 %s22, %s29
      %p78 = scmp.eq.s32.totalorder %s77, 0
      %s80 = sadd.s32 %s79, 1
      %s81 = scalar_select %p78, %s79, %s80
      %p84 = pneg %p78
      %p85 = scmp.eq.s32.totalorder %s22, 1
      %p86 = por %p84, %p85
      %p87 = scmp.ne.s32.totalorder %s79, %s82
      %p88 = scmp.eq.s32.totalorder %s22, 0
      %p89 = por %p87, %p88
      %p90 = scmp.ne.s32.totalorder %s79, %s82
      %p91 = scmp.eq.s32.totalorder %s27, 1
      %p92 = por %p90, %p91
      %p93 = scmp.ne.s32.totalorder %s82, %s83
      %p94 = scmp.eq.s32.totalorder %s27, 0
      %p95 = por %p93, %p94
      %p96 = scmp.ne.s32.totalorder %s82, %s83
      %p97 = scmp.eq.s32.totalorder %s28, 1
      %p98 = por %p96, %p97
      %p100 = scmp.ne.s32.totalorder %s83, %s99
      %p101 = scmp.eq.s32.totalorder %s28, 0
      %p102 = por %p100, %p101
      %s103 = ssub.s32 %s22, %s29
      %p104 = scmp.eq.s32.totalorder %s103, 0
      %s106 = sadd.s32 %s105, 1
      %s107 = scalar_select %p104, %s105, %s106
      %p110 = pneg %p104
      %p111 = scmp.eq.s32.totalorder %s22, 1
      %p112 = por %p110, %p111
      %p113 = scmp.ne.s32.totalorder %s105, %s108
      %p114 = scmp.eq.s32.totalorder %s22, 0
      %p115 = por %p113, %p114
      %p116 = scmp.ne.s32.totalorder %s105, %s108
      %p117 = scmp.eq.s32.totalorder %s27, 1
      %p118 = por %p116, %p117
      %p119 = scmp.ne.s32.totalorder %s108, %s109
      %p120 = scmp.eq.s32.totalorder %s27, 0
      %p121 = por %p119, %p120
      %p122 = scmp.ne.s32.totalorder %s108, %s109
      %p123 = scmp.eq.s32.totalorder %s28, 1
      %p124 = por %p122, %p123
      %p126 = scmp.ne.s32.totalorder %s109, %s125
      %p127 = scmp.eq.s32.totalorder %s28, 0
      %p128 = por %p126, %p127
      %p129 = scmp.le.s32.totalorder 1, %s22
      %p130 = scmp.lt.s32.totalorder %s22, 3
      %p131 = pnand %p129, %p130
      %p132 = pneg %p131
      // Predicated region
      $region9: #{tpu_custom_call.1} parent=5 // pred_check
        _
      $region10: #{tpu_custom_call.1} parent=5 // pred_check_branch
        %134 = sbr.rel (%p131) target = $region12
      $region11: #{tpu_custom_call.1} parent=5 // pred_region
        %s135 = ssub.s32 %s22, 1
        // Predicated region
        $region13: #{tpu_custom_call.1} parent=11 // pred_check
          %p136 = pneg %p43
        $region14: #{tpu_custom_call.1} parent=11 // pred_check_branch
          %138 = sbr.rel (%p136) target = $region16
        $region15: #{tpu_custom_call.1} parent=11 // pred_region
          %s140 = ssub.s32 8192, 8192
          %141 = vsyncadd [#allocation9], %s140
          %s142 = sshll.u32 [#allocation8], 4
          %s143 = int_to_ptr.vmem [resolvable:$true] %s142
          %148 = dma.hbm_to_vmem [thread:$0]  %s2, 8192, %s143, [#allocation9], 512, 512, 32
        $region16: #{tpu_custom_call.1} parent=11 // pred_fallthru
          _
      $region12: #{tpu_custom_call.1} parent=5 // pred_fallthru
        _
      %p149 = scmp.lt.s32.totalorder %s22, 2
      // Predicated region
      $region17: #{tpu_custom_call.1} parent=5 // pred_check
        %p150 = pneg %p149
      $region18: #{tpu_custom_call.1} parent=5 // pred_check_branch
        %152 = sbr.rel (%p150) target = $region20
      $region19: #{tpu_custom_call.1} parent=5 // pred_region
        // Predicated region
        $region21: #{tpu_custom_call.1} parent=19 // pred_check
          %p153 = pneg %p63
        $region22: #{tpu_custom_call.1} parent=19 // pred_check_branch
          %155 = sbr.rel (%p153) target = $region24
        $region23: #{tpu_custom_call.1} parent=19 // pred_region
          %s156 = sand.u32 %s22, 1
          %s157 = scalar_lea.sflag [#allocation12], %s156
          %s158 = sand.u32 %s53, 1
          %s159 = smul.addr %s158, 512
          %s160 = scalar_lea.vmem [#allocation11], %s159
          %s161 = smul.u32 4, %s22
          %s163 = ssub.s32 8192, 8192
          %164 = vsyncadd %s157, %s163
          %s165 = smul.addr %s161, 128
          %s166 = scalar_lea.hbm %s3, %s165
          %s167 = sshll.u32 %s160, 4
          %s168 = int_to_ptr.vmem [resolvable:$true] %s167
          %173 = dma.hbm_to_vmem [thread:$0]  %s166, 8192, %s168, %s157, 1024, 512, 32
        $region24: #{tpu_custom_call.1} parent=19 // pred_fallthru
          _
        // Predicated region
        $region25: #{tpu_custom_call.1} parent=19 // pred_check
          %p174 = pneg %p89
        $region26: #{tpu_custom_call.1} parent=19 // pred_check_branch
          %176 = sbr.rel (%p174) target = $region28
        $region27: #{tpu_custom_call.1} parent=19 // pred_region
          %s177 = sand.u32 %s22, 1
          %s178 = scalar_lea.sflag [#allocation12], %s177
          %s179 = sand.u32 %s79, 1
          %s180 = smul.addr %s179, 4
          %s181 = scalar_lea.vmem [#allocation13], %s180
          %s182 = smul.u32 4, %s22
          %s184 = ssub.s32 64, 64
          %185 = vsyncadd %s178, %s184
          %s186 = smul.addr %s182, 16
          %s187 = scalar_lea.hbm %s4, %s186
          %s189 = sshll.u32 %s181, 4
          %s190 = int_to_ptr.vmem [resolvable:$true] %s189
          %192 = dma.hbm_to_vmem [thread:$0]  %s187, 64, %s190, %s178
        $region28: #{tpu_custom_call.1} parent=19 // pred_fallthru
          _
      $region20: #{tpu_custom_call.1} parent=5 // pred_fallthru
        _
      %p193 = scmp.le.s32.totalorder 1, %s22
      %p194 = scmp.lt.s32.totalorder %s22, 3
      %p195 = pnand %p193, %p194
      %p196 = pneg %p195
      // Predicated region
      $region29: #{tpu_custom_call.1} parent=5 // pred_check
        _
      $region30: #{tpu_custom_call.1} parent=5 // pred_check_branch
        %198 = sbr.rel (%p195) target = $region32
      $region31: #{tpu_custom_call.1} parent=5 // pred_region
        %s199 = ssub.s32 %s22, 1
        // Predicated region
        $region33: #{tpu_custom_call.1} parent=31 // pred_check
          %p200 = pneg %p43
        $region34: #{tpu_custom_call.1} parent=31 // pred_check_branch
          %202 = sbr.rel (%p200) target = $region36
        $region35: #{tpu_custom_call.1} parent=31 // pred_region
          %203 = dma.done [#allocation9], 8192
        $region36: #{tpu_custom_call.1} parent=31 // pred_fallthru
          _
        %s204 = sand.u32 %s27, 1
        %s205 = scalar_lea.sflag [#allocation12], %s204
        %s206 = sand.u32 %s56, 1
        %s207 = smul.addr %s206, 512
        %s208 = scalar_lea.vmem [#allocation11], %s207
        // Predicated region
        $region37: #{tpu_custom_call.1} parent=31 // pred_check
          %p209 = pneg %p69
        $region38: #{tpu_custom_call.1} parent=31 // pred_check_branch
          %211 = sbr.rel (%p209) target = $region40
        $region39: #{tpu_custom_call.1} parent=31 // pred_region
          %212 = dma.done %s205, 8192
        $region40: #{tpu_custom_call.1} parent=31 // pred_fallthru
          _
        %s213 = sand.u32 %s27, 1
        %s214 = scalar_lea.sflag [#allocation12], %s213
        %s215 = sand.u32 %s82, 1
        %s216 = smul.addr %s215, 4
        %s217 = scalar_lea.vmem [#allocation13], %s216
        // Predicated region
        $region41: #{tpu_custom_call.1} parent=31 // pred_check
          %p218 = pneg %p95
        $region42: #{tpu_custom_call.1} parent=31 // pred_check_branch
          %220 = sbr.rel (%p218) target = $region44
        $region43: #{tpu_custom_call.1} parent=31 // pred_region
          %221 = dma.done %s214, 64
        $region44: #{tpu_custom_call.1} parent=31 // pred_fallthru
          _
        %p222 = pneg %p43
        %p223 = pneg %p40
        %s224 = sand.u32 %s27, 1
        %s225 = scalar_lea.sflag [#allocation12], %s224
        %s226 = sand.u32 %s56, 1
        %s227 = smul.addr %s226, 512
        %s228 = scalar_lea.vmem [#allocation11], %s227
        %p229 = pneg %p69
        %p230 = pneg %p66
        %s231 = sand.u32 %s27, 1
        %s232 = scalar_lea.sflag [#allocation12], %s231
        %s233 = sand.u32 %s82, 1
        %s234 = smul.addr %s233, 4
        %s235 = scalar_lea.vmem [#allocation13], %s234
        %p236 = pneg %p95
        %p237 = pneg %p92
        %p238 = pneg %p121
        %p239 = pneg %p118
        %s240 = sand.u32 %s108, 1
        %s241 = scalar_lea.sflag [#allocation10], %s240
        %s242 = sand.u32 %s108, 1
        %s243 = smul.addr %s242, 32
        %s244 = scalar_lea.vmem [#allocation14], %s243
        %s245 = smul.u32 4, %s27
        %s246 = smul.u32 4, %s27
        %s247 = smul.u32 4, %s27
        %p248 = scmp.eq.s32.totalorder %s27, 0
        // Predicated region
        $region45: #{tpu_custom_call.1} parent=31 // pred_check
          %p249 = pneg %p248
        $region46: #{tpu_custom_call.1} parent=31 // pred_check_branch
          %251 = sbr.rel (%p249) target = $region48
        $region47: #{tpu_custom_call.1} parent=31 // pred_region
          %s252 = sld [smem:[#allocation7]]
          %s253 = sshrl.u32 %s252, 3
          %s254 = sand.u32 %s252, 7
          %s255 = smul.u32 %s253, 32
          %s256 = sadd.s32 %s254, %s255
          %s257 = smul.addr %s256, 16
          %s258 = scalar_lea.hbm %s1, %s257
          %s260 = sshll.u32 [#allocation2], 4
          %s261 = int_to_ptr.vmem [resolvable:$true] %s260
          %263 = dma.hbm_to_vmem [thread:$0]  %s258, 64, %s261, [#allocation5], 128, 128, 1
          %s264 = sld [smem:[#allocation7 + $0x1]]
          %s265 = sshrl.u32 %s264, 3
          %s266 = sand.u32 %s264, 7
          %s267 = smul.u32 %s265, 32
          %s268 = sadd.s32 %s266, %s267
          %s269 = smul.addr %s268, 16
          %s270 = scalar_lea.hbm %s1, %s269
          %s271 = scalar_lea.vmem [#allocation2], 1
          %s273 = sshll.u32 %s271, 4
          %s274 = int_to_ptr.vmem [resolvable:$true] %s273
          %276 = dma.hbm_to_vmem [thread:$0]  %s270, 64, %s274, [#allocation5], 128, 128, 1
          %s277 = sld [smem:[#allocation7 + $0x2]]
          %s278 = sshrl.u32 %s277, 3
          %s279 = sand.u32 %s277, 7
          %s280 = smul.u32 %s278, 32
          %s281 = sadd.s32 %s279, %s280
          %s282 = smul.addr %s281, 16
          %s283 = scalar_lea.hbm %s1, %s282
          %s284 = scalar_lea.vmem [#allocation2], 2
          %s286 = sshll.u32 %s284, 4
          %s287 = int_to_ptr.vmem [resolvable:$true] %s286
          %289 = dma.hbm_to_vmem [thread:$0]  %s283, 64, %s287, [#allocation5], 128, 128, 1
          %s290 = sld [smem:[#allocation7 + $0x3]]
          %s291 = sshrl.u32 %s290, 3
          %s292 = sand.u32 %s290, 7
          %s293 = smul.u32 %s291, 32
          %s294 = sadd.s32 %s292, %s293
          %s295 = smul.addr %s294, 16
          %s296 = scalar_lea.hbm %s1, %s295
          %s297 = scalar_lea.vmem [#allocation2], 3
          %s299 = sshll.u32 %s297, 4
          %s300 = int_to_ptr.vmem [resolvable:$true] %s299
          %302 = dma.hbm_to_vmem [thread:$0]  %s296, 64, %s300, [#allocation5], 128, 128, 1
          %s303 = sld [smem:[#allocation7 + $0x4]]
          %s304 = sshrl.u32 %s303, 3
          %s305 = sand.u32 %s303, 7
          %s306 = smul.u32 %s304, 32
          %s307 = sadd.s32 %s305, %s306
          %s308 = smul.addr %s307, 16
          %s309 = scalar_lea.hbm %s1, %s308
          %s310 = scalar_lea.vmem [#allocation2], 4
          %s312 = sshll.u32 %s310, 4
          %s313 = int_to_ptr.vmem [resolvable:$true] %s312
          %315 = dma.hbm_to_vmem [thread:$0]  %s309, 64, %s313, [#allocation5], 128, 128, 1
          %s316 = sld [smem:[#allocation7 + $0x5]]
          %s317 = sshrl.u32 %s316, 3
          %s318 = sand.u32 %s316, 7
          %s319 = smul.u32 %s317, 32
          %s320 = sadd.s32 %s318, %s319
          %s321 = smul.addr %s320, 16
          %s322 = scalar_lea.hbm %s1, %s321
          %s323 = scalar_lea.vmem [#allocation2], 5
          %s325 = sshll.u32 %s323, 4
          %s326 = int_to_ptr.vmem [resolvable:$true] %s325
          %328 = dma.hbm_to_vmem [thread:$0]  %s322, 64, %s326, [#allocation5], 128, 128, 1
          %s329 = sld [smem:[#allocation7 + $0x6]]
          %s330 = sshrl.u32 %s329, 3
          %s331 = sand.u32 %s329, 7
          %s332 = smul.u32 %s330, 32
          %s333 = sadd.s32 %s331, %s332
          %s334 = smul.addr %s333, 16
          %s335 = scalar_lea.hbm %s1, %s334
          %s336 = scalar_lea.vmem [#allocation2], 6
          %s338 = sshll.u32 %s336, 4
          %s339 = int_to_ptr.vmem [resolvable:$true] %s338
          %341 = dma.hbm_to_vmem [thread:$0]  %s335, 64, %s339, [#allocation5], 128, 128, 1
          %s342 = sld [smem:[#allocation7 + $0x7]]
          %s343 = sshrl.u32 %s342, 3
          %s344 = sand.u32 %s342, 7
          %s345 = smul.u32 %s343, 32
          %s346 = sadd.s32 %s344, %s345
          %s347 = smul.addr %s346, 16
          %s348 = scalar_lea.hbm %s1, %s347
          %s349 = scalar_lea.vmem [#allocation2], 7
          %s351 = sshll.u32 %s349, 4
          %s352 = int_to_ptr.vmem [resolvable:$true] %s351
          %354 = dma.hbm_to_vmem [thread:$0]  %s348, 64, %s352, [#allocation5], 128, 128, 1
          %s355 = sld [smem:[#allocation7 + $0x8]]
          %s356 = sshrl.u32 %s355, 3
          %s357 = sand.u32 %s355, 7
          %s358 = smul.u32 %s356, 32
          %s359 = sadd.s32 %s357, %s358
          %s360 = smul.addr %s359, 16
          %s361 = scalar_lea.hbm %s1, %s360
          %s362 = scalar_lea.vmem [#allocation2], 32
          %s363 = scalar_lea.sflag [#allocation5], 1
          %s365 = sshll.u32 %s362, 4
          %s366 = int_to_ptr.vmem [resolvable:$true] %s365
          %368 = dma.hbm_to_vmem [thread:$0]  %s361, 64, %s366, %s363, 128, 128, 1
          %s369 = sld [smem:[#allocation7 + $0x9]]
          %s370 = sshrl.u32 %s369, 3
          %s371 = sand.u32 %s369, 7
          %s372 = smul.u32 %s370, 32
          %s373 = sadd.s32 %s371, %s372
          %s374 = smul.addr %s373, 16
          %s375 = scalar_lea.hbm %s1, %s374
          %s376 = scalar_lea.vmem [#allocation2], 33
          %s378 = sshll.u32 %s376, 4
          %s379 = int_to_ptr.vmem [resolvable:$true] %s378
          %381 = dma.hbm_to_vmem [thread:$0]  %s375, 64, %s379, %s363, 128, 128, 1
          %s382 = sld [smem:[#allocation7 + $0xa]]
          %s383 = sshrl.u32 %s382, 3
          %s384 = sand.u32 %s382, 7
          %s385 = smul.u32 %s383, 32
          %s386 = sadd.s32 %s384, %s385
          %s387 = smul.addr %s386, 16
          %s388 = scalar_lea.hbm %s1, %s387
          %s389 = scalar_lea.vmem [#allocation2], 34
          %s391 = sshll.u32 %s389, 4
          %s392 = int_to_ptr.vmem [resolvable:$true] %s391
          %394 = dma.hbm_to_vmem [thread:$0]  %s388, 64, %s392, %s363, 128, 128, 1
          %s395 = sld [smem:[#allocation7 + $0xb]]
          %s396 = sshrl.u32 %s395, 3
          %s397 = sand.u32 %s395, 7
          %s398 = smul.u32 %s396, 32
          %s399 = sadd.s32 %s397, %s398
          %s400 = smul.addr %s399, 16
          %s401 = scalar_lea.hbm %s1, %s400
          %s402 = scalar_lea.vmem [#allocation2], 35
          %s404 = sshll.u32 %s402, 4
          %s405 = int_to_ptr.vmem [resolvable:$true] %s404
          %407 = dma.hbm_to_vmem [thread:$0]  %s401, 64, %s405, %s363, 128, 128, 1
          %s408 = sld [smem:[#allocation7 + $0xc]]
          %s409 = sshrl.u32 %s408, 3
          %s410 = sand.u32 %s408, 7
          %s411 = smul.u32 %s409, 32
          %s412 = sadd.s32 %s410, %s411
          %s413 = smul.addr %s412, 16
          %s414 = scalar_lea.hbm %s1, %s413
          %s415 = scalar_lea.vmem [#allocation2], 36
          %s417 = sshll.u32 %s415, 4
          %s418 = int_to_ptr.vmem [resolvable:$true] %s417
          %420 = dma.hbm_to_vmem [thread:$0]  %s414, 64, %s418, %s363, 128, 128, 1
          %s421 = sld [smem:[#allocation7 + $0xd]]
          %s422 = sshrl.u32 %s421, 3
          %s423 = sand.u32 %s421, 7
          %s424 = smul.u32 %s422, 32
          %s425 = sadd.s32 %s423, %s424
          %s426 = smul.addr %s425, 16
          %s427 = scalar_lea.hbm %s1, %s426
          %s428 = scalar_lea.vmem [#allocation2], 37
          %s430 = sshll.u32 %s428, 4
          %s431 = int_to_ptr.vmem [resolvable:$true] %s430
          %433 = dma.hbm_to_vmem [thread:$0]  %s427, 64, %s431, %s363, 128, 128, 1
          %s434 = sld [smem:[#allocation7 + $0xe]]
          %s435 = sshrl.u32 %s434, 3
          %s436 = sand.u32 %s434, 7
          %s437 = smul.u32 %s435, 32
          %s438 = sadd.s32 %s436, %s437
          %s439 = smul.addr %s438, 16
          %s440 = scalar_lea.hbm %s1, %s439
          %s441 = scalar_lea.vmem [#allocation2], 38
          %s443 = sshll.u32 %s441, 4
          %s444 = int_to_ptr.vmem [resolvable:$true] %s443
          %446 = dma.hbm_to_vmem [thread:$0]  %s440, 64, %s444, %s363, 128, 128, 1
          %s447 = sld [smem:[#allocation7 + $0xf]]
          %s448 = sshrl.u32 %s447, 3
          %s449 = sand.u32 %s447, 7
          %s450 = smul.u32 %s448, 32
          %s451 = sadd.s32 %s449, %s450
          %s452 = smul.addr %s451, 16
          %s453 = scalar_lea.hbm %s1, %s452
          %s454 = scalar_lea.vmem [#allocation2], 39
          %s456 = sshll.u32 %s454, 4
          %s457 = int_to_ptr.vmem [resolvable:$true] %s456
          %459 = dma.hbm_to_vmem [thread:$0]  %s453, 64, %s457, %s363, 128, 128, 1
          %s460 = sld [smem:[#allocation7 + $0x10]]
          %s461 = sshrl.u32 %s460, 3
          %s462 = sand.u32 %s460, 7
          %s463 = smul.u32 %s461, 32
          %s464 = sadd.s32 %s462, %s463
          %s465 = smul.addr %s464, 16
          %s466 = scalar_lea.hbm %s1, %s465
          %s467 = scalar_lea.vmem [#allocation2], 64
          %s468 = scalar_lea.sflag [#allocation5], 2
          %s470 = sshll.u32 %s467, 4
          %s471 = int_to_ptr.vmem [resolvable:$true] %s470
          %473 = dma.hbm_to_vmem [thread:$0]  %s466, 64, %s471, %s468, 128, 128, 1
          %s474 = sld [smem:[#allocation7 + $0x11]]
          %s475 = sshrl.u32 %s474, 3
          %s476 = sand.u32 %s474, 7
          %s477 = smul.u32 %s475, 32
          %s478 = sadd.s32 %s476, %s477
          %s479 = smul.addr %s478, 16
          %s480 = scalar_lea.hbm %s1, %s479
          %s481 = scalar_lea.vmem [#allocation2], 65
          %s483 = sshll.u32 %s481, 4
          %s484 = int_to_ptr.vmem [resolvable:$true] %s483
          %486 = dma.hbm_to_vmem [thread:$0]  %s480, 64, %s484, %s468, 128, 128, 1
          %s487 = sld [smem:[#allocation7 + $0x12]]
          %s488 = sshrl.u32 %s487, 3
          %s489 = sand.u32 %s487, 7
          %s490 = smul.u32 %s488, 32
          %s491 = sadd.s32 %s489, %s490
          %s492 = smul.addr %s491, 16
          %s493 = scalar_lea.hbm %s1, %s492
          %s494 = scalar_lea.vmem [#allocation2], 66
          %s496 = sshll.u32 %s494, 4
          %s497 = int_to_ptr.vmem [resolvable:$true] %s496
          %499 = dma.hbm_to_vmem [thread:$0]  %s493, 64, %s497, %s468, 128, 128, 1
          %s500 = sld [smem:[#allocation7 + $0x13]]
          %s501 = sshrl.u32 %s500, 3
          %s502 = sand.u32 %s500, 7
          %s503 = smul.u32 %s501, 32
          %s504 = sadd.s32 %s502, %s503
          %s505 = smul.addr %s504, 16
          %s506 = scalar_lea.hbm %s1, %s505
          %s507 = scalar_lea.vmem [#allocation2], 67
          %s509 = sshll.u32 %s507, 4
          %s510 = int_to_ptr.vmem [resolvable:$true] %s509
          %512 = dma.hbm_to_vmem [thread:$0]  %s506, 64, %s510, %s468, 128, 128, 1
          %s513 = sld [smem:[#allocation7 + $0x14]]
          %s514 = sshrl.u32 %s513, 3
          %s515 = sand.u32 %s513, 7
          %s516 = smul.u32 %s514, 32
          %s517 = sadd.s32 %s515, %s516
          %s518 = smul.addr %s517, 16
          %s519 = scalar_lea.hbm %s1, %s518
          %s520 = scalar_lea.vmem [#allocation2], 68
          %s522 = sshll.u32 %s520, 4
          %s523 = int_to_ptr.vmem [resolvable:$true] %s522
          %525 = dma.hbm_to_vmem [thread:$0]  %s519, 64, %s523, %s468, 128, 128, 1
          %s526 = sld [smem:[#allocation7 + $0x15]]
          %s527 = sshrl.u32 %s526, 3
          %s528 = sand.u32 %s526, 7
          %s529 = smul.u32 %s527, 32
          %s530 = sadd.s32 %s528, %s529
          %s531 = smul.addr %s530, 16
          %s532 = scalar_lea.hbm %s1, %s531
          %s533 = scalar_lea.vmem [#allocation2], 69
          %s535 = sshll.u32 %s533, 4
          %s536 = int_to_ptr.vmem [resolvable:$true] %s535
          %538 = dma.hbm_to_vmem [thread:$0]  %s532, 64, %s536, %s468, 128, 128, 1
          %s539 = sld [smem:[#allocation7 + $0x16]]
          %s540 = sshrl.u32 %s539, 3
          %s541 = sand.u32 %s539, 7
          %s542 = smul.u32 %s540, 32
          %s543 = sadd.s32 %s541, %s542
          %s544 = smul.addr %s543, 16
          %s545 = scalar_lea.hbm %s1, %s544
          %s546 = scalar_lea.vmem [#allocation2], 70
          %s548 = sshll.u32 %s546, 4
          %s549 = int_to_ptr.vmem [resolvable:$true] %s548
          %551 = dma.hbm_to_vmem [thread:$0]  %s545, 64, %s549, %s468, 128, 128, 1
          %s552 = sld [smem:[#allocation7 + $0x17]]
          %s553 = sshrl.u32 %s552, 3
          %s554 = sand.u32 %s552, 7
          %s555 = smul.u32 %s553, 32
          %s556 = sadd.s32 %s554, %s555
          %s557 = smul.addr %s556, 16
          %s558 = scalar_lea.hbm %s1, %s557
          %s559 = scalar_lea.vmem [#allocation2], 71
          %s561 = sshll.u32 %s559, 4
          %s562 = int_to_ptr.vmem [resolvable:$true] %s561
          %564 = dma.hbm_to_vmem [thread:$0]  %s558, 64, %s562, %s468, 128, 128, 1
          %s565 = sld [smem:[#allocation7 + $0x18]]
          %s566 = sshrl.u32 %s565, 3
          %s567 = sand.u32 %s565, 7
          %s568 = smul.u32 %s566, 32
          %s569 = sadd.s32 %s567, %s568
          %s570 = smul.addr %s569, 16
          %s571 = scalar_lea.hbm %s1, %s570
          %s572 = scalar_lea.vmem [#allocation2], 96
          %s573 = scalar_lea.sflag [#allocation5], 3
          %s575 = sshll.u32 %s572, 4
          %s576 = int_to_ptr.vmem [resolvable:$true] %s575
          %578 = dma.hbm_to_vmem [thread:$0]  %s571, 64, %s576, %s573, 128, 128, 1
          %s579 = sld [smem:[#allocation7 + $0x19]]
          %s580 = sshrl.u32 %s579, 3
          %s581 = sand.u32 %s579, 7
          %s582 = smul.u32 %s580, 32
          %s583 = sadd.s32 %s581, %s582
          %s584 = smul.addr %s583, 16
          %s585 = scalar_lea.hbm %s1, %s584
          %s586 = scalar_lea.vmem [#allocation2], 97
          %s588 = sshll.u32 %s586, 4
          %s589 = int_to_ptr.vmem [resolvable:$true] %s588
          %591 = dma.hbm_to_vmem [thread:$0]  %s585, 64, %s589, %s573, 128, 128, 1
          %s592 = sld [smem:[#allocation7 + $0x1a]]
          %s593 = sshrl.u32 %s592, 3
          %s594 = sand.u32 %s592, 7
          %s595 = smul.u32 %s593, 32
          %s596 = sadd.s32 %s594, %s595
          %s597 = smul.addr %s596, 16
          %s598 = scalar_lea.hbm %s1, %s597
          %s599 = scalar_lea.vmem [#allocation2], 98
          %s601 = sshll.u32 %s599, 4
          %s602 = int_to_ptr.vmem [resolvable:$true] %s601
          %604 = dma.hbm_to_vmem [thread:$0]  %s598, 64, %s602, %s573, 128, 128, 1
          %s605 = sld [smem:[#allocation7 + $0x1b]]
          %s606 = sshrl.u32 %s605, 3
          %s607 = sand.u32 %s605, 7
          %s608 = smul.u32 %s606, 32
          %s609 = sadd.s32 %s607, %s608
          %s610 = smul.addr %s609, 16
          %s611 = scalar_lea.hbm %s1, %s610
          %s612 = scalar_lea.vmem [#allocation2], 99
          %s614 = sshll.u32 %s612, 4
          %s615 = int_to_ptr.vmem [resolvable:$true] %s614
          %617 = dma.hbm_to_vmem [thread:$0]  %s611, 64, %s615, %s573, 128, 128, 1
          %s618 = sld [smem:[#allocation7 + $0x1c]]
          %s619 = sshrl.u32 %s618, 3
          %s620 = sand.u32 %s618, 7
          %s621 = smul.u32 %s619, 32
          %s622 = sadd.s32 %s620, %s621
          %s623 = smul.addr %s622, 16
          %s624 = scalar_lea.hbm %s1, %s623
          %s625 = scalar_lea.vmem [#allocation2], 100
          %s627 = sshll.u32 %s625, 4
          %s628 = int_to_ptr.vmem [resolvable:$true] %s627
          %630 = dma.hbm_to_vmem [thread:$0]  %s624, 64, %s628, %s573, 128, 128, 1
          %s631 = sld [smem:[#allocation7 + $0x1d]]
          %s632 = sshrl.u32 %s631, 3
          %s633 = sand.u32 %s631, 7
          %s634 = smul.u32 %s632, 32
          %s635 = sadd.s32 %s633, %s634
          %s636 = smul.addr %s635, 16
          %s637 = scalar_lea.hbm %s1, %s636
          %s638 = scalar_lea.vmem [#allocation2], 101
          %s640 = sshll.u32 %s638, 4
          %s641 = int_to_ptr.vmem [resolvable:$true] %s640
          %643 = dma.hbm_to_vmem [thread:$0]  %s637, 64, %s641, %s573, 128, 128, 1
          %s644 = sld [smem:[#allocation7 + $0x1e]]
          %s645 = sshrl.u32 %s644, 3
          %s646 = sand.u32 %s644, 7
          %s647 = smul.u32 %s645, 32
          %s648 = sadd.s32 %s646, %s647
          %s649 = smul.addr %s648, 16
          %s650 = scalar_lea.hbm %s1, %s649
          %s651 = scalar_lea.vmem [#allocation2], 102
          %s653 = sshll.u32 %s651, 4
          %s654 = int_to_ptr.vmem [resolvable:$true] %s653
          %656 = dma.hbm_to_vmem [thread:$0]  %s650, 64, %s654, %s573, 128, 128, 1
          %s657 = sld [smem:[#allocation7 + $0x1f]]
          %s658 = sshrl.u32 %s657, 3
          %s659 = sand.u32 %s657, 7
          %s660 = smul.u32 %s658, 32
          %s661 = sadd.s32 %s659, %s660
          %s662 = smul.addr %s661, 16
          %s663 = scalar_lea.hbm %s1, %s662
          %s664 = scalar_lea.vmem [#allocation2], 103
          %s666 = sshll.u32 %s664, 4
          %s667 = int_to_ptr.vmem [resolvable:$true] %s666
          %669 = dma.hbm_to_vmem [thread:$0]  %s663, 64, %s667, %s573, 128, 128, 1
          %s670 = sld [smem:[#allocation7 + $0x20]]
          %s671 = sshrl.u32 %s670, 3
          %s672 = sand.u32 %s670, 7
          %s673 = smul.u32 %s671, 32
          %s674 = sadd.s32 %s672, %s673
          %s675 = smul.addr %s674, 16
          %s676 = scalar_lea.hbm %s1, %s675
          %s677 = scalar_lea.vmem [#allocation2], 128
          %s678 = scalar_lea.sflag [#allocation5], 4
          %s680 = sshll.u32 %s677, 4
          %s681 = int_to_ptr.vmem [resolvable:$true] %s680
          %683 = dma.hbm_to_vmem [thread:$0]  %s676, 64, %s681, %s678, 128, 128, 1
          %s684 = sld [smem:[#allocation7 + $0x21]]
          %s685 = sshrl.u32 %s684, 3
          %s686 = sand.u32 %s684, 7
          %s687 = smul.u32 %s685, 32
          %s688 = sadd.s32 %s686, %s687
          %s689 = smul.addr %s688, 16
          %s690 = scalar_lea.hbm %s1, %s689
          %s691 = scalar_lea.vmem [#allocation2], 129
          %s693 = sshll.u32 %s691, 4
          %s694 = int_to_ptr.vmem [resolvable:$true] %s693
          %696 = dma.hbm_to_vmem [thread:$0]  %s690, 64, %s694, %s678, 128, 128, 1
          %s697 = sld [smem:[#allocation7 + $0x22]]
          %s698 = sshrl.u32 %s697, 3
          %s699 = sand.u32 %s697, 7
          %s700 = smul.u32 %s698, 32
          %s701 = sadd.s32 %s699, %s700
          %s702 = smul.addr %s701, 16
          %s703 = scalar_lea.hbm %s1, %s702
          %s704 = scalar_lea.vmem [#allocation2], 130
          %s706 = sshll.u32 %s704, 4
          %s707 = int_to_ptr.vmem [resolvable:$true] %s706
          %709 = dma.hbm_to_vmem [thread:$0]  %s703, 64, %s707, %s678, 128, 128, 1
          %s710 = sld [smem:[#allocation7 + $0x23]]
          %s711 = sshrl.u32 %s710, 3
          %s712 = sand.u32 %s710, 7
          %s713 = smul.u32 %s711, 32
          %s714 = sadd.s32 %s712, %s713
          %s715 = smul.addr %s714, 16
          %s716 = scalar_lea.hbm %s1, %s715
          %s717 = scalar_lea.vmem [#allocation2], 131
          %s719 = sshll.u32 %s717, 4
          %s720 = int_to_ptr.vmem [resolvable:$true] %s719
          %722 = dma.hbm_to_vmem [thread:$0]  %s716, 64, %s720, %s678, 128, 128, 1
          %s723 = sld [smem:[#allocation7 + $0x24]]
          %s724 = sshrl.u32 %s723, 3
          %s725 = sand.u32 %s723, 7
          %s726 = smul.u32 %s724, 32
          %s727 = sadd.s32 %s725, %s726
          %s728 = smul.addr %s727, 16
          %s729 = scalar_lea.hbm %s1, %s728
          %s730 = scalar_lea.vmem [#allocation2], 132
          %s732 = sshll.u32 %s730, 4
          %s733 = int_to_ptr.vmem [resolvable:$true] %s732
          %735 = dma.hbm_to_vmem [thread:$0]  %s729, 64, %s733, %s678, 128, 128, 1
          %s736 = sld [smem:[#allocation7 + $0x25]]
          %s737 = sshrl.u32 %s736, 3
          %s738 = sand.u32 %s736, 7
          %s739 = smul.u32 %s737, 32
          %s740 = sadd.s32 %s738, %s739
          %s741 = smul.addr %s740, 16
          %s742 = scalar_lea.hbm %s1, %s741
          %s743 = scalar_lea.vmem [#allocation2], 133
          %s745 = sshll.u32 %s743, 4
          %s746 = int_to_ptr.vmem [resolvable:$true] %s745
          %748 = dma.hbm_to_vmem [thread:$0]  %s742, 64, %s746, %s678, 128, 128, 1
          %s749 = sld [smem:[#allocation7 + $0x26]]
          %s750 = sshrl.u32 %s749, 3
          %s751 = sand.u32 %s749, 7
          %s752 = smul.u32 %s750, 32
          %s753 = sadd.s32 %s751, %s752
          %s754 = smul.addr %s753, 16
          %s755 = scalar_lea.hbm %s1, %s754
          %s756 = scalar_lea.vmem [#allocation2], 134
          %s758 = sshll.u32 %s756, 4
          %s759 = int_to_ptr.vmem [resolvable:$true] %s758
          %761 = dma.hbm_to_vmem [thread:$0]  %s755, 64, %s759, %s678, 128, 128, 1
          %s762 = sld [smem:[#allocation7 + $0x27]]
          %s763 = sshrl.u32 %s762, 3
          %s764 = sand.u32 %s762, 7
          %s765 = smul.u32 %s763, 32
          %s766 = sadd.s32 %s764, %s765
          %s767 = smul.addr %s766, 16
          %s768 = scalar_lea.hbm %s1, %s767
          %s769 = scalar_lea.vmem [#allocation2], 135
          %s771 = sshll.u32 %s769, 4
          %s772 = int_to_ptr.vmem [resolvable:$true] %s771
          %774 = dma.hbm_to_vmem [thread:$0]  %s768, 64, %s772, %s678, 128, 128, 1
          %s775 = sld [smem:[#allocation7 + $0x28]]
          %s776 = sshrl.u32 %s775, 3
          %s777 = sand.u32 %s775, 7
          %s778 = smul.u32 %s776, 32
          %s779 = sadd.s32 %s777, %s778
          %s780 = smul.addr %s779, 16
          %s781 = scalar_lea.hbm %s1, %s780
          %s782 = scalar_lea.vmem [#allocation2], 160
          %s783 = scalar_lea.sflag [#allocation5], 5
          %s785 = sshll.u32 %s782, 4
          %s786 = int_to_ptr.vmem [resolvable:$true] %s785
          %788 = dma.hbm_to_vmem [thread:$0]  %s781, 64, %s786, %s783, 128, 128, 1
          %s789 = sld [smem:[#allocation7 + $0x29]]
          %s790 = sshrl.u32 %s789, 3
          %s791 = sand.u32 %s789, 7
          %s792 = smul.u32 %s790, 32
          %s793 = sadd.s32 %s791, %s792
          %s794 = smul.addr %s793, 16
          %s795 = scalar_lea.hbm %s1, %s794
          %s796 = scalar_lea.vmem [#allocation2], 161
          %s798 = sshll.u32 %s796, 4
          %s799 = int_to_ptr.vmem [resolvable:$true] %s798
          %801 = dma.hbm_to_vmem [thread:$0]  %s795, 64, %s799, %s783, 128, 128, 1
          %s802 = sld [smem:[#allocation7 + $0x2a]]
          %s803 = sshrl.u32 %s802, 3
          %s804 = sand.u32 %s802, 7
          %s805 = smul.u32 %s803, 32
          %s806 = sadd.s32 %s804, %s805
          %s807 = smul.addr %s806, 16
          %s808 = scalar_lea.hbm %s1, %s807
          %s809 = scalar_lea.vmem [#allocation2], 162
          %s811 = sshll.u32 %s809, 4
          %s812 = int_to_ptr.vmem [resolvable:$true] %s811
          %814 = dma.hbm_to_vmem [thread:$0]  %s808, 64, %s812, %s783, 128, 128, 1
          %s815 = sld [smem:[#allocation7 + $0x2b]]
          %s816 = sshrl.u32 %s815, 3
          %s817 = sand.u32 %s815, 7
          %s818 = smul.u32 %s816, 32
          %s819 = sadd.s32 %s817, %s818
          %s820 = smul.addr %s819, 16
          %s821 = scalar_lea.hbm %s1, %s820
          %s822 = scalar_lea.vmem [#allocation2], 163
          %s824 = sshll.u32 %s822, 4
          %s825 = int_to_ptr.vmem [resolvable:$true] %s824
          %827 = dma.hbm_to_vmem [thread:$0]  %s821, 64, %s825, %s783, 128, 128, 1
          %s828 = sld [smem:[#allocation7 + $0x2c]]
          %s829 = sshrl.u32 %s828, 3
          %s830 = sand.u32 %s828, 7
          %s831 = smul.u32 %s829, 32
          %s832 = sadd.s32 %s830, %s831
          %s833 = smul.addr %s832, 16
          %s834 = scalar_lea.hbm %s1, %s833
          %s835 = scalar_lea.vmem [#allocation2], 164
          %s837 = sshll.u32 %s835, 4
          %s838 = int_to_ptr.vmem [resolvable:$true] %s837
          %840 = dma.hbm_to_vmem [thread:$0]  %s834, 64, %s838, %s783, 128, 128, 1
          %s841 = sld [smem:[#allocation7 + $0x2d]]
          %s842 = sshrl.u32 %s841, 3
          %s843 = sand.u32 %s841, 7
          %s844 = smul.u32 %s842, 32
          %s845 = sadd.s32 %s843, %s844
          %s846 = smul.addr %s845, 16
          %s847 = scalar_lea.hbm %s1, %s846
          %s848 = scalar_lea.vmem [#allocation2], 165
          %s850 = sshll.u32 %s848, 4
          %s851 = int_to_ptr.vmem [resolvable:$true] %s850
          %853 = dma.hbm_to_vmem [thread:$0]  %s847, 64, %s851, %s783, 128, 128, 1
          %s854 = sld [smem:[#allocation7 + $0x2e]]
          %s855 = sshrl.u32 %s854, 3
          %s856 = sand.u32 %s854, 7
          %s857 = smul.u32 %s855, 32
          %s858 = sadd.s32 %s856, %s857
          %s859 = smul.addr %s858, 16
          %s860 = scalar_lea.hbm %s1, %s859
          %s861 = scalar_lea.vmem [#allocation2], 166
          %s863 = sshll.u32 %s861, 4
          %s864 = int_to_ptr.vmem [resolvable:$true] %s863
          %866 = dma.hbm_to_vmem [thread:$0]  %s860, 64, %s864, %s783, 128, 128, 1
          %s867 = sld [smem:[#allocation7 + $0x2f]]
          %s868 = sshrl.u32 %s867, 3
          %s869 = sand.u32 %s867, 7
          %s870 = smul.u32 %s868, 32
          %s871 = sadd.s32 %s869, %s870
          %s872 = smul.addr %s871, 16
          %s873 = scalar_lea.hbm %s1, %s872
          %s874 = scalar_lea.vmem [#allocation2], 167
          %s876 = sshll.u32 %s874, 4
          %s877 = int_to_ptr.vmem [resolvable:$true] %s876
          %879 = dma.hbm_to_vmem [thread:$0]  %s873, 64, %s877, %s783, 128, 128, 1
          %s880 = sld [smem:[#allocation7 + $0x30]]
          %s881 = sshrl.u32 %s880, 3
          %s882 = sand.u32 %s880, 7
          %s883 = smul.u32 %s881, 32
          %s884 = sadd.s32 %s882, %s883
          %s885 = smul.addr %s884, 16
          %s886 = scalar_lea.hbm %s1, %s885
          %s887 = scalar_lea.vmem [#allocation2], 192
          %s888 = scalar_lea.sflag [#allocation5], 6
          %s890 = sshll.u32 %s887, 4
          %s891 = int_to_ptr.vmem [resolvable:$true] %s890
          %893 = dma.hbm_to_vmem [thread:$0]  %s886, 64, %s891, %s888, 128, 128, 1
          %s894 = sld [smem:[#allocation7 + $0x31]]
          %s895 = sshrl.u32 %s894, 3
          %s896 = sand.u32 %s894, 7
          %s897 = smul.u32 %s895, 32
          %s898 = sadd.s32 %s896, %s897
          %s899 = smul.addr %s898, 16
          %s900 = scalar_lea.hbm %s1, %s899
          %s901 = scalar_lea.vmem [#allocation2], 193
          %s903 = sshll.u32 %s901, 4
          %s904 = int_to_ptr.vmem [resolvable:$true] %s903
          %906 = dma.hbm_to_vmem [thread:$0]  %s900, 64, %s904, %s888, 128, 128, 1
          %s907 = sld [smem:[#allocation7 + $0x32]]
          %s908 = sshrl.u32 %s907, 3
          %s909 = sand.u32 %s907, 7
          %s910 = smul.u32 %s908, 32
          %s911 = sadd.s32 %s909, %s910
          %s912 = smul.addr %s911, 16
          %s913 = scalar_lea.hbm %s1, %s912
          %s914 = scalar_lea.vmem [#allocation2], 194
          %s916 = sshll.u32 %s914, 4
          %s917 = int_to_ptr.vmem [resolvable:$true] %s916
          %919 = dma.hbm_to_vmem [thread:$0]  %s913, 64, %s917, %s888, 128, 128, 1
          %s920 = sld [smem:[#allocation7 + $0x33]]
          %s921 = sshrl.u32 %s920, 3
          %s922 = sand.u32 %s920, 7
          %s923 = smul.u32 %s921, 32
          %s924 = sadd.s32 %s922, %s923
          %s925 = smul.addr %s924, 16
          %s926 = scalar_lea.hbm %s1, %s925
          %s927 = scalar_lea.vmem [#allocation2], 195
          %s929 = sshll.u32 %s927, 4
          %s930 = int_to_ptr.vmem [resolvable:$true] %s929
          %932 = dma.hbm_to_vmem [thread:$0]  %s926, 64, %s930, %s888, 128, 128, 1
          %s933 = sld [smem:[#allocation7 + $0x34]]
          %s934 = sshrl.u32 %s933, 3
          %s935 = sand.u32 %s933, 7
          %s936 = smul.u32 %s934, 32
          %s937 = sadd.s32 %s935, %s936
          %s938 = smul.addr %s937, 16
          %s939 = scalar_lea.hbm %s1, %s938
          %s940 = scalar_lea.vmem [#allocation2], 196
          %s942 = sshll.u32 %s940, 4
          %s943 = int_to_ptr.vmem [resolvable:$true] %s942
          %945 = dma.hbm_to_vmem [thread:$0]  %s939, 64, %s943, %s888, 128, 128, 1
          %s946 = sld [smem:[#allocation7 + $0x35]]
          %s947 = sshrl.u32 %s946, 3
          %s948 = sand.u32 %s946, 7
          %s949 = smul.u32 %s947, 32
          %s950 = sadd.s32 %s948, %s949
          %s951 = smul.addr %s950, 16
          %s952 = scalar_lea.hbm %s1, %s951
          %s953 = scalar_lea.vmem [#allocation2], 197
          %s955 = sshll.u32 %s953, 4
          %s956 = int_to_ptr.vmem [resolvable:$true] %s955
          %958 = dma.hbm_to_vmem [thread:$0]  %s952, 64, %s956, %s888, 128, 128, 1
          %s959 = sld [smem:[#allocation7 + $0x36]]
          %s960 = sshrl.u32 %s959, 3
          %s961 = sand.u32 %s959, 7
          %s962 = smul.u32 %s960, 32
          %s963 = sadd.s32 %s961, %s962
          %s964 = smul.addr %s963, 16
          %s965 = scalar_lea.hbm %s1, %s964
          %s966 = scalar_lea.vmem [#allocation2], 198
          %s968 = sshll.u32 %s966, 4
          %s969 = int_to_ptr.vmem [resolvable:$true] %s968
          %971 = dma.hbm_to_vmem [thread:$0]  %s965, 64, %s969, %s888, 128, 128, 1
          %s972 = sld [smem:[#allocation7 + $0x37]]
          %s973 = sshrl.u32 %s972, 3
          %s974 = sand.u32 %s972, 7
          %s975 = smul.u32 %s973, 32
          %s976 = sadd.s32 %s974, %s975
          %s977 = smul.addr %s976, 16
          %s978 = scalar_lea.hbm %s1, %s977
          %s979 = scalar_lea.vmem [#allocation2], 199
          %s981 = sshll.u32 %s979, 4
          %s982 = int_to_ptr.vmem [resolvable:$true] %s981
          %984 = dma.hbm_to_vmem [thread:$0]  %s978, 64, %s982, %s888, 128, 128, 1
          %s985 = sld [smem:[#allocation7 + $0x38]]
          %s986 = sshrl.u32 %s985, 3
          %s987 = sand.u32 %s985, 7
          %s988 = smul.u32 %s986, 32
          %s989 = sadd.s32 %s987, %s988
          %s990 = smul.addr %s989, 16
          %s991 = scalar_lea.hbm %s1, %s990
          %s992 = scalar_lea.vmem [#allocation2], 224
          %s993 = scalar_lea.sflag [#allocation5], 7
          %s995 = sshll.u32 %s992, 4
          %s996 = int_to_ptr.vmem [resolvable:$true] %s995
          %998 = dma.hbm_to_vmem [thread:$0]  %s991, 64, %s996, %s993, 128, 128, 1
          %s999 = sld [smem:[#allocation7 + $0x39]]
          %s1000 = sshrl.u32 %s999, 3
          %s1001 = sand.u32 %s999, 7
          %s1002 = smul.u32 %s1000, 32
          %s1003 = sadd.s32 %s1001, %s1002
          %s1004 = smul.addr %s1003, 16
          %s1005 = scalar_lea.hbm %s1, %s1004
          %s1006 = scalar_lea.vmem [#allocation2], 225
          %s1008 = sshll.u32 %s1006, 4
          %s1009 = int_to_ptr.vmem [resolvable:$true] %s1008
          %1011 = dma.hbm_to_vmem [thread:$0]  %s1005, 64, %s1009, %s993, 128, 128, 1
          %s1012 = sld [smem:[#allocation7 + $0x3a]]
          %s1013 = sshrl.u32 %s1012, 3
          %s1014 = sand.u32 %s1012, 7
          %s1015 = smul.u32 %s1013, 32
          %s1016 = sadd.s32 %s1014, %s1015
          %s1017 = smul.addr %s1016, 16
          %s1018 = scalar_lea.hbm %s1, %s1017
          %s1019 = scalar_lea.vmem [#allocation2], 226
          %s1021 = sshll.u32 %s1019, 4
          %s1022 = int_to_ptr.vmem [resolvable:$true] %s1021
          %1024 = dma.hbm_to_vmem [thread:$0]  %s1018, 64, %s1022, %s993, 128, 128, 1
          %s1025 = sld [smem:[#allocation7 + $0x3b]]
          %s1026 = sshrl.u32 %s1025, 3
          %s1027 = sand.u32 %s1025, 7
          %s1028 = smul.u32 %s1026, 32
          %s1029 = sadd.s32 %s1027, %s1028
          %s1030 = smul.addr %s1029, 16
          %s1031 = scalar_lea.hbm %s1, %s1030
          %s1032 = scalar_lea.vmem [#allocation2], 227
          %s1034 = sshll.u32 %s1032, 4
          %s1035 = int_to_ptr.vmem [resolvable:$true] %s1034
          %1037 = dma.hbm_to_vmem [thread:$0]  %s1031, 64, %s1035, %s993, 128, 128, 1
          %s1038 = sld [smem:[#allocation7 + $0x3c]]
          %s1039 = sshrl.u32 %s1038, 3
          %s1040 = sand.u32 %s1038, 7
          %s1041 = smul.u32 %s1039, 32
          %s1042 = sadd.s32 %s1040, %s1041
          %s1043 = smul.addr %s1042, 16
          %s1044 = scalar_lea.hbm %s1, %s1043
          %s1045 = scalar_lea.vmem [#allocation2], 228
          %s1047 = sshll.u32 %s1045, 4
          %s1048 = int_to_ptr.vmem [resolvable:$true] %s1047
          %1050 = dma.hbm_to_vmem [thread:$0]  %s1044, 64, %s1048, %s993, 128, 128, 1
          %s1051 = sld [smem:[#allocation7 + $0x3d]]
          %s1052 = sshrl.u32 %s1051, 3
          %s1053 = sand.u32 %s1051, 7
          %s1054 = smul.u32 %s1052, 32
          %s1055 = sadd.s32 %s1053, %s1054
          %s1056 = smul.addr %s1055, 16
          %s1057 = scalar_lea.hbm %s1, %s1056
          %s1058 = scalar_lea.vmem [#allocation2], 229
          %s1060 = sshll.u32 %s1058, 4
          %s1061 = int_to_ptr.vmem [resolvable:$true] %s1060
          %1063 = dma.hbm_to_vmem [thread:$0]  %s1057, 64, %s1061, %s993, 128, 128, 1
          %s1064 = sld [smem:[#allocation7 + $0x3e]]
          %s1065 = sshrl.u32 %s1064, 3
          %s1066 = sand.u32 %s1064, 7
          %s1067 = smul.u32 %s1065, 32
          %s1068 = sadd.s32 %s1066, %s1067
          %s1069 = smul.addr %s1068, 16
          %s1070 = scalar_lea.hbm %s1, %s1069
          %s1071 = scalar_lea.vmem [#allocation2], 230
          %s1073 = sshll.u32 %s1071, 4
          %s1074 = int_to_ptr.vmem [resolvable:$true] %s1073
          %1076 = dma.hbm_to_vmem [thread:$0]  %s1070, 64, %s1074, %s993, 128, 128, 1
          %s1077 = sld [smem:[#allocation7 + $0x3f]]
          %s1078 = sshrl.u32 %s1077, 3
          %s1079 = sand.u32 %s1077, 7
          %s1080 = smul.u32 %s1078, 32
          %s1081 = sadd.s32 %s1079, %s1080
          %s1082 = smul.addr %s1081, 16
          %s1083 = scalar_lea.hbm %s1, %s1082
          %s1084 = scalar_lea.vmem [#allocation2], 231
          %s1086 = sshll.u32 %s1084, 4
          %s1087 = int_to_ptr.vmem [resolvable:$true] %s1086
          %1089 = dma.hbm_to_vmem [thread:$0]  %s1083, 64, %s1087, %s993, 128, 128, 1
          %1090 = vst [vmem:[#allocation3] sm:$0xff] 0.0
          %1091 = vst [vmem:[#allocation4] sm:$0xff] 0.0
          %s1092 = smul.u32 1, 4
          %s1093 = sshll.u32 %s1092, 4
          %1094 = dma.done [#allocation5], %s1093
          %s1095 = sshll.u32 %s1092, 4
          %1096 = dma.done [#allocation5], %s1095
          %s1097 = sshll.u32 %s1092, 4
          %1098 = dma.done [#allocation5], %s1097
          %s1099 = sshll.u32 %s1092, 4
          %1100 = dma.done [#allocation5], %s1099
          %s1101 = sshll.u32 %s1092, 4
          %1102 = dma.done [#allocation5], %s1101
          %s1103 = sshll.u32 %s1092, 4
          %1104 = dma.done [#allocation5], %s1103
          %s1105 = sshll.u32 %s1092, 4
          %1106 = dma.done [#allocation5], %s1105
          %s1107 = sshll.u32 %s1092, 4
          %1108 = dma.done [#allocation5], %s1107
          %v1109 = vld [vmem:[#allocation2] sm:$0xff]
          %v1110 = vld [vmem:[#allocation2 + $0x8] sm:$0xff]
          %v1111 = vld [vmem:[#allocation2 + $0x10] sm:$0xff]
          %v1112 = vld [vmem:[#allocation2 + $0x18] sm:$0xff]
          %v1113 = vld [vmem:[#allocation3] sm:$0xff]
          %v1114 = vld [vmem:[#allocation4] sm:$0xff]
          %v1115 = vld [vmem:[#allocation8] sm:$0xff]
          %v1116 = vld [vmem:[#allocation8 + $0x8] sm:$0xff]
          %v1117 = vld [vmem:[#allocation8 + $0x10] sm:$0xff]
          %v1118 = vld [vmem:[#allocation8 + $0x18] sm:$0xff]
          %v1119 = vld [vmem:[#allocation8 + $0x20] sm:$0xff]
          %v1120 = vld [vmem:[#allocation8 + $0x28] sm:$0xff]
          %v1121 = vld [vmem:[#allocation8 + $0x30] sm:$0xff]
          %v1122 = vld [vmem:[#allocation8 + $0x38] sm:$0xff]
          %v1123 = vld [vmem:[#allocation8 + $0x40] sm:$0xff]
          %v1124 = vld [vmem:[#allocation8 + $0x48] sm:$0xff]
          %v1125 = vld [vmem:[#allocation8 + $0x50] sm:$0xff]
          %v1126 = vld [vmem:[#allocation8 + $0x58] sm:$0xff]
          %v1127 = vld [vmem:[#allocation8 + $0x60] sm:$0xff]
          %v1128 = vld [vmem:[#allocation8 + $0x68] sm:$0xff]
          %v1129 = vld [vmem:[#allocation8 + $0x70] sm:$0xff]
          %v1130 = vld [vmem:[#allocation8 + $0x78] sm:$0xff]
          %v1131 = vld [vmem:[#allocation8 + $0x80] sm:$0xff]
          %v1132 = vld [vmem:[#allocation8 + $0x88] sm:$0xff]
          %v1133 = vld [vmem:[#allocation8 + $0x90] sm:$0xff]
          %v1134 = vld [vmem:[#allocation8 + $0x98] sm:$0xff]
          %v1135 = vld [vmem:[#allocation8 + $0xa0] sm:$0xff]
          %v1136 = vld [vmem:[#allocation8 + $0xa8] sm:$0xff]
          %v1137 = vld [vmem:[#allocation8 + $0xb0] sm:$0xff]
          %v1138 = vld [vmem:[#allocation8 + $0xb8] sm:$0xff]
          %v1139 = vld [vmem:[#allocation8 + $0xc0] sm:$0xff]
          %v1140 = vld [vmem:[#allocation8 + $0xc8] sm:$0xff]
          %v1141 = vld [vmem:[#allocation8 + $0xd0] sm:$0xff]
          %v1142 = vld [vmem:[#allocation8 + $0xd8] sm:$0xff]
          %v1143 = vld [vmem:[#allocation8 + $0xe0] sm:$0xff]
          %v1144 = vld [vmem:[#allocation8 + $0xe8] sm:$0xff]
          %v1145 = vld [vmem:[#allocation8 + $0xf0] sm:$0xff]
          %v1146 = vld [vmem:[#allocation8 + $0xf8] sm:$0xff]
          %v1147 = vld [vmem:[#allocation8 + $0x100] sm:$0xff]
          %v1148 = vld [vmem:[#allocation8 + $0x108] sm:$0xff]
          %v1149 = vld [vmem:[#allocation8 + $0x110] sm:$0xff]
          %v1150 = vld [vmem:[#allocation8 + $0x118] sm:$0xff]
          %v1151 = vld [vmem:[#allocation8 + $0x120] sm:$0xff]
          %v1152 = vld [vmem:[#allocation8 + $0x128] sm:$0xff]
          %v1153 = vld [vmem:[#allocation8 + $0x130] sm:$0xff]
          %v1154 = vld [vmem:[#allocation8 + $0x138] sm:$0xff]
          %v1155 = vld [vmem:[#allocation8 + $0x140] sm:$0xff]
          %v1156 = vld [vmem:[#allocation8 + $0x148] sm:$0xff]
          %v1157 = vld [vmem:[#allocation8 + $0x150] sm:$0xff]
          %v1158 = vld [vmem:[#allocation8 + $0x158] sm:$0xff]
          %v1159 = vld [vmem:[#allocation8 + $0x160] sm:$0xff]
          %v1160 = vld [vmem:[#allocation8 + $0x168] sm:$0xff]
          %v1161 = vld [vmem:[#allocation8 + $0x170] sm:$0xff]
          %v1162 = vld [vmem:[#allocation8 + $0x178] sm:$0xff]
          %v1163 = vld [vmem:[#allocation8 + $0x180] sm:$0xff]
          %v1164 = vld [vmem:[#allocation8 + $0x188] sm:$0xff]
          %v1165 = vld [vmem:[#allocation8 + $0x190] sm:$0xff]
          %v1166 = vld [vmem:[#allocation8 + $0x198] sm:$0xff]
          %v1167 = vld [vmem:[#allocation8 + $0x1a0] sm:$0xff]
          %v1168 = vld [vmem:[#allocation8 + $0x1a8] sm:$0xff]
          %v1169 = vld [vmem:[#allocation8 + $0x1b0] sm:$0xff]
          %v1170 = vld [vmem:[#allocation8 + $0x1b8] sm:$0xff]
          %v1171 = vld [vmem:[#allocation8 + $0x1c0] sm:$0xff]
          %v1172 = vld [vmem:[#allocation8 + $0x1c8] sm:$0xff]
          %v1173 = vld [vmem:[#allocation8 + $0x1d0] sm:$0xff]
          %v1174 = vld [vmem:[#allocation8 + $0x1d8] sm:$0xff]
          %v1175 = vld [vmem:[#allocation8 + $0x1e0] sm:$0xff]
          %v1176 = vld [vmem:[#allocation8 + $0x1e8] sm:$0xff]
          %v1177 = vld [vmem:[#allocation8 + $0x1f0] sm:$0xff]
          %v1178 = vld [vmem:[#allocation8 + $0x1f8] sm:$0xff]
          %1179 = vmatprep.subr.mxu0 %v1116
          %1180 = vmatpush1.msra.mxu0 %v1115
          %1181 = vmatprep.subr.mxu0 %v1120
          %1182 = vmatpush1.msra.mxu0 %v1119
          %1183 = vmatprep.subr.mxu0 %v1124
          %1184 = vmatpush1.msra.mxu0 %v1123
          %1185 = vmatprep.subr.mxu0 %v1128
          %1186 = vmatpush1.msra.mxu0 %v1127
          %1187 = vmatprep.subr.mxu0 %v1132
          %1188 = vmatpush1.msra.mxu0 %v1131
          %1189 = vmatprep.subr.mxu0 %v1136
          %1190 = vmatpush1.msra.mxu0 %v1135
          %1191 = vmatprep.subr.mxu0 %v1140
          %1192 = vmatpush1.msra.mxu0 %v1139
          %1193 = vmatprep.subr.mxu0 %v1144
          %1194 = vmatpush1.msra.mxu0 %v1143
          %1195 = vmatprep.subr.mxu0 %v1148
          %1196 = vmatpush1.msra.mxu0 %v1147
          %1197 = vmatprep.subr.mxu0 %v1152
          %1198 = vmatpush1.msra.mxu0 %v1151
          %1199 = vmatprep.subr.mxu0 %v1156
          %1200 = vmatpush1.msra.mxu0 %v1155
          %1201 = vmatprep.subr.mxu0 %v1160
          %1202 = vmatpush1.msra.mxu0 %v1159
          %1203 = vmatprep.subr.mxu0 %v1164
          %1204 = vmatpush1.msra.mxu0 %v1163
          %1205 = vmatprep.subr.mxu0 %v1168
          %1206 = vmatpush1.msra.mxu0 %v1167
          %1207 = vmatprep.subr.mxu0 %v1172
          %1208 = vmatpush1.msra.mxu0 %v1171
          %1209 = vmatprep.subr.mxu0 %v1176
          %1210 = vmatpush1.msra.mxu0 %v1175
          %1211 = vmatprep.subr.mxu0 0.0
          %1212 = vmatpush1.msra.mxu0 0.0
          %1213 = vmatprep.subr.mxu0 0.0
          %1214 = vmatpush1.msra.mxu0 0.0
          %1215 = vmatprep.subr.mxu0 0.0
          %1216 = vmatpush1.msra.mxu0 0.0
          %1217 = vmatprep.subr.mxu0 0.0
          %1218 = vmatpush1.msra.mxu0 0.0
          %1219 = vmatprep.subr.mxu0 0.0
          %1220 = vmatpush1.msra.mxu0 0.0
          %1221 = vmatprep.subr.mxu0 0.0
          %1222 = vmatpush1.msra.mxu0 0.0
          %1223 = vmatprep.subr.mxu0 0.0
          %1224 = vmatpush1.msra.mxu0 0.0
          %1225 = vmatprep.subr.mxu0 0.0
          %1226 = vmatpush1.msra.mxu0 0.0
          %1227 = vmatprep.subr.mxu0 0.0
          %1228 = vmatpush1.msra.mxu0 0.0
          %1229 = vmatprep.subr.mxu0 0.0
          %1230 = vmatpush1.msra.mxu0 0.0
          %1231 = vmatprep.subr.mxu0 0.0
          %1232 = vmatpush1.msra.mxu0 0.0
          %1233 = vmatprep.subr.mxu0 0.0
          %1234 = vmatpush1.msra.mxu0 0.0
          %1235 = vmatprep.subr.mxu0 0.0
          %1236 = vmatpush1.msra.mxu0 0.0
          %1237 = vmatprep.subr.mxu0 0.0
          %1238 = vmatpush1.msra.mxu0 0.0
          %1239 = vmatprep.subr.mxu0 0.0
          %1240 = vmatpush1.msra.mxu0 0.0
          %1241 = vmatprep.subr.mxu0 0.0
          %1242 = vmatpush1.msra.mxu0 0.0
          %1243 = vmatprep.mubr.f32.mxu0 0.0
          %1244 = vmatmul.mubr.f32.gmra.mrb[0].mxu0 %v1113
          %v1245 = vpop.f32.mrb[0].mxu0
          %v1246 = vadd.f32 0.0, %v1245
          %v1247 = vpop.f32.mrb[0].mxu0
          %v1248 = vadd.f32 0.0, %v1247
          %1249 = vdwg.mxu0
          %1250 = vmatprep.subr.mxu0 %v1118
          %1251 = vmatpush1.msra.mxu0 %v1117
          %1252 = vmatprep.subr.mxu0 %v1122
          %1253 = vmatpush1.msra.mxu0 %v1121
          %1254 = vmatprep.subr.mxu0 %v1126
          %1255 = vmatpush1.msra.mxu0 %v1125
          %1256 = vmatprep.subr.mxu0 %v1130
          %1257 = vmatpush1.msra.mxu0 %v1129
          %1258 = vmatprep.subr.mxu0 %v1134
          %1259 = vmatpush1.msra.mxu0 %v1133
          %1260 = vmatprep.subr.mxu0 %v1138
          %1261 = vmatpush1.msra.mxu0 %v1137
          %1262 = vmatprep.subr.mxu0 %v1142
          %1263 = vmatpush1.msra.mxu0 %v1141
          %1264 = vmatprep.subr.mxu0 %v1146
          %1265 = vmatpush1.msra.mxu0 %v1145
          %1266 = vmatprep.subr.mxu0 %v1150
          %1267 = vmatpush1.msra.mxu0 %v1149
          %1268 = vmatprep.subr.mxu0 %v1154
          %1269 = vmatpush1.msra.mxu0 %v1153
          %1270 = vmatprep.subr.mxu0 %v1158
          %1271 = vmatpush1.msra.mxu0 %v1157
          %1272 = vmatprep.subr.mxu0 %v1162
          %1273 = vmatpush1.msra.mxu0 %v1161
          %1274 = vmatprep.subr.mxu0 %v1166
          %1275 = vmatpush1.msra.mxu0 %v1165
          %1276 = vmatprep.subr.mxu0 %v1170
          %1277 = vmatpush1.msra.mxu0 %v1169
          %1278 = vmatprep.subr.mxu0 %v1174
          %1279 = vmatpush1.msra.mxu0 %v1173
          %1280 = vmatprep.subr.mxu0 %v1178
          %1281 = vmatpush1.msra.mxu0 %v1177
          %1282 = vmatprep.subr.mxu0 0.0
          %1283 = vmatpush1.msra.mxu0 0.0
          %1284 = vmatprep.subr.mxu0 0.0
          %1285 = vmatpush1.msra.mxu0 0.0
          %1286 = vmatprep.subr.mxu0 0.0
          %1287 = vmatpush1.msra.mxu0 0.0
          %1288 = vmatprep.subr.mxu0 0.0
          %1289 = vmatpush1.msra.mxu0 0.0
          %1290 = vmatprep.subr.mxu0 0.0
          %1291 = vmatpush1.msra.mxu0 0.0
          %1292 = vmatprep.subr.mxu0 0.0
          %1293 = vmatpush1.msra.mxu0 0.0
          %1294 = vmatprep.subr.mxu0 0.0
          %1295 = vmatpush1.msra.mxu0 0.0
          %1296 = vmatprep.subr.mxu0 0.0
          %1297 = vmatpush1.msra.mxu0 0.0
          %1298 = vmatprep.subr.mxu0 0.0
          %1299 = vmatpush1.msra.mxu0 0.0
          %1300 = vmatprep.subr.mxu0 0.0
          %1301 = vmatpush1.msra.mxu0 0.0
          %1302 = vmatprep.subr.mxu0 0.0
          %1303 = vmatpush1.msra.mxu0 0.0
          %1304 = vmatprep.subr.mxu0 0.0
          %1305 = vmatpush1.msra.mxu0 0.0
          %1306 = vmatprep.subr.mxu0 0.0
          %1307 = vmatpush1.msra.mxu0 0.0
          %1308 = vmatprep.subr.mxu0 0.0
          %1309 = vmatpush1.msra.mxu0 0.0
          %1310 = vmatprep.subr.mxu0 0.0
          %1311 = vmatpush1.msra.mxu0 0.0
          %1312 = vmatprep.subr.mxu0 0.0
          %1313 = vmatpush1.msra.mxu0 0.0
          %1314 = vmatprep.mubr.f32.mxu0 0.0
          %1315 = vmatmul.mubr.f32.gmra.mrb[0].mxu0 %v1113
          %v1316 = vpop.f32.mrb[0].mxu0
          %v1317 = vadd.f32 0.0, %v1316
          %v1318 = vpop.f32.mrb[0].mxu0
          %v1319 = vadd.f32 0.0, %v1318
          %1320 = vdwg.mxu0
          %v1321 = vadd.f32 %v1109, %v1246
          %v1322 = vadd.f32 %v1110, %v1248
          %v1323 = vadd.f32 %v1111, %v1317
          %v1324 = vadd.f32 %v1112, %v1319
          %v1325 = vxor.u32 %v1321, 2147483648
          %v1326 = vmul.f32 %v1325, 1.442695
          %v1327 = vpow.pop %v1326
          %v1328 = vadd.f32 %v1327, 1.0
          %v1329 = vrcp.pop %v1328
          %v1330 = vmul.f32 1.0, %v1329
          %v1331 = vxor.u32 %v1322, 2147483648
          %v1332 = vmul.f32 %v1331, 1.442695
          %v1333 = vpow.pop %v1332
          %v1334 = vadd.f32 %v1333, 1.0
          %v1335 = vrcp.pop %v1334
          %v1336 = vmul.f32 1.0, %v1335
          %v1337 = vtanh.pop %v1323
          %v1338 = vxor.u32 %v1324, 2147483648
          %v1339 = vmul.f32 %v1338, 1.442695
          %v1340 = vpow.pop %v1339
          %v1341 = vadd.f32 %v1340, 1.0
          %v1342 = vrcp.pop %v1341
          %v1343 = vmul.f32 1.0, %v1342
          %v1344 = vmul.f32 %v1336, %v1114
          %v1345 = vmul.f32 %v1330, %v1337
          %v1346 = vadd.f32 %v1344, %v1345
          %1347 = vst [vmem:[#allocation4] sm:$0xff] %v1346
          %v1348 = vtanh.pop %v1346
          %v1349 = vmul.f32 %v1343, %v1348
          %1350 = vst [vmem:[#allocation3] sm:$0xff] %v1349
          %s1351 = sshll.u32 %s1092, 4
          %1352 = dma.done %s363, %s1351
          %s1353 = sshll.u32 %s1092, 4
          %1354 = dma.done %s363, %s1353
          %s1355 = sshll.u32 %s1092, 4
          %1356 = dma.done %s363, %s1355
          %s1357 = sshll.u32 %s1092, 4
          %1358 = dma.done %s363, %s1357
          %s1359 = sshll.u32 %s1092, 4
          %1360 = dma.done %s363, %s1359
          %s1361 = sshll.u32 %s1092, 4
          %1362 = dma.done %s363, %s1361
          %s1363 = sshll.u32 %s1092, 4
          %1364 = dma.done %s363, %s1363
          %s1365 = sshll.u32 %s1092, 4
          %1366 = dma.done %s363, %s1365
          %v1367 = vld [vmem:[#allocation2 + $0x20] sm:$0xff]
          %v1368 = vld [vmem:[#allocation2 + $0x28] sm:$0xff]
          %v1369 = vld [vmem:[#allocation2 + $0x30] sm:$0xff]
          %v1370 = vld [vmem:[#allocation2 + $0x38] sm:$0xff]
          %v1371 = vld [vmem:[#allocation3] sm:$0xff]
          %v1372 = vld [vmem:[#allocation4] sm:$0xff]
          %v1373 = vld [vmem:[#allocation8] sm:$0xff]
          %v1374 = vld [vmem:[#allocation8 + $0x8] sm:$0xff]
          %v1375 = vld [vmem:[#allocation8 + $0x10] sm:$0xff]
          %v1376 = vld [vmem:[#allocation8 + $0x18] sm:$0xff]
          %v1377 = vld [vmem:[#allocation8 + $0x20] sm:$0xff]
          %v1378 = vld [vmem:[#allocation8 + $0x28] sm:$0xff]
          %v1379 = vld [vmem:[#allocation8 + $0x30] sm:$0xff]
          %v1380 = vld [vmem:[#allocation8 + $0x38] sm:$0xff]
          %v1381 = vld [vmem:[#allocation8 + $0x40] sm:$0xff]
          %v1382 = vld [vmem:[#allocation8 + $0x48] sm:$0xff]
          %v1383 = vld [vmem:[#allocation8 + $0x50] sm:$0xff]
          %v1384 = vld [vmem:[#allocation8 + $0x58] sm:$0xff]
          %v1385 = vld [vmem:[#allocation8 + $0x60] sm:$0xff]
          %v1386 = vld [vmem:[#allocation8 + $0x68] sm:$0xff]
          %v1387 = vld [vmem:[#allocation8 + $0x70] sm:$0xff]
          %v1388 = vld [vmem:[#allocation8 + $0x78] sm:$0xff]
          %v1389 = vld [vmem:[#allocation8 + $0x80] sm:$0xff]
          %v1390 = vld [vmem:[#allocation8 + $0x88] sm:$0xff]
          %v1391 = vld [vmem:[#allocation8 + $0x90] sm:$0xff]
          %v1392 = vld [vmem:[#allocation8 + $0x98] sm:$0xff]
          %v1393 = vld [vmem:[#allocation8 + $0xa0] sm:$0xff]
          %v1394 = vld [vmem:[#allocation8 + $0xa8] sm:$0xff]
          %v1395 = vld [vmem:[#allocation8 + $0xb0] sm:$0xff]
          %v1396 = vld [vmem:[#allocation8 + $0xb8] sm:$0xff]
          %v1397 = vld [vmem:[#allocation8 + $0xc0] sm:$0xff]
          %v1398 = vld [vmem:[#allocation8 + $0xc8] sm:$0xff]
          %v1399 = vld [vmem:[#allocation8 + $0xd0] sm:$0xff]
          %v1400 = vld [vmem:[#allocation8 + $0xd8] sm:$0xff]
          %v1401 = vld [vmem:[#allocation8 + $0xe0] sm:$0xff]
          %v1402 = vld [vmem:[#allocation8 + $0xe8] sm:$0xff]
          %v1403 = vld [vmem:[#allocation8 + $0xf0] sm:$0xff]
          %v1404 = vld [vmem:[#allocation8 + $0xf8] sm:$0xff]
          %v1405 = vld [vmem:[#allocation8 + $0x100] sm:$0xff]
          %v1406 = vld [vmem:[#allocation8 + $0x108] sm:$0xff]
          %v1407 = vld [vmem:[#allocation8 + $0x110] sm:$0xff]
          %v1408 = vld [vmem:[#allocation8 + $0x118] sm:$0xff]
          %v1409 = vld [vmem:[#allocation8 + $0x120] sm:$0xff]
          %v1410 = vld [vmem:[#allocation8 + $0x128] sm:$0xff]
          %v1411 = vld [vmem:[#allocation8 + $0x130] sm:$0xff]
          %v1412 = vld [vmem:[#allocation8 + $0x138] sm:$0xff]
          %v1413 = vld [vmem:[#allocation8 + $0x140] sm:$0xff]
          %v1414 = vld [vmem:[#allocation8 + $0x148] sm:$0xff]
          %v1415 = vld [vmem:[#allocation8 + $0x150] sm:$0xff]
          %v1416 = vld [vmem:[#allocation8 + $0x158] sm:$0xff]
          %v1417 = vld [vmem:[#allocation8 + $0x160] sm:$0xff]
          %v1418 = vld [vmem:[#allocation8 + $0x168] sm:$0xff]
          %v1419 = vld [vmem:[#allocation8 + $0x170] sm:$0xff]
          %v1420 = vld [vmem:[#allocation8 + $0x178] sm:$0xff]
          %v1421 = vld [vmem:[#allocation8 + $0x180] sm:$0xff]
          %v1422 = vld [vmem:[#allocation8 + $0x188] sm:$0xff]
          %v1423 = vld [vmem:[#allocation8 + $0x190] sm:$0xff]
          %v1424 = vld [vmem:[#allocation8 + $0x198] sm:$0xff]
          %v1425 = vld [vmem:[#allocation8 + $0x1a0] sm:$0xff]
          %v1426 = vld [vmem:[#allocation8 + $0x1a8] sm:$0xff]
          %v1427 = vld [vmem:[#allocation8 + $0x1b0] sm:$0xff]
          %v1428 = vld [vmem:[#allocation8 + $0x1b8] sm:$0xff]
          %v1429 = vld [vmem:[#allocation8 + $0x1c0] sm:$0xff]
          %v1430 = vld [vmem:[#allocation8 + $0x1c8] sm:$0xff]
          %v1431 = vld [vmem:[#allocation8 + $0x1d0] sm:$0xff]
          %v1432 = vld [vmem:[#allocation8 + $0x1d8] sm:$0xff]
          %v1433 = vld [vmem:[#allocation8 + $0x1e0] sm:$0xff]
          %v1434 = vld [vmem:[#allocation8 + $0x1e8] sm:$0xff]
          %v1435 = vld [vmem:[#allocation8 + $0x1f0] sm:$0xff]
          %v1436 = vld [vmem:[#allocation8 + $0x1f8] sm:$0xff]
          %1437 = vmatprep.subr.mxu0 %v1374
          %1438 = vmatpush1.msra.mxu0 %v1373
          %1439 = vmatprep.subr.mxu0 %v1378
          %1440 = vmatpush1.msra.mxu0 %v1377
          %1441 = vmatprep.subr.mxu0 %v1382
          %1442 = vmatpush1.msra.mxu0 %v1381
          %1443 = vmatprep.subr.mxu0 %v1386
          %1444 = vmatpush1.msra.mxu0 %v1385
          %1445 = vmatprep.subr.mxu0 %v1390
          %1446 = vmatpush1.msra.mxu0 %v1389
          %1447 = vmatprep.subr.mxu0 %v1394
          %1448 = vmatpush1.msra.mxu0 %v1393
          %1449 = vmatprep.subr.mxu0 %v1398
          %1450 = vmatpush1.msra.mxu0 %v1397
          %1451 = vmatprep.subr.mxu0 %v1402
          %1452 = vmatpush1.msra.mxu0 %v1401
          %1453 = vmatprep.subr.mxu0 %v1406
          %1454 = vmatpush1.msra.mxu0 %v1405
          %1455 = vmatprep.subr.mxu0 %v1410
          %1456 = vmatpush1.msra.mxu0 %v1409
          %1457 = vmatprep.subr.mxu0 %v1414
          %1458 = vmatpush1.msra.mxu0 %v1413
          %1459 = vmatprep.subr.mxu0 %v1418
          %1460 = vmatpush1.msra.mxu0 %v1417
          %1461 = vmatprep.subr.mxu0 %v1422
          %1462 = vmatpush1.msra.mxu0 %v1421
          %1463 = vmatprep.subr.mxu0 %v1426
          %1464 = vmatpush1.msra.mxu0 %v1425
          %1465 = vmatprep.subr.mxu0 %v1430
          %1466 = vmatpush1.msra.mxu0 %v1429
          %1467 = vmatprep.subr.mxu0 %v1434
          %1468 = vmatpush1.msra.mxu0 %v1433
          %1469 = vmatprep.subr.mxu0 0.0
          %1470 = vmatpush1.msra.mxu0 0.0
          %1471 = vmatprep.subr.mxu0 0.0
          %1472 = vmatpush1.msra.mxu0 0.0
          %1473 = vmatprep.subr.mxu0 0.0
          %1474 = vmatpush1.msra.mxu0 0.0
          %1475 = vmatprep.subr.mxu0 0.0
          %1476 = vmatpush1.msra.mxu0 0.0
          %1477 = vmatprep.subr.mxu0 0.0
          %1478 = vmatpush1.msra.mxu0 0.0
          %1479 = vmatprep.subr.mxu0 0.0
          %1480 = vmatpush1.msra.mxu0 0.0
          %1481 = vmatprep.subr.mxu0 0.0
          %1482 = vmatpush1.msra.mxu0 0.0
          %1483 = vmatprep.subr.mxu0 0.0
          %1484 = vmatpush1.msra.mxu0 0.0
          %1485 = vmatprep.subr.mxu0 0.0
          %1486 = vmatpush1.msra.mxu0 0.0
          %1487 = vmatprep.subr.mxu0 0.0
          %1488 = vmatpush1.msra.mxu0 0.0
          %1489 = vmatprep.subr.mxu0 0.0
          %1490 = vmatpush1.msra.mxu0 0.0
          %1491 = vmatprep.subr.mxu0 0.0
          %1492 = vmatpush1.msra.mxu0 0.0
          %1493 = vmatprep.subr.mxu0 0.0
          %1494 = vmatpush1.msra.mxu0 0.0
          %1495 = vmatprep.subr.mxu0 0.0
          %1496 = vmatpush1.msra.mxu0 0.0
          %1497 = vmatprep.subr.mxu0 0.0
          %1498 = vmatpush1.msra.mxu0 0.0
          %1499 = vmatprep.subr.mxu0 0.0
          %1500 = vmatpush1.msra.mxu0 0.0
          %1501 = vmatprep.mubr.f32.mxu0 0.0
          %1502 = vmatmul.mubr.f32.gmra.mrb[0].mxu0 %v1371
          %v1503 = vpop.f32.mrb[0].mxu0
          %v1504 = vadd.f32 0.0, %v1503
          %v1505 = vpop.f32.mrb[0].mxu0
          %v1506 = vadd.f32 0.0, %v1505
          %1507 = vdwg.mxu0
          %1508 = vmatprep.subr.mxu0 %v1376
          %1509 = vmatpush1.msra.mxu0 %v1375
          %1510 = vmatprep.subr.mxu0 %v1380
          %1511 = vmatpush1.msra.mxu0 %v1379
          %1512 = vmatprep.subr.mxu0 %v1384
          %1513 = vmatpush1.msra.mxu0 %v1383
          %1514 = vmatprep.subr.mxu0 %v1388
          %1515 = vmatpush1.msra.mxu0 %v1387
          %1516 = vmatprep.subr.mxu0 %v1392
          %1517 = vmatpush1.msra.mxu0 %v1391
          %1518 = vmatprep.subr.mxu0 %v1396
          %1519 = vmatpush1.msra.mxu0 %v1395
          %1520 = vmatprep.subr.mxu0 %v1400
          %1521 = vmatpush1.msra.mxu0 %v1399
          %1522 = vmatprep.subr.mxu0 %v1404
          %1523 = vmatpush1.msra.mxu0 %v1403
          %1524 = vmatprep.subr.mxu0 %v1408
          %1525 = vmatpush1.msra.mxu0 %v1407
          %1526 = vmatprep.subr.mxu0 %v1412
          %1527 = vmatpush1.msra.mxu0 %v1411
          %1528 = vmatprep.subr.mxu0 %v1416
          %1529 = vmatpush1.msra.mxu0 %v1415
          %1530 = vmatprep.subr.mxu0 %v1420
          %1531 = vmatpush1.msra.mxu0 %v1419
          %1532 = vmatprep.subr.mxu0 %v1424
          %1533 = vmatpush1.msra.mxu0 %v1423
          %1534 = vmatprep.subr.mxu0 %v1428
          %1535 = vmatpush1.msra.mxu0 %v1427
          %1536 = vmatprep.subr.mxu0 %v1432
          %1537 = vmatpush1.msra.mxu0 %v1431
          %1538 = vmatprep.subr.mxu0 %v1436
          %1539 = vmatpush1.msra.mxu0 %v1435
          %1540 = vmatprep.subr.mxu0 0.0
          %1541 = vmatpush1.msra.mxu0 0.0
          %1542 = vmatprep.subr.mxu0 0.0
          %1543 = vmatpush1.msra.mxu0 0.0
          %1544 = vmatprep.subr.mxu0 0.0
          %1545 = vmatpush1.msra.mxu0 0.0
          %1546 = vmatprep.subr.mxu0 0.0
          %1547 = vmatpush1.msra.mxu0 0.0
          %1548 = vmatprep.subr.mxu0 0.0
          %1549 = vmatpush1.msra.mxu0 0.0
          %1550 = vmatprep.subr.mxu0 0.0
          %1551 = vmatpush1.msra.mxu0 0.0
          %1552 = vmatprep.subr.mxu0 0.0
          %1553 = vmatpush1.msra.mxu0 0.0
          %1554 = vmatprep.subr.mxu0 0.0
          %1555 = vmatpush1.msra.mxu0 0.0
          %1556 = vmatprep.subr.mxu0 0.0
          %1557 = vmatpush1.msra.mxu0 0.0
          %1558 = vmatprep.subr.mxu0 0.0
          %1559 = vmatpush1.msra.mxu0 0.0
          %1560 = vmatprep.subr.mxu0 0.0
          %1561 = vmatpush1.msra.mxu0 0.0
          %1562 = vmatprep.subr.mxu0 0.0
          %1563 = vmatpush1.msra.mxu0 0.0
          %1564 = vmatprep.subr.mxu0 0.0
          %1565 = vmatpush1.msra.mxu0 0.0
          %1566 = vmatprep.subr.mxu0 0.0
          %1567 = vmatpush1.msra.mxu0 0.0
          %1568 = vmatprep.subr.mxu0 0.0
          %1569 = vmatpush1.msra.mxu0 0.0
          %1570 = vmatprep.subr.mxu0 0.0
          %1571 = vmatpush1.msra.mxu0 0.0
          %1572 = vmatprep.mubr.f32.mxu0 0.0
          %1573 = vmatmul.mubr.f32.gmra.mrb[0].mxu0 %v1371
          %v1574 = vpop.f32.mrb[0].mxu0
          %v1575 = vadd.f32 0.0, %v1574
          %v1576 = vpop.f32.mrb[0].mxu0
          %v1577 = vadd.f32 0.0, %v1576
          %1578 = vdwg.mxu0
          %v1579 = vadd.f32 %v1367, %v1504
          %v1580 = vadd.f32 %v1368, %v1506
          %v1581 = vadd.f32 %v1369, %v1575
          %v1582 = vadd.f32 %v1370, %v1577
          %v1583 = vxor.u32 %v1579, 2147483648
          %v1584 = vmul.f32 %v1583, 1.442695
          %v1585 = vpow.pop %v1584
          %v1586 = vadd.f32 %v1585, 1.0
          %v1587 = vrcp.pop %v1586
          %v1588 = vmul.f32 1.0, %v1587
          %v1589 = vxor.u32 %v1580, 2147483648
          %v1590 = vmul.f32 %v1589, 1.442695
          %v1591 = vpow.pop %v1590
          %v1592 = vadd.f32 %v1591, 1.0
          %v1593 = vrcp.pop %v1592
          %v1594 = vmul.f32 1.0, %v1593
          %v1595 = vtanh.pop %v1581
          %v1596 = vxor.u32 %v1582, 2147483648
          %v1597 = vmul.f32 %v1596, 1.442695
          %v1598 = vpow.pop %v1597
          %v1599 = vadd.f32 %v1598, 1.0
          %v1600 = vrcp.pop %v1599
          %v1601 = vmul.f32 1.0, %v1600
          %v1602 = vmul.f32 %v1594, %v1372
          %v1603 = vmul.f32 %v1588, %v1595
          %v1604 = vadd.f32 %v1602, %v1603
          %1605 = vst [vmem:[#allocation4] sm:$0xff] %v1604
          %v1606 = vtanh.pop %v1604
          %v1607 = vmul.f32 %v1601, %v1606
          %1608 = vst [vmem:[#allocation3] sm:$0xff] %v1607
          %s1609 = sshll.u32 %s1092, 4
          %1610 = dma.done %s468, %s1609
          %s1611 = sshll.u32 %s1092, 4
          %1612 = dma.done %s468, %s1611
          %s1613 = sshll.u32 %s1092, 4
          %1614 = dma.done %s468, %s1613
          %s1615 = sshll.u32 %s1092, 4
          %1616 = dma.done %s468, %s1615
          %s1617 = sshll.u32 %s1092, 4
          %1618 = dma.done %s468, %s1617
          %s1619 = sshll.u32 %s1092, 4
          %1620 = dma.done %s468, %s1619
          %s1621 = sshll.u32 %s1092, 4
          %1622 = dma.done %s468, %s1621
          %s1623 = sshll.u32 %s1092, 4
          %1624 = dma.done %s468, %s1623
          %v1625 = vld [vmem:[#allocation2 + $0x40] sm:$0xff]
          %v1626 = vld [vmem:[#allocation2 + $0x48] sm:$0xff]
          %v1627 = vld [vmem:[#allocation2 + $0x50] sm:$0xff]
          %v1628 = vld [vmem:[#allocation2 + $0x58] sm:$0xff]
          %v1629 = vld [vmem:[#allocation3] sm:$0xff]
          %v1630 = vld [vmem:[#allocation4] sm:$0xff]
          %v1631 = vld [vmem:[#allocation8] sm:$0xff]
          %v1632 = vld [vmem:[#allocation8 + $0x8] sm:$0xff]
          %v1633 = vld [vmem:[#allocation8 + $0x10] sm:$0xff]
          %v1634 = vld [vmem:[#allocation8 + $0x18] sm:$0xff]
          %v1635 = vld [vmem:[#allocation8 + $0x20] sm:$0xff]
          %v1636 = vld [vmem:[#allocation8 + $0x28] sm:$0xff]
          %v1637 = vld [vmem:[#allocation8 + $0x30] sm:$0xff]
          %v1638 = vld [vmem:[#allocation8 + $0x38] sm:$0xff]
          %v1639 = vld [vmem:[#allocation8 + $0x40] sm:$0xff]
          %v1640 = vld [vmem:[#allocation8 + $0x48] sm:$0xff]
          %v1641 = vld [vmem:[#allocation8 + $0x50] sm:$0xff]
          %v1642 = vld [vmem:[#allocation8 + $0x58] sm:$0xff]
          %v1643 = vld [vmem:[#allocation8 + $0x60] sm:$0xff]
          %v1644 = vld [vmem:[#allocation8 + $0x68] sm:$0xff]
          %v1645 = vld [vmem:[#allocation8 + $0x70] sm:$0xff]
          %v1646 = vld [vmem:[#allocation8 + $0x78] sm:$0xff]
          %v1647 = vld [vmem:[#allocation8 + $0x80] sm:$0xff]
          %v1648 = vld [vmem:[#allocation8 + $0x88] sm:$0xff]
          %v1649 = vld [vmem:[#allocation8 + $0x90] sm:$0xff]
          %v1650 = vld [vmem:[#allocation8 + $0x98] sm:$0xff]
          %v1651 = vld [vmem:[#allocation8 + $0xa0] sm:$0xff]
          %v1652 = vld [vmem:[#allocation8 + $0xa8] sm:$0xff]
          %v1653 = vld [vmem:[#allocation8 + $0xb0] sm:$0xff]
          %v1654 = vld [vmem:[#allocation8 + $0xb8] sm:$0xff]
          %v1655 = vld [vmem:[#allocation8 + $0xc0] sm:$0xff]
          %v1656 = vld [vmem:[#allocation8 + $0xc8] sm:$0xff]
          %v1657 = vld [vmem:[#allocation8 + $0xd0] sm:$0xff]
          %v1658 = vld [vmem:[#allocation8 + $0xd8] sm:$0xff]
          %v1659 = vld [vmem:[#allocation8 + $0xe0] sm:$0xff]
          %v1660 = vld [vmem:[#allocation8 + $0xe8] sm:$0xff]
          %v1661 = vld [vmem:[#allocation8 + $0xf0] sm:$0xff]
          %v1662 = vld [vmem:[#allocation8 + $0xf8] sm:$0xff]
          %v1663 = vld [vmem:[#allocation8 + $0x100] sm:$0xff]
          %v1664 = vld [vmem:[#allocation8 + $0x108] sm:$0xff]
          %v1665 = vld [vmem:[#allocation8 + $0x110] sm:$0xff]
          %v1666 = vld [vmem:[#allocation8 + $0x118] sm:$0xff]
          %v1667 = vld [vmem:[#allocation8 + $0x120] sm:$0xff]
          %v1668 = vld [vmem:[#allocation8 + $0x128] sm:$0xff]
          %v1669 = vld [vmem:[#allocation8 + $0x130] sm:$0xff]
          %v1670 = vld [vmem:[#allocation8 + $0x138] sm:$0xff]
          %v1671 = vld [vmem:[#allocation8 + $0x140] sm:$0xff]
          %v1672 = vld [vmem:[#allocation8 + $0x148] sm:$0xff]
          %v1673 = vld [vmem:[#allocation8 + $0x150] sm:$0xff]
          %v1674 = vld [vmem:[#allocation8 + $0x158] sm:$0xff]
          %v1675 = vld [vmem:[#allocation8 + $0x160] sm:$0xff]
          %v1676 = vld [vmem:[#allocation8 + $0x168] sm:$0xff]
          %v1677 = vld [vmem:[#allocation8 + $0x170] sm:$0xff]
          %v1678 = vld [vmem:[#allocation8 + $0x178] sm:$0xff]
          %v1679 = vld [vmem:[#allocation8 + $0x180] sm:$0xff]
          %v1680 = vld [vmem:[#allocation8 + $0x188] sm:$0xff]
          %v1681 = vld [vmem:[#allocation8 + $0x190] sm:$0xff]
          %v1682 = vld [vmem:[#allocation8 + $0x198] sm:$0xff]
          %v1683 = vld [vmem:[#allocation8 + $0x1a0] sm:$0xff]
          %v1684 = vld [vmem:[#allocation8 + $0x1a8] sm:$0xff]
          %v1685 = vld [vmem:[#allocation8 + $0x1b0] sm:$0xff]
          %v1686 = vld [vmem:[#allocation8 + $0x1b8] sm:$0xff]
          %v1687 = vld [vmem:[#allocation8 + $0x1c0] sm:$0xff]
          %v1688 = vld [vmem:[#allocation8 + $0x1c8] sm:$0xff]
          %v1689 = vld [vmem:[#allocation8 + $0x1d0] sm:$0xff]
          %v1690 = vld [vmem:[#allocation8 + $0x1d8] sm:$0xff]
          %v1691 = vld [vmem:[#allocation8 + $0x1e0] sm:$0xff]
          %v1692 = vld [vmem:[#allocation8 + $0x1e8] sm:$0xff]
          %v1693 = vld [vmem:[#allocation8 + $0x1f0] sm:$0xff]
          %v1694 = vld [vmem:[#allocation8 + $0x1f8] sm:$0xff]
          %1695 = vmatprep.subr.mxu0 %v1632
          %1696 = vmatpush1.msra.mxu0 %v1631
          %1697 = vmatprep.subr.mxu0 %v1636
          %1698 = vmatpush1.msra.mxu0 %v1635
          %1699 = vmatprep.subr.mxu0 %v1640
          %1700 = vmatpush1.msra.mxu0 %v1639
          %1701 = vmatprep.subr.mxu0 %v1644
          %1702 = vmatpush1.msra.mxu0 %v1643
          %1703 = vmatprep.subr.mxu0 %v1648
          %1704 = vmatpush1.msra.mxu0 %v1647
          %1705 = vmatprep.subr.mxu0 %v1652
          %1706 = vmatpush1.msra.mxu0 %v1651
          %1707 = vmatprep.subr.mxu0 %v1656
          %1708 = vmatpush1.msra.mxu0 %v1655
          %1709 = vmatprep.subr.mxu0 %v1660
          %1710 = vmatpush1.msra.mxu0 %v1659
          %1711 = vmatprep.subr.mxu0 %v1664
          %1712 = vmatpush1.msra.mxu0 %v1663
          %1713 = vmatprep.subr.mxu0 %v1668
          %1714 = vmatpush1.msra.mxu0 %v1667
          %1715 = vmatprep.subr.mxu0 %v1672
          %1716 = vmatpush1.msra.mxu0 %v1671
          %1717 = vmatprep.subr.mxu0 %v1676
          %1718 = vmatpush1.msra.mxu0 %v1675
          %1719 = vmatprep.subr.mxu0 %v1680
          %1720 = vmatpush1.msra.mxu0 %v1679
          %1721 = vmatprep.subr.mxu0 %v1684
          %1722 = vmatpush1.msra.mxu0 %v1683
          %1723 = vmatprep.subr.mxu0 %v1688
          %1724 = vmatpush1.msra.mxu0 %v1687
          %1725 = vmatprep.subr.mxu0 %v1692
          %1726 = vmatpush1.msra.mxu0 %v1691
          %1727 = vmatprep.subr.mxu0 0.0
          %1728 = vmatpush1.msra.mxu0 0.0
          %1729 = vmatprep.subr.mxu0 0.0
          %1730 = vmatpush1.msra.mxu0 0.0
          %1731 = vmatprep.subr.mxu0 0.0
          %1732 = vmatpush1.msra.mxu0 0.0
          %1733 = vmatprep.subr.mxu0 0.0
          %1734 = vmatpush1.msra.mxu0 0.0
          %1735 = vmatprep.subr.mxu0 0.0
          %1736 = vmatpush1.msra.mxu0 0.0
          %1737 = vmatprep.subr.mxu0 0.0
          %1738 = vmatpush1.msra.mxu0 0.0
          %1739 = vmatprep.subr.mxu0 0.0
          %1740 = vmatpush1.msra.mxu0 0.0
          %1741 = vmatprep.subr.mxu0 0.0
          %1742 = vmatpush1.msra.mxu0 0.0
          %1743 = vmatprep.subr.mxu0 0.0
          %1744 = vmatpush1.msra.mxu0 0.0
          %1745 = vmatprep.subr.mxu0 0.0
          %1746 = vmatpush1.msra.mxu0 0.0
          %1747 = vmatprep.subr.mxu0 0.0
          %1748 = vmatpush1.msra.mxu0 0.0
          %1749 = vmatprep.subr.mxu0 0.0
          %1750 = vmatpush1.msra.mxu0 0.0
          %1751 = vmatprep.subr.mxu0 0.0
          %1752 = vmatpush1.msra.mxu0 0.0
          %1753 = vmatprep.subr.mxu0 0.0
          %1754 = vmatpush1.msra.mxu0 0.0
          %1755 = vmatprep.subr.mxu0 0.0
          %1756 = vmatpush1.msra.mxu0 0.0
          %1757 = vmatprep.subr.mxu0 0.0
          %1758 = vmatpush1.msra.mxu0 0.0
          %1759 = vmatprep.mubr.f32.mxu0 0.0
          %1760 = vmatmul.mubr.f32.gmra.mrb[0].mxu0 %v1629
          %v1761 = vpop.f32.mrb[0].mxu0
          %v1762 = vadd.f32 0.0, %v1761
          %v1763 = vpop.f32.mrb[0].mxu0
          %v1764 = vadd.f32 0.0, %v1763
          %1765 = vdwg.mxu0
          %1766 = vmatprep.subr.mxu0 %v1634
          %1767 = vmatpush1.msra.mxu0 %v1633
          %1768 = vmatprep.subr.mxu0 %v1638
          %1769 = vmatpush1.msra.mxu0 %v1637
          %1770 = vmatprep.subr.mxu0 %v1642
          %1771 = vmatpush1.msra.mxu0 %v1641
          %1772 = vmatprep.subr.mxu0 %v1646
          %1773 = vmatpush1.msra.mxu0 %v1645
          %1774 = vmatprep.subr.mxu0 %v1650
          %1775 = vmatpush1.msra.mxu0 %v1649
          %1776 = vmatprep.subr.mxu0 %v1654
          %1777 = vmatpush1.msra.mxu0 %v1653
          %1778 = vmatprep.subr.mxu0 %v1658
          %1779 = vmatpush1.msra.mxu0 %v1657
          %1780 = vmatprep.subr.mxu0 %v1662
          %1781 = vmatpush1.msra.mxu0 %v1661
          %1782 = vmatprep.subr.mxu0 %v1666
          %1783 = vmatpush1.msra.mxu0 %v1665
          %1784 = vmatprep.subr.mxu0 %v1670
          %1785 = vmatpush1.msra.mxu0 %v1669
          %1786 = vmatprep.subr.mxu0 %v1674
          %1787 = vmatpush1.msra.mxu0 %v1673
          %1788 = vmatprep.subr.mxu0 %v1678
          %1789 = vmatpush1.msra.mxu0 %v1677
          %1790 = vmatprep.subr.mxu0 %v1682
          %1791 = vmatpush1.msra.mxu0 %v1681
          %1792 = vmatprep.subr.mxu0 %v1686
          %1793 = vmatpush1.msra.mxu0 %v1685
          %1794 = vmatprep.subr.mxu0 %v1690
          %1795 = vmatpush1.msra.mxu0 %v1689
          %1796 = vmatprep.subr.mxu0 %v1694
          %1797 = vmatpush1.msra.mxu0 %v1693
          %1798 = vmatprep.subr.mxu0 0.0
          %1799 = vmatpush1.msra.mxu0 0.0
          %1800 = vmatprep.subr.mxu0 0.0
          %1801 = vmatpush1.msra.mxu0 0.0
          %1802 = vmatprep.subr.mxu0 0.0
          %1803 = vmatpush1.msra.mxu0 0.0
          %1804 = vmatprep.subr.mxu0 0.0
          %1805 = vmatpush1.msra.mxu0 0.0
          %1806 = vmatprep.subr.mxu0 0.0
          %1807 = vmatpush1.msra.mxu0 0.0
          %1808 = vmatprep.subr.mxu0 0.0
          %1809 = vmatpush1.msra.mxu0 0.0
          %1810 = vmatprep.subr.mxu0 0.0
          %1811 = vmatpush1.msra.mxu0 0.0
          %1812 = vmatprep.subr.mxu0 0.0
          %1813 = vmatpush1.msra.mxu0 0.0
          %1814 = vmatprep.subr.mxu0 0.0
          %1815 = vmatpush1.msra.mxu0 0.0
          %1816 = vmatprep.subr.mxu0 0.0
          %1817 = vmatpush1.msra.mxu0 0.0
          %1818 = vmatprep.subr.mxu0 0.0
          %1819 = vmatpush1.msra.mxu0 0.0
          %1820 = vmatprep.subr.mxu0 0.0
          %1821 = vmatpush1.msra.mxu0 0.0
          %1822 = vmatprep.subr.mxu0 0.0
          %1823 = vmatpush1.msra.mxu0 0.0
          %1824 = vmatprep.subr.mxu0 0.0
          %1825 = vmatpush1.msra.mxu0 0.0
          %1826 = vmatprep.subr.mxu0 0.0
          %1827 = vmatpush1.msra.mxu0 0.0
          %1828 = vmatprep.subr.mxu0 0.0
          %1829 = vmatpush1.msra.mxu0 0.0
          %1830 = vmatprep.mubr.f32.mxu0 0.0
          %1831 = vmatmul.mubr.f32.gmra.mrb[0].mxu0 %v1629
          %v1832 = vpop.f32.mrb[0].mxu0
          %v1833 = vadd.f32 0.0, %v1832
          %v1834 = vpop.f32.mrb[0].mxu0
          %v1835 = vadd.f32 0.0, %v1834
          %1836 = vdwg.mxu0
          %v1837 = vadd.f32 %v1625, %v1762
          %v1838 = vadd.f32 %v1626, %v1764
          %v1839 = vadd.f32 %v1627, %v1833
          %v1840 = vadd.f32 %v1628, %v1835
          %v1841 = vxor.u32 %v1837, 2147483648
          %v1842 = vmul.f32 %v1841, 1.442695
          %v1843 = vpow.pop %v1842
          %v1844 = vadd.f32 %v1843, 1.0
          %v1845 = vrcp.pop %v1844
          %v1846 = vmul.f32 1.0, %v1845
          %v1847 = vxor.u32 %v1838, 2147483648
          %v1848 = vmul.f32 %v1847, 1.442695
          %v1849 = vpow.pop %v1848
          %v1850 = vadd.f32 %v1849, 1.0
          %v1851 = vrcp.pop %v1850
          %v1852 = vmul.f32 1.0, %v1851
          %v1853 = vtanh.pop %v1839
          %v1854 = vxor.u32 %v1840, 2147483648
          %v1855 = vmul.f32 %v1854, 1.442695
          %v1856 = vpow.pop %v1855
          %v1857 = vadd.f32 %v1856, 1.0
          %v1858 = vrcp.pop %v1857
          %v1859 = vmul.f32 1.0, %v1858
          %v1860 = vmul.f32 %v1852, %v1630
          %v1861 = vmul.f32 %v1846, %v1853
          %v1862 = vadd.f32 %v1860, %v1861
          %1863 = vst [vmem:[#allocation4] sm:$0xff] %v1862
          %v1864 = vtanh.pop %v1862
          %v1865 = vmul.f32 %v1859, %v1864
          %1866 = vst [vmem:[#allocation3] sm:$0xff] %v1865
          %s1867 = sshll.u32 %s1092, 4
          %1868 = dma.done %s573, %s1867
          %s1869 = sshll.u32 %s1092, 4
          %1870 = dma.done %s573, %s1869
          %s1871 = sshll.u32 %s1092, 4
          %1872 = dma.done %s573, %s1871
          %s1873 = sshll.u32 %s1092, 4
          %1874 = dma.done %s573, %s1873
          %s1875 = sshll.u32 %s1092, 4
          %1876 = dma.done %s573, %s1875
          %s1877 = sshll.u32 %s1092, 4
          %1878 = dma.done %s573, %s1877
          %s1879 = sshll.u32 %s1092, 4
          %1880 = dma.done %s573, %s1879
          %s1881 = sshll.u32 %s1092, 4
          %1882 = dma.done %s573, %s1881
          %v1883 = vld [vmem:[#allocation2 + $0x60] sm:$0xff]
          %v1884 = vld [vmem:[#allocation2 + $0x68] sm:$0xff]
          %v1885 = vld [vmem:[#allocation2 + $0x70] sm:$0xff]
          %v1886 = vld [vmem:[#allocation2 + $0x78] sm:$0xff]
          %v1887 = vld [vmem:[#allocation3] sm:$0xff]
          %v1888 = vld [vmem:[#allocation4] sm:$0xff]
          %v1889 = vld [vmem:[#allocation8] sm:$0xff]
          %v1890 = vld [vmem:[#allocation8 + $0x8] sm:$0xff]
          %v1891 = vld [vmem:[#allocation8 + $0x10] sm:$0xff]
          %v1892 = vld [vmem:[#allocation8 + $0x18] sm:$0xff]
          %v1893 = vld [vmem:[#allocation8 + $0x20] sm:$0xff]
          %v1894 = vld [vmem:[#allocation8 + $0x28] sm:$0xff]
          %v1895 = vld [vmem:[#allocation8 + $0x30] sm:$0xff]
          %v1896 = vld [vmem:[#allocation8 + $0x38] sm:$0xff]
          %v1897 = vld [vmem:[#allocation8 + $0x40] sm:$0xff]
          %v1898 = vld [vmem:[#allocation8 + $0x48] sm:$0xff]
          %v1899 = vld [vmem:[#allocation8 + $0x50] sm:$0xff]
          %v1900 = vld [vmem:[#allocation8 + $0x58] sm:$0xff]
          %v1901 = vld [vmem:[#allocation8 + $0x60] sm:$0xff]
          %v1902 = vld [vmem:[#allocation8 + $0x68] sm:$0xff]
          %v1903 = vld [vmem:[#allocation8 + $0x70] sm:$0xff]
          %v1904 = vld [vmem:[#allocation8 + $0x78] sm:$0xff]
          %v1905 = vld [vmem:[#allocation8 + $0x80] sm:$0xff]
          %v1906 = vld [vmem:[#allocation8 + $0x88] sm:$0xff]
          %v1907 = vld [vmem:[#allocation8 + $0x90] sm:$0xff]
          %v1908 = vld [vmem:[#allocation8 + $0x98] sm:$0xff]
          %v1909 = vld [vmem:[#allocation8 + $0xa0] sm:$0xff]
          %v1910 = vld [vmem:[#allocation8 + $0xa8] sm:$0xff]
          %v1911 = vld [vmem:[#allocation8 + $0xb0] sm:$0xff]
          %v1912 = vld [vmem:[#allocation8 + $0xb8] sm:$0xff]
          %v1913 = vld [vmem:[#allocation8 + $0xc0] sm:$0xff]
          %v1914 = vld [vmem:[#allocation8 + $0xc8] sm:$0xff]
          %v1915 = vld [vmem:[#allocation8 + $0xd0] sm:$0xff]
          %v1916 = vld [vmem:[#allocation8 + $0xd8] sm:$0xff]
          %v1917 = vld [vmem:[#allocation8 + $0xe0] sm:$0xff]
          %v1918 = vld [vmem:[#allocation8 + $0xe8] sm:$0xff]
          %v1919 = vld [vmem:[#allocation8 + $0xf0] sm:$0xff]
          %v1920 = vld [vmem:[#allocation8 + $0xf8] sm:$0xff]
          %v1921 = vld [vmem:[#allocation8 + $0x100] sm:$0xff]
          %v1922 = vld [vmem:[#allocation8 + $0x108] sm:$0xff]
          %v1923 = vld [vmem:[#allocation8 + $0x110] sm:$0xff]
          %v1924 = vld [vmem:[#allocation8 + $0x118] sm:$0xff]
          %v1925 = vld [vmem:[#allocation8 + $0x120] sm:$0xff]
          %v1926 = vld [vmem:[#allocation8 + $0x128] sm:$0xff]
          %v1927 = vld [vmem:[#allocation8 + $0x130] sm:$0xff]
          %v1928 = vld [vmem:[#allocation8 + $0x138] sm:$0xff]
          %v1929 = vld [vmem:[#allocation8 + $0x140] sm:$0xff]
          %v1930 = vld [vmem:[#allocation8 + $0x148] sm:$0xff]
          %v1931 = vld [vmem:[#allocation8 + $0x150] sm:$0xff]
          %v1932 = vld [vmem:[#allocation8 + $0x158] sm:$0xff]
          %v1933 = vld [vmem:[#allocation8 + $0x160] sm:$0xff]
          %v1934 = vld [vmem:[#allocation8 + $0x168] sm:$0xff]
          %v1935 = vld [vmem:[#allocation8 + $0x170] sm:$0xff]
          %v1936 = vld [vmem:[#allocation8 + $0x178] sm:$0xff]
          %v1937 = vld [vmem:[#allocation8 + $0x180] sm:$0xff]
          %v1938 = vld [vmem:[#allocation8 + $0x188] sm:$0xff]
          %v1939 = vld [vmem:[#allocation8 + $0x190] sm:$0xff]
          %v1940 = vld [vmem:[#allocation8 + $0x198] sm:$0xff]
          %v1941 = vld [vmem:[#allocation8 + $0x1a0] sm:$0xff]
          %v1942 = vld [vmem:[#allocation8 + $0x1a8] sm:$0xff]
          %v1943 = vld [vmem:[#allocation8 + $0x1b0] sm:$0xff]
          %v1944 = vld [vmem:[#allocation8 + $0x1b8] sm:$0xff]
          %v1945 = vld [vmem:[#allocation8 + $0x1c0] sm:$0xff]
          %v1946 = vld [vmem:[#allocation8 + $0x1c8] sm:$0xff]
          %v1947 = vld [vmem:[#allocation8 + $0x1d0] sm:$0xff]
          %v1948 = vld [vmem:[#allocation8 + $0x1d8] sm:$0xff]
          %v1949 = vld [vmem:[#allocation8 + $0x1e0] sm:$0xff]
          %v1950 = vld [vmem:[#allocation8 + $0x1e8] sm:$0xff]
          %v1951 = vld [vmem:[#allocation8 + $0x1f0] sm:$0xff]
          %v1952 = vld [vmem:[#allocation8 + $0x1f8] sm:$0xff]
          %1953 = vmatprep.subr.mxu0 %v1890
          %1954 = vmatpush1.msra.mxu0 %v1889
          %1955 = vmatprep.subr.mxu0 %v1894
          %1956 = vmatpush1.msra.mxu0 %v1893
          %1957 = vmatprep.subr.mxu0 %v1898
          %1958 = vmatpush1.msra.mxu0 %v1897
          %1959 = vmatprep.subr.mxu0 %v1902
          %1960 = vmatpush1.msra.mxu0 %v1901
          %1961 = vmatprep.subr.mxu0 %v1906
          %1962 = vmatpush1.msra.mxu0 %v1905
          %1963 = vmatprep.subr.mxu0 %v1910
          %1964 = vmatpush1.msra.mxu0 %v1909
          %1965 = vmatprep.subr.mxu0 %v1914
          %1966 = vmatpush1.msra.mxu0 %v1913
          %1967 = vmatprep.subr.mxu0 %v1918
          %1968 = vmatpush1.msra.mxu0 %v1917
          %1969 = vmatprep.subr.mxu0 %v1922
          %1970 = vmatpush1.msra.mxu0 %v1921
          %1971 = vmatprep.subr.mxu0 %v1926
          %1972 = vmatpush1.msra.mxu0 %v1925
          %1973 = vmatprep.subr.mxu0 %v1930
          %1974 = vmatpush1.msra.mxu0 %v1929
          %1975 = vmatprep.subr.mxu0 %v1934
          %1976 = vmatpush1.msra.mxu0 %v1933
          %1977 = vmatprep.subr.mxu0 %v1938
          %1978 = vmatpush1.msra.mxu0 %v1937
          %1979 = vmatprep.subr.mxu0 %v1942
          %1980 = vmatpush1.msra.mxu0 %v1941
          %1981 = vmatprep.subr.mxu0 %v1946
          %1982 = vmatpush1.msra.mxu0 %v1945
          %1983 = vmatprep.subr.mxu0 %v1950
          %1984 = vmatpush1.msra.mxu0 %v1949
          %1985 = vmatprep.subr.mxu0 0.0
          %1986 = vmatpush1.msra.mxu0 0.0
          %1987 = vmatprep.subr.mxu0 0.0
          %1988 = vmatpush1.msra.mxu0 0.0
          %1989 = vmatprep.subr.mxu0 0.0
          %1990 = vmatpush1.msra.mxu0 0.0
          %1991 = vmatprep.subr.mxu0 0.0
          %1992 = vmatpush1.msra.mxu0 0.0
          %1993 = vmatprep.subr.mxu0 0.0
          %1994 = vmatpush1.msra.mxu0 0.0
          %1995 = vmatprep.subr.mxu0 0.0
          %1996 = vmatpush1.msra.mxu0 0.0
          %1997 = vmatprep.subr.mxu0 0.0
          %1998 = vmatpush1.msra.mxu0 0.0
          %1999 = vmatprep.subr.mxu0 0.0
          %2000 = vmatpush1.msra.mxu0 0.0
          %2001 = vmatprep.subr.mxu0 0.0
          %2002 = vmatpush1.msra.mxu0 0.0
          %2003 = vmatprep.subr.mxu0 0.0
          %2004 = vmatpush1.msra.mxu0 0.0
          %2005 = vmatprep.subr.mxu0 0.0
          %2006 = vmatpush1.msra.mxu0 0.0
          %2007 = vmatprep.subr.mxu0 0.0
          %2008 = vmatpush1.msra.mxu0 0.0
          %2009 = vmatprep.subr.mxu0 0.0
          %2010 = vmatpush1.msra.mxu0 0.0
          %2011 = vmatprep.subr.mxu0 0.0
          %2012 = vmatpush1.msra.mxu0 0.0
          %2013 = vmatprep.subr.mxu0 0.0
          %2014 = vmatpush1.msra.mxu0 0.0
          %2015 = vmatprep.subr.mxu0 0.0
          %2016 = vmatpush1.msra.mxu0 0.0
          %2017 = vmatprep.mubr.f32.mxu0 0.0
          %2018 = vmatmul.mubr.f32.gmra.mrb[0].mxu0 %v1887
          %v2019 = vpop.f32.mrb[0].mxu0
          %v2020 = vadd.f32 0.0, %v2019
          %v2021 = vpop.f32.mrb[0].mxu0
          %v2022 = vadd.f32 0.0, %v2021
          %2023 = vdwg.mxu0
          %2024 = vmatprep.subr.mxu0 %v1892
          %2025 = vmatpush1.msra.mxu0 %v1891
          %2026 = vmatprep.subr.mxu0 %v1896
          %2027 = vmatpush1.msra.mxu0 %v1895
          %2028 = vmatprep.subr.mxu0 %v1900
          %2029 = vmatpush1.msra.mxu0 %v1899
          %2030 = vmatprep.subr.mxu0 %v1904
          %2031 = vmatpush1.msra.mxu0 %v1903
          %2032 = vmatprep.subr.mxu0 %v1908
          %2033 = vmatpush1.msra.mxu0 %v1907
          %2034 = vmatprep.subr.mxu0 %v1912
          %2035 = vmatpush1.msra.mxu0 %v1911
          %2036 = vmatprep.subr.mxu0 %v1916
          %2037 = vmatpush1.msra.mxu0 %v1915
          %2038 = vmatprep.subr.mxu0 %v1920
          %2039 = vmatpush1.msra.mxu0 %v1919
          %2040 = vmatprep.subr.mxu0 %v1924
          %2041 = vmatpush1.msra.mxu0 %v1923
          %2042 = vmatprep.subr.mxu0 %v1928
          %2043 = vmatpush1.msra.mxu0 %v1927
          %2044 = vmatprep.subr.mxu0 %v1932
          %2045 = vmatpush1.msra.mxu0 %v1931
          %2046 = vmatprep.subr.mxu0 %v1936
          %2047 = vmatpush1.msra.mxu0 %v1935
          %2048 = vmatprep.subr.mxu0 %v1940
          %2049 = vmatpush1.msra.mxu0 %v1939
          %2050 = vmatprep.subr.mxu0 %v1944
          %2051 = vmatpush1.msra.mxu0 %v1943
          %2052 = vmatprep.subr.mxu0 %v1948
          %2053 = vmatpush1.msra.mxu0 %v1947
          %2054 = vmatprep.subr.mxu0 %v1952
          %2055 = vmatpush1.msra.mxu0 %v1951
          %2056 = vmatprep.subr.mxu0 0.0
          %2057 = vmatpush1.msra.mxu0 0.0
          %2058 = vmatprep.subr.mxu0 0.0
          %2059 = vmatpush1.msra.mxu0 0.0
          %2060 = vmatprep.subr.mxu0 0.0
          %2061 = vmatpush1.msra.mxu0 0.0
          %2062 = vmatprep.subr.mxu0 0.0
          %2063 = vmatpush1.msra.mxu0 0.0
          %2064 = vmatprep.subr.mxu0 0.0
          %2065 = vmatpush1.msra.mxu0 0.0
          %2066 = vmatprep.subr.mxu0 0.0
          %2067 = vmatpush1.msra.mxu0 0.0
          %2068 = vmatprep.subr.mxu0 0.0
          %2069 = vmatpush1.msra.mxu0 0.0
          %2070 = vmatprep.subr.mxu0 0.0
          %2071 = vmatpush1.msra.mxu0 0.0
          %2072 = vmatprep.subr.mxu0 0.0
          %2073 = vmatpush1.msra.mxu0 0.0
          %2074 = vmatprep.subr.mxu0 0.0
          %2075 = vmatpush1.msra.mxu0 0.0
          %2076 = vmatprep.subr.mxu0 0.0
          %2077 = vmatpush1.msra.mxu0 0.0
          %2078 = vmatprep.subr.mxu0 0.0
          %2079 = vmatpush1.msra.mxu0 0.0
          %2080 = vmatprep.subr.mxu0 0.0
          %2081 = vmatpush1.msra.mxu0 0.0
          %2082 = vmatprep.subr.mxu0 0.0
          %2083 = vmatpush1.msra.mxu0 0.0
          %2084 = vmatprep.subr.mxu0 0.0
          %2085 = vmatpush1.msra.mxu0 0.0
          %2086 = vmatprep.subr.mxu0 0.0
          %2087 = vmatpush1.msra.mxu0 0.0
          %2088 = vmatprep.mubr.f32.mxu0 0.0
          %2089 = vmatmul.mubr.f32.gmra.mrb[0].mxu0 %v1887
          %v2090 = vpop.f32.mrb[0].mxu0
          %v2091 = vadd.f32 0.0, %v2090
          %v2092 = vpop.f32.mrb[0].mxu0
          %v2093 = vadd.f32 0.0, %v2092
          %2094 = vdwg.mxu0
          %v2095 = vadd.f32 %v1883, %v2020
          %v2096 = vadd.f32 %v1884, %v2022
          %v2097 = vadd.f32 %v1885, %v2091
          %v2098 = vadd.f32 %v1886, %v2093
          %v2099 = vxor.u32 %v2095, 2147483648
          %v2100 = vmul.f32 %v2099, 1.442695
          %v2101 = vpow.pop %v2100
          %v2102 = vadd.f32 %v2101, 1.0
          %v2103 = vrcp.pop %v2102
          %v2104 = vmul.f32 1.0, %v2103
          %v2105 = vxor.u32 %v2096, 2147483648
          %v2106 = vmul.f32 %v2105, 1.442695
          %v2107 = vpow.pop %v2106
          %v2108 = vadd.f32 %v2107, 1.0
          %v2109 = vrcp.pop %v2108
          %v2110 = vmul.f32 1.0, %v2109
          %v2111 = vtanh.pop %v2097
          %v2112 = vxor.u32 %v2098, 2147483648
          %v2113 = vmul.f32 %v2112, 1.442695
          %v2114 = vpow.pop %v2113
          %v2115 = vadd.f32 %v2114, 1.0
          %v2116 = vrcp.pop %v2115
          %v2117 = vmul.f32 1.0, %v2116
          %v2118 = vmul.f32 %v2110, %v1888
          %v2119 = vmul.f32 %v2104, %v2111
          %v2120 = vadd.f32 %v2118, %v2119
          %2121 = vst [vmem:[#allocation4] sm:$0xff] %v2120
          %v2122 = vtanh.pop %v2120
          %v2123 = vmul.f32 %v2117, %v2122
          %2124 = vst [vmem:[#allocation3] sm:$0xff] %v2123
          %s2125 = sshll.u32 %s1092, 4
          %2126 = dma.done %s678, %s2125
          %s2127 = sshll.u32 %s1092, 4
          %2128 = dma.done %s678, %s2127
          %s2129 = sshll.u32 %s1092, 4
          %2130 = dma.done %s678, %s2129
          %s2131 = sshll.u32 %s1092, 4
          %2132 = dma.done %s678, %s2131
          %s2133 = sshll.u32 %s1092, 4
          %2134 = dma.done %s678, %s2133
          %s2135 = sshll.u32 %s1092, 4
          %2136 = dma.done %s678, %s2135
          %s2137 = sshll.u32 %s1092, 4
          %2138 = dma.done %s678, %s2137
          %s2139 = sshll.u32 %s1092, 4
          %2140 = dma.done %s678, %s2139
          %v2141 = vld [vmem:[#allocation2 + $0x80] sm:$0xff]
          %v2142 = vld [vmem:[#allocation2 + $0x88] sm:$0xff]
          %v2143 = vld [vmem:[#allocation2 + $0x90] sm:$0xff]
          %v2144 = vld [vmem:[#allocation2 + $0x98] sm:$0xff]
          %v2145 = vld [vmem:[#allocation3] sm:$0xff]
          %v2146 = vld [vmem:[#allocation4] sm:$0xff]
          %v2147 = vld [vmem:[#allocation8] sm:$0xff]
          %v2148 = vld [vmem:[#allocation8 + $0x8] sm:$0xff]
          %v2149 = vld [vmem:[#allocation8 + $0x10] sm:$0xff]
          %v2150 = vld [vmem:[#allocation8 + $0x18] sm:$0xff]
          %v2151 = vld [vmem:[#allocation8 + $0x20] sm:$0xff]
          %v2152 = vld [vmem:[#allocation8 + $0x28] sm:$0xff]
          %v2153 = vld [vmem:[#allocation8 + $0x30] sm:$0xff]
          %v2154 = vld [vmem:[#allocation8 + $0x38] sm:$0xff]
          %v2155 = vld [vmem:[#allocation8 + $0x40] sm:$0xff]
          %v2156 = vld [vmem:[#allocation8 + $0x48] sm:$0xff]
          %v2157 = vld [vmem:[#allocation8 + $0x50] sm:$0xff]
          %v2158 = vld [vmem:[#allocation8 + $0x58] sm:$0xff]
          %v2159 = vld [vmem:[#allocation8 + $0x60] sm:$0xff]
          %v2160 = vld [vmem:[#allocation8 + $0x68] sm:$0xff]
          %v2161 = vld [vmem:[#allocation8 + $0x70] sm:$0xff]
          %v2162 = vld [vmem:[#allocation8 + $0x78] sm:$0xff]
          %v2163 = vld [vmem:[#allocation8 + $0x80] sm:$0xff]
          %v2164 = vld [vmem:[#allocation8 + $0x88] sm:$0xff]
          %v2165 = vld [vmem:[#allocation8 + $0x90] sm:$0xff]
          %v2166 = vld [vmem:[#allocation8 + $0x98] sm:$0xff]
          %v2167 = vld [vmem:[#allocation8 + $0xa0] sm:$0xff]
          %v2168 = vld [vmem:[#allocation8 + $0xa8] sm:$0xff]
          %v2169 = vld [vmem:[#allocation8 + $0xb0] sm:$0xff]
          %v2170 = vld [vmem:[#allocation8 + $0xb8] sm:$0xff]
          %v2171 = vld [vmem:[#allocation8 + $0xc0] sm:$0xff]
          %v2172 = vld [vmem:[#allocation8 + $0xc8] sm:$0xff]
          %v2173 = vld [vmem:[#allocation8 + $0xd0] sm:$0xff]
          %v2174 = vld [vmem:[#allocation8 + $0xd8] sm:$0xff]
          %v2175 = vld [vmem:[#allocation8 + $0xe0] sm:$0xff]
          %v2176 = vld [vmem:[#allocation8 + $0xe8] sm:$0xff]
          %v2177 = vld [vmem:[#allocation8 + $0xf0] sm:$0xff]
          %v2178 = vld [vmem:[#allocation8 + $0xf8] sm:$0xff]
          %v2179 = vld [vmem:[#allocation8 + $0x100] sm:$0xff]
          %v2180 = vld [vmem:[#allocation8 + $0x108] sm:$0xff]
          %v2181 = vld [vmem:[#allocation8 + $0x110] sm:$0xff]
          %v2182 = vld [vmem:[#allocation8 + $0x118] sm:$0xff]
          %v2183 = vld [vmem:[#allocation8 + $0x120] sm:$0xff]
          %v2184 = vld [vmem:[#allocation8 + $0x128] sm:$0xff]
          %v2185 = vld [vmem:[#allocation8 + $0x130] sm:$0xff]
          %v2186 = vld [vmem:[#allocation8 + $0x138] sm:$0xff]
          %v2187 = vld [vmem:[#allocation8 + $0x140] sm:$0xff]
          %v2188 = vld [vmem:[#allocation8 + $0x148] sm:$0xff]
          %v2189 = vld [vmem:[#allocation8 + $0x150] sm:$0xff]
          %v2190 = vld [vmem:[#allocation8 + $0x158] sm:$0xff]
          %v2191 = vld [vmem:[#allocation8 + $0x160] sm:$0xff]
          %v2192 = vld [vmem:[#allocation8 + $0x168] sm:$0xff]
          %v2193 = vld [vmem:[#allocation8 + $0x170] sm:$0xff]
          %v2194 = vld [vmem:[#allocation8 + $0x178] sm:$0xff]
          %v2195 = vld [vmem:[#allocation8 + $0x180] sm:$0xff]
          %v2196 = vld [vmem:[#allocation8 + $0x188] sm:$0xff]
          %v2197 = vld [vmem:[#allocation8 + $0x190] sm:$0xff]
          %v2198 = vld [vmem:[#allocation8 + $0x198] sm:$0xff]
          %v2199 = vld [vmem:[#allocation8 + $0x1a0] sm:$0xff]
          %v2200 = vld [vmem:[#allocation8 + $0x1a8] sm:$0xff]
          %v2201 = vld [vmem:[#allocation8 + $0x1b0] sm:$0xff]
          %v2202 = vld [vmem:[#allocation8 + $0x1b8] sm:$0xff]
          %v2203 = vld [vmem:[#allocation8 + $0x1c0] sm:$0xff]
          %v2204 = vld [vmem:[#allocation8 + $0x1c8] sm:$0xff]
          %v2205 = vld [vmem:[#allocation8 + $0x1d0] sm:$0xff]
          %v2206 = vld [vmem:[#allocation8 + $0x1d8] sm:$0xff]
          %v2207 = vld [vmem:[#allocation8 + $0x1e0] sm:$0xff]
          %v2208 = vld [vmem:[#allocation8 + $0x1e8] sm:$0xff]
          %v2209 = vld [vmem:[#allocation8 + $0x1f0] sm:$0xff]
          %v2210 = vld [vmem:[#allocation8 + $0x1f8] sm:$0xff]
          %2211 = vmatprep.subr.mxu0 %v2148
          %2212 = vmatpush1.msra.mxu0 %v2147
          %2213 = vmatprep.subr.mxu0 %v2152
          %2214 = vmatpush1.msra.mxu0 %v2151
          %2215 = vmatprep.subr.mxu0 %v2156
          %2216 = vmatpush1.msra.mxu0 %v2155
          %2217 = vmatprep.subr.mxu0 %v2160
          %2218 = vmatpush1.msra.mxu0 %v2159
          %2219 = vmatprep.subr.mxu0 %v2164
          %2220 = vmatpush1.msra.mxu0 %v2163
          %2221 = vmatprep.subr.mxu0 %v2168
          %2222 = vmatpush1.msra.mxu0 %v2167
          %2223 = vmatprep.subr.mxu0 %v2172
          %2224 = vmatpush1.msra.mxu0 %v2171
          %2225 = vmatprep.subr.mxu0 %v2176
          %2226 = vmatpush1.msra.mxu0 %v2175
          %2227 = vmatprep.subr.mxu0 %v2180
          %2228 = vmatpush1.msra.mxu0 %v2179
          %2229 = vmatprep.subr.mxu0 %v2184
          %2230 = vmatpush1.msra.mxu0 %v2183
          %2231 = vmatprep.subr.mxu0 %v2188
          %2232 = vmatpush1.msra.mxu0 %v2187
          %2233 = vmatprep.subr.mxu0 %v2192
          %2234 = vmatpush1.msra.mxu0 %v2191
          %2235 = vmatprep.subr.mxu0 %v2196
          %2236 = vmatpush1.msra.mxu0 %v2195
          %2237 = vmatprep.subr.mxu0 %v2200
          %2238 = vmatpush1.msra.mxu0 %v2199
          %2239 = vmatprep.subr.mxu0 %v2204
          %2240 = vmatpush1.msra.mxu0 %v2203
          %2241 = vmatprep.subr.mxu0 %v2208
          %2242 = vmatpush1.msra.mxu0 %v2207
          %2243 = vmatprep.subr.mxu0 0.0
          %2244 = vmatpush1.msra.mxu0 0.0
          %2245 = vmatprep.subr.mxu0 0.0
          %2246 = vmatpush1.msra.mxu0 0.0
          %2247 = vmatprep.subr.mxu0 0.0
          %2248 = vmatpush1.msra.mxu0 0.0
          %2249 = vmatprep.subr.mxu0 0.0
          %2250 = vmatpush1.msra.mxu0 0.0
          %2251 = vmatprep.subr.mxu0 0.0
          %2252 = vmatpush1.msra.mxu0 0.0
          %2253 = vmatprep.subr.mxu0 0.0
          %2254 = vmatpush1.msra.mxu0 0.0
          %2255 = vmatprep.subr.mxu0 0.0
          %2256 = vmatpush1.msra.mxu0 0.0
          %2257 = vmatprep.subr.mxu0 0.0
          %2258 = vmatpush1.msra.mxu0 0.0
          %2259 = vmatprep.subr.mxu0 0.0
          %2260 = vmatpush1.msra.mxu0 0.0
          %2261 = vmatprep.subr.mxu0 0.0
          %2262 = vmatpush1.msra.mxu0 0.0
          %2263 = vmatprep.subr.mxu0 0.0
          %2264 = vmatpush1.msra.mxu0 0.0
          %2265 = vmatprep.subr.mxu0 0.0
          %2266 = vmatpush1.msra.mxu0 0.0
          %2267 = vmatprep.subr.mxu0 0.0
          %2268 = vmatpush1.msra.mxu0 0.0
          %2269 = vmatprep.subr.mxu0 0.0
          %2270 = vmatpush1.msra.mxu0 0.0
          %2271 = vmatprep.subr.mxu0 0.0
          %2272 = vmatpush1.msra.mxu0 0.0
          %2273 = vmatprep.subr.mxu0 0.0
          %2274 = vmatpush1.msra.mxu0 0.0
          %2275 = vmatprep.mubr.f32.mxu0 0.0
          %2276 = vmatmul.mubr.f32.gmra.mrb[0].mxu0 %v2145
          %v2277 = vpop.f32.mrb[0].mxu0
          %v2278 = vadd.f32 0.0, %v2277
          %v2279 = vpop.f32.mrb[0].mxu0
          %v2280 = vadd.f32 0.0, %v2279
          %2281 = vdwg.mxu0
          %2282 = vmatprep.subr.mxu0 %v2150
          %2283 = vmatpush1.msra.mxu0 %v2149
          %2284 = vmatprep.subr.mxu0 %v2154
          %2285 = vmatpush1.msra.mxu0 %v2153
          %2286 = vmatprep.subr.mxu0 %v2158
          %2287 = vmatpush1.msra.mxu0 %v2157
          %2288 = vmatprep.subr.mxu0 %v2162
          %2289 = vmatpush1.msra.mxu0 %v2161
          %2290 = vmatprep.subr.mxu0 %v2166
          %2291 = vmatpush1.msra.mxu0 %v2165
          %2292 = vmatprep.subr.mxu0 %v2170
          %2293 = vmatpush1.msra.mxu0 %v2169
          %2294 = vmatprep.subr.mxu0 %v2174
          %2295 = vmatpush1.msra.mxu0 %v2173
          %2296 = vmatprep.subr.mxu0 %v2178
          %2297 = vmatpush1.msra.mxu0 %v2177
          %2298 = vmatprep.subr.mxu0 %v2182
          %2299 = vmatpush1.msra.mxu0 %v2181
          %2300 = vmatprep.subr.mxu0 %v2186
          %2301 = vmatpush1.msra.mxu0 %v2185
          %2302 = vmatprep.subr.mxu0 %v2190
          %2303 = vmatpush1.msra.mxu0 %v2189
          %2304 = vmatprep.subr.mxu0 %v2194
          %2305 = vmatpush1.msra.mxu0 %v2193
          %2306 = vmatprep.subr.mxu0 %v2198
          %2307 = vmatpush1.msra.mxu0 %v2197
          %2308 = vmatprep.subr.mxu0 %v2202
          %2309 = vmatpush1.msra.mxu0 %v2201
          %2310 = vmatprep.subr.mxu0 %v2206
          %2311 = vmatpush1.msra.mxu0 %v2205
          %2312 = vmatprep.subr.mxu0 %v2210
          %2313 = vmatpush1.msra.mxu0 %v2209
          %2314 = vmatprep.subr.mxu0 0.0
          %2315 = vmatpush1.msra.mxu0 0.0
          %2316 = vmatprep.subr.mxu0 0.0
          %2317 = vmatpush1.msra.mxu0 0.0
          %2318 = vmatprep.subr.mxu0 0.0
          %2319 = vmatpush1.msra.mxu0 0.0
          %2320 = vmatprep.subr.mxu0 0.0
          %2321 = vmatpush1.msra.mxu0 0.0
          %2322 = vmatprep.subr.mxu0 0.0
          %2323 = vmatpush1.msra.mxu0 0.0
          %2324 = vmatprep.subr.mxu0 0.0
          %2325 = vmatpush1.msra.mxu0 0.0
          %2326 = vmatprep.subr.mxu0 0.0
          %2327 = vmatpush1.msra.mxu0 0.0
          %2328 = vmatprep.subr.mxu0 0.0
          %2329 = vmatpush1.msra.mxu0 0.0
          %2330 = vmatprep.subr.mxu0 0.0
          %2331 = vmatpush1.msra.mxu0 0.0
          %2332 = vmatprep.subr.mxu0 0.0
          %2333 = vmatpush1.msra.mxu0 0.0
          %2334 = vmatprep.subr.mxu0 0.0
          %2335 = vmatpush1.msra.mxu0 0.0
          %2336 = vmatprep.subr.mxu0 0.0
          %2337 = vmatpush1.msra.mxu0 0.0
          %2338 = vmatprep.subr.mxu0 0.0
          %2339 = vmatpush1.msra.mxu0 0.0
          %2340 = vmatprep.subr.mxu0 0.0
          %2341 = vmatpush1.msra.mxu0 0.0
          %2342 = vmatprep.subr.mxu0 0.0
          %2343 = vmatpush1.msra.mxu0 0.0
          %2344 = vmatprep.subr.mxu0 0.0
          %2345 = vmatpush1.msra.mxu0 0.0
          %2346 = vmatprep.mubr.f32.mxu0 0.0
          %2347 = vmatmul.mubr.f32.gmra.mrb[0].mxu0 %v2145
          %v2348 = vpop.f32.mrb[0].mxu0
          %v2349 = vadd.f32 0.0, %v2348
          %v2350 = vpop.f32.mrb[0].mxu0
          %v2351 = vadd.f32 0.0, %v2350
          %2352 = vdwg.mxu0
          %v2353 = vadd.f32 %v2141, %v2278
          %v2354 = vadd.f32 %v2142, %v2280
          %v2355 = vadd.f32 %v2143, %v2349
          %v2356 = vadd.f32 %v2144, %v2351
          %v2357 = vxor.u32 %v2353, 2147483648
          %v2358 = vmul.f32 %v2357, 1.442695
          %v2359 = vpow.pop %v2358
          %v2360 = vadd.f32 %v2359, 1.0
          %v2361 = vrcp.pop %v2360
          %v2362 = vmul.f32 1.0, %v2361
          %v2363 = vxor.u32 %v2354, 2147483648
          %v2364 = vmul.f32 %v2363, 1.442695
          %v2365 = vpow.pop %v2364
          %v2366 = vadd.f32 %v2365, 1.0
          %v2367 = vrcp.pop %v2366
          %v2368 = vmul.f32 1.0, %v2367
          %v2369 = vtanh.pop %v2355
          %v2370 = vxor.u32 %v2356, 2147483648
          %v2371 = vmul.f32 %v2370, 1.442695
          %v2372 = vpow.pop %v2371
          %v2373 = vadd.f32 %v2372, 1.0
          %v2374 = vrcp.pop %v2373
          %v2375 = vmul.f32 1.0, %v2374
          %v2376 = vmul.f32 %v2368, %v2146
          %v2377 = vmul.f32 %v2362, %v2369
          %v2378 = vadd.f32 %v2376, %v2377
          %2379 = vst [vmem:[#allocation4] sm:$0xff] %v2378
          %v2380 = vtanh.pop %v2378
          %v2381 = vmul.f32 %v2375, %v2380
          %2382 = vst [vmem:[#allocation3] sm:$0xff] %v2381
          %s2383 = sshll.u32 %s1092, 4
          %2384 = dma.done %s783, %s2383
          %s2385 = sshll.u32 %s1092, 4
          %2386 = dma.done %s783, %s2385
          %s2387 = sshll.u32 %s1092, 4
          %2388 = dma.done %s783, %s2387
          %s2389 = sshll.u32 %s1092, 4
          %2390 = dma.done %s783, %s2389
          %s2391 = sshll.u32 %s1092, 4
          %2392 = dma.done %s783, %s2391
          %s2393 = sshll.u32 %s1092, 4
          %2394 = dma.done %s783, %s2393
          %s2395 = sshll.u32 %s1092, 4
          %2396 = dma.done %s783, %s2395
          %s2397 = sshll.u32 %s1092, 4
          %2398 = dma.done %s783, %s2397
          %v2399 = vld [vmem:[#allocation2 + $0xa0] sm:$0xff]
          %v2400 = vld [vmem:[#allocation2 + $0xa8] sm:$0xff]
          %v2401 = vld [vmem:[#allocation2 + $0xb0] sm:$0xff]
          %v2402 = vld [vmem:[#allocation2 + $0xb8] sm:$0xff]
          %v2403 = vld [vmem:[#allocation3] sm:$0xff]
          %v2404 = vld [vmem:[#allocation4] sm:$0xff]
          %v2405 = vld [vmem:[#allocation8] sm:$0xff]
          %v2406 = vld [vmem:[#allocation8 + $0x8] sm:$0xff]
          %v2407 = vld [vmem:[#allocation8 + $0x10] sm:$0xff]
          %v2408 = vld [vmem:[#allocation8 + $0x18] sm:$0xff]
          %v2409 = vld [vmem:[#allocation8 + $0x20] sm:$0xff]
          %v2410 = vld [vmem:[#allocation8 + $0x28] sm:$0xff]
          %v2411 = vld [vmem:[#allocation8 + $0x30] sm:$0xff]
          %v2412 = vld [vmem:[#allocation8 + $0x38] sm:$0xff]
          %v2413 = vld [vmem:[#allocation8 + $0x40] sm:$0xff]
          %v2414 = vld [vmem:[#allocation8 + $0x48] sm:$0xff]
          %v2415 = vld [vmem:[#allocation8 + $0x50] sm:$0xff]
          %v2416 = vld [vmem:[#allocation8 + $0x58] sm:$0xff]
          %v2417 = vld [vmem:[#allocation8 + $0x60] sm:$0xff]
          %v2418 = vld [vmem:[#allocation8 + $0x68] sm:$0xff]
          %v2419 = vld [vmem:[#allocation8 + $0x70] sm:$0xff]
          %v2420 = vld [vmem:[#allocation8 + $0x78] sm:$0xff]
          %v2421 = vld [vmem:[#allocation8 + $0x80] sm:$0xff]
          %v2422 = vld [vmem:[#allocation8 + $0x88] sm:$0xff]
          %v2423 = vld [vmem:[#allocation8 + $0x90] sm:$0xff]
          %v2424 = vld [vmem:[#allocation8 + $0x98] sm:$0xff]
          %v2425 = vld [vmem:[#allocation8 + $0xa0] sm:$0xff]
          %v2426 = vld [vmem:[#allocation8 + $0xa8] sm:$0xff]
          %v2427 = vld [vmem:[#allocation8 + $0xb0] sm:$0xff]
          %v2428 = vld [vmem:[#allocation8 + $0xb8] sm:$0xff]
          %v2429 = vld [vmem:[#allocation8 + $0xc0] sm:$0xff]
          %v2430 = vld [vmem:[#allocation8 + $0xc8] sm:$0xff]
          %v2431 = vld [vmem:[#allocation8 + $0xd0] sm:$0xff]
          %v2432 = vld [vmem:[#allocation8 + $0xd8] sm:$0xff]
          %v2433 = vld [vmem:[#allocation8 + $0xe0] sm:$0xff]
          %v2434 = vld [vmem:[#allocation8 + $0xe8] sm:$0xff]
          %v2435 = vld [vmem:[#allocation8 + $0xf0] sm:$0xff]
          %v2436 = vld [vmem:[#allocation8 + $0xf8] sm:$0xff]
          %v2437 = vld [vmem:[#allocation8 + $0x100] sm:$0xff]
          %v2438 = vld [vmem:[#allocation8 + $0x108] sm:$0xff]
          %v2439 = vld [vmem:[#allocation8 + $0x110] sm:$0xff]
          %v2440 = vld [vmem:[#allocation8 + $0x118] sm:$0xff]
          %v2441 = vld [vmem:[#allocation8 + $0x120] sm:$0xff]
          %v2442 = vld [vmem:[#allocation8 + $0x128] sm:$0xff]
          %v2443 = vld [vmem:[#allocation8 + $0x130] sm:$0xff]
          %v2444 = vld [vmem:[#allocation8 + $0x138] sm:$0xff]
          %v2445 = vld [vmem:[#allocation8 + $0x140] sm:$0xff]
          %v2446 = vld [vmem:[#allocation8 + $0x148] sm:$0xff]
          %v2447 = vld [vmem:[#allocation8 + $0x150] sm:$0xff]
          %v2448 = vld [vmem:[#allocation8 + $0x158] sm:$0xff]
          %v2449 = vld [vmem:[#allocation8 + $0x160] sm:$0xff]
          %v2450 = vld [vmem:[#allocation8 + $0x168] sm:$0xff]
          %v2451 = vld [vmem:[#allocation8 + $0x170] sm:$0xff]
          %v2452 = vld [vmem:[#allocation8 + $0x178] sm:$0xff]
          %v2453 = vld [vmem:[#allocation8 + $0x180] sm:$0xff]
          %v2454 = vld [vmem:[#allocation8 + $0x188] sm:$0xff]
          %v2455 = vld [vmem:[#allocation8 + $0x190] sm:$0xff]
          %v2456 = vld [vmem:[#allocation8 + $0x198] sm:$0xff]
          %v2457 = vld [vmem:[#allocation8 + $0x1a0] sm:$0xff]
          %v2458 = vld [vmem:[#allocation8 + $0x1a8] sm:$0xff]
          %v2459 = vld [vmem:[#allocation8 + $0x1b0] sm:$0xff]
          %v2460 = vld [vmem:[#allocation8 + $0x1b8] sm:$0xff]
          %v2461 = vld [vmem:[#allocation8 + $0x1c0] sm:$0xff]
          %v2462 = vld [vmem:[#allocation8 + $0x1c8] sm:$0xff]
          %v2463 = vld [vmem:[#allocation8 + $0x1d0] sm:$0xff]
          %v2464 = vld [vmem:[#allocation8 + $0x1d8] sm:$0xff]
          %v2465 = vld [vmem:[#allocation8 + $0x1e0] sm:$0xff]
          %v2466 = vld [vmem:[#allocation8 + $0x1e8] sm:$0xff]
          %v2467 = vld [vmem:[#allocation8 + $0x1f0] sm:$0xff]
          %v2468 = vld [vmem:[#allocation8 + $0x1f8] sm:$0xff]
          %2469 = vmatprep.subr.mxu0 %v2406
          %2470 = vmatpush1.msra.mxu0 %v2405
          %2471 = vmatprep.subr.mxu0 %v2410
          %2472 = vmatpush1.msra.mxu0 %v2409
          %2473 = vmatprep.subr.mxu0 %v2414
          %2474 = vmatpush1.msra.mxu0 %v2413
          %2475 = vmatprep.subr.mxu0 %v2418
          %2476 = vmatpush1.msra.mxu0 %v2417
          %2477 = vmatprep.subr.mxu0 %v2422
          %2478 = vmatpush1.msra.mxu0 %v2421
          %2479 = vmatprep.subr.mxu0 %v2426
          %2480 = vmatpush1.msra.mxu0 %v2425
          %2481 = vmatprep.subr.mxu0 %v2430
          %2482 = vmatpush1.msra.mxu0 %v2429
          %2483 = vmatprep.subr.mxu0 %v2434
          %2484 = vmatpush1.msra.mxu0 %v2433
          %2485 = vmatprep.subr.mxu0 %v2438
          %2486 = vmatpush1.msra.mxu0 %v2437
          %2487 = vmatprep.subr.mxu0 %v2442
          %2488 = vmatpush1.msra.mxu0 %v2441
          %2489 = vmatprep.subr.mxu0 %v2446
          %2490 = vmatpush1.msra.mxu0 %v2445
          %2491 = vmatprep.subr.mxu0 %v2450
          %2492 = vmatpush1.msra.mxu0 %v2449
          %2493 = vmatprep.subr.mxu0 %v2454
          %2494 = vmatpush1.msra.mxu0 %v2453
          %2495 = vmatprep.subr.mxu0 %v2458
          %2496 = vmatpush1.msra.mxu0 %v2457
          %2497 = vmatprep.subr.mxu0 %v2462
          %2498 = vmatpush1.msra.mxu0 %v2461
          %2499 = vmatprep.subr.mxu0 %v2466
          %2500 = vmatpush1.msra.mxu0 %v2465
          %2501 = vmatprep.subr.mxu0 0.0
          %2502 = vmatpush1.msra.mxu0 0.0
          %2503 = vmatprep.subr.mxu0 0.0
          %2504 = vmatpush1.msra.mxu0 0.0
          %2505 = vmatprep.subr.mxu0 0.0
          %2506 = vmatpush1.msra.mxu0 0.0
          %2507 = vmatprep.subr.mxu0 0.0
          %2508 = vmatpush1.msra.mxu0 0.0
          %2509 = vmatprep.subr.mxu0 0.0
          %2510 = vmatpush1.msra.mxu0 0.0
          %2511 = vmatprep.subr.mxu0 0.0
          %2512 = vmatpush1.msra.mxu0 0.0
          %2513 = vmatprep.subr.mxu0 0.0
          %2514 = vmatpush1.msra.mxu0 0.0
          %2515 = vmatprep.subr.mxu0 0.0
          %2516 = vmatpush1.msra.mxu0 0.0
          %2517 = vmatprep.subr.mxu0 0.0
          %2518 = vmatpush1.msra.mxu0 0.0
          %2519 = vmatprep.subr.mxu0 0.0
          %2520 = vmatpush1.msra.mxu0 0.0
          %2521 = vmatprep.subr.mxu0 0.0
          %2522 = vmatpush1.msra.mxu0 0.0
          %2523 = vmatprep.subr.mxu0 0.0
          %2524 = vmatpush1.msra.mxu0 0.0
          %2525 = vmatprep.subr.mxu0 0.0
          %2526 = vmatpush1.msra.mxu0 0.0
          %2527 = vmatprep.subr.mxu0 0.0
          %2528 = vmatpush1.msra.mxu0 0.0
          %2529 = vmatprep.subr.mxu0 0.0
          %2530 = vmatpush1.msra.mxu0 0.0
          %2531 = vmatprep.subr.mxu0 0.0
          %2532 = vmatpush1.msra.mxu0 0.0
          %2533 = vmatprep.mubr.f32.mxu0 0.0
          %2534 = vmatmul.mubr.f32.gmra.mrb[0].mxu0 %v2403
          %v2535 = vpop.f32.mrb[0].mxu0
          %v2536 = vadd.f32 0.0, %v2535
          %v2537 = vpop.f32.mrb[0].mxu0
          %v2538 = vadd.f32 0.0, %v2537
          %2539 = vdwg.mxu0
          %2540 = vmatprep.subr.mxu0 %v2408
          %2541 = vmatpush1.msra.mxu0 %v2407
          %2542 = vmatprep.subr.mxu0 %v2412
          %2543 = vmatpush1.msra.mxu0 %v2411
          %2544 = vmatprep.subr.mxu0 %v2416
          %2545 = vmatpush1.msra.mxu0 %v2415
          %2546 = vmatprep.subr.mxu0 %v2420
          %2547 = vmatpush1.msra.mxu0 %v2419
          %2548 = vmatprep.subr.mxu0 %v2424
          %2549 = vmatpush1.msra.mxu0 %v2423
          %2550 = vmatprep.subr.mxu0 %v2428
          %2551 = vmatpush1.msra.mxu0 %v2427
          %2552 = vmatprep.subr.mxu0 %v2432
          %2553 = vmatpush1.msra.mxu0 %v2431
          %2554 = vmatprep.subr.mxu0 %v2436
          %2555 = vmatpush1.msra.mxu0 %v2435
          %2556 = vmatprep.subr.mxu0 %v2440
          %2557 = vmatpush1.msra.mxu0 %v2439
          %2558 = vmatprep.subr.mxu0 %v2444
          %2559 = vmatpush1.msra.mxu0 %v2443
          %2560 = vmatprep.subr.mxu0 %v2448
          %2561 = vmatpush1.msra.mxu0 %v2447
          %2562 = vmatprep.subr.mxu0 %v2452
          %2563 = vmatpush1.msra.mxu0 %v2451
          %2564 = vmatprep.subr.mxu0 %v2456
          %2565 = vmatpush1.msra.mxu0 %v2455
          %2566 = vmatprep.subr.mxu0 %v2460
          %2567 = vmatpush1.msra.mxu0 %v2459
          %2568 = vmatprep.subr.mxu0 %v2464
          %2569 = vmatpush1.msra.mxu0 %v2463
          %2570 = vmatprep.subr.mxu0 %v2468
          %2571 = vmatpush1.msra.mxu0 %v2467
          %2572 = vmatprep.subr.mxu0 0.0
          %2573 = vmatpush1.msra.mxu0 0.0
          %2574 = vmatprep.subr.mxu0 0.0
          %2575 = vmatpush1.msra.mxu0 0.0
          %2576 = vmatprep.subr.mxu0 0.0
          %2577 = vmatpush1.msra.mxu0 0.0
          %2578 = vmatprep.subr.mxu0 0.0
          %2579 = vmatpush1.msra.mxu0 0.0
          %2580 = vmatprep.subr.mxu0 0.0
          %2581 = vmatpush1.msra.mxu0 0.0
          %2582 = vmatprep.subr.mxu0 0.0
          %2583 = vmatpush1.msra.mxu0 0.0
          %2584 = vmatprep.subr.mxu0 0.0
          %2585 = vmatpush1.msra.mxu0 0.0
          %2586 = vmatprep.subr.mxu0 0.0
          %2587 = vmatpush1.msra.mxu0 0.0
          %2588 = vmatprep.subr.mxu0 0.0
          %2589 = vmatpush1.msra.mxu0 0.0
          %2590 = vmatprep.subr.mxu0 0.0
          %2591 = vmatpush1.msra.mxu0 0.0
          %2592 = vmatprep.subr.mxu0 0.0
          %2593 = vmatpush1.msra.mxu0 0.0
          %2594 = vmatprep.subr.mxu0 0.0
          %2595 = vmatpush1.msra.mxu0 0.0
          %2596 = vmatprep.subr.mxu0 0.0
          %2597 = vmatpush1.msra.mxu0 0.0
          %2598 = vmatprep.subr.mxu0 0.0
          %2599 = vmatpush1.msra.mxu0 0.0
          %2600 = vmatprep.subr.mxu0 0.0
          %2601 = vmatpush1.msra.mxu0 0.0
          %2602 = vmatprep.subr.mxu0 0.0
          %2603 = vmatpush1.msra.mxu0 0.0
          %2604 = vmatprep.mubr.f32.mxu0 0.0
          %2605 = vmatmul.mubr.f32.gmra.mrb[0].mxu0 %v2403
          %v2606 = vpop.f32.mrb[0].mxu0
          %v2607 = vadd.f32 0.0, %v2606
          %v2608 = vpop.f32.mrb[0].mxu0
          %v2609 = vadd.f32 0.0, %v2608
          %2610 = vdwg.mxu0
          %v2611 = vadd.f32 %v2399, %v2536
          %v2612 = vadd.f32 %v2400, %v2538
          %v2613 = vadd.f32 %v2401, %v2607
          %v2614 = vadd.f32 %v2402, %v2609
          %v2615 = vxor.u32 %v2611, 2147483648
          %v2616 = vmul.f32 %v2615, 1.442695
          %v2617 = vpow.pop %v2616
          %v2618 = vadd.f32 %v2617, 1.0
          %v2619 = vrcp.pop %v2618
          %v2620 = vmul.f32 1.0, %v2619
          %v2621 = vxor.u32 %v2612, 2147483648
          %v2622 = vmul.f32 %v2621, 1.442695
          %v2623 = vpow.pop %v2622
          %v2624 = vadd.f32 %v2623, 1.0
          %v2625 = vrcp.pop %v2624
          %v2626 = vmul.f32 1.0, %v2625
          %v2627 = vtanh.pop %v2613
          %v2628 = vxor.u32 %v2614, 2147483648
          %v2629 = vmul.f32 %v2628, 1.442695
          %v2630 = vpow.pop %v2629
          %v2631 = vadd.f32 %v2630, 1.0
          %v2632 = vrcp.pop %v2631
          %v2633 = vmul.f32 1.0, %v2632
          %v2634 = vmul.f32 %v2626, %v2404
          %v2635 = vmul.f32 %v2620, %v2627
          %v2636 = vadd.f32 %v2634, %v2635
          %2637 = vst [vmem:[#allocation4] sm:$0xff] %v2636
          %v2638 = vtanh.pop %v2636
          %v2639 = vmul.f32 %v2633, %v2638
          %2640 = vst [vmem:[#allocation3] sm:$0xff] %v2639
          %s2641 = sshll.u32 %s1092, 4
          %2642 = dma.done %s888, %s2641
          %s2643 = sshll.u32 %s1092, 4
          %2644 = dma.done %s888, %s2643
          %s2645 = sshll.u32 %s1092, 4
          %2646 = dma.done %s888, %s2645
          %s2647 = sshll.u32 %s1092, 4
          %2648 = dma.done %s888, %s2647
          %s2649 = sshll.u32 %s1092, 4
          %2650 = dma.done %s888, %s2649
          %s2651 = sshll.u32 %s1092, 4
          %2652 = dma.done %s888, %s2651
          %s2653 = sshll.u32 %s1092, 4
          %2654 = dma.done %s888, %s2653
          %s2655 = sshll.u32 %s1092, 4
          %2656 = dma.done %s888, %s2655
          %v2657 = vld [vmem:[#allocation2 + $0xc0] sm:$0xff]
          %v2658 = vld [vmem:[#allocation2 + $0xc8] sm:$0xff]
          %v2659 = vld [vmem:[#allocation2 + $0xd0] sm:$0xff]
          %v2660 = vld [vmem:[#allocation2 + $0xd8] sm:$0xff]
          %v2661 = vld [vmem:[#allocation3] sm:$0xff]
          %v2662 = vld [vmem:[#allocation4] sm:$0xff]
          %v2663 = vld [vmem:[#allocation8] sm:$0xff]
          %v2664 = vld [vmem:[#allocation8 + $0x8] sm:$0xff]
          %v2665 = vld [vmem:[#allocation8 + $0x10] sm:$0xff]
          %v2666 = vld [vmem:[#allocation8 + $0x18] sm:$0xff]
          %v2667 = vld [vmem:[#allocation8 + $0x20] sm:$0xff]
          %v2668 = vld [vmem:[#allocation8 + $0x28] sm:$0xff]
          %v2669 = vld [vmem:[#allocation8 + $0x30] sm:$0xff]
          %v2670 = vld [vmem:[#allocation8 + $0x38] sm:$0xff]
          %v2671 = vld [vmem:[#allocation8 + $0x40] sm:$0xff]
          %v2672 = vld [vmem:[#allocation8 + $0x48] sm:$0xff]
          %v2673 = vld [vmem:[#allocation8 + $0x50] sm:$0xff]
          %v2674 = vld [vmem:[#allocation8 + $0x58] sm:$0xff]
          %v2675 = vld [vmem:[#allocation8 + $0x60] sm:$0xff]
          %v2676 = vld [vmem:[#allocation8 + $0x68] sm:$0xff]
          %v2677 = vld [vmem:[#allocation8 + $0x70] sm:$0xff]
          %v2678 = vld [vmem:[#allocation8 + $0x78] sm:$0xff]
          %v2679 = vld [vmem:[#allocation8 + $0x80] sm:$0xff]
          %v2680 = vld [vmem:[#allocation8 + $0x88] sm:$0xff]
          %v2681 = vld [vmem:[#allocation8 + $0x90] sm:$0xff]
          %v2682 = vld [vmem:[#allocation8 + $0x98] sm:$0xff]
          %v2683 = vld [vmem:[#allocation8 + $0xa0] sm:$0xff]
          %v2684 = vld [vmem:[#allocation8 + $0xa8] sm:$0xff]
          %v2685 = vld [vmem:[#allocation8 + $0xb0] sm:$0xff]
          %v2686 = vld [vmem:[#allocation8 + $0xb8] sm:$0xff]
          %v2687 = vld [vmem:[#allocation8 + $0xc0] sm:$0xff]
          %v2688 = vld [vmem:[#allocation8 + $0xc8] sm:$0xff]
          %v2689 = vld [vmem:[#allocation8 + $0xd0] sm:$0xff]
          %v2690 = vld [vmem:[#allocation8 + $0xd8] sm:$0xff]
          %v2691 = vld [vmem:[#allocation8 + $0xe0] sm:$0xff]
          %v2692 = vld [vmem:[#allocation8 + $0xe8] sm:$0xff]
          %v2693 = vld [vmem:[#allocation8 + $0xf0] sm:$0xff]
          %v2694 = vld [vmem:[#allocation8 + $0xf8] sm:$0xff]
          %v2695 = vld [vmem:[#allocation8 + $0x100] sm:$0xff]
          %v2696 = vld [vmem:[#allocation8 + $0x108] sm:$0xff]
          %v2697 = vld [vmem:[#allocation8 + $0x110] sm:$0xff]
          %v2698 = vld [vmem:[#allocation8 + $0x118] sm:$0xff]
          %v2699 = vld [vmem:[#allocation8 + $0x120] sm:$0xff]
          %v2700 = vld [vmem:[#allocation8 + $0x128] sm:$0xff]
          %v2701 = vld [vmem:[#allocation8 + $0x130] sm:$0xff]
          %v2702 = vld [vmem:[#allocation8 + $0x138] sm:$0xff]
          %v2703 = vld [vmem:[#allocation8 + $0x140] sm:$0xff]
          %v2704 = vld [vmem:[#allocation8 + $0x148] sm:$0xff]
          %v2705 = vld [vmem:[#allocation8 + $0x150] sm:$0xff]
          %v2706 = vld [vmem:[#allocation8 + $0x158] sm:$0xff]
          %v2707 = vld [vmem:[#allocation8 + $0x160] sm:$0xff]
          %v2708 = vld [vmem:[#allocation8 + $0x168] sm:$0xff]
          %v2709 = vld [vmem:[#allocation8 + $0x170] sm:$0xff]
          %v2710 = vld [vmem:[#allocation8 + $0x178] sm:$0xff]
          %v2711 = vld [vmem:[#allocation8 + $0x180] sm:$0xff]
          %v2712 = vld [vmem:[#allocation8 + $0x188] sm:$0xff]
          %v2713 = vld [vmem:[#allocation8 + $0x190] sm:$0xff]
          %v2714 = vld [vmem:[#allocation8 + $0x198] sm:$0xff]
          %v2715 = vld [vmem:[#allocation8 + $0x1a0] sm:$0xff]
          %v2716 = vld [vmem:[#allocation8 + $0x1a8] sm:$0xff]
          %v2717 = vld [vmem:[#allocation8 + $0x1b0] sm:$0xff]
          %v2718 = vld [vmem:[#allocation8 + $0x1b8] sm:$0xff]
          %v2719 = vld [vmem:[#allocation8 + $0x1c0] sm:$0xff]
          %v2720 = vld [vmem:[#allocation8 + $0x1c8] sm:$0xff]
          %v2721 = vld [vmem:[#allocation8 + $0x1d0] sm:$0xff]
          %v2722 = vld [vmem:[#allocation8 + $0x1d8] sm:$0xff]
          %v2723 = vld [vmem:[#allocation8 + $0x1e0] sm:$0xff]
          %v2724 = vld [vmem:[#allocation8 + $0x1e8] sm:$0xff]
          %v2725 = vld [vmem:[#allocation8 + $0x1f0] sm:$0xff]
          %v2726 = vld [vmem:[#allocation8 + $0x1f8] sm:$0xff]
          %2727 = vmatprep.subr.mxu0 %v2664
          %2728 = vmatpush1.msra.mxu0 %v2663
          %2729 = vmatprep.subr.mxu0 %v2668
          %2730 = vmatpush1.msra.mxu0 %v2667
          %2731 = vmatprep.subr.mxu0 %v2672
          %2732 = vmatpush1.msra.mxu0 %v2671
          %2733 = vmatprep.subr.mxu0 %v2676
          %2734 = vmatpush1.msra.mxu0 %v2675
          %2735 = vmatprep.subr.mxu0 %v2680
          %2736 = vmatpush1.msra.mxu0 %v2679
          %2737 = vmatprep.subr.mxu0 %v2684
          %2738 = vmatpush1.msra.mxu0 %v2683
          %2739 = vmatprep.subr.mxu0 %v2688
          %2740 = vmatpush1.msra.mxu0 %v2687
          %2741 = vmatprep.subr.mxu0 %v2692
          %2742 = vmatpush1.msra.mxu0 %v2691
          %2743 = vmatprep.subr.mxu0 %v2696
          %2744 = vmatpush1.msra.mxu0 %v2695
          %2745 = vmatprep.subr.mxu0 %v2700
          %2746 = vmatpush1.msra.mxu0 %v2699
          %2747 = vmatprep.subr.mxu0 %v2704
          %2748 = vmatpush1.msra.mxu0 %v2703
          %2749 = vmatprep.subr.mxu0 %v2708
          %2750 = vmatpush1.msra.mxu0 %v2707
          %2751 = vmatprep.subr.mxu0 %v2712
          %2752 = vmatpush1.msra.mxu0 %v2711
          %2753 = vmatprep.subr.mxu0 %v2716
          %2754 = vmatpush1.msra.mxu0 %v2715
          %2755 = vmatprep.subr.mxu0 %v2720
          %2756 = vmatpush1.msra.mxu0 %v2719
          %2757 = vmatprep.subr.mxu0 %v2724
          %2758 = vmatpush1.msra.mxu0 %v2723
          %2759 = vmatprep.subr.mxu0 0.0
          %2760 = vmatpush1.msra.mxu0 0.0
          %2761 = vmatprep.subr.mxu0 0.0
          %2762 = vmatpush1.msra.mxu0 0.0
          %2763 = vmatprep.subr.mxu0 0.0
          %2764 = vmatpush1.msra.mxu0 0.0
          %2765 = vmatprep.subr.mxu0 0.0
          %2766 = vmatpush1.msra.mxu0 0.0
          %2767 = vmatprep.subr.mxu0 0.0
          %2768 = vmatpush1.msra.mxu0 0.0
          %2769 = vmatprep.subr.mxu0 0.0
          %2770 = vmatpush1.msra.mxu0 0.0
          %2771 = vmatprep.subr.mxu0 0.0
          %2772 = vmatpush1.msra.mxu0 0.0
          %2773 = vmatprep.subr.mxu0 0.0
          %2774 = vmatpush1.msra.mxu0 0.0
          %2775 = vmatprep.subr.mxu0 0.0
          %2776 = vmatpush1.msra.mxu0 0.0
          %2777 = vmatprep.subr.mxu0 0.0
          %2778 = vmatpush1.msra.mxu0 0.0
          %2779 = vmatprep.subr.mxu0 0.0
          %2780 = vmatpush1.msra.mxu0 0.0
          %2781 = vmatprep.subr.mxu0 0.0
          %2782 = vmatpush1.msra.mxu0 0.0
          %2783 = vmatprep.subr.mxu0 0.0
          %2784 = vmatpush1.msra.mxu0 0.0
          %2785 = vmatprep.subr.mxu0 0.0
          %2786 = vmatpush1.msra.mxu0 0.0
          %2787 = vmatprep.subr.mxu0 0.0
          %2788 = vmatpush1.msra.mxu0 0.0
          %2789 = vmatprep.subr.mxu0 0.0
          %2790 = vmatpush1.msra.mxu0 0.0
          %2791 = vmatprep.mubr.f32.mxu0 0.0
          %2792 = vmatmul.mubr.f32.gmra.mrb[0].mxu0 %v2661
          %v2793 = vpop.f32.mrb[0].mxu0
          %v2794 = vadd.f32 0.0, %v2793
          %v2795 = vpop.f32.mrb[0].mxu0
          %v2796 = vadd.f32 0.0, %v2795
          %2797 = vdwg.mxu0
          %2798 = vmatprep.subr.mxu0 %v2666
          %2799 = vmatpush1.msra.mxu0 %v2665
          %2800 = vmatprep.subr.mxu0 %v2670
          %2801 = vmatpush1.msra.mxu0 %v2669
          %2802 = vmatprep.subr.mxu0 %v2674
          %2803 = vmatpush1.msra.mxu0 %v2673
          %2804 = vmatprep.subr.mxu0 %v2678
          %2805 = vmatpush1.msra.mxu0 %v2677
          %2806 = vmatprep.subr.mxu0 %v2682
          %2807 = vmatpush1.msra.mxu0 %v2681
          %2808 = vmatprep.subr.mxu0 %v2686
          %2809 = vmatpush1.msra.mxu0 %v2685
          %2810 = vmatprep.subr.mxu0 %v2690
          %2811 = vmatpush1.msra.mxu0 %v2689
          %2812 = vmatprep.subr.mxu0 %v2694
          %2813 = vmatpush1.msra.mxu0 %v2693
          %2814 = vmatprep.subr.mxu0 %v2698
          %2815 = vmatpush1.msra.mxu0 %v2697
          %2816 = vmatprep.subr.mxu0 %v2702
          %2817 = vmatpush1.msra.mxu0 %v2701
          %2818 = vmatprep.subr.mxu0 %v2706
          %2819 = vmatpush1.msra.mxu0 %v2705
          %2820 = vmatprep.subr.mxu0 %v2710
          %2821 = vmatpush1.msra.mxu0 %v2709
          %2822 = vmatprep.subr.mxu0 %v2714
          %2823 = vmatpush1.msra.mxu0 %v2713
          %2824 = vmatprep.subr.mxu0 %v2718
          %2825 = vmatpush1.msra.mxu0 %v2717
          %2826 = vmatprep.subr.mxu0 %v2722
          %2827 = vmatpush1.msra.mxu0 %v2721
          %2828 = vmatprep.subr.mxu0 %v2726
          %2829 = vmatpush1.msra.mxu0 %v2725
          %2830 = vmatprep.subr.mxu0 0.0
          %2831 = vmatpush1.msra.mxu0 0.0
          %2832 = vmatprep.subr.mxu0 0.0
          %2833 = vmatpush1.msra.mxu0 0.0
          %2834 = vmatprep.subr.mxu0 0.0
          %2835 = vmatpush1.msra.mxu0 0.0
          %2836 = vmatprep.subr.mxu0 0.0
          %2837 = vmatpush1.msra.mxu0 0.0
          %2838 = vmatprep.subr.mxu0 0.0
          %2839 = vmatpush1.msra.mxu0 0.0
          %2840 = vmatprep.subr.mxu0 0.0
          %2841 = vmatpush1.msra.mxu0 0.0
          %2842 = vmatprep.subr.mxu0 0.0
          %2843 = vmatpush1.msra.mxu0 0.0
          %2844 = vmatprep.subr.mxu0 0.0
          %2845 = vmatpush1.msra.mxu0 0.0
          %2846 = vmatprep.subr.mxu0 0.0
          %2847 = vmatpush1.msra.mxu0 0.0
          %2848 = vmatprep.subr.mxu0 0.0
          %2849 = vmatpush1.msra.mxu0 0.0
          %2850 = vmatprep.subr.mxu0 0.0
          %2851 = vmatpush1.msra.mxu0 0.0
          %2852 = vmatprep.subr.mxu0 0.0
          %2853 = vmatpush1.msra.mxu0 0.0
          %2854 = vmatprep.subr.mxu0 0.0
          %2855 = vmatpush1.msra.mxu0 0.0
          %2856 = vmatprep.subr.mxu0 0.0
          %2857 = vmatpush1.msra.mxu0 0.0
          %2858 = vmatprep.subr.mxu0 0.0
          %2859 = vmatpush1.msra.mxu0 0.0
          %2860 = vmatprep.subr.mxu0 0.0
          %2861 = vmatpush1.msra.mxu0 0.0
          %2862 = vmatprep.mubr.f32.mxu0 0.0
          %2863 = vmatmul.mubr.f32.gmra.mrb[0].mxu0 %v2661
          %v2864 = vpop.f32.mrb[0].mxu0
          %v2865 = vadd.f32 0.0, %v2864
          %v2866 = vpop.f32.mrb[0].mxu0
          %v2867 = vadd.f32 0.0, %v2866
          %2868 = vdwg.mxu0
          %v2869 = vadd.f32 %v2657, %v2794
          %v2870 = vadd.f32 %v2658, %v2796
          %v2871 = vadd.f32 %v2659, %v2865
          %v2872 = vadd.f32 %v2660, %v2867
          %v2873 = vxor.u32 %v2869, 2147483648
          %v2874 = vmul.f32 %v2873, 1.442695
          %v2875 = vpow.pop %v2874
          %v2876 = vadd.f32 %v2875, 1.0
          %v2877 = vrcp.pop %v2876
          %v2878 = vmul.f32 1.0, %v2877
          %v2879 = vxor.u32 %v2870, 2147483648
          %v2880 = vmul.f32 %v2879, 1.442695
          %v2881 = vpow.pop %v2880
          %v2882 = vadd.f32 %v2881, 1.0
          %v2883 = vrcp.pop %v2882
          %v2884 = vmul.f32 1.0, %v2883
          %v2885 = vtanh.pop %v2871
          %v2886 = vxor.u32 %v2872, 2147483648
          %v2887 = vmul.f32 %v2886, 1.442695
          %v2888 = vpow.pop %v2887
          %v2889 = vadd.f32 %v2888, 1.0
          %v2890 = vrcp.pop %v2889
          %v2891 = vmul.f32 1.0, %v2890
          %v2892 = vmul.f32 %v2884, %v2662
          %v2893 = vmul.f32 %v2878, %v2885
          %v2894 = vadd.f32 %v2892, %v2893
          %2895 = vst [vmem:[#allocation4] sm:$0xff] %v2894
          %v2896 = vtanh.pop %v2894
          %v2897 = vmul.f32 %v2891, %v2896
          %2898 = vst [vmem:[#allocation3] sm:$0xff] %v2897
          %s2899 = sshll.u32 %s1092, 4
          %2900 = dma.done %s993, %s2899
          %s2901 = sshll.u32 %s1092, 4
          %2902 = dma.done %s993, %s2901
          %s2903 = sshll.u32 %s1092, 4
          %2904 = dma.done %s993, %s2903
          %s2905 = sshll.u32 %s1092, 4
          %2906 = dma.done %s993, %s2905
          %s2907 = sshll.u32 %s1092, 4
          %2908 = dma.done %s993, %s2907
          %s2909 = sshll.u32 %s1092, 4
          %2910 = dma.done %s993, %s2909
          %s2911 = sshll.u32 %s1092, 4
          %2912 = dma.done %s993, %s2911
          %s2913 = sshll.u32 %s1092, 4
          %2914 = dma.done %s993, %s2913
          %v2915 = vld [vmem:[#allocation2 + $0xe0] sm:$0xff]
          %v2916 = vld [vmem:[#allocation2 + $0xe8] sm:$0xff]
          %v2917 = vld [vmem:[#allocation2 + $0xf0] sm:$0xff]
          %v2918 = vld [vmem:[#allocation2 + $0xf8] sm:$0xff]
          %v2919 = vld [vmem:[#allocation3] sm:$0xff]
          %v2920 = vld [vmem:[#allocation4] sm:$0xff]
          %v2921 = vld [vmem:[#allocation8] sm:$0xff]
          %v2922 = vld [vmem:[#allocation8 + $0x8] sm:$0xff]
          %v2923 = vld [vmem:[#allocation8 + $0x10] sm:$0xff]
          %v2924 = vld [vmem:[#allocation8 + $0x18] sm:$0xff]
          %v2925 = vld [vmem:[#allocation8 + $0x20] sm:$0xff]
          %v2926 = vld [vmem:[#allocation8 + $0x28] sm:$0xff]
          %v2927 = vld [vmem:[#allocation8 + $0x30] sm:$0xff]
          %v2928 = vld [vmem:[#allocation8 + $0x38] sm:$0xff]
          %v2929 = vld [vmem:[#allocation8 + $0x40] sm:$0xff]
          %v2930 = vld [vmem:[#allocation8 + $0x48] sm:$0xff]
          %v2931 = vld [vmem:[#allocation8 + $0x50] sm:$0xff]
          %v2932 = vld [vmem:[#allocation8 + $0x58] sm:$0xff]
          %v2933 = vld [vmem:[#allocation8 + $0x60] sm:$0xff]
          %v2934 = vld [vmem:[#allocation8 + $0x68] sm:$0xff]
          %v2935 = vld [vmem:[#allocation8 + $0x70] sm:$0xff]
          %v2936 = vld [vmem:[#allocation8 + $0x78] sm:$0xff]
          %v2937 = vld [vmem:[#allocation8 + $0x80] sm:$0xff]
          %v2938 = vld [vmem:[#allocation8 + $0x88] sm:$0xff]
          %v2939 = vld [vmem:[#allocation8 + $0x90] sm:$0xff]
          %v2940 = vld [vmem:[#allocation8 + $0x98] sm:$0xff]
          %v2941 = vld [vmem:[#allocation8 + $0xa0] sm:$0xff]
          %v2942 = vld [vmem:[#allocation8 + $0xa8] sm:$0xff]
          %v2943 = vld [vmem:[#allocation8 + $0xb0] sm:$0xff]
          %v2944 = vld [vmem:[#allocation8 + $0xb8] sm:$0xff]
          %v2945 = vld [vmem:[#allocation8 + $0xc0] sm:$0xff]
          %v2946 = vld [vmem:[#allocation8 + $0xc8] sm:$0xff]
          %v2947 = vld [vmem:[#allocation8 + $0xd0] sm:$0xff]
          %v2948 = vld [vmem:[#allocation8 + $0xd8] sm:$0xff]
          %v2949 = vld [vmem:[#allocation8 + $0xe0] sm:$0xff]
          %v2950 = vld [vmem:[#allocation8 + $0xe8] sm:$0xff]
          %v2951 = vld [vmem:[#allocation8 + $0xf0] sm:$0xff]
          %v2952 = vld [vmem:[#allocation8 + $0xf8] sm:$0xff]
          %v2953 = vld [vmem:[#allocation8 + $0x100] sm:$0xff]
          %v2954 = vld [vmem:[#allocation8 + $0x108] sm:$0xff]
          %v2955 = vld [vmem:[#allocation8 + $0x110] sm:$0xff]
          %v2956 = vld [vmem:[#allocation8 + $0x118] sm:$0xff]
          %v2957 = vld [vmem:[#allocation8 + $0x120] sm:$0xff]
          %v2958 = vld [vmem:[#allocation8 + $0x128] sm:$0xff]
          %v2959 = vld [vmem:[#allocation8 + $0x130] sm:$0xff]
          %v2960 = vld [vmem:[#allocation8 + $0x138] sm:$0xff]
          %v2961 = vld [vmem:[#allocation8 + $0x140] sm:$0xff]
          %v2962 = vld [vmem:[#allocation8 + $0x148] sm:$0xff]
          %v2963 = vld [vmem:[#allocation8 + $0x150] sm:$0xff]
          %v2964 = vld [vmem:[#allocation8 + $0x158] sm:$0xff]
          %v2965 = vld [vmem:[#allocation8 + $0x160] sm:$0xff]
          %v2966 = vld [vmem:[#allocation8 + $0x168] sm:$0xff]
          %v2967 = vld [vmem:[#allocation8 + $0x170] sm:$0xff]
          %v2968 = vld [vmem:[#allocation8 + $0x178] sm:$0xff]
          %v2969 = vld [vmem:[#allocation8 + $0x180] sm:$0xff]
          %v2970 = vld [vmem:[#allocation8 + $0x188] sm:$0xff]
          %v2971 = vld [vmem:[#allocation8 + $0x190] sm:$0xff]
          %v2972 = vld [vmem:[#allocation8 + $0x198] sm:$0xff]
          %v2973 = vld [vmem:[#allocation8 + $0x1a0] sm:$0xff]
          %v2974 = vld [vmem:[#allocation8 + $0x1a8] sm:$0xff]
          %v2975 = vld [vmem:[#allocation8 + $0x1b0] sm:$0xff]
          %v2976 = vld [vmem:[#allocation8 + $0x1b8] sm:$0xff]
          %v2977 = vld [vmem:[#allocation8 + $0x1c0] sm:$0xff]
          %v2978 = vld [vmem:[#allocation8 + $0x1c8] sm:$0xff]
          %v2979 = vld [vmem:[#allocation8 + $0x1d0] sm:$0xff]
          %v2980 = vld [vmem:[#allocation8 + $0x1d8] sm:$0xff]
          %v2981 = vld [vmem:[#allocation8 + $0x1e0] sm:$0xff]
          %v2982 = vld [vmem:[#allocation8 + $0x1e8] sm:$0xff]
          %v2983 = vld [vmem:[#allocation8 + $0x1f0] sm:$0xff]
          %v2984 = vld [vmem:[#allocation8 + $0x1f8] sm:$0xff]
          %2985 = vmatprep.subr.mxu0 %v2922
          %2986 = vmatpush1.msra.mxu0 %v2921
          %2987 = vmatprep.subr.mxu0 %v2926
          %2988 = vmatpush1.msra.mxu0 %v2925
          %2989 = vmatprep.subr.mxu0 %v2930
          %2990 = vmatpush1.msra.mxu0 %v2929
          %2991 = vmatprep.subr.mxu0 %v2934
          %2992 = vmatpush1.msra.mxu0 %v2933
          %2993 = vmatprep.subr.mxu0 %v2938
          %2994 = vmatpush1.msra.mxu0 %v2937
          %2995 = vmatprep.subr.mxu0 %v2942
          %2996 = vmatpush1.msra.mxu0 %v2941
          %2997 = vmatprep.subr.mxu0 %v2946
          %2998 = vmatpush1.msra.mxu0 %v2945
          %2999 = vmatprep.subr.mxu0 %v2950
          %3000 = vmatpush1.msra.mxu0 %v2949
          %3001 = vmatprep.subr.mxu0 %v2954
          %3002 = vmatpush1.msra.mxu0 %v2953
          %3003 = vmatprep.subr.mxu0 %v2958
          %3004 = vmatpush1.msra.mxu0 %v2957
          %3005 = vmatprep.subr.mxu0 %v2962
          %3006 = vmatpush1.msra.mxu0 %v2961
          %3007 = vmatprep.subr.mxu0 %v2966
          %3008 = vmatpush1.msra.mxu0 %v2965
          %3009 = vmatprep.subr.mxu0 %v2970
          %3010 = vmatpush1.msra.mxu0 %v2969
          %3011 = vmatprep.subr.mxu0 %v2974
          %3012 = vmatpush1.msra.mxu0 %v2973
          %3013 = vmatprep.subr.mxu0 %v2978
          %3014 = vmatpush1.msra.mxu0 %v2977
          %3015 = vmatprep.subr.mxu0 %v2982
          %3016 = vmatpush1.msra.mxu0 %v2981
          %3017 = vmatprep.subr.mxu0 0.0
          %3018 = vmatpush1.msra.mxu0 0.0
          %3019 = vmatprep.subr.mxu0 0.0
          %3020 = vmatpush1.msra.mxu0 0.0
          %3021 = vmatprep.subr.mxu0 0.0
          %3022 = vmatpush1.msra.mxu0 0.0
          %3023 = vmatprep.subr.mxu0 0.0
          %3024 = vmatpush1.msra.mxu0 0.0
          %3025 = vmatprep.subr.mxu0 0.0
          %3026 = vmatpush1.msra.mxu0 0.0
          %3027 = vmatprep.subr.mxu0 0.0
          %3028 = vmatpush1.msra.mxu0 0.0
          %3029 = vmatprep.subr.mxu0 0.0
          %3030 = vmatpush1.msra.mxu0 0.0
          %3031 = vmatprep.subr.mxu0 0.0
          %3032 = vmatpush1.msra.mxu0 0.0
          %3033 = vmatprep.subr.mxu0 0.0
          %3034 = vmatpush1.msra.mxu0 0.0
          %3035 = vmatprep.subr.mxu0 0.0
          %3036 = vmatpush1.msra.mxu0 0.0
          %3037 = vmatprep.subr.mxu0 0.0
          %3038 = vmatpush1.msra.mxu0 0.0
          %3039 = vmatprep.subr.mxu0 0.0
          %3040 = vmatpush1.msra.mxu0 0.0
          %3041 = vmatprep.subr.mxu0 0.0
          %3042 = vmatpush1.msra.mxu0 0.0
          %3043 = vmatprep.subr.mxu0 0.0
          %3044 = vmatpush1.msra.mxu0 0.0
          %3045 = vmatprep.subr.mxu0 0.0
          %3046 = vmatpush1.msra.mxu0 0.0
          %3047 = vmatprep.subr.mxu0 0.0
          %3048 = vmatpush1.msra.mxu0 0.0
          %3049 = vmatprep.mubr.f32.mxu0 0.0
          %3050 = vmatmul.mubr.f32.gmra.mrb[0].mxu0 %v2919
          %v3051 = vpop.f32.mrb[0].mxu0
          %v3052 = vadd.f32 0.0, %v3051
          %v3053 = vpop.f32.mrb[0].mxu0
          %v3054 = vadd.f32 0.0, %v3053
          %3055 = vdwg.mxu0
          %3056 = vmatprep.subr.mxu0 %v2924
          %3057 = vmatpush1.msra.mxu0 %v2923
          %3058 = vmatprep.subr.mxu0 %v2928
          %3059 = vmatpush1.msra.mxu0 %v2927
          %3060 = vmatprep.subr.mxu0 %v2932
          %3061 = vmatpush1.msra.mxu0 %v2931
          %3062 = vmatprep.subr.mxu0 %v2936
          %3063 = vmatpush1.msra.mxu0 %v2935
          %3064 = vmatprep.subr.mxu0 %v2940
          %3065 = vmatpush1.msra.mxu0 %v2939
          %3066 = vmatprep.subr.mxu0 %v2944
          %3067 = vmatpush1.msra.mxu0 %v2943
          %3068 = vmatprep.subr.mxu0 %v2948
          %3069 = vmatpush1.msra.mxu0 %v2947
          %3070 = vmatprep.subr.mxu0 %v2952
          %3071 = vmatpush1.msra.mxu0 %v2951
          %3072 = vmatprep.subr.mxu0 %v2956
          %3073 = vmatpush1.msra.mxu0 %v2955
          %3074 = vmatprep.subr.mxu0 %v2960
          %3075 = vmatpush1.msra.mxu0 %v2959
          %3076 = vmatprep.subr.mxu0 %v2964
          %3077 = vmatpush1.msra.mxu0 %v2963
          %3078 = vmatprep.subr.mxu0 %v2968
          %3079 = vmatpush1.msra.mxu0 %v2967
          %3080 = vmatprep.subr.mxu0 %v2972
          %3081 = vmatpush1.msra.mxu0 %v2971
          %3082 = vmatprep.subr.mxu0 %v2976
          %3083 = vmatpush1.msra.mxu0 %v2975
          %3084 = vmatprep.subr.mxu0 %v2980
          %3085 = vmatpush1.msra.mxu0 %v2979
          %3086 = vmatprep.subr.mxu0 %v2984
          %3087 = vmatpush1.msra.mxu0 %v2983
          %3088 = vmatprep.subr.mxu0 0.0
          %3089 = vmatpush1.msra.mxu0 0.0
          %3090 = vmatprep.subr.mxu0 0.0
          %3091 = vmatpush1.msra.mxu0 0.0
          %3092 = vmatprep.subr.mxu0 0.0
          %3093 = vmatpush1.msra.mxu0 0.0
          %3094 = vmatprep.subr.mxu0 0.0
          %3095 = vmatpush1.msra.mxu0 0.0
          %3096 = vmatprep.subr.mxu0 0.0
          %3097 = vmatpush1.msra.mxu0 0.0
          %3098 = vmatprep.subr.mxu0 0.0
          %3099 = vmatpush1.msra.mxu0 0.0
          %3100 = vmatprep.subr.mxu0 0.0
          %3101 = vmatpush1.msra.mxu0 0.0
          %3102 = vmatprep.subr.mxu0 0.0
          %3103 = vmatpush1.msra.mxu0 0.0
          %3104 = vmatprep.subr.mxu0 0.0
          %3105 = vmatpush1.msra.mxu0 0.0
          %3106 = vmatprep.subr.mxu0 0.0
          %3107 = vmatpush1.msra.mxu0 0.0
          %3108 = vmatprep.subr.mxu0 0.0
          %3109 = vmatpush1.msra.mxu0 0.0
          %3110 = vmatprep.subr.mxu0 0.0
          %3111 = vmatpush1.msra.mxu0 0.0
          %3112 = vmatprep.subr.mxu0 0.0
          %3113 = vmatpush1.msra.mxu0 0.0
          %3114 = vmatprep.subr.mxu0 0.0
          %3115 = vmatpush1.msra.mxu0 0.0
          %3116 = vmatprep.subr.mxu0 0.0
          %3117 = vmatpush1.msra.mxu0 0.0
          %3118 = vmatprep.subr.mxu0 0.0
          %3119 = vmatpush1.msra.mxu0 0.0
          %3120 = vmatprep.mubr.f32.mxu0 0.0
          %3121 = vmatmul.mubr.f32.gmra.mrb[0].mxu0 %v2919
          %v3122 = vpop.f32.mrb[0].mxu0
          %v3123 = vadd.f32 0.0, %v3122
          %v3124 = vpop.f32.mrb[0].mxu0
          %v3125 = vadd.f32 0.0, %v3124
          %3126 = vdwg.mxu0
          %v3127 = vadd.f32 %v2915, %v3052
          %v3128 = vadd.f32 %v2916, %v3054
          %v3129 = vadd.f32 %v2917, %v3123
          %v3130 = vadd.f32 %v2918, %v3125
          %v3131 = vxor.u32 %v3127, 2147483648
          %v3132 = vmul.f32 %v3131, 1.442695
          %v3133 = vpow.pop %v3132
          %v3134 = vadd.f32 %v3133, 1.0
          %v3135 = vrcp.pop %v3134
          %v3136 = vmul.f32 1.0, %v3135
          %v3137 = vxor.u32 %v3128, 2147483648
          %v3138 = vmul.f32 %v3137, 1.442695
          %v3139 = vpow.pop %v3138
          %v3140 = vadd.f32 %v3139, 1.0
          %v3141 = vrcp.pop %v3140
          %v3142 = vmul.f32 1.0, %v3141
          %v3143 = vtanh.pop %v3129
          %v3144 = vxor.u32 %v3130, 2147483648
          %v3145 = vmul.f32 %v3144, 1.442695
          %v3146 = vpow.pop %v3145
          %v3147 = vadd.f32 %v3146, 1.0
          %v3148 = vrcp.pop %v3147
          %v3149 = vmul.f32 1.0, %v3148
          %v3150 = vmul.f32 %v3142, %v2920
          %v3151 = vmul.f32 %v3136, %v3143
          %v3152 = vadd.f32 %v3150, %v3151
          %3153 = vst [vmem:[#allocation4] sm:$0xff] %v3152
          %v3154 = vtanh.pop %v3152
          %v3155 = vmul.f32 %v3149, %v3154
          %3156 = vst [vmem:[#allocation3] sm:$0xff] %v3155
        $region48: #{tpu_custom_call.1} parent=31 // pred_fallthru
          _
        %v3157 = vld [vmem:[#allocation3] sm:$0xff]
        %v3158 = vld [vmem:[%s208] sm:$0xff]
        %v3159 = vld [vmem:[%s208 + $0x8] sm:$0xff]
        %v3160 = vld [vmem:[%s208 + $0x10] sm:$0xff]
        %v3161 = vld [vmem:[%s208 + $0x18] sm:$0xff]
        %v3162 = vld [vmem:[%s208 + $0x20] sm:$0xff]
        %v3163 = vld [vmem:[%s208 + $0x28] sm:$0xff]
        %v3164 = vld [vmem:[%s208 + $0x30] sm:$0xff]
        %v3165 = vld [vmem:[%s208 + $0x38] sm:$0xff]
        %v3166 = vld [vmem:[%s208 + $0x40] sm:$0xff]
        %v3167 = vld [vmem:[%s208 + $0x48] sm:$0xff]
        %v3168 = vld [vmem:[%s208 + $0x50] sm:$0xff]
        %v3169 = vld [vmem:[%s208 + $0x58] sm:$0xff]
        %v3170 = vld [vmem:[%s208 + $0x60] sm:$0xff]
        %v3171 = vld [vmem:[%s208 + $0x68] sm:$0xff]
        %v3172 = vld [vmem:[%s208 + $0x70] sm:$0xff]
        %v3173 = vld [vmem:[%s208 + $0x78] sm:$0xff]
        %v3174 = vld [vmem:[%s208 + $0x80] sm:$0xff]
        %v3175 = vld [vmem:[%s208 + $0x88] sm:$0xff]
        %v3176 = vld [vmem:[%s208 + $0x90] sm:$0xff]
        %v3177 = vld [vmem:[%s208 + $0x98] sm:$0xff]
        %v3178 = vld [vmem:[%s208 + $0xa0] sm:$0xff]
        %v3179 = vld [vmem:[%s208 + $0xa8] sm:$0xff]
        %v3180 = vld [vmem:[%s208 + $0xb0] sm:$0xff]
        %v3181 = vld [vmem:[%s208 + $0xb8] sm:$0xff]
        %v3182 = vld [vmem:[%s208 + $0xc0] sm:$0xff]
        %v3183 = vld [vmem:[%s208 + $0xc8] sm:$0xff]
        %v3184 = vld [vmem:[%s208 + $0xd0] sm:$0xff]
        %v3185 = vld [vmem:[%s208 + $0xd8] sm:$0xff]
        %v3186 = vld [vmem:[%s208 + $0xe0] sm:$0xff]
        %v3187 = vld [vmem:[%s208 + $0xe8] sm:$0xff]
        %v3188 = vld [vmem:[%s208 + $0xf0] sm:$0xff]
        %v3189 = vld [vmem:[%s208 + $0xf8] sm:$0xff]
        %v3190 = vld [vmem:[%s208 + $0x100] sm:$0xff]
        %v3191 = vld [vmem:[%s208 + $0x108] sm:$0xff]
        %v3192 = vld [vmem:[%s208 + $0x110] sm:$0xff]
        %v3193 = vld [vmem:[%s208 + $0x118] sm:$0xff]
        %v3194 = vld [vmem:[%s208 + $0x120] sm:$0xff]
        %v3195 = vld [vmem:[%s208 + $0x128] sm:$0xff]
        %v3196 = vld [vmem:[%s208 + $0x130] sm:$0xff]
        %v3197 = vld [vmem:[%s208 + $0x138] sm:$0xff]
        %v3198 = vld [vmem:[%s208 + $0x140] sm:$0xff]
        %v3199 = vld [vmem:[%s208 + $0x148] sm:$0xff]
        %v3200 = vld [vmem:[%s208 + $0x150] sm:$0xff]
        %v3201 = vld [vmem:[%s208 + $0x158] sm:$0xff]
        %v3202 = vld [vmem:[%s208 + $0x160] sm:$0xff]
        %v3203 = vld [vmem:[%s208 + $0x168] sm:$0xff]
        %v3204 = vld [vmem:[%s208 + $0x170] sm:$0xff]
        %v3205 = vld [vmem:[%s208 + $0x178] sm:$0xff]
        %v3206 = vld [vmem:[%s208 + $0x180] sm:$0xff]
        %v3207 = vld [vmem:[%s208 + $0x188] sm:$0xff]
        %v3208 = vld [vmem:[%s208 + $0x190] sm:$0xff]
        %v3209 = vld [vmem:[%s208 + $0x198] sm:$0xff]
        %v3210 = vld [vmem:[%s208 + $0x1a0] sm:$0xff]
        %v3211 = vld [vmem:[%s208 + $0x1a8] sm:$0xff]
        %v3212 = vld [vmem:[%s208 + $0x1b0] sm:$0xff]
        %v3213 = vld [vmem:[%s208 + $0x1b8] sm:$0xff]
        %v3214 = vld [vmem:[%s208 + $0x1c0] sm:$0xff]
        %v3215 = vld [vmem:[%s208 + $0x1c8] sm:$0xff]
        %v3216 = vld [vmem:[%s208 + $0x1d0] sm:$0xff]
        %v3217 = vld [vmem:[%s208 + $0x1d8] sm:$0xff]
        %v3218 = vld [vmem:[%s208 + $0x1e0] sm:$0xff]
        %v3219 = vld [vmem:[%s208 + $0x1e8] sm:$0xff]
        %v3220 = vld [vmem:[%s208 + $0x1f0] sm:$0xff]
        %v3221 = vld [vmem:[%s208 + $0x1f8] sm:$0xff]
        %v3222 = vld [vmem:[%s217] sm:$0xf]
        %v3224 = vlaneseq
        %v3225 = vshrl.u32 %v3224, 7
        %v3226 = vsub.s32 0, %v3225
        %v3227 = vrot.slane %v3222, %v3226
        %v3228 = vlaneseq
        %v3229 = vshrl.u32 %v3228, 7
        %v3230 = vsub.s32 1, %v3229
        %v3231 = vrot.slane %v3222, %v3230
        %v3232 = vlaneseq
        %v3233 = vshrl.u32 %v3232, 7
        %v3234 = vsub.s32 2, %v3233
        %v3235 = vrot.slane %v3222, %v3234
        %v3236 = vlaneseq
        %v3237 = vshrl.u32 %v3236, 7
        %v3238 = vsub.s32 3, %v3237
        %v3239 = vrot.slane %v3222, %v3238
        %3244 = vmatprep.subr.mxu0 %v3159
        %3245 = vmatpush1.msra.mxu0 %v3158
        %3246 = vmatprep.subr.mxu0 %v3163
        %3247 = vmatpush1.msra.mxu0 %v3162
        %3248 = vmatprep.subr.mxu0 %v3167
        %3249 = vmatpush1.msra.mxu0 %v3166
        %3250 = vmatprep.subr.mxu0 %v3171
        %3251 = vmatpush1.msra.mxu0 %v3170
        %3252 = vmatprep.subr.mxu0 %v3175
        %3253 = vmatpush1.msra.mxu0 %v3174
        %3254 = vmatprep.subr.mxu0 %v3179
        %3255 = vmatpush1.msra.mxu0 %v3178
        %3256 = vmatprep.subr.mxu0 %v3183
        %3257 = vmatpush1.msra.mxu0 %v3182
        %3258 = vmatprep.subr.mxu0 %v3187
        %3259 = vmatpush1.msra.mxu0 %v3186
        %3260 = vmatprep.subr.mxu0 %v3191
        %3261 = vmatpush1.msra.mxu0 %v3190
        %3262 = vmatprep.subr.mxu0 %v3195
        %3263 = vmatpush1.msra.mxu0 %v3194
        %3264 = vmatprep.subr.mxu0 %v3199
        %3265 = vmatpush1.msra.mxu0 %v3198
        %3266 = vmatprep.subr.mxu0 %v3203
        %3267 = vmatpush1.msra.mxu0 %v3202
        %3268 = vmatprep.subr.mxu0 %v3207
        %3269 = vmatpush1.msra.mxu0 %v3206
        %3270 = vmatprep.subr.mxu0 %v3211
        %3271 = vmatpush1.msra.mxu0 %v3210
        %3272 = vmatprep.subr.mxu0 %v3215
        %3273 = vmatpush1.msra.mxu0 %v3214
        %3274 = vmatprep.subr.mxu0 %v3219
        %3275 = vmatpush1.msra.mxu0 %v3218
        %3276 = vmatprep.subr.mxu0 0.0
        %3277 = vmatpush1.msra.mxu0 0.0
        %3278 = vmatprep.subr.mxu0 0.0
        %3279 = vmatpush1.msra.mxu0 0.0
        %3280 = vmatprep.subr.mxu0 0.0
        %3281 = vmatpush1.msra.mxu0 0.0
        %3282 = vmatprep.subr.mxu0 0.0
        %3283 = vmatpush1.msra.mxu0 0.0
        %3284 = vmatprep.subr.mxu0 0.0
        %3285 = vmatpush1.msra.mxu0 0.0
        %3286 = vmatprep.subr.mxu0 0.0
        %3287 = vmatpush1.msra.mxu0 0.0
        %3288 = vmatprep.subr.mxu0 0.0
        %3289 = vmatpush1.msra.mxu0 0.0
        %3290 = vmatprep.subr.mxu0 0.0
        %3291 = vmatpush1.msra.mxu0 0.0
        %3292 = vmatprep.subr.mxu0 0.0
        %3293 = vmatpush1.msra.mxu0 0.0
        %3294 = vmatprep.subr.mxu0 0.0
        %3295 = vmatpush1.msra.mxu0 0.0
        %3296 = vmatprep.subr.mxu0 0.0
        %3297 = vmatpush1.msra.mxu0 0.0
        %3298 = vmatprep.subr.mxu0 0.0
        %3299 = vmatpush1.msra.mxu0 0.0
        %3300 = vmatprep.subr.mxu0 0.0
        %3301 = vmatpush1.msra.mxu0 0.0
        %3302 = vmatprep.subr.mxu0 0.0
        %3303 = vmatpush1.msra.mxu0 0.0
        %3304 = vmatprep.subr.mxu0 0.0
        %3305 = vmatpush1.msra.mxu0 0.0
        %3306 = vmatprep.subr.mxu0 0.0
        %3307 = vmatpush1.msra.mxu0 0.0
        %3308 = vmatprep.mubr.f32.mxu0 0.0
        %3309 = vmatmul.mubr.f32.gmra.mrb[0].mxu0 %v3157
        %v3310 = vpop.f32.mrb[0].mxu0
        %v3311 = vadd.f32 %v3227, %v3310
        %v3312 = vpop.f32.mrb[0].mxu0
        %v3313 = vadd.f32 %v3231, %v3312
        %3314 = vdwg.mxu0
        %3315 = vmatprep.subr.mxu0 %v3161
        %3316 = vmatpush1.msra.mxu0 %v3160
        %3317 = vmatprep.subr.mxu0 %v3165
        %3318 = vmatpush1.msra.mxu0 %v3164
        %3319 = vmatprep.subr.mxu0 %v3169
        %3320 = vmatpush1.msra.mxu0 %v3168
        %3321 = vmatprep.subr.mxu0 %v3173
        %3322 = vmatpush1.msra.mxu0 %v3172
        %3323 = vmatprep.subr.mxu0 %v3177
        %3324 = vmatpush1.msra.mxu0 %v3176
        %3325 = vmatprep.subr.mxu0 %v3181
        %3326 = vmatpush1.msra.mxu0 %v3180
        %3327 = vmatprep.subr.mxu0 %v3185
        %3328 = vmatpush1.msra.mxu0 %v3184
        %3329 = vmatprep.subr.mxu0 %v3189
        %3330 = vmatpush1.msra.mxu0 %v3188
        %3331 = vmatprep.subr.mxu0 %v3193
        %3332 = vmatpush1.msra.mxu0 %v3192
        %3333 = vmatprep.subr.mxu0 %v3197
        %3334 = vmatpush1.msra.mxu0 %v3196
        %3335 = vmatprep.subr.mxu0 %v3201
        %3336 = vmatpush1.msra.mxu0 %v3200
        %3337 = vmatprep.subr.mxu0 %v3205
        %3338 = vmatpush1.msra.mxu0 %v3204
        %3339 = vmatprep.subr.mxu0 %v3209
        %3340 = vmatpush1.msra.mxu0 %v3208
        %3341 = vmatprep.subr.mxu0 %v3213
        %3342 = vmatpush1.msra.mxu0 %v3212
        %3343 = vmatprep.subr.mxu0 %v3217
        %3344 = vmatpush1.msra.mxu0 %v3216
        %3345 = vmatprep.subr.mxu0 %v3221
        %3346 = vmatpush1.msra.mxu0 %v3220
        %3347 = vmatprep.subr.mxu0 0.0
        %3348 = vmatpush1.msra.mxu0 0.0
        %3349 = vmatprep.subr.mxu0 0.0
        %3350 = vmatpush1.msra.mxu0 0.0
        %3351 = vmatprep.subr.mxu0 0.0
        %3352 = vmatpush1.msra.mxu0 0.0
        %3353 = vmatprep.subr.mxu0 0.0
        %3354 = vmatpush1.msra.mxu0 0.0
        %3355 = vmatprep.subr.mxu0 0.0
        %3356 = vmatpush1.msra.mxu0 0.0
        %3357 = vmatprep.subr.mxu0 0.0
        %3358 = vmatpush1.msra.mxu0 0.0
        %3359 = vmatprep.subr.mxu0 0.0
        %3360 = vmatpush1.msra.mxu0 0.0
        %3361 = vmatprep.subr.mxu0 0.0
        %3362 = vmatpush1.msra.mxu0 0.0
        %3363 = vmatprep.subr.mxu0 0.0
        %3364 = vmatpush1.msra.mxu0 0.0
        %3365 = vmatprep.subr.mxu0 0.0
        %3366 = vmatpush1.msra.mxu0 0.0
        %3367 = vmatprep.subr.mxu0 0.0
        %3368 = vmatpush1.msra.mxu0 0.0
        %3369 = vmatprep.subr.mxu0 0.0
        %3370 = vmatpush1.msra.mxu0 0.0
        %3371 = vmatprep.subr.mxu0 0.0
        %3372 = vmatpush1.msra.mxu0 0.0
        %3373 = vmatprep.subr.mxu0 0.0
        %3374 = vmatpush1.msra.mxu0 0.0
        %3375 = vmatprep.subr.mxu0 0.0
        %3376 = vmatpush1.msra.mxu0 0.0
        %3377 = vmatprep.subr.mxu0 0.0
        %3378 = vmatpush1.msra.mxu0 0.0
        %3379 = vmatprep.mubr.f32.mxu0 0.0
        %3380 = vmatmul.mubr.f32.gmra.mrb[0].mxu0 %v3157
        %v3381 = vpop.f32.mrb[0].mxu0
        %v3382 = vadd.f32 %v3235, %v3381
        %v3383 = vpop.f32.mrb[0].mxu0
        %v3384 = vadd.f32 %v3239, %v3383
        %3385 = vdwg.mxu0
        %3386 = vst [vmem:[%s244] sm:$0xff] %v3311
        %3387 = vst [vmem:[%s244 + $0x8] sm:$0xff] %v3313
        %3388 = vst [vmem:[%s244 + $0x10] sm:$0xff] %v3382
        %3389 = vst [vmem:[%s244 + $0x18] sm:$0xff] %v3384
        %s3390 = sand.u32 %s108, 1
        %s3391 = scalar_lea.sflag [#allocation10], %s3390
        %s3392 = sand.u32 %s108, 1
        %s3393 = smul.addr %s3392, 32
        %s3394 = scalar_lea.vmem [#allocation14], %s3393
        // Predicated region
        $region49: #{tpu_custom_call.1} parent=31 // pred_check
          %p3395 = pneg %p118
        $region50: #{tpu_custom_call.1} parent=31 // pred_check_branch
          %3397 = sbr.rel (%p3395) target = $region52
        $region51: #{tpu_custom_call.1} parent=31 // pred_region
          %s3398 = smul.u32 4, %s27
          %s3400 = ssub.s32 512, 512
          %3401 = vsyncadd %s3391, %s3400
          %s3402 = smul.addr %s3398, 128
          %s3403 = scalar_lea.hbm %s5, %s3402
          %s3405 = sshll.u32 %s3394, 4
          %s3406 = int_to_ptr.vmem [resolvable:$true] %s3405
          %3408 = dma.vmem_to_hbm [thread:$0]  %s3406, 512, %s3403, %s3391
        $region52: #{tpu_custom_call.1} parent=31 // pred_fallthru
          _
      $region32: #{tpu_custom_call.1} parent=5 // pred_fallthru
        _
      %p3409 = scmp.le.s32.totalorder 2, %s22
      // Predicated region
      $region53: #{tpu_custom_call.1} parent=5 // pred_check
        %p3410 = pneg %p3409
      $region54: #{tpu_custom_call.1} parent=5 // pred_check_branch
        %3412 = sbr.rel (%p3410) target = $region56
      $region55: #{tpu_custom_call.1} parent=5 // pred_region
        %s3413 = ssub.s32 %s22, 2
        // Predicated region
        $region57: #{tpu_custom_call.1} parent=55 // pred_check
          %p3414 = pneg %p124
        $region58: #{tpu_custom_call.1} parent=55 // pred_check_branch
          %3416 = sbr.rel (%p3414) target = $region60
        $region59: #{tpu_custom_call.1} parent=55 // pred_region
          %s3417 = sand.u32 %s109, 1
          %s3418 = scalar_lea.sflag [#allocation10], %s3417
          %s3419 = sand.u32 %s109, 1
          %s3420 = smul.addr %s3419, 32
          %s3421 = scalar_lea.vmem [#allocation14], %s3420
          %3422 = dma.done %s3418, 512
        $region60: #{tpu_custom_call.1} parent=55 // pred_fallthru
          _
      $region56: #{tpu_custom_call.1} parent=5 // pred_fallthru
        _
    $region6: #{tpu_custom_call.1} parent=1 // loop_footer
      %s26 = sadd.s32 1, %s22
    $region7: #{tpu_custom_call.1} parent=1 // loop_footer_branch
      %21 = sbr.rel target = $region3
    $region8: #{tpu_custom_call.1} parent=1 // loop_exit
      _
    %3423 = vsyncpa [#allocation9], 1
    %s3424 = scalar_lea.sflag [#allocation9], 1
    %3425 = vsyncpa %s3424, 1
    %3426 = vsyncpa [#allocation12], 1
    %s3427 = scalar_lea.sflag [#allocation12], 1
    %3428 = vsyncpa %s3427, 1
    %3429 = vsyncpa [#allocation10], 1
    %s3430 = scalar_lea.sflag [#allocation10], 1
    %3431 = vsyncpa %s3430, 1
  %3432 = vsyncmov [#allocation5]
  %s3433 = vpop.sfrf %3432
  %p3434 = scmp.eq.s32.totalorder %s3433, 0
  %p3435 = pneg %p3434
  %3437 = shalt.err (%p3435)
  %s3438 = scalar_lea.sflag [#allocation5], 1
  %3439 = vsyncmov %s3438
  %s3440 = vpop.sfrf %3439
  %p3441 = scmp.eq.s32.totalorder %s3440, 0
  %p3442 = pneg %p3441
  %3444 = shalt.err (%p3442)
  %s3445 = scalar_lea.sflag [#allocation5], 2
  %3446 = vsyncmov %s3445
  %s3447 = vpop.sfrf %3446
  %p3448 = scmp.eq.s32.totalorder %s3447, 0
  %p3449 = pneg %p3448
  %3451 = shalt.err (%p3449)
  %s3452 = scalar_lea.sflag [#allocation5], 3
  %3453 = vsyncmov %s3452
  %s3454 = vpop.sfrf %3453
  %p3455 = scmp.eq.s32.totalorder %s3454, 0
  %p3456 = pneg %p3455
  %3458 = shalt.err (%p3456)
  %s3459 = scalar_lea.sflag [#allocation5], 4
  %3460 = vsyncmov %s3459
  %s3461 = vpop.sfrf %3460
  %p3462 = scmp.eq.s32.totalorder %s3461, 0
  %p3463 = pneg %p3462
  %3465 = shalt.err (%p3463)
  %s3466 = scalar_lea.sflag [#allocation5], 5
  %3467 = vsyncmov %s3466
  %s3468 = vpop.sfrf %3467
  %p3469 = scmp.eq.s32.totalorder %s3468, 0
  %p3470 = pneg %p3469
  %3472 = shalt.err (%p3470)
  %s3473 = scalar_lea.sflag [#allocation5], 6
  %3474 = vsyncmov %s3473
  %s3475 = vpop.sfrf %3474
  %p3476 = scmp.eq.s32.totalorder %s3475, 0
  %p3477 = pneg %p3476
  %3479 = shalt.err (%p3477)
  %s3480 = scalar_lea.sflag [#allocation5], 7
  %3481 = vsyncmov %s3480
  %s3482 = vpop.sfrf %3481
  %p3483 = scmp.eq.s32.totalorder %s3482, 0
  %p3484 = pneg %p3483
  %3486 = shalt.err (%p3484)

</llo_original>
